<compile_context>
chip_gen: v7x
topology: tpu7x:2x2x1
jax: 0.10.0
libtpu: 0.0.40
codegen_flags: <defaults>
</compile_context>

<pallas_src>
import functools

import jax
import jax.numpy as jnp
from jax import lax
from jax.experimental import pallas as pl
from jax.experimental.pallas import tpu as pltpu


_CPAD = 128    # hidden channels padded to a full lane group (lane-dense tiles)
_CIN_PAD = 8   # stem input channels (RGB + flow = 5) padded to a sublane multiple


def _row_margin(w):
    # Zero margin above/below the flattened (H*W, C) activation; must cover the
    # largest flat tap shift (W + 1) and be a multiple of 8 for aligned stores.
    return ((w + 1 + 7) // 8) * 8


# ----------------------------------------------------------------------------
# Fused forward kernel (one sample per grid step)
# ----------------------------------------------------------------------------
def _fused_forward_kernel(x_ref, masks_ref, w1_ref, b1_ref, wa_ref, ba_ref,
                          wb_ref, bb_ref, fcw_ref, fcb_ref, o_ref,
                          pad1_ref, pad2_ref, *, H, W):
    """stem conv -> (conv_a, conv_b + skip) -> global avg pool -> fc, in VMEM.

    Activations are kept flattened row-major as (H*W, C) with `off` zero rows
    above/below.  A 3x3 'same' conv = 9 shifted MXU matmuls; rows whose column
    would wrap (x+dx outside [0, W)) are zeroed by the precomputed masks and
    rows whose y+dy falls outside [0, H) land in the zero margin.
    """
    HW = H * W
    off = _row_margin(W)

    mask_left = masks_ref[0]    # (HW, 1): 0 where x == 0      (dx = -1 taps)
    mask_right = masks_ref[1]   # (HW, 1): 0 where x == W - 1  (dx = +1 taps)

    def conv3x3(src_ref, w_ref, bias):
        cout = bias.shape[-1]
        # Bias hoisted into the accumulator init.
        acc = jnp.broadcast_to(bias, (HW, cout)).astype(jnp.float32)
        for oy in range(3):
            for ox in range(3):
                dy, dx = oy - 1, ox - 1
                shift = dy * W + dx
                patch = src_ref[off + shift: off + shift + HW, :]
                if dx == -1:
                    patch = patch * mask_left
                elif dx == 1:
                    patch = patch * mask_right
                acc = acc + jnp.dot(patch.astype(jnp.bfloat16), w_ref[oy, ox],
                                    preferred_element_type=jnp.float32)
        return acc

    # Stem: flow-aware 5(->8)-channel conv + bias + ReLU.
    h = jnp.maximum(conv3x3(x_ref, w1_ref, b1_ref[...]), 0.0)       # (HW, 128) f32

    # Residual block: conv_a (+ bias, ReLU).
    pad1_ref[...] = jnp.zeros_like(pad1_ref)
    pad1_ref[off:off + HW, :] = h
    h2 = jnp.maximum(conv3x3(pad1_ref, wa_ref, ba_ref[...]), 0.0)

    # Residual block: conv_b + bias + skip connection + ReLU.
    pad2_ref[...] = jnp.zeros_like(pad2_ref)
    pad2_ref[off:off + HW, :] = h2
    h3 = jnp.maximum(conv3x3(pad2_ref, wb_ref, bb_ref[...]) + h, 0.0)

    # Global average pool + fc head, fused in the same kernel.
    pooled = jnp.mean(h3, axis=0, keepdims=True)                    # (1, 128) f32
    o_ref[...] = (jnp.dot(pooled, fcw_ref[...],
                          preferred_element_type=jnp.float32) + fcb_ref[...])


# ----------------------------------------------------------------------------
# Wrappers
# ----------------------------------------------------------------------------
def _prepare_kernel_params(params):
    """PyTorch-layout params -> MXU-friendly kernel layout.

    Conv weights: OIHW -> (kh, kw, Cin_pad, 128) bf16, channels zero-padded;
    biases -> (1, 128) f32; fc -> (128, emb)/(1, emb) f32.  Padded channels
    carry exact zeros through the whole network, so the math is unchanged.
    """
    def conv_w(w):
        cout, cin = int(w.shape[0]), int(w.shape[1])
        cin_pad = _CIN_PAD if cin <= _CIN_PAD else _CPAD
        w = jnp.transpose(w, (2, 3, 1, 0))                        # (3,3,Cin,Cout)
        w = jnp.pad(w, ((0, 0), (0, 0), (0, cin_pad - cin), (0, _CPAD - cout)))
        return w.astype(jnp.bfloat16)

    def conv_b(b):
        return jnp.pad(b, (0, _CPAD - b.shape[0])).reshape(1, _CPAD).astype(jnp.float32)

    fc_w = jnp.pad(params["fc_w"].astype(jnp.float32),
                   ((0, _CPAD - params["fc_w"].shape[0]), (0, 0)))
    fc_b = params["fc_b"].reshape(1, -1).astype(jnp.float32)
    return (conv_w(params["w1"]), conv_b(params["b1"]),
            conv_w(params["wa"]), conv_b(params["ba"]),
            conv_w(params["wb"]), conv_b(params["bb"]), fc_w, fc_b)


def rgbf_embedding_forward(params, x_nchw):
    """x_nchw: (B, 5, H, W) float32 -> (B, emb_dim) float32 embedding."""
    B, Cin, H, W = x_nchw.shape
    if Cin > _CIN_PAD:
        raise ValueError("stem expects <= 8 input channels (RGB / RGB+flow)")
    if H % 8 or W % 8:
        raise ValueError("H and W must be multiples of 8")
    HW = H * W
    off = _row_margin(W)
    rows = HW + 2 * off
    emb_dim = params["fc_w"].shape[1]

    w1, b1, wa, ba, wb, bb, fc_w, fc_b = _prepare_kernel_params(params)

    # NCHW -> flattened row-major NHWC, zero channel pad + zero row margins.
    x = jnp.transpose(x_nchw, (0, 2, 3, 1)).astype(jnp.float32)
    x = jnp.pad(x, ((0, 0), (0, 0), (0, 0), (0, _CIN_PAD - Cin)))
    x = x.reshape(B, HW, _CIN_PAD)
    x = jnp.pad(x, ((0, 0), (off, off), (0, 0))).astype(jnp.bfloat16)

    # Column-wrap masks for the dx = -1 / dx = +1 conv taps.
    col = jnp.arange(HW, dtype=jnp.int32) % W
    masks = jnp.stack([(col >= 1).astype(jnp.float32),
                       (col <= W - 2).astype(jnp.float32)]).reshape(2, HW, 1)

    kernel = functools.partial(_fused_forward_kernel, H=H, W=W)
    resident2 = lambda b: (0, 0)
    resident3 = lambda b: (0, 0, 0)
    resident4 = lambda b: (0, 0, 0, 0)

    out = pl.pallas_call(
        kernel,
        out_shape=jax.ShapeDtypeStruct((B, 1, emb_dim), jnp.float32),
        grid=(B,),                       # one sample per step; parallel -> 2 TCs on v7x
        in_specs=[
            pl.BlockSpec((None, rows, _CIN_PAD), lambda b: (b, 0, 0)),   # x (per sample)
            pl.BlockSpec((2, HW, 1), resident3),                          # wrap masks
            pl.BlockSpec((3, 3, _CIN_PAD, _CPAD), resident4),             # w1
            pl.BlockSpec((1, _CPAD), resident2),                          # b1
            pl.BlockSpec((3, 3, _CPAD, _CPAD), resident4),                # wa
            pl.BlockSpec((1, _CPAD), resident2),                          # ba
            pl.BlockSpec((3, 3, _CPAD, _CPAD), resident4),                # wb
            pl.BlockSpec((1, _CPAD), resident2),                          # bb
            pl.BlockSpec((_CPAD, emb_dim), resident2),                    # fc_w
            pl.BlockSpec((1, emb_dim), resident2),                        # fc_b
        ],
        out_specs=pl.BlockSpec((None, 1, emb_dim), lambda b: (b, 0, 0)),
        scratch_shapes=[
            pltpu.VMEM((rows, _CPAD), jnp.float32),   # zero-margined h  (conv_a input)
            pltpu.VMEM((rows, _CPAD), jnp.float32),   # zero-margined h2 (conv_b input)
        ],
        compiler_params=pltpu.CompilerParams(
            dimension_semantics=("parallel",)),
    )(x, masks, w1, b1, wa, ba, wb, bb, fc_w, fc_b)
    return out.reshape(B, emb_dim)


# ----------------------------------------------------------------------------
# Parameter construction (deterministic, mirrors __init__ semantics)
# ----------------------------------------------------------------------------
def init_params(key, *, channels=32, emb_dim=16, use_flow=True):
    ks = jax.random.split(key, 8)

    # Original "RGB" first conv of the backbone: (C, 3, 3, 3) + bias.
    w1_rgb = 0.1 * jax.random.normal(ks[0], (channels, 3, 3, 3), jnp.float32)
    b1 = 0.1 * jax.random.normal(ks[1], (channels,), jnp.float32)

    if use_flow:
        # add_flow_to_model: mean over the RGB in-channel dim, expanded to 5.
        w1 = jnp.broadcast_to(
            jnp.mean(w1_rgb, axis=1, keepdims=True), (channels, 5, 3, 3))
    else:
        w1 = w1_rgb

    # One basic residual block (conv_a, conv_b).
    wa = 0.1 * jax.random.normal(ks[2], (channels, channels, 3, 3), jnp.float32)
    ba = 0.1 * jax.random.normal(ks[3], (channels,), jnp.float32)
    wb = 0.1 * jax.random.normal(ks[4], (channels, channels, 3, 3), jnp.float32)
    bb = 0.1 * jax.random.normal(ks[5], (channels,), jnp.float32)

    # replace_last_layer: fresh Linear(feature_dim=channels, emb_dim).
    fc_w = 0.1 * jax.random.normal(ks[6], (channels, emb_dim), jnp.float32)
    fc_b = 0.1 * jax.random.normal(ks[7], (emb_dim,), jnp.float32)

    return dict(w1=jnp.asarray(w1), b1=b1, wa=wa, ba=ba, wb=wb, bb=bb,
                fc_w=fc_w, fc_b=fc_b)


# ----------------------------------------------------------------------------
# Pure-JAX reference (for a loose numerical self-check)
# ----------------------------------------------------------------------------
def reference_forward(params, x_nchw):
    x = jnp.transpose(x_nchw, (0, 2, 3, 1)).astype(jnp.float32)
    dn = ("NHWC", "OIHW", "NHWC")
    conv = lambda v, w: lax.conv_general_dilated(
        v, w, window_strides=(1, 1), padding="SAME", dimension_numbers=dn)
    h = jax.nn.relu(conv(x, params["w1"]) + params["b1"])
    h2 = jax.nn.relu(conv(h, params["wa"]) + params["ba"])
    h3 = jax.nn.relu(conv(h2, params["wb"]) + params["bb"] + h)
    pooled = jnp.mean(h3, axis=(1, 2))
    return pooled @ params["fc_w"] + params["fc_b"]


# ----------------------------------------------------------------------------
if __name__ == "__main__":
    key = jax.random.PRNGKey(0)
    kp, kx = jax.random.split(key)

    B, Cin, H, W = 2, 5, 16, 16          # use_flow=True -> 5 input channels
    channels, emb_dim = 32, 16

    params = init_params(kp, channels=channels, emb_dim=emb_dim, use_flow=True)
    x = jax.random.normal(kx, (B, Cin, H, W), jnp.float32)

    emb = jax.jit(rgbf_embedding_forward)(params, x)
    emb = jax.block_until_ready(emb)

    assert emb.shape == (B, emb_dim), emb.shape
    assert emb.dtype == jnp.float32
    assert bool(jnp.all(jnp.isfinite(emb)))

    # Loose check vs. f32 XLA reference (kernel feeds the MXU bf16 inputs).
    ref = reference_forward(params, x)
    max_err = float(jnp.max(jnp.abs(emb - ref)))
    assert max_err < 5e-2, f"kernel/reference mismatch: {max_err}"

    print("KERNEL_OK")
</pallas_src>

<mosaic_0001>
module attributes {stable_mosaic.version = 11 : i64} {
  func.func @_fused_forward_kernel(%arg0: i32, %arg1: memref<1x304x8xbf16, #tpu.memory_space<vmem>>, %arg2: memref<2x256x1xf32, #tpu.memory_space<vmem>>, %arg3: memref<3x3x8x128xbf16, #tpu.memory_space<vmem>>, %arg4: memref<1x128xf32, #tpu.memory_space<vmem>>, %arg5: memref<3x3x128x128xbf16, #tpu.memory_space<vmem>>, %arg6: memref<1x128xf32, #tpu.memory_space<vmem>>, %arg7: memref<3x3x128x128xbf16, #tpu.memory_space<vmem>>, %arg8: memref<1x128xf32, #tpu.memory_space<vmem>>, %arg9: memref<128x16xf32, #tpu.memory_space<vmem>>, %arg10: memref<1x16xf32, #tpu.memory_space<vmem>>, %arg11: memref<1x1x16xf32, #tpu.memory_space<vmem>>, %arg12: memref<304x128xf32, #tpu.memory_space<vmem>>, %arg13: memref<304x128xf32, #tpu.memory_space<vmem>>) attributes {dimension_semantics = [#tpu.dimension_semantics<parallel>], iteration_bounds = array<i64: 2>, scalar_prefetch = 0 : i64, scratch_operands = 2 : i64, tpu.core_type = #tpu.core_type<tc>, window_params = [{transform_indices = @transform_0, window_bounds = array<i64: 1, 304, 8>}, {pipeline_mode = #tpu.pipeline_mode<synchronous>, transform_indices = @transform_1, window_bounds = array<i64: 2, 256, 1>}, {pipeline_mode = #tpu.pipeline_mode<synchronous>, transform_indices = @transform_2, window_bounds = array<i64: 3, 3, 8, 128>}, {pipeline_mode = #tpu.pipeline_mode<synchronous>, transform_indices = @transform_3, window_bounds = array<i64: 1, 128>}, {pipeline_mode = #tpu.pipeline_mode<synchronous>, transform_indices = @transform_4, window_bounds = array<i64: 3, 3, 128, 128>}, {pipeline_mode = #tpu.pipeline_mode<synchronous>, transform_indices = @transform_5, window_bounds = array<i64: 1, 128>}, {pipeline_mode = #tpu.pipeline_mode<synchronous>, transform_indices = @transform_6, window_bounds = array<i64: 3, 3, 128, 128>}, {pipeline_mode = #tpu.pipeline_mode<synchronous>, transform_indices = @transform_7, window_bounds = array<i64: 1, 128>}, {pipeline_mode = #tpu.pipeline_mode<synchronous>, transform_indices = @transform_8, window_bounds = array<i64: 128, 16>}, {pipeline_mode = #tpu.pipeline_mode<synchronous>, transform_indices = @transform_9, window_bounds = array<i64: 1, 16>}, {transform_indices = @transform_10, window_bounds = array<i64: 1, 1, 16>}]} {
    %c0 = arith.constant 0 : index
    %c0_0 = arith.constant 0 : index
    %c0_1 = arith.constant 0 : index
    %0 = vector.load %arg2[%c0, %c0_0, %c0_1] : memref<2x256x1xf32, #tpu.memory_space<vmem>>, vector<1x256x1xf32>
    %1 = vector.shape_cast %0 : vector<1x256x1xf32> to vector<256x1xf32>
    %c1 = arith.constant 1 : index
    %c0_2 = arith.constant 0 : index
    %c0_3 = arith.constant 0 : index
    %2 = vector.load %arg2[%c1, %c0_2, %c0_3] : memref<2x256x1xf32, #tpu.memory_space<vmem>>, vector<1x256x1xf32>
    %3 = vector.shape_cast %2 : vector<1x256x1xf32> to vector<256x1xf32>
    %c0_4 = arith.constant 0 : index
    %c0_5 = arith.constant 0 : index
    %4 = vector.load %arg4[%c0_4, %c0_5] : memref<1x128xf32, #tpu.memory_space<vmem>>, vector<1x128xf32>
    %5 = vector.shape_cast %4 : vector<1x128xf32> to vector<1x128xf32>
    %6 = vector.broadcast %5 : vector<1x128xf32> to vector<256x128xf32>
    %c0_6 = arith.constant 0 : index
    %c7 = arith.constant 7 : index
    %c0_7 = arith.constant 0 : index
    %7 = vector.load %arg1[%c0_6, %c7, %c0_7] : memref<1x304x8xbf16, #tpu.memory_space<vmem>>, vector<1x256x8xbf16>
    %8 = vector.shape_cast %7 : vector<1x256x8xbf16> to vector<256x8xbf16>
    %9 = arith.extf %8 : vector<256x8xbf16> to vector<256x8xf32>
    %10 = vector.broadcast %1 : vector<256x1xf32> to vector<256x8xf32>
    %11 = arith.mulf %9, %10 : vector<256x8xf32>
    %12 = arith.truncf %11 : vector<256x8xf32> to vector<256x8xbf16>
    %c0_8 = arith.constant 0 : index
    %c0_9 = arith.constant 0 : index
    %c0_10 = arith.constant 0 : index
    %c0_11 = arith.constant 0 : index
    %13 = vector.load %arg3[%c0_8, %c0_9, %c0_10, %c0_11] : memref<3x3x8x128xbf16, #tpu.memory_space<vmem>>, vector<1x1x8x128xbf16>
    %14 = vector.shape_cast %13 : vector<1x1x8x128xbf16> to vector<8x128xbf16>
    %cst = arith.constant dense<0.000000e+00> : vector<256x128xf32>
    %15 = tpu.matmul %12, %14, %cst {dimension_numbers = #tpu.dot_dimension_numbers<[1], [0], [0], [1], [0, 0, 1, 1], [], []>} : vector<256x8xbf16>, vector<8x128xbf16>, vector<256x128xf32> -> vector<256x128xf32>
    %16 = arith.addf %6, %15 : vector<256x128xf32>
    %c0_12 = arith.constant 0 : index
    %c8 = arith.constant 8 : index
    %c0_13 = arith.constant 0 : index
    %17 = vector.load %arg1[%c0_12, %c8, %c0_13] : memref<1x304x8xbf16, #tpu.memory_space<vmem>>, vector<1x256x8xbf16>
    %18 = vector.shape_cast %17 : vector<1x256x8xbf16> to vector<256x8xbf16>
    %c0_14 = arith.constant 0 : index
    %c1_15 = arith.constant 1 : index
    %c0_16 = arith.constant 0 : index
    %c0_17 = arith.constant 0 : index
    %19 = vector.load %arg3[%c0_14, %c1_15, %c0_16, %c0_17] : memref<3x3x8x128xbf16, #tpu.memory_space<vmem>>, vector<1x1x8x128xbf16>
    %20 = vector.shape_cast %19 : vector<1x1x8x128xbf16> to vector<8x128xbf16>
    %cst_18 = arith.constant dense<0.000000e+00> : vector<256x128xf32>
    %21 = tpu.matmul %18, %20, %cst_18 {dimension_numbers = #tpu.dot_dimension_numbers<[1], [0], [0], [1], [0, 0, 1, 1], [], []>} : vector<256x8xbf16>, vector<8x128xbf16>, vector<256x128xf32> -> vector<256x128xf32>
    %22 = arith.addf %16, %21 : vector<256x128xf32>
    %c0_19 = arith.constant 0 : index
    %c9 = arith.constant 9 : index
    %c0_20 = arith.constant 0 : index
    %23 = vector.load %arg1[%c0_19, %c9, %c0_20] : memref<1x304x8xbf16, #tpu.memory_space<vmem>>, vector<1x256x8xbf16>
    %24 = vector.shape_cast %23 : vector<1x256x8xbf16> to vector<256x8xbf16>
    %25 = arith.extf %24 : vector<256x8xbf16> to vector<256x8xf32>
    %26 = vector.broadcast %3 : vector<256x1xf32> to vector<256x8xf32>
    %27 = arith.mulf %25, %26 : vector<256x8xf32>
    %28 = arith.truncf %27 : vector<256x8xf32> to vector<256x8xbf16>
    %c0_21 = arith.constant 0 : index
    %c2 = arith.constant 2 : index
    %c0_22 = arith.constant 0 : index
    %c0_23 = arith.constant 0 : index
    %29 = vector.load %arg3[%c0_21, %c2, %c0_22, %c0_23] : memref<3x3x8x128xbf16, #tpu.memory_space<vmem>>, vector<1x1x8x128xbf16>
    %30 = vector.shape_cast %29 : vector<1x1x8x128xbf16> to vector<8x128xbf16>
    %cst_24 = arith.constant dense<0.000000e+00> : vector<256x128xf32>
    %31 = tpu.matmul %28, %30, %cst_24 {dimension_numbers = #tpu.dot_dimension_numbers<[1], [0], [0], [1], [0, 0, 1, 1], [], []>} : vector<256x8xbf16>, vector<8x128xbf16>, vector<256x128xf32> -> vector<256x128xf32>
    %32 = arith.addf %22, %31 : vector<256x128xf32>
    %c0_25 = arith.constant 0 : index
    %c23 = arith.constant 23 : index
    %c0_26 = arith.constant 0 : index
    %33 = vector.load %arg1[%c0_25, %c23, %c0_26] : memref<1x304x8xbf16, #tpu.memory_space<vmem>>, vector<1x256x8xbf16>
    %34 = vector.shape_cast %33 : vector<1x256x8xbf16> to vector<256x8xbf16>
    %35 = arith.extf %34 : vector<256x8xbf16> to vector<256x8xf32>
    %36 = vector.broadcast %1 : vector<256x1xf32> to vector<256x8xf32>
    %37 = arith.mulf %35, %36 : vector<256x8xf32>
    %38 = arith.truncf %37 : vector<256x8xf32> to vector<256x8xbf16>
    %c1_27 = arith.constant 1 : index
    %c0_28 = arith.constant 0 : index
    %c0_29 = arith.constant 0 : index
    %c0_30 = arith.constant 0 : index
    %39 = vector.load %arg3[%c1_27, %c0_28, %c0_29, %c0_30] : memref<3x3x8x128xbf16, #tpu.memory_space<vmem>>, vector<1x1x8x128xbf16>
    %40 = vector.shape_cast %39 : vector<1x1x8x128xbf16> to vector<8x128xbf16>
    %cst_31 = arith.constant dense<0.000000e+00> : vector<256x128xf32>
    %41 = tpu.matmul %38, %40, %cst_31 {dimension_numbers = #tpu.dot_dimension_numbers<[1], [0], [0], [1], [0, 0, 1, 1], [], []>} : vector<256x8xbf16>, vector<8x128xbf16>, vector<256x128xf32> -> vector<256x128xf32>
    %42 = arith.addf %32, %41 : vector<256x128xf32>
    %c0_32 = arith.constant 0 : index
    %c24 = arith.constant 24 : index
    %c0_33 = arith.constant 0 : index
    %43 = vector.load %arg1[%c0_32, %c24, %c0_33] : memref<1x304x8xbf16, #tpu.memory_space<vmem>>, vector<1x256x8xbf16>
    %44 = vector.shape_cast %43 : vector<1x256x8xbf16> to vector<256x8xbf16>
    %c1_34 = arith.constant 1 : index
    %c1_35 = arith.constant 1 : index
    %c0_36 = arith.constant 0 : index
    %c0_37 = arith.constant 0 : index
    %45 = vector.load %arg3[%c1_34, %c1_35, %c0_36, %c0_37] : memref<3x3x8x128xbf16, #tpu.memory_space<vmem>>, vector<1x1x8x128xbf16>
    %46 = vector.shape_cast %45 : vector<1x1x8x128xbf16> to vector<8x128xbf16>
    %cst_38 = arith.constant dense<0.000000e+00> : vector<256x128xf32>
    %47 = tpu.matmul %44, %46, %cst_38 {dimension_numbers = #tpu.dot_dimension_numbers<[1], [0], [0], [1], [0, 0, 1, 1], [], []>} : vector<256x8xbf16>, vector<8x128xbf16>, vector<256x128xf32> -> vector<256x128xf32>
    %48 = arith.addf %42, %47 : vector<256x128xf32>
    %c0_39 = arith.constant 0 : index
    %c25 = arith.constant 25 : index
    %c0_40 = arith.constant 0 : index
    %49 = vector.load %arg1[%c0_39, %c25, %c0_40] : memref<1x304x8xbf16, #tpu.memory_space<vmem>>, vector<1x256x8xbf16>
    %50 = vector.shape_cast %49 : vector<1x256x8xbf16> to vector<256x8xbf16>
    %51 = arith.extf %50 : vector<256x8xbf16> to vector<256x8xf32>
    %52 = vector.broadcast %3 : vector<256x1xf32> to vector<256x8xf32>
    %53 = arith.mulf %51, %52 : vector<256x8xf32>
    %54 = arith.truncf %53 : vector<256x8xf32> to vector<256x8xbf16>
    %c1_41 = arith.constant 1 : index
    %c2_42 = arith.constant 2 : index
    %c0_43 = arith.constant 0 : index
    %c0_44 = arith.constant 0 : index
    %55 = vector.load %arg3[%c1_41, %c2_42, %c0_43, %c0_44] : memref<3x3x8x128xbf16, #tpu.memory_space<vmem>>, vector<1x1x8x128xbf16>
    %56 = vector.shape_cast %55 : vector<1x1x8x128xbf16> to vector<8x128xbf16>
    %cst_45 = arith.constant dense<0.000000e+00> : vector<256x128xf32>
    %57 = tpu.matmul %54, %56, %cst_45 {dimension_numbers = #tpu.dot_dimension_numbers<[1], [0], [0], [1], [0, 0, 1, 1], [], []>} : vector<256x8xbf16>, vector<8x128xbf16>, vector<256x128xf32> -> vector<256x128xf32>
    %58 = arith.addf %48, %57 : vector<256x128xf32>
    %c0_46 = arith.constant 0 : index
    %c39 = arith.constant 39 : index
    %c0_47 = arith.constant 0 : index
    %59 = vector.load %arg1[%c0_46, %c39, %c0_47] : memref<1x304x8xbf16, #tpu.memory_space<vmem>>, vector<1x256x8xbf16>
    %60 = vector.shape_cast %59 : vector<1x256x8xbf16> to vector<256x8xbf16>
    %61 = arith.extf %60 : vector<256x8xbf16> to vector<256x8xf32>
    %62 = vector.broadcast %1 : vector<256x1xf32> to vector<256x8xf32>
    %63 = arith.mulf %61, %62 : vector<256x8xf32>
    %64 = arith.truncf %63 : vector<256x8xf32> to vector<256x8xbf16>
    %c2_48 = arith.constant 2 : index
    %c0_49 = arith.constant 0 : index
    %c0_50 = arith.constant 0 : index
    %c0_51 = arith.constant 0 : index
    %65 = vector.load %arg3[%c2_48, %c0_49, %c0_50, %c0_51] : memref<3x3x8x128xbf16, #tpu.memory_space<vmem>>, vector<1x1x8x128xbf16>
    %66 = vector.shape_cast %65 : vector<1x1x8x128xbf16> to vector<8x128xbf16>
    %cst_52 = arith.constant dense<0.000000e+00> : vector<256x128xf32>
    %67 = tpu.matmul %64, %66, %cst_52 {dimension_numbers = #tpu.dot_dimension_numbers<[1], [0], [0], [1], [0, 0, 1, 1], [], []>} : vector<256x8xbf16>, vector<8x128xbf16>, vector<256x128xf32> -> vector<256x128xf32>
    %68 = arith.addf %58, %67 : vector<256x128xf32>
    %c0_53 = arith.constant 0 : index
    %c40 = arith.constant 40 : index
    %c0_54 = arith.constant 0 : index
    %69 = vector.load %arg1[%c0_53, %c40, %c0_54] : memref<1x304x8xbf16, #tpu.memory_space<vmem>>, vector<1x256x8xbf16>
    %70 = vector.shape_cast %69 : vector<1x256x8xbf16> to vector<256x8xbf16>
    %c2_55 = arith.constant 2 : index
    %c1_56 = arith.constant 1 : index
    %c0_57 = arith.constant 0 : index
    %c0_58 = arith.constant 0 : index
    %71 = vector.load %arg3[%c2_55, %c1_56, %c0_57, %c0_58] : memref<3x3x8x128xbf16, #tpu.memory_space<vmem>>, vector<1x1x8x128xbf16>
    %72 = vector.shape_cast %71 : vector<1x1x8x128xbf16> to vector<8x128xbf16>
    %cst_59 = arith.constant dense<0.000000e+00> : vector<256x128xf32>
    %73 = tpu.matmul %70, %72, %cst_59 {dimension_numbers = #tpu.dot_dimension_numbers<[1], [0], [0], [1], [0, 0, 1, 1], [], []>} : vector<256x8xbf16>, vector<8x128xbf16>, vector<256x128xf32> -> vector<256x128xf32>
    %74 = arith.addf %68, %73 : vector<256x128xf32>
    %c0_60 = arith.constant 0 : index
    %c41 = arith.constant 41 : index
    %c0_61 = arith.constant 0 : index
    %75 = vector.load %arg1[%c0_60, %c41, %c0_61] : memref<1x304x8xbf16, #tpu.memory_space<vmem>>, vector<1x256x8xbf16>
    %76 = vector.shape_cast %75 : vector<1x256x8xbf16> to vector<256x8xbf16>
    %77 = arith.extf %76 : vector<256x8xbf16> to vector<256x8xf32>
    %78 = vector.broadcast %3 : vector<256x1xf32> to vector<256x8xf32>
    %79 = arith.mulf %77, %78 : vector<256x8xf32>
    %80 = arith.truncf %79 : vector<256x8xf32> to vector<256x8xbf16>
    %c2_62 = arith.constant 2 : index
    %c2_63 = arith.constant 2 : index
    %c0_64 = arith.constant 0 : index
    %c0_65 = arith.constant 0 : index
    %81 = vector.load %arg3[%c2_62, %c2_63, %c0_64, %c0_65] : memref<3x3x8x128xbf16, #tpu.memory_space<vmem>>, vector<1x1x8x128xbf16>
    %82 = vector.shape_cast %81 : vector<1x1x8x128xbf16> to vector<8x128xbf16>
    %cst_66 = arith.constant dense<0.000000e+00> : vector<256x128xf32>
    %83 = tpu.matmul %80, %82, %cst_66 {dimension_numbers = #tpu.dot_dimension_numbers<[1], [0], [0], [1], [0, 0, 1, 1], [], []>} : vector<256x8xbf16>, vector<8x128xbf16>, vector<256x128xf32> -> vector<256x128xf32>
    %84 = arith.addf %74, %83 : vector<256x128xf32>
    %cst_67 = arith.constant 0.000000e+00 : f32
    %85 = vector.broadcast %cst_67 : f32 to vector<256x128xf32>
    %86 = arith.maximumf %84, %85 : vector<256x128xf32>
    %cst_68 = arith.constant 0.000000e+00 : f32
    %87 = vector.broadcast %cst_68 : f32 to vector<304x128xf32>
    %c0_69 = arith.constant 0 : index
    %c0_70 = arith.constant 0 : index
    %88 = vector.load %arg12[%c0_69, %c0_70] : memref<304x128xf32, #tpu.memory_space<vmem>>, vector<304x128xf32>
    tpu.vector_store %arg12[%c0_69, %c0_70], %87 {strides = array<i32>} : memref<304x128xf32, #tpu.memory_space<vmem>>, vector<304x128xf32>,
    %c24_71 = arith.constant 24 : index
    %c0_72 = arith.constant 0 : index
    %89 = vector.load %arg12[%c24_71, %c0_72] : memref<304x128xf32, #tpu.memory_space<vmem>>, vector<256x128xf32>
    tpu.vector_store %arg12[%c24_71, %c0_72], %86 {strides = array<i32>} : memref<304x128xf32, #tpu.memory_space<vmem>>, vector<256x128xf32>,
    %c0_73 = arith.constant 0 : index
    %c0_74 = arith.constant 0 : index
    %90 = vector.load %arg6[%c0_73, %c0_74] : memref<1x128xf32, #tpu.memory_space<vmem>>, vector<1x128xf32>
    %91 = vector.shape_cast %90 : vector<1x128xf32> to vector<1x128xf32>
    %92 = vector.broadcast %91 : vector<1x128xf32> to vector<256x128xf32>
    %c7_75 = arith.constant 7 : index
    %c0_76 = arith.constant 0 : index
    %93 = vector.load %arg12[%c7_75, %c0_76] : memref<304x128xf32, #tpu.memory_space<vmem>>, vector<256x128xf32>
    %94 = vector.broadcast %1 : vector<256x1xf32> to vector<256x128xf32>
    %95 = arith.mulf %93, %94 : vector<256x128xf32>
    %96 = arith.truncf %95 : vector<256x128xf32> to vector<256x128xbf16>
    %c0_77 = arith.constant 0 : index
    %c0_78 = arith.constant 0 : index
    %c0_79 = arith.constant 0 : index
    %c0_80 = arith.constant 0 : index
    %97 = vector.load %arg5[%c0_77, %c0_78, %c0_79, %c0_80] : memref<3x3x128x128xbf16, #tpu.memory_space<vmem>>, vector<1x1x128x128xbf16>
    %98 = vector.shape_cast %97 : vector<1x1x128x128xbf16> to vector<128x128xbf16>
    %cst_81 = arith.constant dense<0.000000e+00> : vector<256x128xf32>
    %99 = tpu.matmul %96, %98, %cst_81 {dimension_numbers = #tpu.dot_dimension_numbers<[1], [0], [0], [1], [0, 0, 1, 1], [], []>} : vector<256x128xbf16>, vector<128x128xbf16>, vector<256x128xf32> -> vector<256x128xf32>
    %100 = arith.addf %92, %99 : vector<256x128xf32>
    %c8_82 = arith.constant 8 : index
    %c0_83 = arith.constant 0 : index
    %101 = vector.load %arg12[%c8_82, %c0_83] : memref<304x128xf32, #tpu.memory_space<vmem>>, vector<256x128xf32>
    %102 = arith.truncf %101 : vector<256x128xf32> to vector<256x128xbf16>
    %c0_84 = arith.constant 0 : index
    %c1_85 = arith.constant 1 : index
    %c0_86 = arith.constant 0 : index
    %c0_87 = arith.constant 0 : index
    %103 = vector.load %arg5[%c0_84, %c1_85, %c0_86, %c0_87] : memref<3x3x128x128xbf16, #tpu.memory_space<vmem>>, vector<1x1x128x128xbf16>
    %104 = vector.shape_cast %103 : vector<1x1x128x128xbf16> to vector<128x128xbf16>
    %cst_88 = arith.constant dense<0.000000e+00> : vector<256x128xf32>
    %105 = tpu.matmul %102, %104, %cst_88 {dimension_numbers = #tpu.dot_dimension_numbers<[1], [0], [0], [1], [0, 0, 1, 1], [], []>} : vector<256x128xbf16>, vector<128x128xbf16>, vector<256x128xf32> -> vector<256x128xf32>
    %106 = arith.addf %100, %105 : vector<256x128xf32>
    %c9_89 = arith.constant 9 : index
    %c0_90 = arith.constant 0 : index
    %107 = vector.load %arg12[%c9_89, %c0_90] : memref<304x128xf32, #tpu.memory_space<vmem>>, vector<256x128xf32>
    %108 = vector.broadcast %3 : vector<256x1xf32> to vector<256x128xf32>
    %109 = arith.mulf %107, %108 : vector<256x128xf32>
    %110 = arith.truncf %109 : vector<256x128xf32> to vector<256x128xbf16>
    %c0_91 = arith.constant 0 : index
    %c2_92 = arith.constant 2 : index
    %c0_93 = arith.constant 0 : index
    %c0_94 = arith.constant 0 : index
    %111 = vector.load %arg5[%c0_91, %c2_92, %c0_93, %c0_94] : memref<3x3x128x128xbf16, #tpu.memory_space<vmem>>, vector<1x1x128x128xbf16>
    %112 = vector.shape_cast %111 : vector<1x1x128x128xbf16> to vector<128x128xbf16>
    %cst_95 = arith.constant dense<0.000000e+00> : vector<256x128xf32>
    %113 = tpu.matmul %110, %112, %cst_95 {dimension_numbers = #tpu.dot_dimension_numbers<[1], [0], [0], [1], [0, 0, 1, 1], [], []>} : vector<256x128xbf16>, vector<128x128xbf16>, vector<256x128xf32> -> vector<256x128xf32>
    %114 = arith.addf %106, %113 : vector<256x128xf32>
    %c23_96 = arith.constant 23 : index
    %c0_97 = arith.constant 0 : index
    %115 = vector.load %arg12[%c23_96, %c0_97] : memref<304x128xf32, #tpu.memory_space<vmem>>, vector<256x128xf32>
    %116 = vector.broadcast %1 : vector<256x1xf32> to vector<256x128xf32>
    %117 = arith.mulf %115, %116 : vector<256x128xf32>
    %118 = arith.truncf %117 : vector<256x128xf32> to vector<256x128xbf16>
    %c1_98 = arith.constant 1 : index
    %c0_99 = arith.constant 0 : index
    %c0_100 = arith.constant 0 : index
    %c0_101 = arith.constant 0 : index
    %119 = vector.load %arg5[%c1_98, %c0_99, %c0_100, %c0_101] : memref<3x3x128x128xbf16, #tpu.memory_space<vmem>>, vector<1x1x128x128xbf16>
    %120 = vector.shape_cast %119 : vector<1x1x128x128xbf16> to vector<128x128xbf16>
    %cst_102 = arith.constant dense<0.000000e+00> : vector<256x128xf32>
    %121 = tpu.matmul %118, %120, %cst_102 {dimension_numbers = #tpu.dot_dimension_numbers<[1], [0], [0], [1], [0, 0, 1, 1], [], []>} : vector<256x128xbf16>, vector<128x128xbf16>, vector<256x128xf32> -> vector<256x128xf32>
    %122 = arith.addf %114, %121 : vector<256x128xf32>
    %c24_103 = arith.constant 24 : index
    %c0_104 = arith.constant 0 : index
    %123 = vector.load %arg12[%c24_103, %c0_104] : memref<304x128xf32, #tpu.memory_space<vmem>>, vector<256x128xf32>
    %124 = arith.truncf %123 : vector<256x128xf32> to vector<256x128xbf16>
    %c1_105 = arith.constant 1 : index
    %c1_106 = arith.constant 1 : index
    %c0_107 = arith.constant 0 : index
    %c0_108 = arith.constant 0 : index
    %125 = vector.load %arg5[%c1_105, %c1_106, %c0_107, %c0_108] : memref<3x3x128x128xbf16, #tpu.memory_space<vmem>>, vector<1x1x128x128xbf16>
    %126 = vector.shape_cast %125 : vector<1x1x128x128xbf16> to vector<128x128xbf16>
    %cst_109 = arith.constant dense<0.000000e+00> : vector<256x128xf32>
    %127 = tpu.matmul %124, %126, %cst_109 {dimension_numbers = #tpu.dot_dimension_numbers<[1], [0], [0], [1], [0, 0, 1, 1], [], []>} : vector<256x128xbf16>, vector<128x128xbf16>, vector<256x128xf32> -> vector<256x128xf32>
    %128 = arith.addf %122, %127 : vector<256x128xf32>
    %c25_110 = arith.constant 25 : index
    %c0_111 = arith.constant 0 : index
    %129 = vector.load %arg12[%c25_110, %c0_111] : memref<304x128xf32, #tpu.memory_space<vmem>>, vector<256x128xf32>
    %130 = vector.broadcast %3 : vector<256x1xf32> to vector<256x128xf32>
    %131 = arith.mulf %129, %130 : vector<256x128xf32>
    %132 = arith.truncf %131 : vector<256x128xf32> to vector<256x128xbf16>
    %c1_112 = arith.constant 1 : index
    %c2_113 = arith.constant 2 : index
    %c0_114 = arith.constant 0 : index
    %c0_115 = arith.constant 0 : index
    %133 = vector.load %arg5[%c1_112, %c2_113, %c0_114, %c0_115] : memref<3x3x128x128xbf16, #tpu.memory_space<vmem>>, vector<1x1x128x128xbf16>
    %134 = vector.shape_cast %133 : vector<1x1x128x128xbf16> to vector<128x128xbf16>
    %cst_116 = arith.constant dense<0.000000e+00> : vector<256x128xf32>
    %135 = tpu.matmul %132, %134, %cst_116 {dimension_numbers = #tpu.dot_dimension_numbers<[1], [0], [0], [1], [0, 0, 1, 1], [], []>} : vector<256x128xbf16>, vector<128x128xbf16>, vector<256x128xf32> -> vector<256x128xf32>
    %136 = arith.addf %128, %135 : vector<256x128xf32>
    %c39_117 = arith.constant 39 : index
    %c0_118 = arith.constant 0 : index
    %137 = vector.load %arg12[%c39_117, %c0_118] : memref<304x128xf32, #tpu.memory_space<vmem>>, vector<256x128xf32>
    %138 = vector.broadcast %1 : vector<256x1xf32> to vector<256x128xf32>
    %139 = arith.mulf %137, %138 : vector<256x128xf32>
    %140 = arith.truncf %139 : vector<256x128xf32> to vector<256x128xbf16>
    %c2_119 = arith.constant 2 : index
    %c0_120 = arith.constant 0 : index
    %c0_121 = arith.constant 0 : index
    %c0_122 = arith.constant 0 : index
    %141 = vector.load %arg5[%c2_119, %c0_120, %c0_121, %c0_122] : memref<3x3x128x128xbf16, #tpu.memory_space<vmem>>, vector<1x1x128x128xbf16>
    %142 = vector.shape_cast %141 : vector<1x1x128x128xbf16> to vector<128x128xbf16>
    %cst_123 = arith.constant dense<0.000000e+00> : vector<256x128xf32>
    %143 = tpu.matmul %140, %142, %cst_123 {dimension_numbers = #tpu.dot_dimension_numbers<[1], [0], [0], [1], [0, 0, 1, 1], [], []>} : vector<256x128xbf16>, vector<128x128xbf16>, vector<256x128xf32> -> vector<256x128xf32>
    %144 = arith.addf %136, %143 : vector<256x128xf32>
    %c40_124 = arith.constant 40 : index
    %c0_125 = arith.constant 0 : index
    %145 = vector.load %arg12[%c40_124, %c0_125] : memref<304x128xf32, #tpu.memory_space<vmem>>, vector<256x128xf32>
    %146 = arith.truncf %145 : vector<256x128xf32> to vector<256x128xbf16>
    %c2_126 = arith.constant 2 : index
    %c1_127 = arith.constant 1 : index
    %c0_128 = arith.constant 0 : index
    %c0_129 = arith.constant 0 : index
    %147 = vector.load %arg5[%c2_126, %c1_127, %c0_128, %c0_129] : memref<3x3x128x128xbf16, #tpu.memory_space<vmem>>, vector<1x1x128x128xbf16>
    %148 = vector.shape_cast %147 : vector<1x1x128x128xbf16> to vector<128x128xbf16>
    %cst_130 = arith.constant dense<0.000000e+00> : vector<256x128xf32>
    %149 = tpu.matmul %146, %148, %cst_130 {dimension_numbers = #tpu.dot_dimension_numbers<[1], [0], [0], [1], [0, 0, 1, 1], [], []>} : vector<256x128xbf16>, vector<128x128xbf16>, vector<256x128xf32> -> vector<256x128xf32>
    %150 = arith.addf %144, %149 : vector<256x128xf32>
    %c41_131 = arith.constant 41 : index
    %c0_132 = arith.constant 0 : index
    %151 = vector.load %arg12[%c41_131, %c0_132] : memref<304x128xf32, #tpu.memory_space<vmem>>, vector<256x128xf32>
    %152 = vector.broadcast %3 : vector<256x1xf32> to vector<256x128xf32>
    %153 = arith.mulf %151, %152 : vector<256x128xf32>
    %154 = arith.truncf %153 : vector<256x128xf32> to vector<256x128xbf16>
    %c2_133 = arith.constant 2 : index
    %c2_134 = arith.constant 2 : index
    %c0_135 = arith.constant 0 : index
    %c0_136 = arith.constant 0 : index
    %155 = vector.load %arg5[%c2_133, %c2_134, %c0_135, %c0_136] : memref<3x3x128x128xbf16, #tpu.memory_space<vmem>>, vector<1x1x128x128xbf16>
    %156 = vector.shape_cast %155 : vector<1x1x128x128xbf16> to vector<128x128xbf16>
    %cst_137 = arith.constant dense<0.000000e+00> : vector<256x128xf32>
    %157 = tpu.matmul %154, %156, %cst_137 {dimension_numbers = #tpu.dot_dimension_numbers<[1], [0], [0], [1], [0, 0, 1, 1], [], []>} : vector<256x128xbf16>, vector<128x128xbf16>, vector<256x128xf32> -> vector<256x128xf32>
    %158 = arith.addf %150, %157 : vector<256x128xf32>
    %cst_138 = arith.constant 0.000000e+00 : f32
    %159 = vector.broadcast %cst_138 : f32 to vector<256x128xf32>
    %160 = arith.maximumf %158, %159 : vector<256x128xf32>
    %cst_139 = arith.constant 0.000000e+00 : f32
    %161 = vector.broadcast %cst_139 : f32 to vector<304x128xf32>
    %c0_140 = arith.constant 0 : index
    %c0_141 = arith.constant 0 : index
    %162 = vector.load %arg13[%c0_140, %c0_141] : memref<304x128xf32, #tpu.memory_space<vmem>>, vector<304x128xf32>
    tpu.vector_store %arg13[%c0_140, %c0_141], %161 {strides = array<i32>} : memref<304x128xf32, #tpu.memory_space<vmem>>, vector<304x128xf32>,
    %c24_142 = arith.constant 24 : index
    %c0_143 = arith.constant 0 : index
    %163 = vector.load %arg13[%c24_142, %c0_143] : memref<304x128xf32, #tpu.memory_space<vmem>>, vector<256x128xf32>
    tpu.vector_store %arg13[%c24_142, %c0_143], %160 {strides = array<i32>} : memref<304x128xf32, #tpu.memory_space<vmem>>, vector<256x128xf32>,
    %c0_144 = arith.constant 0 : index
    %c0_145 = arith.constant 0 : index
    %164 = vector.load %arg8[%c0_144, %c0_145] : memref<1x128xf32, #tpu.memory_space<vmem>>, vector<1x128xf32>
    %165 = vector.shape_cast %164 : vector<1x128xf32> to vector<1x128xf32>
    %166 = vector.broadcast %165 : vector<1x128xf32> to vector<256x128xf32>
    %c7_146 = arith.constant 7 : index
    %c0_147 = arith.constant 0 : index
    %167 = vector.load %arg13[%c7_146, %c0_147] : memref<304x128xf32, #tpu.memory_space<vmem>>, vector<256x128xf32>
    %168 = vector.broadcast %1 : vector<256x1xf32> to vector<256x128xf32>
    %169 = arith.mulf %167, %168 : vector<256x128xf32>
    %170 = arith.truncf %169 : vector<256x128xf32> to vector<256x128xbf16>
    %c0_148 = arith.constant 0 : index
    %c0_149 = arith.constant 0 : index
    %c0_150 = arith.constant 0 : index
    %c0_151 = arith.constant 0 : index
    %171 = vector.load %arg7[%c0_148, %c0_149, %c0_150, %c0_151] : memref<3x3x128x128xbf16, #tpu.memory_space<vmem>>, vector<1x1x128x128xbf16>
    %172 = vector.shape_cast %171 : vector<1x1x128x128xbf16> to vector<128x128xbf16>
    %cst_152 = arith.constant dense<0.000000e+00> : vector<256x128xf32>
    %173 = tpu.matmul %170, %172, %cst_152 {dimension_numbers = #tpu.dot_dimension_numbers<[1], [0], [0], [1], [0, 0, 1, 1], [], []>} : vector<256x128xbf16>, vector<128x128xbf16>, vector<256x128xf32> -> vector<256x128xf32>
    %174 = arith.addf %166, %173 : vector<256x128xf32>
    %c8_153 = arith.constant 8 : index
    %c0_154 = arith.constant 0 : index
    %175 = vector.load %arg13[%c8_153, %c0_154] : memref<304x128xf32, #tpu.memory_space<vmem>>, vector<256x128xf32>
    %176 = arith.truncf %175 : vector<256x128xf32> to vector<256x128xbf16>
    %c0_155 = arith.constant 0 : index
    %c1_156 = arith.constant 1 : index
    %c0_157 = arith.constant 0 : index
    %c0_158 = arith.constant 0 : index
    %177 = vector.load %arg7[%c0_155, %c1_156, %c0_157, %c0_158] : memref<3x3x128x128xbf16, #tpu.memory_space<vmem>>, vector<1x1x128x128xbf16>
    %178 = vector.shape_cast %177 : vector<1x1x128x128xbf16> to vector<128x128xbf16>
    %cst_159 = arith.constant dense<0.000000e+00> : vector<256x128xf32>
    %179 = tpu.matmul %176, %178, %cst_159 {dimension_numbers = #tpu.dot_dimension_numbers<[1], [0], [0], [1], [0, 0, 1, 1], [], []>} : vector<256x128xbf16>, vector<128x128xbf16>, vector<256x128xf32> -> vector<256x128xf32>
    %180 = arith.addf %174, %179 : vector<256x128xf32>
    %c9_160 = arith.constant 9 : index
    %c0_161 = arith.constant 0 : index
    %181 = vector.load %arg13[%c9_160, %c0_161] : memref<304x128xf32, #tpu.memory_space<vmem>>, vector<256x128xf32>
    %182 = vector.broadcast %3 : vector<256x1xf32> to vector<256x128xf32>
    %183 = arith.mulf %181, %182 : vector<256x128xf32>
    %184 = arith.truncf %183 : vector<256x128xf32> to vector<256x128xbf16>
    %c0_162 = arith.constant 0 : index
    %c2_163 = arith.constant 2 : index
    %c0_164 = arith.constant 0 : index
    %c0_165 = arith.constant 0 : index
    %185 = vector.load %arg7[%c0_162, %c2_163, %c0_164, %c0_165] : memref<3x3x128x128xbf16, #tpu.memory_space<vmem>>, vector<1x1x128x128xbf16>
    %186 = vector.shape_cast %185 : vector<1x1x128x128xbf16> to vector<128x128xbf16>
    %cst_166 = arith.constant dense<0.000000e+00> : vector<256x128xf32>
    %187 = tpu.matmul %184, %186, %cst_166 {dimension_numbers = #tpu.dot_dimension_numbers<[1], [0], [0], [1], [0, 0, 1, 1], [], []>} : vector<256x128xbf16>, vector<128x128xbf16>, vector<256x128xf32> -> vector<256x128xf32>
    %188 = arith.addf %180, %187 : vector<256x128xf32>
    %c23_167 = arith.constant 23 : index
    %c0_168 = arith.constant 0 : index
    %189 = vector.load %arg13[%c23_167, %c0_168] : memref<304x128xf32, #tpu.memory_space<vmem>>, vector<256x128xf32>
    %190 = vector.broadcast %1 : vector<256x1xf32> to vector<256x128xf32>
    %191 = arith.mulf %189, %190 : vector<256x128xf32>
    %192 = arith.truncf %191 : vector<256x128xf32> to vector<256x128xbf16>
    %c1_169 = arith.constant 1 : index
    %c0_170 = arith.constant 0 : index
    %c0_171 = arith.constant 0 : index
    %c0_172 = arith.constant 0 : index
    %193 = vector.load %arg7[%c1_169, %c0_170, %c0_171, %c0_172] : memref<3x3x128x128xbf16, #tpu.memory_space<vmem>>, vector<1x1x128x128xbf16>
    %194 = vector.shape_cast %193 : vector<1x1x128x128xbf16> to vector<128x128xbf16>
    %cst_173 = arith.constant dense<0.000000e+00> : vector<256x128xf32>
    %195 = tpu.matmul %192, %194, %cst_173 {dimension_numbers = #tpu.dot_dimension_numbers<[1], [0], [0], [1], [0, 0, 1, 1], [], []>} : vector<256x128xbf16>, vector<128x128xbf16>, vector<256x128xf32> -> vector<256x128xf32>
    %196 = arith.addf %188, %195 : vector<256x128xf32>
    %c24_174 = arith.constant 24 : index
    %c0_175 = arith.constant 0 : index
    %197 = vector.load %arg13[%c24_174, %c0_175] : memref<304x128xf32, #tpu.memory_space<vmem>>, vector<256x128xf32>
    %198 = arith.truncf %197 : vector<256x128xf32> to vector<256x128xbf16>
    %c1_176 = arith.constant 1 : index
    %c1_177 = arith.constant 1 : index
    %c0_178 = arith.constant 0 : index
    %c0_179 = arith.constant 0 : index
    %199 = vector.load %arg7[%c1_176, %c1_177, %c0_178, %c0_179] : memref<3x3x128x128xbf16, #tpu.memory_space<vmem>>, vector<1x1x128x128xbf16>
    %200 = vector.shape_cast %199 : vector<1x1x128x128xbf16> to vector<128x128xbf16>
    %cst_180 = arith.constant dense<0.000000e+00> : vector<256x128xf32>
    %201 = tpu.matmul %198, %200, %cst_180 {dimension_numbers = #tpu.dot_dimension_numbers<[1], [0], [0], [1], [0, 0, 1, 1], [], []>} : vector<256x128xbf16>, vector<128x128xbf16>, vector<256x128xf32> -> vector<256x128xf32>
    %202 = arith.addf %196, %201 : vector<256x128xf32>
    %c25_181 = arith.constant 25 : index
    %c0_182 = arith.constant 0 : index
    %203 = vector.load %arg13[%c25_181, %c0_182] : memref<304x128xf32, #tpu.memory_space<vmem>>, vector<256x128xf32>
    %204 = vector.broadcast %3 : vector<256x1xf32> to vector<256x128xf32>
    %205 = arith.mulf %203, %204 : vector<256x128xf32>
    %206 = arith.truncf %205 : vector<256x128xf32> to vector<256x128xbf16>
    %c1_183 = arith.constant 1 : index
    %c2_184 = arith.constant 2 : index
    %c0_185 = arith.constant 0 : index
    %c0_186 = arith.constant 0 : index
    %207 = vector.load %arg7[%c1_183, %c2_184, %c0_185, %c0_186] : memref<3x3x128x128xbf16, #tpu.memory_space<vmem>>, vector<1x1x128x128xbf16>
    %208 = vector.shape_cast %207 : vector<1x1x128x128xbf16> to vector<128x128xbf16>
    %cst_187 = arith.constant dense<0.000000e+00> : vector<256x128xf32>
    %209 = tpu.matmul %206, %208, %cst_187 {dimension_numbers = #tpu.dot_dimension_numbers<[1], [0], [0], [1], [0, 0, 1, 1], [], []>} : vector<256x128xbf16>, vector<128x128xbf16>, vector<256x128xf32> -> vector<256x128xf32>
    %210 = arith.addf %202, %209 : vector<256x128xf32>
    %c39_188 = arith.constant 39 : index
    %c0_189 = arith.constant 0 : index
    %211 = vector.load %arg13[%c39_188, %c0_189] : memref<304x128xf32, #tpu.memory_space<vmem>>, vector<256x128xf32>
    %212 = vector.broadcast %1 : vector<256x1xf32> to vector<256x128xf32>
    %213 = arith.mulf %211, %212 : vector<256x128xf32>
    %214 = arith.truncf %213 : vector<256x128xf32> to vector<256x128xbf16>
    %c2_190 = arith.constant 2 : index
    %c0_191 = arith.constant 0 : index
    %c0_192 = arith.constant 0 : index
    %c0_193 = arith.constant 0 : index
    %215 = vector.load %arg7[%c2_190, %c0_191, %c0_192, %c0_193] : memref<3x3x128x128xbf16, #tpu.memory_space<vmem>>, vector<1x1x128x128xbf16>
    %216 = vector.shape_cast %215 : vector<1x1x128x128xbf16> to vector<128x128xbf16>
    %cst_194 = arith.constant dense<0.000000e+00> : vector<256x128xf32>
    %217 = tpu.matmul %214, %216, %cst_194 {dimension_numbers = #tpu.dot_dimension_numbers<[1], [0], [0], [1], [0, 0, 1, 1], [], []>} : vector<256x128xbf16>, vector<128x128xbf16>, vector<256x128xf32> -> vector<256x128xf32>
    %218 = arith.addf %210, %217 : vector<256x128xf32>
    %c40_195 = arith.constant 40 : index
    %c0_196 = arith.constant 0 : index
    %219 = vector.load %arg13[%c40_195, %c0_196] : memref<304x128xf32, #tpu.memory_space<vmem>>, vector<256x128xf32>
    %220 = arith.truncf %219 : vector<256x128xf32> to vector<256x128xbf16>
    %c2_197 = arith.constant 2 : index
    %c1_198 = arith.constant 1 : index
    %c0_199 = arith.constant 0 : index
    %c0_200 = arith.constant 0 : index
    %221 = vector.load %arg7[%c2_197, %c1_198, %c0_199, %c0_200] : memref<3x3x128x128xbf16, #tpu.memory_space<vmem>>, vector<1x1x128x128xbf16>
    %222 = vector.shape_cast %221 : vector<1x1x128x128xbf16> to vector<128x128xbf16>
    %cst_201 = arith.constant dense<0.000000e+00> : vector<256x128xf32>
    %223 = tpu.matmul %220, %222, %cst_201 {dimension_numbers = #tpu.dot_dimension_numbers<[1], [0], [0], [1], [0, 0, 1, 1], [], []>} : vector<256x128xbf16>, vector<128x128xbf16>, vector<256x128xf32> -> vector<256x128xf32>
    %224 = arith.addf %218, %223 : vector<256x128xf32>
    %c41_202 = arith.constant 41 : index
    %c0_203 = arith.constant 0 : index
    %225 = vector.load %arg13[%c41_202, %c0_203] : memref<304x128xf32, #tpu.memory_space<vmem>>, vector<256x128xf32>
    %226 = vector.broadcast %3 : vector<256x1xf32> to vector<256x128xf32>
    %227 = arith.mulf %225, %226 : vector<256x128xf32>
    %228 = arith.truncf %227 : vector<256x128xf32> to vector<256x128xbf16>
    %c2_204 = arith.constant 2 : index
    %c2_205 = arith.constant 2 : index
    %c0_206 = arith.constant 0 : index
    %c0_207 = arith.constant 0 : index
    %229 = vector.load %arg7[%c2_204, %c2_205, %c0_206, %c0_207] : memref<3x3x128x128xbf16, #tpu.memory_space<vmem>>, vector<1x1x128x128xbf16>
    %230 = vector.shape_cast %229 : vector<1x1x128x128xbf16> to vector<128x128xbf16>
    %cst_208 = arith.constant dense<0.000000e+00> : vector<256x128xf32>
    %231 = tpu.matmul %228, %230, %cst_208 {dimension_numbers = #tpu.dot_dimension_numbers<[1], [0], [0], [1], [0, 0, 1, 1], [], []>} : vector<256x128xbf16>, vector<128x128xbf16>, vector<256x128xf32> -> vector<256x128xf32>
    %232 = arith.addf %224, %231 : vector<256x128xf32>
    %233 = arith.addf %232, %86 : vector<256x128xf32>
    %cst_209 = arith.constant 0.000000e+00 : f32
    %234 = vector.broadcast %cst_209 : f32 to vector<256x128xf32>
    %235 = arith.maximumf %233, %234 : vector<256x128xf32>
    %cst_210 = arith.constant dense<0.000000e+00> : vector<128xf32>
    %236 = vector.multi_reduction <add>, %235, %cst_210 [0] : vector<256x128xf32> to vector<128xf32>
    %237 = vector.shape_cast %236 : vector<128xf32> to vector<1x128xf32>
    %cst_211 = arith.constant 2.560000e+02 : f32
    %238 = vector.broadcast %cst_211 : f32 to vector<1x128xf32>
    %239 = arith.divf %237, %238 : vector<1x128xf32>
    %c0_212 = arith.constant 0 : index
    %c0_213 = arith.constant 0 : index
    %240 = vector.load %arg9[%c0_212, %c0_213] : memref<128x16xf32, #tpu.memory_space<vmem>>, vector<128x16xf32>
    %cst_214 = arith.constant dense<0.000000e+00> : vector<1x16xf32>
    %241 = tpu.matmul %239, %240, %cst_214 {dimension_numbers = #tpu.dot_dimension_numbers<[1], [0], [0], [1], [0, 0, 1, 1], [], []>} : vector<1x128xf32>, vector<128x16xf32>, vector<1x16xf32> -> vector<1x16xf32>
    %c0_215 = arith.constant 0 : index
    %c0_216 = arith.constant 0 : index
    %242 = vector.load %arg10[%c0_215, %c0_216] : memref<1x16xf32, #tpu.memory_space<vmem>>, vector<1x16xf32>
    %243 = arith.addf %241, %242 : vector<1x16xf32>
    %c0_217 = arith.constant 0 : index
    %c0_218 = arith.constant 0 : index
    %c0_219 = arith.constant 0 : index
    %244 = vector.load %arg11[%c0_217, %c0_218, %c0_219] : memref<1x1x16xf32, #tpu.memory_space<vmem>>, vector<1x1x16xf32>
    %245 = vector.shape_cast %244 : vector<1x1x16xf32> to vector<1x16xf32>
    %246 = vector.shape_cast %243 : vector<1x16xf32> to vector<1x1x16xf32>
    tpu.vector_store %arg11[%c0_217, %c0_218, %c0_219], %246 {strides = array<i32>} : memref<1x1x16xf32, #tpu.memory_space<vmem>>, vector<1x1x16xf32>,
    return
  }
  func.func @transform_0(%arg0: i32) -> (i32, i32, i32) {
    %c0_i32 = arith.constant 0 : i32
    %c0_i32_0 = arith.constant 0 : i32
    %c0_i32_1 = arith.constant 0 : i32
    return %arg0, %c0_i32, %c0_i32_0 : i32, i32, i32
  }
  func.func @transform_1(%arg0: i32) -> (i32, i32, i32) {
    %c0_i32 = arith.constant 0 : i32
    %c0_i32_0 = arith.constant 0 : i32
    %c0_i32_1 = arith.constant 0 : i32
    %c0_i32_2 = arith.constant 0 : i32
    return %c0_i32, %c0_i32_0, %c0_i32_1 : i32, i32, i32
  }
  func.func @transform_2(%arg0: i32) -> (i32, i32, i32, i32) {
    %c0_i32 = arith.constant 0 : i32
    %c0_i32_0 = arith.constant 0 : i32
    %c0_i32_1 = arith.constant 0 : i32
    %c0_i32_2 = arith.constant 0 : i32
    %c0_i32_3 = arith.constant 0 : i32
    return %c0_i32, %c0_i32_0, %c0_i32_1, %c0_i32_2 : i32, i32, i32, i32
  }
  func.func @transform_3(%arg0: i32) -> (i32, i32) {
    %c0_i32 = arith.constant 0 : i32
    %c0_i32_0 = arith.constant 0 : i32
    %c0_i32_1 = arith.constant 0 : i32
    return %c0_i32, %c0_i32_0 : i32, i32
  }
  func.func @transform_4(%arg0: i32) -> (i32, i32, i32, i32) {
    %c0_i32 = arith.constant 0 : i32
    %c0_i32_0 = arith.constant 0 : i32
    %c0_i32_1 = arith.constant 0 : i32
    %c0_i32_2 = arith.constant 0 : i32
    %c0_i32_3 = arith.constant 0 : i32
    return %c0_i32, %c0_i32_0, %c0_i32_1, %c0_i32_2 : i32, i32, i32, i32
  }
  func.func @transform_5(%arg0: i32) -> (i32, i32) {
    %c0_i32 = arith.constant 0 : i32
    %c0_i32_0 = arith.constant 0 : i32
    %c0_i32_1 = arith.constant 0 : i32
    return %c0_i32, %c0_i32_0 : i32, i32
  }
  func.func @transform_6(%arg0: i32) -> (i32, i32, i32, i32) {
    %c0_i32 = arith.constant 0 : i32
    %c0_i32_0 = arith.constant 0 : i32
    %c0_i32_1 = arith.constant 0 : i32
    %c0_i32_2 = arith.constant 0 : i32
    %c0_i32_3 = arith.constant 0 : i32
    return %c0_i32, %c0_i32_0, %c0_i32_1, %c0_i32_2 : i32, i32, i32, i32
  }
  func.func @transform_7(%arg0: i32) -> (i32, i32) {
    %c0_i32 = arith.constant 0 : i32
    %c0_i32_0 = arith.constant 0 : i32
    %c0_i32_1 = arith.constant 0 : i32
    return %c0_i32, %c0_i32_0 : i32, i32
  }
  func.func @transform_8(%arg0: i32) -> (i32, i32) {
    %c0_i32 = arith.constant 0 : i32
    %c0_i32_0 = arith.constant 0 : i32
    %c0_i32_1 = arith.constant 0 : i32
    return %c0_i32, %c0_i32_0 : i32, i32
  }
  func.func @transform_9(%arg0: i32) -> (i32, i32) {
    %c0_i32 = arith.constant 0 : i32
    %c0_i32_0 = arith.constant 0 : i32
    %c0_i32_1 = arith.constant 0 : i32
    return %c0_i32, %c0_i32_0 : i32, i32
  }
  func.func @transform_10(%arg0: i32) -> (i32, i32, i32) {
    %c0_i32 = arith.constant 0 : i32
    %c0_i32_0 = arith.constant 0 : i32
    %c0_i32_1 = arith.constant 0 : i32
    return %arg0, %c0_i32, %c0_i32_0 : i32, i32, i32
  }
}

</mosaic_0001>

<llo_original>
// kernel: rgbf_embedding_forward.1
$region0: #{rgbf_embedding_forward.1}
  #allocation0 [shape = 'u32[]', space=smem, size = 0x4, offset = 0x4, fixed_abs, tag = 'smem constant byte address 0x4 - core index']
  #allocation1 [shape = 'u32[144,128]{1,0:T(1,128)}', space=vmem, size = 0x12000, scoped, tag = 'internal scratch']
  #allocation2 [shape = 'f32[304,128]{1,0:T(8,128)}', space=vmem, size = 0x26000, scoped, tag = 'scratch operand']
  #allocation3 [shape = 'f32[304,128]{1,0:T(8,128)}', space=vmem, size = 0x26000, scoped, tag = 'scratch operand']
  %s0 = inlined_call_operand.vmem [shape: bf16[2,304,8], index: 0, kind: input, shape index: {}]
  %s1 = inlined_call_operand.vmem [shape: f32[2,256,1], index: 1, kind: input, shape index: {}]
  %s2 = inlined_call_operand.vmem [shape: bf16[3,3,8,128], index: 2, kind: input, shape index: {}]
  %s3 = inlined_call_operand.vmem [shape: f32[1,128], index: 3, kind: input, shape index: {}]
  %s4 = inlined_call_operand.vmem [shape: bf16[3,3,128,128], index: 4, kind: input, shape index: {}]
  %s5 = inlined_call_operand.vmem [shape: f32[1,128], index: 5, kind: input, shape index: {}]
  %s6 = inlined_call_operand.vmem [shape: bf16[3,3,128,128], index: 6, kind: input, shape index: {}]
  %s7 = inlined_call_operand.vmem [shape: f32[1,128], index: 7, kind: input, shape index: {}]
  %s8 = inlined_call_operand.vmem [shape: f32[128,16], index: 8, kind: input, shape index: {}]
  %s9 = inlined_call_operand.vmem [shape: f32[1,16], index: 9, kind: input, shape index: {}]
  %s10 = inlined_call_operand.hbm [shape: f32[2,1,16], index: 10, kind: output, shape index: {}]
  %s11 = sld [smem:[#allocation0]]
  $region73: #{rgbf_embedding_forward.1} parent=0
    _
  %s13 = ssub.s32 1, %s11
  %s14 = scalar_select 0, %s13, %s11
  $region1: #{rgbf_embedding_forward.1} parent=0
    #allocation4 [shape = 'u8[1024]{0}', space=vmem, size = 0x400, scoped, tag = 'output window, operand 0']
    #allocation5 [shape = 's32[2]{0}', space=sflag, size = 0x8, scoped, tag = 'scoped memory for rgbf_embedding_forward.1']
    %15 = vsyncpa [#allocation5], 0
    %s16 = scalar_lea.sflag [#allocation5], 1
    %17 = vsyncpa %s16, 0
    loop: start=0, step=1, limit=4
    $region2: #{rgbf_embedding_forward.1} parent=1 // loop_pre_header
      _
    $region3: #{rgbf_embedding_forward.1} parent=1 // loop_header
      %s19 = sphi 0, %s23
      %p20 = scmp.ge.s32.totalorder %s19, 4
      %s29 = sphi 0, %s31
      %s32 = sphi 0, %s29
      %s33 = sphi 0, %s32
      %s49 = sphi 0, %s33
      %s53 = sphi 0, %s53
      %s55 = sphi 0, %s53
      %s56 = sphi 0, %s55
      %s70 = sphi 0, %s56
      %s74 = sphi 0, %s74
      %s76 = sphi 0, %s74
      %s77 = sphi 0, %s76
      %s91 = sphi 0, %s77
      %s95 = sphi 0, %s95
      %s97 = sphi 0, %s95
      %s98 = sphi 0, %s97
      %s112 = sphi 0, %s98
      %s116 = sphi 0, %s116
      %s118 = sphi 0, %s116
      %s119 = sphi 0, %s118
      %s133 = sphi 0, %s119
      %s137 = sphi 0, %s137
      %s139 = sphi 0, %s137
      %s140 = sphi 0, %s139
      %s154 = sphi 0, %s140
      %s158 = sphi 0, %s158
      %s160 = sphi 0, %s158
      %s161 = sphi 0, %s160
      %s175 = sphi 0, %s161
      %s179 = sphi 0, %s179
      %s181 = sphi 0, %s179
      %s182 = sphi 0, %s181
      %s196 = sphi 0, %s182
      %s200 = sphi 0, %s200
      %s202 = sphi 0, %s200
      %s203 = sphi 0, %s202
      %s217 = sphi 0, %s203
      %s221 = sphi 0, %s221
      %s223 = sphi 0, %s221
      %s224 = sphi 0, %s223
      %s238 = sphi 0, %s224
      %s244 = sphi 0, %s246
      %s247 = sphi 0, %s244
      %s248 = sphi 0, %s247
      %s264 = sphi 0, %s248
    $region4: #{rgbf_embedding_forward.1} parent=1 // loop_header_branch
      %22 = sbr.rel (%p20) target = $region8
    $region5: #{rgbf_embedding_forward.1} parent=1 // loop_body
      %s24 = ssub.s32 %s19, 1
      %s25 = ssub.s32 %s19, 2
      %s26 = sadd.s32 %s19, 1
      %s27 = ssub.s32 %s19, %s26
      %p28 = scmp.eq.s32.totalorder %s27, 0
      %s30 = sadd.s32 %s29, 1
      %s31 = scalar_select %p28, %s29, %s30
      %p34 = pneg %p28
      %p35 = scmp.eq.s32.totalorder %s19, 1
      %p36 = por %p34, %p35
      %p37 = scmp.ne.s32.totalorder %s29, %s32
      %p38 = scmp.eq.s32.totalorder %s19, 0
      %p39 = por %p37, %p38
      %p40 = scmp.ne.s32.totalorder %s29, %s32
      %p41 = scmp.eq.s32.totalorder %s24, 1
      %p42 = por %p40, %p41
      %p43 = scmp.ne.s32.totalorder %s32, %s33
      %p44 = scmp.eq.s32.totalorder %s24, 0
      %p45 = por %p43, %p44
      %p46 = scmp.ne.s32.totalorder %s32, %s33
      %p47 = scmp.eq.s32.totalorder %s25, 1
      %p48 = por %p46, %p47
      %p50 = scmp.ne.s32.totalorder %s33, %s49
      %p51 = scmp.eq.s32.totalorder %s25, 0
      %p52 = por %p50, %p51
      %s54 = sadd.s32 %s53, 1
      %p57 = scmp.eq.s32.totalorder %s19, 1
      %p58 = scmp.ne.s32.totalorder %s53, %s55
      %p59 = scmp.eq.s32.totalorder %s19, 0
      %p60 = por %p58, %p59
      %p61 = scmp.ne.s32.totalorder %s53, %s55
      %p62 = scmp.eq.s32.totalorder %s24, 1
      %p63 = por %p61, %p62
      %p64 = scmp.ne.s32.totalorder %s55, %s56
      %p65 = scmp.eq.s32.totalorder %s24, 0
      %p66 = por %p64, %p65
      %p67 = scmp.ne.s32.totalorder %s55, %s56
      %p68 = scmp.eq.s32.totalorder %s25, 1
      %p69 = por %p67, %p68
      %p71 = scmp.ne.s32.totalorder %s56, %s70
      %p72 = scmp.eq.s32.totalorder %s25, 0
      %p73 = por %p71, %p72
      %s75 = sadd.s32 %s74, 1
      %p78 = scmp.eq.s32.totalorder %s19, 1
      %p79 = scmp.ne.s32.totalorder %s74, %s76
      %p80 = scmp.eq.s32.totalorder %s19, 0
      %p81 = por %p79, %p80
      %p82 = scmp.ne.s32.totalorder %s74, %s76
      %p83 = scmp.eq.s32.totalorder %s24, 1
      %p84 = por %p82, %p83
      %p85 = scmp.ne.s32.totalorder %s76, %s77
      %p86 = scmp.eq.s32.totalorder %s24, 0
      %p87 = por %p85, %p86
      %p88 = scmp.ne.s32.totalorder %s76, %s77
      %p89 = scmp.eq.s32.totalorder %s25, 1
      %p90 = por %p88, %p89
      %p92 = scmp.ne.s32.totalorder %s77, %s91
      %p93 = scmp.eq.s32.totalorder %s25, 0
      %p94 = por %p92, %p93
      %s96 = sadd.s32 %s95, 1
      %p99 = scmp.eq.s32.totalorder %s19, 1
      %p100 = scmp.ne.s32.totalorder %s95, %s97
      %p101 = scmp.eq.s32.totalorder %s19, 0
      %p102 = por %p100, %p101
      %p103 = scmp.ne.s32.totalorder %s95, %s97
      %p104 = scmp.eq.s32.totalorder %s24, 1
      %p105 = por %p103, %p104
      %p106 = scmp.ne.s32.totalorder %s97, %s98
      %p107 = scmp.eq.s32.totalorder %s24, 0
      %p108 = por %p106, %p107
      %p109 = scmp.ne.s32.totalorder %s97, %s98
      %p110 = scmp.eq.s32.totalorder %s25, 1
      %p111 = por %p109, %p110
      %p113 = scmp.ne.s32.totalorder %s98, %s112
      %p114 = scmp.eq.s32.totalorder %s25, 0
      %p115 = por %p113, %p114
      %s117 = sadd.s32 %s116, 1
      %p120 = scmp.eq.s32.totalorder %s19, 1
      %p121 = scmp.ne.s32.totalorder %s116, %s118
      %p122 = scmp.eq.s32.totalorder %s19, 0
      %p123 = por %p121, %p122
      %p124 = scmp.ne.s32.totalorder %s116, %s118
      %p125 = scmp.eq.s32.totalorder %s24, 1
      %p126 = por %p124, %p125
      %p127 = scmp.ne.s32.totalorder %s118, %s119
      %p128 = scmp.eq.s32.totalorder %s24, 0
      %p129 = por %p127, %p128
      %p130 = scmp.ne.s32.totalorder %s118, %s119
      %p131 = scmp.eq.s32.totalorder %s25, 1
      %p132 = por %p130, %p131
      %p134 = scmp.ne.s32.totalorder %s119, %s133
      %p135 = scmp.eq.s32.totalorder %s25, 0
      %p136 = por %p134, %p135
      %s138 = sadd.s32 %s137, 1
      %p141 = scmp.eq.s32.totalorder %s19, 1
      %p142 = scmp.ne.s32.totalorder %s137, %s139
      %p143 = scmp.eq.s32.totalorder %s19, 0
      %p144 = por %p142, %p143
      %p145 = scmp.ne.s32.totalorder %s137, %s139
      %p146 = scmp.eq.s32.totalorder %s24, 1
      %p147 = por %p145, %p146
      %p148 = scmp.ne.s32.totalorder %s139, %s140
      %p149 = scmp.eq.s32.totalorder %s24, 0
      %p150 = por %p148, %p149
      %p151 = scmp.ne.s32.totalorder %s139, %s140
      %p152 = scmp.eq.s32.totalorder %s25, 1
      %p153 = por %p151, %p152
      %p155 = scmp.ne.s32.totalorder %s140, %s154
      %p156 = scmp.eq.s32.totalorder %s25, 0
      %p157 = por %p155, %p156
      %s159 = sadd.s32 %s158, 1
      %p162 = scmp.eq.s32.totalorder %s19, 1
      %p163 = scmp.ne.s32.totalorder %s158, %s160
      %p164 = scmp.eq.s32.totalorder %s19, 0
      %p165 = por %p163, %p164
      %p166 = scmp.ne.s32.totalorder %s158, %s160
      %p167 = scmp.eq.s32.totalorder %s24, 1
      %p168 = por %p166, %p167
      %p169 = scmp.ne.s32.totalorder %s160, %s161
      %p170 = scmp.eq.s32.totalorder %s24, 0
      %p171 = por %p169, %p170
      %p172 = scmp.ne.s32.totalorder %s160, %s161
      %p173 = scmp.eq.s32.totalorder %s25, 1
      %p174 = por %p172, %p173
      %p176 = scmp.ne.s32.totalorder %s161, %s175
      %p177 = scmp.eq.s32.totalorder %s25, 0
      %p178 = por %p176, %p177
      %s180 = sadd.s32 %s179, 1
      %p183 = scmp.eq.s32.totalorder %s19, 1
      %p184 = scmp.ne.s32.totalorder %s179, %s181
      %p185 = scmp.eq.s32.totalorder %s19, 0
      %p186 = por %p184, %p185
      %p187 = scmp.ne.s32.totalorder %s179, %s181
      %p188 = scmp.eq.s32.totalorder %s24, 1
      %p189 = por %p187, %p188
      %p190 = scmp.ne.s32.totalorder %s181, %s182
      %p191 = scmp.eq.s32.totalorder %s24, 0
      %p192 = por %p190, %p191
      %p193 = scmp.ne.s32.totalorder %s181, %s182
      %p194 = scmp.eq.s32.totalorder %s25, 1
      %p195 = por %p193, %p194
      %p197 = scmp.ne.s32.totalorder %s182, %s196
      %p198 = scmp.eq.s32.totalorder %s25, 0
      %p199 = por %p197, %p198
      %s201 = sadd.s32 %s200, 1
      %p204 = scmp.eq.s32.totalorder %s19, 1
      %p205 = scmp.ne.s32.totalorder %s200, %s202
      %p206 = scmp.eq.s32.totalorder %s19, 0
      %p207 = por %p205, %p206
      %p208 = scmp.ne.s32.totalorder %s200, %s202
      %p209 = scmp.eq.s32.totalorder %s24, 1
      %p210 = por %p208, %p209
      %p211 = scmp.ne.s32.totalorder %s202, %s203
      %p212 = scmp.eq.s32.totalorder %s24, 0
      %p213 = por %p211, %p212
      %p214 = scmp.ne.s32.totalorder %s202, %s203
      %p215 = scmp.eq.s32.totalorder %s25, 1
      %p216 = por %p214, %p215
      %p218 = scmp.ne.s32.totalorder %s203, %s217
      %p219 = scmp.eq.s32.totalorder %s25, 0
      %p220 = por %p218, %p219
      %s222 = sadd.s32 %s221, 1
      %p225 = scmp.eq.s32.totalorder %s19, 1
      %p226 = scmp.ne.s32.totalorder %s221, %s223
      %p227 = scmp.eq.s32.totalorder %s19, 0
      %p228 = por %p226, %p227
      %p229 = scmp.ne.s32.totalorder %s221, %s223
      %p230 = scmp.eq.s32.totalorder %s24, 1
      %p231 = por %p229, %p230
      %p232 = scmp.ne.s32.totalorder %s223, %s224
      %p233 = scmp.eq.s32.totalorder %s24, 0
      %p234 = por %p232, %p233
      %p235 = scmp.ne.s32.totalorder %s223, %s224
      %p236 = scmp.eq.s32.totalorder %s25, 1
      %p237 = por %p235, %p236
      %p239 = scmp.ne.s32.totalorder %s224, %s238
      %p240 = scmp.eq.s32.totalorder %s25, 0
      %p241 = por %p239, %p240
      %s242 = ssub.s32 %s19, %s26
      %p243 = scmp.eq.s32.totalorder %s242, 0
      %s245 = sadd.s32 %s244, 1
      %s246 = scalar_select %p243, %s244, %s245
      %p249 = pneg %p243
      %p250 = scmp.eq.s32.totalorder %s19, 1
      %p251 = por %p249, %p250
      %p252 = scmp.ne.s32.totalorder %s244, %s247
      %p253 = scmp.eq.s32.totalorder %s19, 0
      %p254 = por %p252, %p253
      %p255 = scmp.ne.s32.totalorder %s244, %s247
      %p256 = scmp.eq.s32.totalorder %s24, 1
      %p257 = por %p255, %p256
      %p258 = scmp.ne.s32.totalorder %s247, %s248
      %p259 = scmp.eq.s32.totalorder %s24, 0
      %p260 = por %p258, %p259
      %p261 = scmp.ne.s32.totalorder %s247, %s248
      %p262 = scmp.eq.s32.totalorder %s25, 1
      %p263 = por %p261, %p262
      %p265 = scmp.ne.s32.totalorder %s248, %s264
      %p266 = scmp.eq.s32.totalorder %s25, 0
      %p267 = por %p265, %p266
      %p268 = scmp.le.s32.totalorder 1, %s19
      %p269 = scmp.lt.s32.totalorder %s19, 3
      %p270 = pnand %p268, %p269
      %p271 = pneg %p270
      // Predicated region
      $region9: #{rgbf_embedding_forward.1} parent=5 // pred_check
        _
      $region10: #{rgbf_embedding_forward.1} parent=5 // pred_check_branch
        %273 = sbr.rel (%p270) target = $region12
      $region11: #{rgbf_embedding_forward.1} parent=5 // pred_region
        %s274 = ssub.s32 %s19, 1
        // Predicated region
        $region13: #{rgbf_embedding_forward.1} parent=11 // pred_check
          %p275 = pneg %p66
        $region14: #{rgbf_embedding_forward.1} parent=11 // pred_check_branch
          %277 = sbr.rel (%p275) target = $region16
        $region15: #{rgbf_embedding_forward.1} parent=11 // pred_region
          _
        $region16: #{rgbf_embedding_forward.1} parent=11 // pred_fallthru
          _
        // Predicated region
        $region17: #{rgbf_embedding_forward.1} parent=11 // pred_check
          %p278 = pneg %p87
        $region18: #{rgbf_embedding_forward.1} parent=11 // pred_check_branch
          %280 = sbr.rel (%p278) target = $region20
        $region19: #{rgbf_embedding_forward.1} parent=11 // pred_region
          _
        $region20: #{rgbf_embedding_forward.1} parent=11 // pred_fallthru
          _
        // Predicated region
        $region21: #{rgbf_embedding_forward.1} parent=11 // pred_check
          %p281 = pneg %p108
        $region22: #{rgbf_embedding_forward.1} parent=11 // pred_check_branch
          %283 = sbr.rel (%p281) target = $region24
        $region23: #{rgbf_embedding_forward.1} parent=11 // pred_region
          _
        $region24: #{rgbf_embedding_forward.1} parent=11 // pred_fallthru
          _
        // Predicated region
        $region25: #{rgbf_embedding_forward.1} parent=11 // pred_check
          %p284 = pneg %p129
        $region26: #{rgbf_embedding_forward.1} parent=11 // pred_check_branch
          %286 = sbr.rel (%p284) target = $region28
        $region27: #{rgbf_embedding_forward.1} parent=11 // pred_region
          _
        $region28: #{rgbf_embedding_forward.1} parent=11 // pred_fallthru
          _
        // Predicated region
        $region29: #{rgbf_embedding_forward.1} parent=11 // pred_check
          %p287 = pneg %p150
        $region30: #{rgbf_embedding_forward.1} parent=11 // pred_check_branch
          %289 = sbr.rel (%p287) target = $region32
        $region31: #{rgbf_embedding_forward.1} parent=11 // pred_region
          _
        $region32: #{rgbf_embedding_forward.1} parent=11 // pred_fallthru
          _
        // Predicated region
        $region33: #{rgbf_embedding_forward.1} parent=11 // pred_check
          %p290 = pneg %p171
        $region34: #{rgbf_embedding_forward.1} parent=11 // pred_check_branch
          %292 = sbr.rel (%p290) target = $region36
        $region35: #{rgbf_embedding_forward.1} parent=11 // pred_region
          _
        $region36: #{rgbf_embedding_forward.1} parent=11 // pred_fallthru
          _
        // Predicated region
        $region37: #{rgbf_embedding_forward.1} parent=11 // pred_check
          %p293 = pneg %p192
        $region38: #{rgbf_embedding_forward.1} parent=11 // pred_check_branch
          %295 = sbr.rel (%p293) target = $region40
        $region39: #{rgbf_embedding_forward.1} parent=11 // pred_region
          _
        $region40: #{rgbf_embedding_forward.1} parent=11 // pred_fallthru
          _
        // Predicated region
        $region41: #{rgbf_embedding_forward.1} parent=11 // pred_check
          %p296 = pneg %p213
        $region42: #{rgbf_embedding_forward.1} parent=11 // pred_check_branch
          %298 = sbr.rel (%p296) target = $region44
        $region43: #{rgbf_embedding_forward.1} parent=11 // pred_region
          _
        $region44: #{rgbf_embedding_forward.1} parent=11 // pred_fallthru
          _
        // Predicated region
        $region45: #{rgbf_embedding_forward.1} parent=11 // pred_check
          %p299 = pneg %p234
        $region46: #{rgbf_embedding_forward.1} parent=11 // pred_check_branch
          %301 = sbr.rel (%p299) target = $region48
        $region47: #{rgbf_embedding_forward.1} parent=11 // pred_region
          _
        $region48: #{rgbf_embedding_forward.1} parent=11 // pred_fallthru
          _
      $region12: #{rgbf_embedding_forward.1} parent=5 // pred_fallthru
        _
      %p302 = scmp.lt.s32.totalorder %s19, 2
      // Predicated region
      $region49: #{rgbf_embedding_forward.1} parent=5 // pred_check
        %p303 = pneg %p302
      $region50: #{rgbf_embedding_forward.1} parent=5 // pred_check_branch
        %305 = sbr.rel (%p303) target = $region52
      $region51: #{rgbf_embedding_forward.1} parent=5 // pred_region
        // Predicated region
        $region53: #{rgbf_embedding_forward.1} parent=51 // pred_check
          %p306 = pneg %p39
        $region54: #{rgbf_embedding_forward.1} parent=51 // pred_check_branch
          %308 = sbr.rel (%p306) target = $region56
        $region55: #{rgbf_embedding_forward.1} parent=51 // pred_region
          %p309 = scmp.lt.s32.totalorder %s19, 1
          %s310 = scalar_select %p309, %s19, 1
          %s311 = smul.addr %s310, 38
          %s312 = smul.addr %s311, 4
          %s313 = scalar_lea.vmem %s0, %s312
        $region56: #{rgbf_embedding_forward.1} parent=51 // pred_fallthru
          _
      $region52: #{rgbf_embedding_forward.1} parent=5 // pred_fallthru
        _
      %p314 = scmp.le.s32.totalorder 1, %s19
      %p315 = scmp.lt.s32.totalorder %s19, 3
      %p316 = pnand %p314, %p315
      %p317 = pneg %p316
      // Predicated region
      $region57: #{rgbf_embedding_forward.1} parent=5 // pred_check
        _
      $region58: #{rgbf_embedding_forward.1} parent=5 // pred_check_branch
        %319 = sbr.rel (%p316) target = $region60
      $region59: #{rgbf_embedding_forward.1} parent=5 // pred_region
        %s320 = ssub.s32 %s19, 1
        %p321 = scmp.lt.s32.totalorder %s24, 1
        %s322 = scalar_select %p321, %s24, 1
        %s323 = smul.addr %s322, 38
        %s324 = smul.addr %s323, 4
        %s325 = scalar_lea.vmem %s0, %s324
        %p326 = pneg %p45
        %p327 = pneg %p42
        %p328 = pneg %p66
        %p329 = pneg %p63
        %p330 = pneg %p87
        %p331 = pneg %p84
        %p332 = pneg %p108
        %p333 = pneg %p105
        %p334 = pneg %p129
        %p335 = pneg %p126
        %p336 = pneg %p150
        %p337 = pneg %p147
        %p338 = pneg %p171
        %p339 = pneg %p168
        %p340 = pneg %p192
        %p341 = pneg %p189
        %p342 = pneg %p213
        %p343 = pneg %p210
        %p344 = pneg %p234
        %p345 = pneg %p231
        %p346 = pneg %p260
        %p347 = pneg %p257
        %s348 = sand.u32 %s247, 1
        %s349 = scalar_lea.sflag [#allocation5], %s348
        %s350 = sand.u32 %s247, 1
        %s351 = scalar_lea.vmem [#allocation4], %s350
        %p352 = scmp.lt.s32.totalorder %s24, 1
        %s353 = scalar_select %p352, %s24, 1
        %s354 = smul.addr %s353, 38
        %s355 = smul.addr %s354, 4
        %s356 = scalar_lea.vmem %s0, %s355
        %v358 = vld [vmem:[%s1] sm:$0xff]
        %v359 = vld [vmem:[%s1 + $0x8] sm:$0xff]
        %v360 = vld [vmem:[%s1 + $0x10] sm:$0xff]
        %v361 = vld [vmem:[%s1 + $0x18] sm:$0xff]
        %v362 = vld [vmem:[%s1 + $0x20] sm:$0xff]
        %v363 = vld [vmem:[%s1 + $0x28] sm:$0xff]
        %v364 = vld [vmem:[%s1 + $0x30] sm:$0xff]
        %v365 = vld [vmem:[%s1 + $0x38] sm:$0xff]
        %v366 = vld [vmem:[%s1 + $0x40] sm:$0xff]
        %v367 = vld [vmem:[%s1 + $0x48] sm:$0xff]
        %v368 = vld [vmem:[%s1 + $0x50] sm:$0xff]
        %v369 = vld [vmem:[%s1 + $0x58] sm:$0xff]
        %v370 = vld [vmem:[%s1 + $0x60] sm:$0xff]
        %v371 = vld [vmem:[%s1 + $0x68] sm:$0xff]
        %v372 = vld [vmem:[%s1 + $0x70] sm:$0xff]
        %v373 = vld [vmem:[%s1 + $0x78] sm:$0xff]
        %v374 = vld [vmem:[%s1 + $0x80] sm:$0xff]
        %v375 = vld [vmem:[%s1 + $0x88] sm:$0xff]
        %v376 = vld [vmem:[%s1 + $0x90] sm:$0xff]
        %v377 = vld [vmem:[%s1 + $0x98] sm:$0xff]
        %v378 = vld [vmem:[%s1 + $0xa0] sm:$0xff]
        %v379 = vld [vmem:[%s1 + $0xa8] sm:$0xff]
        %v380 = vld [vmem:[%s1 + $0xb0] sm:$0xff]
        %v381 = vld [vmem:[%s1 + $0xb8] sm:$0xff]
        %v382 = vld [vmem:[%s1 + $0xc0] sm:$0xff]
        %v383 = vld [vmem:[%s1 + $0xc8] sm:$0xff]
        %v384 = vld [vmem:[%s1 + $0xd0] sm:$0xff]
        %v385 = vld [vmem:[%s1 + $0xd8] sm:$0xff]
        %v386 = vld [vmem:[%s1 + $0xe0] sm:$0xff]
        %v387 = vld [vmem:[%s1 + $0xe8] sm:$0xff]
        %v388 = vld [vmem:[%s1 + $0xf0] sm:$0xff]
        %v389 = vld [vmem:[%s1 + $0xf8] sm:$0xff]
        %s390 = scalar_lea.vmem %s1, 256
        %v391 = vld [vmem:[%s390] sm:$0xff]
        %v392 = vld [vmem:[%s390 + $0x8] sm:$0xff]
        %v393 = vld [vmem:[%s390 + $0x10] sm:$0xff]
        %v394 = vld [vmem:[%s390 + $0x18] sm:$0xff]
        %v395 = vld [vmem:[%s390 + $0x20] sm:$0xff]
        %v396 = vld [vmem:[%s390 + $0x28] sm:$0xff]
        %v397 = vld [vmem:[%s390 + $0x30] sm:$0xff]
        %v398 = vld [vmem:[%s390 + $0x38] sm:$0xff]
        %v399 = vld [vmem:[%s390 + $0x40] sm:$0xff]
        %v400 = vld [vmem:[%s390 + $0x48] sm:$0xff]
        %v401 = vld [vmem:[%s390 + $0x50] sm:$0xff]
        %v402 = vld [vmem:[%s390 + $0x58] sm:$0xff]
        %v403 = vld [vmem:[%s390 + $0x60] sm:$0xff]
        %v404 = vld [vmem:[%s390 + $0x68] sm:$0xff]
        %v405 = vld [vmem:[%s390 + $0x70] sm:$0xff]
        %v406 = vld [vmem:[%s390 + $0x78] sm:$0xff]
        %v407 = vld [vmem:[%s390 + $0x80] sm:$0xff]
        %v408 = vld [vmem:[%s390 + $0x88] sm:$0xff]
        %v409 = vld [vmem:[%s390 + $0x90] sm:$0xff]
        %v410 = vld [vmem:[%s390 + $0x98] sm:$0xff]
        %v411 = vld [vmem:[%s390 + $0xa0] sm:$0xff]
        %v412 = vld [vmem:[%s390 + $0xa8] sm:$0xff]
        %v413 = vld [vmem:[%s390 + $0xb0] sm:$0xff]
        %v414 = vld [vmem:[%s390 + $0xb8] sm:$0xff]
        %v415 = vld [vmem:[%s390 + $0xc0] sm:$0xff]
        %v416 = vld [vmem:[%s390 + $0xc8] sm:$0xff]
        %v417 = vld [vmem:[%s390 + $0xd0] sm:$0xff]
        %v418 = vld [vmem:[%s390 + $0xd8] sm:$0xff]
        %v419 = vld [vmem:[%s390 + $0xe0] sm:$0xff]
        %v420 = vld [vmem:[%s390 + $0xe8] sm:$0xff]
        %v421 = vld [vmem:[%s390 + $0xf0] sm:$0xff]
        %v422 = vld [vmem:[%s390 + $0xf8] sm:$0xff]
        %v423 = vld [vmem:[%s3] sm:$0x1]
        %v425 = vlaneseq
        %v426 = vshrl.u32 %v425, 7
        %v427 = vsub.s32 0, %v426
        %v428 = vrot.slane %v423, %v427
        %v430 = vld [vmem:[%s356] sm:$0x8]
        %v431 = vld [vmem:[%s356 + $0x4] sm:$0xf]
        %v432 = vld [vmem:[%s356 + $0x8] sm:$0xf]
        %v433 = vld [vmem:[%s356 + $0xc] sm:$0xf]
        %v434 = vld [vmem:[%s356 + $0x10] sm:$0xf]
        %v435 = vld [vmem:[%s356 + $0x14] sm:$0xf]
        %v436 = vld [vmem:[%s356 + $0x18] sm:$0xf]
        %v437 = vld [vmem:[%s356 + $0x1c] sm:$0xf]
        %v438 = vld [vmem:[%s356 + $0x20] sm:$0xf]
        %v439 = vld [vmem:[%s356 + $0x24] sm:$0xf]
        %v440 = vld [vmem:[%s356 + $0x28] sm:$0xf]
        %v441 = vld [vmem:[%s356 + $0x2c] sm:$0xf]
        %v442 = vld [vmem:[%s356 + $0x30] sm:$0xf]
        %v443 = vld [vmem:[%s356 + $0x34] sm:$0xf]
        %v444 = vld [vmem:[%s356 + $0x38] sm:$0xf]
        %v445 = vld [vmem:[%s356 + $0x3c] sm:$0xf]
        %v446 = vld [vmem:[%s356 + $0x40] sm:$0xf]
        %v447 = vld [vmem:[%s356 + $0x44] sm:$0xf]
        %v448 = vld [vmem:[%s356 + $0x48] sm:$0xf]
        %v449 = vld [vmem:[%s356 + $0x4c] sm:$0xf]
        %v450 = vld [vmem:[%s356 + $0x50] sm:$0xf]
        %v451 = vld [vmem:[%s356 + $0x54] sm:$0xf]
        %v452 = vld [vmem:[%s356 + $0x58] sm:$0xf]
        %v453 = vld [vmem:[%s356 + $0x5c] sm:$0xf]
        %v454 = vld [vmem:[%s356 + $0x60] sm:$0xf]
        %v455 = vld [vmem:[%s356 + $0x64] sm:$0xf]
        %v456 = vld [vmem:[%s356 + $0x68] sm:$0xf]
        %v457 = vld [vmem:[%s356 + $0x6c] sm:$0xf]
        %v458 = vld [vmem:[%s356 + $0x70] sm:$0xf]
        %v459 = vld [vmem:[%s356 + $0x74] sm:$0xf]
        %v460 = vld [vmem:[%s356 + $0x78] sm:$0xf]
        %v461 = vld [vmem:[%s356 + $0x7c] sm:$0xf]
        %v462 = vld [vmem:[%s356 + $0x80] sm:$0xf]
        %v463 = vunpack.c.l.bf16 %v430
        %v464 = vunpack.c.l.bf16 %v431
        %v465 = vunpack.c.l.bf16 %v432
        %v466 = vunpack.c.l.bf16 %v433
        %v467 = vunpack.c.l.bf16 %v434
        %v468 = vunpack.c.l.bf16 %v435
        %v469 = vunpack.c.l.bf16 %v436
        %v470 = vunpack.c.l.bf16 %v437
        %v471 = vunpack.c.l.bf16 %v438
        %v472 = vunpack.c.l.bf16 %v439
        %v473 = vunpack.c.l.bf16 %v440
        %v474 = vunpack.c.l.bf16 %v441
        %v475 = vunpack.c.l.bf16 %v442
        %v476 = vunpack.c.l.bf16 %v443
        %v477 = vunpack.c.l.bf16 %v444
        %v478 = vunpack.c.l.bf16 %v445
        %v479 = vunpack.c.l.bf16 %v446
        %v480 = vunpack.c.l.bf16 %v447
        %v481 = vunpack.c.l.bf16 %v448
        %v482 = vunpack.c.l.bf16 %v449
        %v483 = vunpack.c.l.bf16 %v450
        %v484 = vunpack.c.l.bf16 %v451
        %v485 = vunpack.c.l.bf16 %v452
        %v486 = vunpack.c.l.bf16 %v453
        %v487 = vunpack.c.l.bf16 %v454
        %v488 = vunpack.c.l.bf16 %v455
        %v489 = vunpack.c.l.bf16 %v456
        %v490 = vunpack.c.l.bf16 %v457
        %v491 = vunpack.c.l.bf16 %v458
        %v492 = vunpack.c.l.bf16 %v459
        %v493 = vunpack.c.l.bf16 %v460
        %v494 = vunpack.c.l.bf16 %v461
        %v495 = vunpack.c.l.bf16 %v462
        %497 = vset.pattern.permute.xlu0 0
        %498 = vperm.xlu0 %497, %v358
        %v499 = vpop.permute.xlu0 %498
        %501 = vset.pattern.permute.xlu0 0
        %502 = vperm.xlu0 %501, %v359
        %v503 = vpop.permute.xlu0 %502
        %505 = vset.pattern.permute.xlu0 0
        %506 = vperm.xlu0 %505, %v360
        %v507 = vpop.permute.xlu0 %506
        %509 = vset.pattern.permute.xlu0 0
        %510 = vperm.xlu0 %509, %v361
        %v511 = vpop.permute.xlu0 %510
        %513 = vset.pattern.permute.xlu0 0
        %514 = vperm.xlu0 %513, %v362
        %v515 = vpop.permute.xlu0 %514
        %517 = vset.pattern.permute.xlu0 0
        %518 = vperm.xlu0 %517, %v363
        %v519 = vpop.permute.xlu0 %518
        %521 = vset.pattern.permute.xlu0 0
        %522 = vperm.xlu0 %521, %v364
        %v523 = vpop.permute.xlu0 %522
        %525 = vset.pattern.permute.xlu0 0
        %526 = vperm.xlu0 %525, %v365
        %v527 = vpop.permute.xlu0 %526
        %529 = vset.pattern.permute.xlu0 0
        %530 = vperm.xlu0 %529, %v366
        %v531 = vpop.permute.xlu0 %530
        %533 = vset.pattern.permute.xlu0 0
        %534 = vperm.xlu0 %533, %v367
        %v535 = vpop.permute.xlu0 %534
        %537 = vset.pattern.permute.xlu0 0
        %538 = vperm.xlu0 %537, %v368
        %v539 = vpop.permute.xlu0 %538
        %541 = vset.pattern.permute.xlu0 0
        %542 = vperm.xlu0 %541, %v369
        %v543 = vpop.permute.xlu0 %542
        %545 = vset.pattern.permute.xlu0 0
        %546 = vperm.xlu0 %545, %v370
        %v547 = vpop.permute.xlu0 %546
        %549 = vset.pattern.permute.xlu0 0
        %550 = vperm.xlu0 %549, %v371
        %v551 = vpop.permute.xlu0 %550
        %553 = vset.pattern.permute.xlu0 0
        %554 = vperm.xlu0 %553, %v372
        %v555 = vpop.permute.xlu0 %554
        %557 = vset.pattern.permute.xlu0 0
        %558 = vperm.xlu0 %557, %v373
        %v559 = vpop.permute.xlu0 %558
        %561 = vset.pattern.permute.xlu0 0
        %562 = vperm.xlu0 %561, %v374
        %v563 = vpop.permute.xlu0 %562
        %565 = vset.pattern.permute.xlu0 0
        %566 = vperm.xlu0 %565, %v375
        %v567 = vpop.permute.xlu0 %566
        %569 = vset.pattern.permute.xlu0 0
        %570 = vperm.xlu0 %569, %v376
        %v571 = vpop.permute.xlu0 %570
        %573 = vset.pattern.permute.xlu0 0
        %574 = vperm.xlu0 %573, %v377
        %v575 = vpop.permute.xlu0 %574
        %577 = vset.pattern.permute.xlu0 0
        %578 = vperm.xlu0 %577, %v378
        %v579 = vpop.permute.xlu0 %578
        %581 = vset.pattern.permute.xlu0 0
        %582 = vperm.xlu0 %581, %v379
        %v583 = vpop.permute.xlu0 %582
        %585 = vset.pattern.permute.xlu0 0
        %586 = vperm.xlu0 %585, %v380
        %v587 = vpop.permute.xlu0 %586
        %589 = vset.pattern.permute.xlu0 0
        %590 = vperm.xlu0 %589, %v381
        %v591 = vpop.permute.xlu0 %590
        %593 = vset.pattern.permute.xlu0 0
        %594 = vperm.xlu0 %593, %v382
        %v595 = vpop.permute.xlu0 %594
        %597 = vset.pattern.permute.xlu0 0
        %598 = vperm.xlu0 %597, %v383
        %v599 = vpop.permute.xlu0 %598
        %601 = vset.pattern.permute.xlu0 0
        %602 = vperm.xlu0 %601, %v384
        %v603 = vpop.permute.xlu0 %602
        %605 = vset.pattern.permute.xlu0 0
        %606 = vperm.xlu0 %605, %v385
        %v607 = vpop.permute.xlu0 %606
        %609 = vset.pattern.permute.xlu0 0
        %610 = vperm.xlu0 %609, %v386
        %v611 = vpop.permute.xlu0 %610
        %613 = vset.pattern.permute.xlu0 0
        %614 = vperm.xlu0 %613, %v387
        %v615 = vpop.permute.xlu0 %614
        %617 = vset.pattern.permute.xlu0 0
        %618 = vperm.xlu0 %617, %v388
        %v619 = vpop.permute.xlu0 %618
        %621 = vset.pattern.permute.xlu0 0
        %622 = vperm.xlu0 %621, %v389
        %v623 = vpop.permute.xlu0 %622
        %vm624 = vcmask 1046528
        %v625 = vrot.slane %v499, 1
        %v626 = vrot.slane %v503, 1
        %v627 = vsel %vm624, %v625, %v626
        %v628 = vrot.slane %v507, 1
        %v629 = vsel %vm624, %v626, %v628
        %v630 = vrot.slane %v511, 1
        %v631 = vsel %vm624, %v628, %v630
        %v632 = vrot.slane %v515, 1
        %v633 = vsel %vm624, %v630, %v632
        %v634 = vrot.slane %v519, 1
        %v635 = vsel %vm624, %v632, %v634
        %v636 = vrot.slane %v523, 1
        %v637 = vsel %vm624, %v634, %v636
        %v638 = vrot.slane %v527, 1
        %v639 = vsel %vm624, %v636, %v638
        %v640 = vrot.slane %v531, 1
        %v641 = vsel %vm624, %v638, %v640
        %v642 = vrot.slane %v535, 1
        %v643 = vsel %vm624, %v640, %v642
        %v644 = vrot.slane %v539, 1
        %v645 = vsel %vm624, %v642, %v644
        %v646 = vrot.slane %v543, 1
        %v647 = vsel %vm624, %v644, %v646
        %v648 = vrot.slane %v547, 1
        %v649 = vsel %vm624, %v646, %v648
        %v650 = vrot.slane %v551, 1
        %v651 = vsel %vm624, %v648, %v650
        %v652 = vrot.slane %v555, 1
        %v653 = vsel %vm624, %v650, %v652
        %v654 = vrot.slane %v559, 1
        %v655 = vsel %vm624, %v652, %v654
        %v656 = vrot.slane %v563, 1
        %v657 = vsel %vm624, %v654, %v656
        %v658 = vrot.slane %v567, 1
        %v659 = vsel %vm624, %v656, %v658
        %v660 = vrot.slane %v571, 1
        %v661 = vsel %vm624, %v658, %v660
        %v662 = vrot.slane %v575, 1
        %v663 = vsel %vm624, %v660, %v662
        %v664 = vrot.slane %v579, 1
        %v665 = vsel %vm624, %v662, %v664
        %v666 = vrot.slane %v583, 1
        %v667 = vsel %vm624, %v664, %v666
        %v668 = vrot.slane %v587, 1
        %v669 = vsel %vm624, %v666, %v668
        %v670 = vrot.slane %v591, 1
        %v671 = vsel %vm624, %v668, %v670
        %v672 = vrot.slane %v595, 1
        %v673 = vsel %vm624, %v670, %v672
        %v674 = vrot.slane %v599, 1
        %v675 = vsel %vm624, %v672, %v674
        %v676 = vrot.slane %v603, 1
        %v677 = vsel %vm624, %v674, %v676
        %v678 = vrot.slane %v607, 1
        %v679 = vsel %vm624, %v676, %v678
        %v680 = vrot.slane %v611, 1
        %v681 = vsel %vm624, %v678, %v680
        %v682 = vrot.slane %v615, 1
        %v683 = vsel %vm624, %v680, %v682
        %v684 = vrot.slane %v619, 1
        %v685 = vsel %vm624, %v682, %v684
        %v686 = vrot.slane %v623, 1
        %v687 = vsel %vm624, %v684, %v686
        %v721 = vmul.f32 %v463, %v625
        %v722 = vmul.f32 %v464, %v627
        %v723 = vmul.f32 %v465, %v629
        %v724 = vmul.f32 %v466, %v631
        %v725 = vmul.f32 %v467, %v633
        %v726 = vmul.f32 %v468, %v635
        %v727 = vmul.f32 %v469, %v637
        %v728 = vmul.f32 %v470, %v639
        %v729 = vmul.f32 %v471, %v641
        %v730 = vmul.f32 %v472, %v643
        %v731 = vmul.f32 %v473, %v645
        %v732 = vmul.f32 %v474, %v647
        %v733 = vmul.f32 %v475, %v649
        %v734 = vmul.f32 %v476, %v651
        %v735 = vmul.f32 %v477, %v653
        %v736 = vmul.f32 %v478, %v655
        %v737 = vmul.f32 %v479, %v657
        %v738 = vmul.f32 %v480, %v659
        %v739 = vmul.f32 %v481, %v661
        %v740 = vmul.f32 %v482, %v663
        %v741 = vmul.f32 %v483, %v665
        %v742 = vmul.f32 %v484, %v667
        %v743 = vmul.f32 %v485, %v669
        %v744 = vmul.f32 %v486, %v671
        %v745 = vmul.f32 %v487, %v673
        %v746 = vmul.f32 %v488, %v675
        %v747 = vmul.f32 %v489, %v677
        %v748 = vmul.f32 %v490, %v679
        %v749 = vmul.f32 %v491, %v681
        %v750 = vmul.f32 %v492, %v683
        %v751 = vmul.f32 %v493, %v685
        %v752 = vmul.f32 %v494, %v687
        %v753 = vmul.f32 %v495, %v686
        %v754 = vpack.c.bf16 %v722, %v721
        %v755 = vpack.c.bf16 %v724, %v723
        %v756 = vpack.c.bf16 %v726, %v725
        %v757 = vpack.c.bf16 %v728, %v727
        %v758 = vpack.c.bf16 %v730, %v729
        %v759 = vpack.c.bf16 %v732, %v731
        %v760 = vpack.c.bf16 %v734, %v733
        %v761 = vpack.c.bf16 %v736, %v735
        %v762 = vpack.c.bf16 %v738, %v737
        %v763 = vpack.c.bf16 %v740, %v739
        %v764 = vpack.c.bf16 %v742, %v741
        %v765 = vpack.c.bf16 %v744, %v743
        %v766 = vpack.c.bf16 %v746, %v745
        %v767 = vpack.c.bf16 %v748, %v747
        %v768 = vpack.c.bf16 %v750, %v749
        %v769 = vpack.c.bf16 %v752, %v751
        %v770 = vpack.c.bf16 %v753, %v753
        %v771 = vld [vmem:[%s2] sm:$0xf]
        %vm772 = vsmask.f32 4352
        %v774 = vshrl.u32 %v754, 16
        %v776 = vrot.slane %v774, 3
        %v777 = vshll.u32 %v754, 16
        %v779 = vrot.slane %v777, 4
        %v780 = vor.u32 %v776, %v779
        %v782 = vshrl.u32 %v755, 16
        %v784 = vrot.slane %v782, 3
        %v785 = vshll.u32 %v755, 16
        %v787 = vrot.slane %v785, 4
        %v788 = vor.u32 %v784, %v787
        %v789 = vsel %vm772, %v780, %v788
        %v791 = vshrl.u32 %v756, 16
        %v793 = vrot.slane %v791, 3
        %v794 = vshll.u32 %v756, 16
        %v796 = vrot.slane %v794, 4
        %v797 = vor.u32 %v793, %v796
        %v798 = vsel %vm772, %v788, %v797
        %v800 = vshrl.u32 %v757, 16
        %v802 = vrot.slane %v800, 3
        %v803 = vshll.u32 %v757, 16
        %v805 = vrot.slane %v803, 4
        %v806 = vor.u32 %v802, %v805
        %v807 = vsel %vm772, %v797, %v806
        %v809 = vshrl.u32 %v758, 16
        %v811 = vrot.slane %v809, 3
        %v812 = vshll.u32 %v758, 16
        %v814 = vrot.slane %v812, 4
        %v815 = vor.u32 %v811, %v814
        %v816 = vsel %vm772, %v806, %v815
        %v818 = vshrl.u32 %v759, 16
        %v820 = vrot.slane %v818, 3
        %v821 = vshll.u32 %v759, 16
        %v823 = vrot.slane %v821, 4
        %v824 = vor.u32 %v820, %v823
        %v825 = vsel %vm772, %v815, %v824
        %v827 = vshrl.u32 %v760, 16
        %v829 = vrot.slane %v827, 3
        %v830 = vshll.u32 %v760, 16
        %v832 = vrot.slane %v830, 4
        %v833 = vor.u32 %v829, %v832
        %v834 = vsel %vm772, %v824, %v833
        %v836 = vshrl.u32 %v761, 16
        %v838 = vrot.slane %v836, 3
        %v839 = vshll.u32 %v761, 16
        %v841 = vrot.slane %v839, 4
        %v842 = vor.u32 %v838, %v841
        %v843 = vsel %vm772, %v833, %v842
        %v845 = vshrl.u32 %v762, 16
        %v847 = vrot.slane %v845, 3
        %v848 = vshll.u32 %v762, 16
        %v850 = vrot.slane %v848, 4
        %v851 = vor.u32 %v847, %v850
        %v852 = vsel %vm772, %v842, %v851
        %v854 = vshrl.u32 %v763, 16
        %v856 = vrot.slane %v854, 3
        %v857 = vshll.u32 %v763, 16
        %v859 = vrot.slane %v857, 4
        %v860 = vor.u32 %v856, %v859
        %v861 = vsel %vm772, %v851, %v860
        %v863 = vshrl.u32 %v764, 16
        %v865 = vrot.slane %v863, 3
        %v866 = vshll.u32 %v764, 16
        %v868 = vrot.slane %v866, 4
        %v869 = vor.u32 %v865, %v868
        %v870 = vsel %vm772, %v860, %v869
        %v872 = vshrl.u32 %v765, 16
        %v874 = vrot.slane %v872, 3
        %v875 = vshll.u32 %v765, 16
        %v877 = vrot.slane %v875, 4
        %v878 = vor.u32 %v874, %v877
        %v879 = vsel %vm772, %v869, %v878
        %v881 = vshrl.u32 %v766, 16
        %v883 = vrot.slane %v881, 3
        %v884 = vshll.u32 %v766, 16
        %v886 = vrot.slane %v884, 4
        %v887 = vor.u32 %v883, %v886
        %v888 = vsel %vm772, %v878, %v887
        %v890 = vshrl.u32 %v767, 16
        %v892 = vrot.slane %v890, 3
        %v893 = vshll.u32 %v767, 16
        %v895 = vrot.slane %v893, 4
        %v896 = vor.u32 %v892, %v895
        %v897 = vsel %vm772, %v887, %v896
        %v899 = vshrl.u32 %v768, 16
        %v901 = vrot.slane %v899, 3
        %v902 = vshll.u32 %v768, 16
        %v904 = vrot.slane %v902, 4
        %v905 = vor.u32 %v901, %v904
        %v906 = vsel %vm772, %v896, %v905
        %v908 = vshrl.u32 %v769, 16
        %v910 = vrot.slane %v908, 3
        %v911 = vshll.u32 %v769, 16
        %v913 = vrot.slane %v911, 4
        %v914 = vor.u32 %v910, %v913
        %v915 = vsel %vm772, %v905, %v914
        %v917 = vshrl.u32 %v770, 16
        %v919 = vrot.slane %v917, 3
        %v920 = vshll.u32 %v770, 16
        %v922 = vrot.slane %v920, 4
        %v923 = vor.u32 %v919, %v922
        %v924 = vsel %vm772, %v914, %v923
        %vm925 = vcmask 64512
        %v927 = vsel %vm925, %v789, 0
        %v930 = vsel %vm925, %v798, 0
        %v933 = vsel %vm925, %v807, 0
        %v936 = vsel %vm925, %v816, 0
        %v939 = vsel %vm925, %v825, 0
        %v942 = vsel %vm925, %v834, 0
        %v945 = vsel %vm925, %v843, 0
        %v948 = vsel %vm925, %v852, 0
        %v951 = vsel %vm925, %v861, 0
        %v954 = vsel %vm925, %v870, 0
        %v957 = vsel %vm925, %v879, 0
        %v960 = vsel %vm925, %v888, 0
        %v963 = vsel %vm925, %v897, 0
        %v966 = vsel %vm925, %v906, 0
        %v969 = vsel %vm925, %v915, 0
        %v972 = vsel %vm925, %v924, 0
        %vm974 = vcmask 1043456
        %v976 = vsel %vm974, %v771, 0
        %978 = vmatprep.subr.bf16.mxu0 0
        %979 = vmatpush1.bf16.msra.mxu0 %v976
        %980 = vmatprep.subr.bf16.mxu0 0
        %981 = vmatpush1.bf16.msra.mxu0 0
        %982 = vmatprep.subr.bf16.mxu0 0
        %983 = vmatpush1.bf16.msra.mxu0 0
        %984 = vmatprep.subr.bf16.mxu0 0
        %985 = vmatpush1.bf16.msra.mxu0 0
        %986 = vmatprep.subr.bf16.mxu0 0
        %987 = vmatpush1.bf16.msra.mxu0 0
        %988 = vmatprep.subr.bf16.mxu0 0
        %989 = vmatpush1.bf16.msra.mxu0 0
        %990 = vmatprep.subr.bf16.mxu0 0
        %991 = vmatpush1.bf16.msra.mxu0 0
        %992 = vmatprep.subr.bf16.mxu0 0
        %993 = vmatpush1.bf16.msra.mxu0 0
        %994 = vmatprep.subr.bf16.mxu0 0
        %995 = vmatpush1.bf16.msra.mxu0 0
        %996 = vmatprep.subr.bf16.mxu0 0
        %997 = vmatpush1.bf16.msra.mxu0 0
        %998 = vmatprep.subr.bf16.mxu0 0
        %999 = vmatpush1.bf16.msra.mxu0 0
        %1000 = vmatprep.subr.bf16.mxu0 0
        %1001 = vmatpush1.bf16.msra.mxu0 0
        %1002 = vmatprep.subr.bf16.mxu0 0
        %1003 = vmatpush1.bf16.msra.mxu0 0
        %1004 = vmatprep.subr.bf16.mxu0 0
        %1005 = vmatpush1.bf16.msra.mxu0 0
        %1006 = vmatprep.subr.bf16.mxu0 0
        %1007 = vmatpush1.bf16.msra.mxu0 0
        %1008 = vmatprep.subr.bf16.mxu0 0
        %1009 = vmatpush1.bf16.msra.mxu0 0
        %1010 = vmatprep.mubr.bf16.mxu0 0
        %1011 = vmatmul.mubr.bf16.gmra.mrb[0].mxu0 %v927
        %v1012 = vpop.f32.mrb[0].mxu0
        %v1013 = vadd.f32 0.0, %v1012
        %v1014 = vpop.f32.mrb[0].mxu0
        %v1015 = vpop.f32.mrb[0].mxu0
        %v1016 = vadd.f32 0.0, %v1015
        %v1017 = vpop.f32.mrb[0].mxu0
        %1018 = vmatprep.mubr.bf16.mxu0 0
        %1019 = vmatmul.mubr.bf16.gmra.mrb[0].mxu0 %v930
        %v1020 = vpop.f32.mrb[0].mxu0
        %v1021 = vadd.f32 0.0, %v1020
        %v1022 = vpop.f32.mrb[0].mxu0
        %v1023 = vpop.f32.mrb[0].mxu0
        %v1024 = vadd.f32 0.0, %v1023
        %v1025 = vpop.f32.mrb[0].mxu0
        %1026 = vmatprep.mubr.bf16.mxu0 0
        %1027 = vmatmul.mubr.bf16.gmra.mrb[0].mxu0 %v933
        %v1028 = vpop.f32.mrb[0].mxu0
        %v1029 = vadd.f32 0.0, %v1028
        %v1030 = vpop.f32.mrb[0].mxu0
        %v1031 = vpop.f32.mrb[0].mxu0
        %v1032 = vadd.f32 0.0, %v1031
        %v1033 = vpop.f32.mrb[0].mxu0
        %1034 = vmatprep.mubr.bf16.mxu0 0
        %1035 = vmatmul.mubr.bf16.gmra.mrb[0].mxu0 %v936
        %v1036 = vpop.f32.mrb[0].mxu0
        %v1037 = vadd.f32 0.0, %v1036
        %v1038 = vpop.f32.mrb[0].mxu0
        %v1039 = vpop.f32.mrb[0].mxu0
        %v1040 = vadd.f32 0.0, %v1039
        %v1041 = vpop.f32.mrb[0].mxu0
        %1042 = vmatprep.mubr.bf16.mxu0 0
        %1043 = vmatmul.mubr.bf16.gmra.mrb[0].mxu0 %v939
        %v1044 = vpop.f32.mrb[0].mxu0
        %v1045 = vadd.f32 0.0, %v1044
        %v1046 = vpop.f32.mrb[0].mxu0
        %v1047 = vpop.f32.mrb[0].mxu0
        %v1048 = vadd.f32 0.0, %v1047
        %v1049 = vpop.f32.mrb[0].mxu0
        %1050 = vmatprep.mubr.bf16.mxu0 0
        %1051 = vmatmul.mubr.bf16.gmra.mrb[0].mxu0 %v942
        %v1052 = vpop.f32.mrb[0].mxu0
        %v1053 = vadd.f32 0.0, %v1052
        %v1054 = vpop.f32.mrb[0].mxu0
        %v1055 = vpop.f32.mrb[0].mxu0
        %v1056 = vadd.f32 0.0, %v1055
        %v1057 = vpop.f32.mrb[0].mxu0
        %1058 = vmatprep.mubr.bf16.mxu0 0
        %1059 = vmatmul.mubr.bf16.gmra.mrb[0].mxu0 %v945
        %v1060 = vpop.f32.mrb[0].mxu0
        %v1061 = vadd.f32 0.0, %v1060
        %v1062 = vpop.f32.mrb[0].mxu0
        %v1063 = vpop.f32.mrb[0].mxu0
        %v1064 = vadd.f32 0.0, %v1063
        %v1065 = vpop.f32.mrb[0].mxu0
        %1066 = vmatprep.mubr.bf16.mxu0 0
        %1067 = vmatmul.mubr.bf16.gmra.mrb[0].mxu0 %v948
        %v1068 = vpop.f32.mrb[0].mxu0
        %v1069 = vadd.f32 0.0, %v1068
        %v1070 = vpop.f32.mrb[0].mxu0
        %v1071 = vpop.f32.mrb[0].mxu0
        %v1072 = vadd.f32 0.0, %v1071
        %v1073 = vpop.f32.mrb[0].mxu0
        %1074 = vmatprep.mubr.bf16.mxu0 0
        %1075 = vmatmul.mubr.bf16.gmra.mrb[0].mxu0 %v951
        %v1076 = vpop.f32.mrb[0].mxu0
        %v1077 = vadd.f32 0.0, %v1076
        %v1078 = vpop.f32.mrb[0].mxu0
        %v1079 = vpop.f32.mrb[0].mxu0
        %v1080 = vadd.f32 0.0, %v1079
        %v1081 = vpop.f32.mrb[0].mxu0
        %1082 = vmatprep.mubr.bf16.mxu0 0
        %1083 = vmatmul.mubr.bf16.gmra.mrb[0].mxu0 %v954
        %v1084 = vpop.f32.mrb[0].mxu0
        %v1085 = vadd.f32 0.0, %v1084
        %v1086 = vpop.f32.mrb[0].mxu0
        %v1087 = vpop.f32.mrb[0].mxu0
        %v1088 = vadd.f32 0.0, %v1087
        %v1089 = vpop.f32.mrb[0].mxu0
        %1090 = vmatprep.mubr.bf16.mxu0 0
        %1091 = vmatmul.mubr.bf16.gmra.mrb[0].mxu0 %v957
        %v1092 = vpop.f32.mrb[0].mxu0
        %v1093 = vadd.f32 0.0, %v1092
        %v1094 = vpop.f32.mrb[0].mxu0
        %v1095 = vpop.f32.mrb[0].mxu0
        %v1096 = vadd.f32 0.0, %v1095
        %v1097 = vpop.f32.mrb[0].mxu0
        %1098 = vmatprep.mubr.bf16.mxu0 0
        %1099 = vmatmul.mubr.bf16.gmra.mrb[0].mxu0 %v960
        %v1100 = vpop.f32.mrb[0].mxu0
        %v1101 = vadd.f32 0.0, %v1100
        %v1102 = vpop.f32.mrb[0].mxu0
        %v1103 = vpop.f32.mrb[0].mxu0
        %v1104 = vadd.f32 0.0, %v1103
        %v1105 = vpop.f32.mrb[0].mxu0
        %1106 = vmatprep.mubr.bf16.mxu0 0
        %1107 = vmatmul.mubr.bf16.gmra.mrb[0].mxu0 %v963
        %v1108 = vpop.f32.mrb[0].mxu0
        %v1109 = vadd.f32 0.0, %v1108
        %v1110 = vpop.f32.mrb[0].mxu0
        %v1111 = vpop.f32.mrb[0].mxu0
        %v1112 = vadd.f32 0.0, %v1111
        %v1113 = vpop.f32.mrb[0].mxu0
        %1114 = vmatprep.mubr.bf16.mxu0 0
        %1115 = vmatmul.mubr.bf16.gmra.mrb[0].mxu0 %v966
        %v1116 = vpop.f32.mrb[0].mxu0
        %v1117 = vadd.f32 0.0, %v1116
        %v1118 = vpop.f32.mrb[0].mxu0
        %v1119 = vpop.f32.mrb[0].mxu0
        %v1120 = vadd.f32 0.0, %v1119
        %v1121 = vpop.f32.mrb[0].mxu0
        %1122 = vmatprep.mubr.bf16.mxu0 0
        %1123 = vmatmul.mubr.bf16.gmra.mrb[0].mxu0 %v969
        %v1124 = vpop.f32.mrb[0].mxu0
        %v1125 = vadd.f32 0.0, %v1124
        %v1126 = vpop.f32.mrb[0].mxu0
        %v1127 = vpop.f32.mrb[0].mxu0
        %v1128 = vadd.f32 0.0, %v1127
        %v1129 = vpop.f32.mrb[0].mxu0
        %1130 = vmatprep.mubr.bf16.mxu0 0
        %1131 = vmatmul.mubr.bf16.gmra.mrb[0].mxu0 %v972
        %v1132 = vpop.f32.mrb[0].mxu0
        %v1133 = vadd.f32 0.0, %v1132
        %v1134 = vpop.f32.mrb[0].mxu0
        %v1135 = vpop.f32.mrb[0].mxu0
        %v1136 = vadd.f32 0.0, %v1135
        %v1137 = vpop.f32.mrb[0].mxu0
        %1138 = vdwg.mxu0
        %v1139 = vadd.f32 %v428, %v1013
        %v1140 = vadd.f32 %v428, %v1016
        %v1141 = vadd.f32 %v428, %v1021
        %v1142 = vadd.f32 %v428, %v1024
        %v1143 = vadd.f32 %v428, %v1029
        %v1144 = vadd.f32 %v428, %v1032
        %v1145 = vadd.f32 %v428, %v1037
        %v1146 = vadd.f32 %v428, %v1040
        %v1147 = vadd.f32 %v428, %v1045
        %v1148 = vadd.f32 %v428, %v1048
        %v1149 = vadd.f32 %v428, %v1053
        %v1150 = vadd.f32 %v428, %v1056
        %v1151 = vadd.f32 %v428, %v1061
        %v1152 = vadd.f32 %v428, %v1064
        %v1153 = vadd.f32 %v428, %v1069
        %v1154 = vadd.f32 %v428, %v1072
        %v1155 = vadd.f32 %v428, %v1077
        %v1156 = vadd.f32 %v428, %v1080
        %v1157 = vadd.f32 %v428, %v1085
        %v1158 = vadd.f32 %v428, %v1088
        %v1159 = vadd.f32 %v428, %v1093
        %v1160 = vadd.f32 %v428, %v1096
        %v1161 = vadd.f32 %v428, %v1101
        %v1162 = vadd.f32 %v428, %v1104
        %v1163 = vadd.f32 %v428, %v1109
        %v1164 = vadd.f32 %v428, %v1112
        %v1165 = vadd.f32 %v428, %v1117
        %v1166 = vadd.f32 %v428, %v1120
        %v1167 = vadd.f32 %v428, %v1125
        %v1168 = vadd.f32 %v428, %v1128
        %v1169 = vadd.f32 %v428, %v1133
        %v1170 = vadd.f32 %v428, %v1136
        %s1171 = scalar_lea.vmem %s2, 4
        %v1172 = vld [vmem:[%s1171] sm:$0xf]
        %v1205 = vunpack.c.l.b16 %v431
        %v1206 = vunpack.c.l.b16 %v432
        %v1207 = vunpack.c.l.b16 %v433
        %v1208 = vunpack.c.l.b16 %v434
        %v1209 = vunpack.c.l.b16 %v435
        %v1210 = vunpack.c.l.b16 %v436
        %v1211 = vunpack.c.l.b16 %v437
        %v1212 = vunpack.c.l.b16 %v438
        %v1213 = vunpack.c.l.b16 %v439
        %v1214 = vunpack.c.l.b16 %v440
        %v1215 = vunpack.c.l.b16 %v441
        %v1216 = vunpack.c.l.b16 %v442
        %v1217 = vunpack.c.l.b16 %v443
        %v1218 = vunpack.c.l.b16 %v444
        %v1219 = vunpack.c.l.b16 %v445
        %v1220 = vunpack.c.l.b16 %v446
        %v1221 = vunpack.c.l.b16 %v447
        %v1222 = vunpack.c.l.b16 %v448
        %v1223 = vunpack.c.l.b16 %v449
        %v1224 = vunpack.c.l.b16 %v450
        %v1225 = vunpack.c.l.b16 %v451
        %v1226 = vunpack.c.l.b16 %v452
        %v1227 = vunpack.c.l.b16 %v453
        %v1228 = vunpack.c.l.b16 %v454
        %v1229 = vunpack.c.l.b16 %v455
        %v1230 = vunpack.c.l.b16 %v456
        %v1231 = vunpack.c.l.b16 %v457
        %v1232 = vunpack.c.l.b16 %v458
        %v1233 = vunpack.c.l.b16 %v459
        %v1234 = vunpack.c.l.b16 %v460
        %v1235 = vunpack.c.l.b16 %v461
        %v1236 = vunpack.c.l.b16 %v462
        %v1237 = vpack.c.b16 %v1206, %v1205
        %v1238 = vpack.c.b16 %v1208, %v1207
        %v1239 = vpack.c.b16 %v1210, %v1209
        %v1240 = vpack.c.b16 %v1212, %v1211
        %v1241 = vpack.c.b16 %v1214, %v1213
        %v1242 = vpack.c.b16 %v1216, %v1215
        %v1243 = vpack.c.b16 %v1218, %v1217
        %v1244 = vpack.c.b16 %v1220, %v1219
        %v1245 = vpack.c.b16 %v1222, %v1221
        %v1246 = vpack.c.b16 %v1224, %v1223
        %v1247 = vpack.c.b16 %v1226, %v1225
        %v1248 = vpack.c.b16 %v1228, %v1227
        %v1249 = vpack.c.b16 %v1230, %v1229
        %v1250 = vpack.c.b16 %v1232, %v1231
        %v1251 = vpack.c.b16 %v1234, %v1233
        %v1252 = vpack.c.b16 %v1236, %v1235
        %v1254 = vsel %vm925, %v1237, 0
        %v1257 = vsel %vm925, %v1238, 0
        %v1260 = vsel %vm925, %v1239, 0
        %v1263 = vsel %vm925, %v1240, 0
        %v1266 = vsel %vm925, %v1241, 0
        %v1269 = vsel %vm925, %v1242, 0
        %v1272 = vsel %vm925, %v1243, 0
        %v1275 = vsel %vm925, %v1244, 0
        %v1278 = vsel %vm925, %v1245, 0
        %v1281 = vsel %vm925, %v1246, 0
        %v1284 = vsel %vm925, %v1247, 0
        %v1287 = vsel %vm925, %v1248, 0
        %v1290 = vsel %vm925, %v1249, 0
        %v1293 = vsel %vm925, %v1250, 0
        %v1296 = vsel %vm925, %v1251, 0
        %v1299 = vsel %vm925, %v1252, 0
        %v1302 = vsel %vm974, %v1172, 0
        %1304 = vmatprep.subr.bf16.mxu0 0
        %1305 = vmatpush1.bf16.msra.mxu0 %v1302
        %1306 = vmatprep.subr.bf16.mxu0 0
        %1307 = vmatpush1.bf16.msra.mxu0 0
        %1308 = vmatprep.subr.bf16.mxu0 0
        %1309 = vmatpush1.bf16.msra.mxu0 0
        %1310 = vmatprep.subr.bf16.mxu0 0
        %1311 = vmatpush1.bf16.msra.mxu0 0
        %1312 = vmatprep.subr.bf16.mxu0 0
        %1313 = vmatpush1.bf16.msra.mxu0 0
        %1314 = vmatprep.subr.bf16.mxu0 0
        %1315 = vmatpush1.bf16.msra.mxu0 0
        %1316 = vmatprep.subr.bf16.mxu0 0
        %1317 = vmatpush1.bf16.msra.mxu0 0
        %1318 = vmatprep.subr.bf16.mxu0 0
        %1319 = vmatpush1.bf16.msra.mxu0 0
        %1320 = vmatprep.subr.bf16.mxu0 0
        %1321 = vmatpush1.bf16.msra.mxu0 0
        %1322 = vmatprep.subr.bf16.mxu0 0
        %1323 = vmatpush1.bf16.msra.mxu0 0
        %1324 = vmatprep.subr.bf16.mxu0 0
        %1325 = vmatpush1.bf16.msra.mxu0 0
        %1326 = vmatprep.subr.bf16.mxu0 0
        %1327 = vmatpush1.bf16.msra.mxu0 0
        %1328 = vmatprep.subr.bf16.mxu0 0
        %1329 = vmatpush1.bf16.msra.mxu0 0
        %1330 = vmatprep.subr.bf16.mxu0 0
        %1331 = vmatpush1.bf16.msra.mxu0 0
        %1332 = vmatprep.subr.bf16.mxu0 0
        %1333 = vmatpush1.bf16.msra.mxu0 0
        %1334 = vmatprep.subr.bf16.mxu0 0
        %1335 = vmatpush1.bf16.msra.mxu0 0
        %1336 = vmatprep.mubr.bf16.mxu0 0
        %1337 = vmatmul.mubr.bf16.gmra.mrb[0].mxu0 %v1254
        %v1338 = vpop.f32.mrb[0].mxu0
        %v1339 = vadd.f32 0.0, %v1338
        %v1340 = vpop.f32.mrb[0].mxu0
        %v1341 = vpop.f32.mrb[0].mxu0
        %v1342 = vadd.f32 0.0, %v1341
        %v1343 = vpop.f32.mrb[0].mxu0
        %1344 = vmatprep.mubr.bf16.mxu0 0
        %1345 = vmatmul.mubr.bf16.gmra.mrb[0].mxu0 %v1257
        %v1346 = vpop.f32.mrb[0].mxu0
        %v1347 = vadd.f32 0.0, %v1346
        %v1348 = vpop.f32.mrb[0].mxu0
        %v1349 = vpop.f32.mrb[0].mxu0
        %v1350 = vadd.f32 0.0, %v1349
        %v1351 = vpop.f32.mrb[0].mxu0
        %1352 = vmatprep.mubr.bf16.mxu0 0
        %1353 = vmatmul.mubr.bf16.gmra.mrb[0].mxu0 %v1260
        %v1354 = vpop.f32.mrb[0].mxu0
        %v1355 = vadd.f32 0.0, %v1354
        %v1356 = vpop.f32.mrb[0].mxu0
        %v1357 = vpop.f32.mrb[0].mxu0
        %v1358 = vadd.f32 0.0, %v1357
        %v1359 = vpop.f32.mrb[0].mxu0
        %1360 = vmatprep.mubr.bf16.mxu0 0
        %1361 = vmatmul.mubr.bf16.gmra.mrb[0].mxu0 %v1263
        %v1362 = vpop.f32.mrb[0].mxu0
        %v1363 = vadd.f32 0.0, %v1362
        %v1364 = vpop.f32.mrb[0].mxu0
        %v1365 = vpop.f32.mrb[0].mxu0
        %v1366 = vadd.f32 0.0, %v1365
        %v1367 = vpop.f32.mrb[0].mxu0
        %1368 = vmatprep.mubr.bf16.mxu0 0
        %1369 = vmatmul.mubr.bf16.gmra.mrb[0].mxu0 %v1266
        %v1370 = vpop.f32.mrb[0].mxu0
        %v1371 = vadd.f32 0.0, %v1370
        %v1372 = vpop.f32.mrb[0].mxu0
        %v1373 = vpop.f32.mrb[0].mxu0
        %v1374 = vadd.f32 0.0, %v1373
        %v1375 = vpop.f32.mrb[0].mxu0
        %1376 = vmatprep.mubr.bf16.mxu0 0
        %1377 = vmatmul.mubr.bf16.gmra.mrb[0].mxu0 %v1269
        %v1378 = vpop.f32.mrb[0].mxu0
        %v1379 = vadd.f32 0.0, %v1378
        %v1380 = vpop.f32.mrb[0].mxu0
        %v1381 = vpop.f32.mrb[0].mxu0
        %v1382 = vadd.f32 0.0, %v1381
        %v1383 = vpop.f32.mrb[0].mxu0
        %1384 = vmatprep.mubr.bf16.mxu0 0
        %1385 = vmatmul.mubr.bf16.gmra.mrb[0].mxu0 %v1272
        %v1386 = vpop.f32.mrb[0].mxu0
        %v1387 = vadd.f32 0.0, %v1386
        %v1388 = vpop.f32.mrb[0].mxu0
        %v1389 = vpop.f32.mrb[0].mxu0
        %v1390 = vadd.f32 0.0, %v1389
        %v1391 = vpop.f32.mrb[0].mxu0
        %1392 = vmatprep.mubr.bf16.mxu0 0
        %1393 = vmatmul.mubr.bf16.gmra.mrb[0].mxu0 %v1275
        %v1394 = vpop.f32.mrb[0].mxu0
        %v1395 = vadd.f32 0.0, %v1394
        %v1396 = vpop.f32.mrb[0].mxu0
        %v1397 = vpop.f32.mrb[0].mxu0
        %v1398 = vadd.f32 0.0, %v1397
        %v1399 = vpop.f32.mrb[0].mxu0
        %1400 = vmatprep.mubr.bf16.mxu0 0
        %1401 = vmatmul.mubr.bf16.gmra.mrb[0].mxu0 %v1278
        %v1402 = vpop.f32.mrb[0].mxu0
        %v1403 = vadd.f32 0.0, %v1402
        %v1404 = vpop.f32.mrb[0].mxu0
        %v1405 = vpop.f32.mrb[0].mxu0
        %v1406 = vadd.f32 0.0, %v1405
        %v1407 = vpop.f32.mrb[0].mxu0
        %1408 = vmatprep.mubr.bf16.mxu0 0
        %1409 = vmatmul.mubr.bf16.gmra.mrb[0].mxu0 %v1281
        %v1410 = vpop.f32.mrb[0].mxu0
        %v1411 = vadd.f32 0.0, %v1410
        %v1412 = vpop.f32.mrb[0].mxu0
        %v1413 = vpop.f32.mrb[0].mxu0
        %v1414 = vadd.f32 0.0, %v1413
        %v1415 = vpop.f32.mrb[0].mxu0
        %1416 = vmatprep.mubr.bf16.mxu0 0
        %1417 = vmatmul.mubr.bf16.gmra.mrb[0].mxu0 %v1284
        %v1418 = vpop.f32.mrb[0].mxu0
        %v1419 = vadd.f32 0.0, %v1418
        %v1420 = vpop.f32.mrb[0].mxu0
        %v1421 = vpop.f32.mrb[0].mxu0
        %v1422 = vadd.f32 0.0, %v1421
        %v1423 = vpop.f32.mrb[0].mxu0
        %1424 = vmatprep.mubr.bf16.mxu0 0
        %1425 = vmatmul.mubr.bf16.gmra.mrb[0].mxu0 %v1287
        %v1426 = vpop.f32.mrb[0].mxu0
        %v1427 = vadd.f32 0.0, %v1426
        %v1428 = vpop.f32.mrb[0].mxu0
        %v1429 = vpop.f32.mrb[0].mxu0
        %v1430 = vadd.f32 0.0, %v1429
        %v1431 = vpop.f32.mrb[0].mxu0
        %1432 = vmatprep.mubr.bf16.mxu0 0
        %1433 = vmatmul.mubr.bf16.gmra.mrb[0].mxu0 %v1290
        %v1434 = vpop.f32.mrb[0].mxu0
        %v1435 = vadd.f32 0.0, %v1434
        %v1436 = vpop.f32.mrb[0].mxu0
        %v1437 = vpop.f32.mrb[0].mxu0
        %v1438 = vadd.f32 0.0, %v1437
        %v1439 = vpop.f32.mrb[0].mxu0
        %1440 = vmatprep.mubr.bf16.mxu0 0
        %1441 = vmatmul.mubr.bf16.gmra.mrb[0].mxu0 %v1293
        %v1442 = vpop.f32.mrb[0].mxu0
        %v1443 = vadd.f32 0.0, %v1442
        %v1444 = vpop.f32.mrb[0].mxu0
        %v1445 = vpop.f32.mrb[0].mxu0
        %v1446 = vadd.f32 0.0, %v1445
        %v1447 = vpop.f32.mrb[0].mxu0
        %1448 = vmatprep.mubr.bf16.mxu0 0
        %1449 = vmatmul.mubr.bf16.gmra.mrb[0].mxu0 %v1296
        %v1450 = vpop.f32.mrb[0].mxu0
        %v1451 = vadd.f32 0.0, %v1450
        %v1452 = vpop.f32.mrb[0].mxu0
        %v1453 = vpop.f32.mrb[0].mxu0
        %v1454 = vadd.f32 0.0, %v1453
        %v1455 = vpop.f32.mrb[0].mxu0
        %1456 = vmatprep.mubr.bf16.mxu0 0
        %1457 = vmatmul.mubr.bf16.gmra.mrb[0].mxu0 %v1299
        %v1458 = vpop.f32.mrb[0].mxu0
        %v1459 = vadd.f32 0.0, %v1458
        %v1460 = vpop.f32.mrb[0].mxu0
        %v1461 = vpop.f32.mrb[0].mxu0
        %v1462 = vadd.f32 0.0, %v1461
        %v1463 = vpop.f32.mrb[0].mxu0
        %1464 = vdwg.mxu0
        %v1465 = vadd.f32 %v1139, %v1339
        %v1466 = vadd.f32 %v1140, %v1342
        %v1467 = vadd.f32 %v1141, %v1347
        %v1468 = vadd.f32 %v1142, %v1350
        %v1469 = vadd.f32 %v1143, %v1355
        %v1470 = vadd.f32 %v1144, %v1358
        %v1471 = vadd.f32 %v1145, %v1363
        %v1472 = vadd.f32 %v1146, %v1366
        %v1473 = vadd.f32 %v1147, %v1371
        %v1474 = vadd.f32 %v1148, %v1374
        %v1475 = vadd.f32 %v1149, %v1379
        %v1476 = vadd.f32 %v1150, %v1382
        %v1477 = vadd.f32 %v1151, %v1387
        %v1478 = vadd.f32 %v1152, %v1390
        %v1479 = vadd.f32 %v1153, %v1395
        %v1480 = vadd.f32 %v1154, %v1398
        %v1481 = vadd.f32 %v1155, %v1403
        %v1482 = vadd.f32 %v1156, %v1406
        %v1483 = vadd.f32 %v1157, %v1411
        %v1484 = vadd.f32 %v1158, %v1414
        %v1485 = vadd.f32 %v1159, %v1419
        %v1486 = vadd.f32 %v1160, %v1422
        %v1487 = vadd.f32 %v1161, %v1427
        %v1488 = vadd.f32 %v1162, %v1430
        %v1489 = vadd.f32 %v1163, %v1435
        %v1490 = vadd.f32 %v1164, %v1438
        %v1491 = vadd.f32 %v1165, %v1443
        %v1492 = vadd.f32 %v1166, %v1446
        %v1493 = vadd.f32 %v1167, %v1451
        %v1494 = vadd.f32 %v1168, %v1454
        %v1495 = vadd.f32 %v1169, %v1459
        %v1496 = vadd.f32 %v1170, %v1462
        %v1497 = vld [vmem:[%s356 + $0x4] sm:$0xf]
        %v1498 = vld [vmem:[%s356 + $0x8] sm:$0xf]
        %v1499 = vld [vmem:[%s356 + $0xc] sm:$0xf]
        %v1500 = vld [vmem:[%s356 + $0x10] sm:$0xf]
        %v1501 = vld [vmem:[%s356 + $0x14] sm:$0xf]
        %v1502 = vld [vmem:[%s356 + $0x18] sm:$0xf]
        %v1503 = vld [vmem:[%s356 + $0x1c] sm:$0xf]
        %v1504 = vld [vmem:[%s356 + $0x20] sm:$0xf]
        %v1505 = vld [vmem:[%s356 + $0x24] sm:$0xf]
        %v1506 = vld [vmem:[%s356 + $0x28] sm:$0xf]
        %v1507 = vld [vmem:[%s356 + $0x2c] sm:$0xf]
        %v1508 = vld [vmem:[%s356 + $0x30] sm:$0xf]
        %v1509 = vld [vmem:[%s356 + $0x34] sm:$0xf]
        %v1510 = vld [vmem:[%s356 + $0x38] sm:$0xf]
        %v1511 = vld [vmem:[%s356 + $0x3c] sm:$0xf]
        %v1512 = vld [vmem:[%s356 + $0x40] sm:$0xf]
        %v1513 = vld [vmem:[%s356 + $0x44] sm:$0xf]
        %v1514 = vld [vmem:[%s356 + $0x48] sm:$0xf]
        %v1515 = vld [vmem:[%s356 + $0x4c] sm:$0xf]
        %v1516 = vld [vmem:[%s356 + $0x50] sm:$0xf]
        %v1517 = vld [vmem:[%s356 + $0x54] sm:$0xf]
        %v1518 = vld [vmem:[%s356 + $0x58] sm:$0xf]
        %v1519 = vld [vmem:[%s356 + $0x5c] sm:$0xf]
        %v1520 = vld [vmem:[%s356 + $0x60] sm:$0xf]
        %v1521 = vld [vmem:[%s356 + $0x64] sm:$0xf]
        %v1522 = vld [vmem:[%s356 + $0x68] sm:$0xf]
        %v1523 = vld [vmem:[%s356 + $0x6c] sm:$0xf]
        %v1524 = vld [vmem:[%s356 + $0x70] sm:$0xf]
        %v1525 = vld [vmem:[%s356 + $0x74] sm:$0xf]
        %v1526 = vld [vmem:[%s356 + $0x78] sm:$0xf]
        %v1527 = vld [vmem:[%s356 + $0x7c] sm:$0xf]
        %v1528 = vld [vmem:[%s356 + $0x80] sm:$0xf]
        %v1529 = vld [vmem:[%s356 + $0x84] sm:$0x1]
        %v1530 = vunpack.c.l.bf16 %v1497
        %v1531 = vunpack.c.l.bf16 %v1498
        %v1532 = vunpack.c.l.bf16 %v1499
        %v1533 = vunpack.c.l.bf16 %v1500
        %v1534 = vunpack.c.l.bf16 %v1501
        %v1535 = vunpack.c.l.bf16 %v1502
        %v1536 = vunpack.c.l.bf16 %v1503
        %v1537 = vunpack.c.l.bf16 %v1504
        %v1538 = vunpack.c.l.bf16 %v1505
        %v1539 = vunpack.c.l.bf16 %v1506
        %v1540 = vunpack.c.l.bf16 %v1507
        %v1541 = vunpack.c.l.bf16 %v1508
        %v1542 = vunpack.c.l.bf16 %v1509
        %v1543 = vunpack.c.l.bf16 %v1510
        %v1544 = vunpack.c.l.bf16 %v1511
        %v1545 = vunpack.c.l.bf16 %v1512
        %v1546 = vunpack.c.l.bf16 %v1513
        %v1547 = vunpack.c.l.bf16 %v1514
        %v1548 = vunpack.c.l.bf16 %v1515
        %v1549 = vunpack.c.l.bf16 %v1516
        %v1550 = vunpack.c.l.bf16 %v1517
        %v1551 = vunpack.c.l.bf16 %v1518
        %v1552 = vunpack.c.l.bf16 %v1519
        %v1553 = vunpack.c.l.bf16 %v1520
        %v1554 = vunpack.c.l.bf16 %v1521
        %v1555 = vunpack.c.l.bf16 %v1522
        %v1556 = vunpack.c.l.bf16 %v1523
        %v1557 = vunpack.c.l.bf16 %v1524
        %v1558 = vunpack.c.l.bf16 %v1525
        %v1559 = vunpack.c.l.bf16 %v1526
        %v1560 = vunpack.c.l.bf16 %v1527
        %v1561 = vunpack.c.l.bf16 %v1528
        %v1562 = vunpack.c.l.bf16 %v1529
        %1564 = vset.pattern.permute.xlu0 0
        %1565 = vperm.xlu0 %1564, %v391
        %v1566 = vpop.permute.xlu0 %1565
        %1568 = vset.pattern.permute.xlu0 0
        %1569 = vperm.xlu0 %1568, %v392
        %v1570 = vpop.permute.xlu0 %1569
        %1572 = vset.pattern.permute.xlu0 0
        %1573 = vperm.xlu0 %1572, %v393
        %v1574 = vpop.permute.xlu0 %1573
        %1576 = vset.pattern.permute.xlu0 0
        %1577 = vperm.xlu0 %1576, %v394
        %v1578 = vpop.permute.xlu0 %1577
        %1580 = vset.pattern.permute.xlu0 0
        %1581 = vperm.xlu0 %1580, %v395
        %v1582 = vpop.permute.xlu0 %1581
        %1584 = vset.pattern.permute.xlu0 0
        %1585 = vperm.xlu0 %1584, %v396
        %v1586 = vpop.permute.xlu0 %1585
        %1588 = vset.pattern.permute.xlu0 0
        %1589 = vperm.xlu0 %1588, %v397
        %v1590 = vpop.permute.xlu0 %1589
        %1592 = vset.pattern.permute.xlu0 0
        %1593 = vperm.xlu0 %1592, %v398
        %v1594 = vpop.permute.xlu0 %1593
        %1596 = vset.pattern.permute.xlu0 0
        %1597 = vperm.xlu0 %1596, %v399
        %v1598 = vpop.permute.xlu0 %1597
        %1600 = vset.pattern.permute.xlu0 0
        %1601 = vperm.xlu0 %1600, %v400
        %v1602 = vpop.permute.xlu0 %1601
        %1604 = vset.pattern.permute.xlu0 0
        %1605 = vperm.xlu0 %1604, %v401
        %v1606 = vpop.permute.xlu0 %1605
        %1608 = vset.pattern.permute.xlu0 0
        %1609 = vperm.xlu0 %1608, %v402
        %v1610 = vpop.permute.xlu0 %1609
        %1612 = vset.pattern.permute.xlu0 0
        %1613 = vperm.xlu0 %1612, %v403
        %v1614 = vpop.permute.xlu0 %1613
        %1616 = vset.pattern.permute.xlu0 0
        %1617 = vperm.xlu0 %1616, %v404
        %v1618 = vpop.permute.xlu0 %1617
        %1620 = vset.pattern.permute.xlu0 0
        %1621 = vperm.xlu0 %1620, %v405
        %v1622 = vpop.permute.xlu0 %1621
        %1624 = vset.pattern.permute.xlu0 0
        %1625 = vperm.xlu0 %1624, %v406
        %v1626 = vpop.permute.xlu0 %1625
        %1628 = vset.pattern.permute.xlu0 0
        %1629 = vperm.xlu0 %1628, %v407
        %v1630 = vpop.permute.xlu0 %1629
        %1632 = vset.pattern.permute.xlu0 0
        %1633 = vperm.xlu0 %1632, %v408
        %v1634 = vpop.permute.xlu0 %1633
        %1636 = vset.pattern.permute.xlu0 0
        %1637 = vperm.xlu0 %1636, %v409
        %v1638 = vpop.permute.xlu0 %1637
        %1640 = vset.pattern.permute.xlu0 0
        %1641 = vperm.xlu0 %1640, %v410
        %v1642 = vpop.permute.xlu0 %1641
        %1644 = vset.pattern.permute.xlu0 0
        %1645 = vperm.xlu0 %1644, %v411
        %v1646 = vpop.permute.xlu0 %1645
        %1648 = vset.pattern.permute.xlu0 0
        %1649 = vperm.xlu0 %1648, %v412
        %v1650 = vpop.permute.xlu0 %1649
        %1652 = vset.pattern.permute.xlu0 0
        %1653 = vperm.xlu0 %1652, %v413
        %v1654 = vpop.permute.xlu0 %1653
        %1656 = vset.pattern.permute.xlu0 0
        %1657 = vperm.xlu0 %1656, %v414
        %v1658 = vpop.permute.xlu0 %1657
        %1660 = vset.pattern.permute.xlu0 0
        %1661 = vperm.xlu0 %1660, %v415
        %v1662 = vpop.permute.xlu0 %1661
        %1664 = vset.pattern.permute.xlu0 0
        %1665 = vperm.xlu0 %1664, %v416
        %v1666 = vpop.permute.xlu0 %1665
        %1668 = vset.pattern.permute.xlu0 0
        %1669 = vperm.xlu0 %1668, %v417
        %v1670 = vpop.permute.xlu0 %1669
        %1672 = vset.pattern.permute.xlu0 0
        %1673 = vperm.xlu0 %1672, %v418
        %v1674 = vpop.permute.xlu0 %1673
        %1676 = vset.pattern.permute.xlu0 0
        %1677 = vperm.xlu0 %1676, %v419
        %v1678 = vpop.permute.xlu0 %1677
        %1680 = vset.pattern.permute.xlu0 0
        %1681 = vperm.xlu0 %1680, %v420
        %v1682 = vpop.permute.xlu0 %1681
        %1684 = vset.pattern.permute.xlu0 0
        %1685 = vperm.xlu0 %1684, %v421
        %v1686 = vpop.permute.xlu0 %1685
        %1688 = vset.pattern.permute.xlu0 0
        %1689 = vperm.xlu0 %1688, %v422
        %v1690 = vpop.permute.xlu0 %1689
        %vm1691 = vcmask 1040384
        %v1692 = vrot.slane %v1566, 7
        %v1693 = vrot.slane %v1570, 7
        %v1694 = vsel %vm1691, %v1692, %v1693
        %v1695 = vrot.slane %v1574, 7
        %v1696 = vsel %vm1691, %v1693, %v1695
        %v1697 = vrot.slane %v1578, 7
        %v1698 = vsel %vm1691, %v1695, %v1697
        %v1699 = vrot.slane %v1582, 7
        %v1700 = vsel %vm1691, %v1697, %v1699
        %v1701 = vrot.slane %v1586, 7
        %v1702 = vsel %vm1691, %v1699, %v1701
        %v1703 = vrot.slane %v1590, 7
        %v1704 = vsel %vm1691, %v1701, %v1703
        %v1705 = vrot.slane %v1594, 7
        %v1706 = vsel %vm1691, %v1703, %v1705
        %v1707 = vrot.slane %v1598, 7
        %v1708 = vsel %vm1691, %v1705, %v1707
        %v1709 = vrot.slane %v1602, 7
        %v1710 = vsel %vm1691, %v1707, %v1709
        %v1711 = vrot.slane %v1606, 7
        %v1712 = vsel %vm1691, %v1709, %v1711
        %v1713 = vrot.slane %v1610, 7
        %v1714 = vsel %vm1691, %v1711, %v1713
        %v1715 = vrot.slane %v1614, 7
        %v1716 = vsel %vm1691, %v1713, %v1715
        %v1717 = vrot.slane %v1618, 7
        %v1718 = vsel %vm1691, %v1715, %v1717
        %v1719 = vrot.slane %v1622, 7
        %v1720 = vsel %vm1691, %v1717, %v1719
        %v1721 = vrot.slane %v1626, 7
        %v1722 = vsel %vm1691, %v1719, %v1721
        %v1723 = vrot.slane %v1630, 7
        %v1724 = vsel %vm1691, %v1721, %v1723
        %v1725 = vrot.slane %v1634, 7
        %v1726 = vsel %vm1691, %v1723, %v1725
        %v1727 = vrot.slane %v1638, 7
        %v1728 = vsel %vm1691, %v1725, %v1727
        %v1729 = vrot.slane %v1642, 7
        %v1730 = vsel %vm1691, %v1727, %v1729
        %v1731 = vrot.slane %v1646, 7
        %v1732 = vsel %vm1691, %v1729, %v1731
        %v1733 = vrot.slane %v1650, 7
        %v1734 = vsel %vm1691, %v1731, %v1733
        %v1735 = vrot.slane %v1654, 7
        %v1736 = vsel %vm1691, %v1733, %v1735
        %v1737 = vrot.slane %v1658, 7
        %v1738 = vsel %vm1691, %v1735, %v1737
        %v1739 = vrot.slane %v1662, 7
        %v1740 = vsel %vm1691, %v1737, %v1739
        %v1741 = vrot.slane %v1666, 7
        %v1742 = vsel %vm1691, %v1739, %v1741
        %v1743 = vrot.slane %v1670, 7
        %v1744 = vsel %vm1691, %v1741, %v1743
        %v1745 = vrot.slane %v1674, 7
        %v1746 = vsel %vm1691, %v1743, %v1745
        %v1747 = vrot.slane %v1678, 7
        %v1748 = vsel %vm1691, %v1745, %v1747
        %v1749 = vrot.slane %v1682, 7
        %v1750 = vsel %vm1691, %v1747, %v1749
        %v1751 = vrot.slane %v1686, 7
        %v1752 = vsel %vm1691, %v1749, %v1751
        %v1753 = vrot.slane %v1690, 7
        %v1754 = vsel %vm1691, %v1751, %v1753
        %v1788 = vmul.f32 %v1530, %v1692
        %v1789 = vmul.f32 %v1531, %v1694
        %v1790 = vmul.f32 %v1532, %v1696
        %v1791 = vmul.f32 %v1533, %v1698
        %v1792 = vmul.f32 %v1534, %v1700
        %v1793 = vmul.f32 %v1535, %v1702
        %v1794 = vmul.f32 %v1536, %v1704
        %v1795 = vmul.f32 %v1537, %v1706
        %v1796 = vmul.f32 %v1538, %v1708
        %v1797 = vmul.f32 %v1539, %v1710
        %v1798 = vmul.f32 %v1540, %v1712
        %v1799 = vmul.f32 %v1541, %v1714
        %v1800 = vmul.f32 %v1542, %v1716
        %v1801 = vmul.f32 %v1543, %v1718
        %v1802 = vmul.f32 %v1544, %v1720
        %v1803 = vmul.f32 %v1545, %v1722
        %v1804 = vmul.f32 %v1546, %v1724
        %v1805 = vmul.f32 %v1547, %v1726
        %v1806 = vmul.f32 %v1548, %v1728
        %v1807 = vmul.f32 %v1549, %v1730
        %v1808 = vmul.f32 %v1550, %v1732
        %v1809 = vmul.f32 %v1551, %v1734
        %v1810 = vmul.f32 %v1552, %v1736
        %v1811 = vmul.f32 %v1553, %v1738
        %v1812 = vmul.f32 %v1554, %v1740
        %v1813 = vmul.f32 %v1555, %v1742
        %v1814 = vmul.f32 %v1556, %v1744
        %v1815 = vmul.f32 %v1557, %v1746
        %v1816 = vmul.f32 %v1558, %v1748
        %v1817 = vmul.f32 %v1559, %v1750
        %v1818 = vmul.f32 %v1560, %v1752
        %v1819 = vmul.f32 %v1561, %v1754
        %v1820 = vmul.f32 %v1562, %v1753
        %v1821 = vpack.c.bf16 %v1789, %v1788
        %v1822 = vpack.c.bf16 %v1791, %v1790
        %v1823 = vpack.c.bf16 %v1793, %v1792
        %v1824 = vpack.c.bf16 %v1795, %v1794
        %v1825 = vpack.c.bf16 %v1797, %v1796
        %v1826 = vpack.c.bf16 %v1799, %v1798
        %v1827 = vpack.c.bf16 %v1801, %v1800
        %v1828 = vpack.c.bf16 %v1803, %v1802
        %v1829 = vpack.c.bf16 %v1805, %v1804
        %v1830 = vpack.c.bf16 %v1807, %v1806
        %v1831 = vpack.c.bf16 %v1809, %v1808
        %v1832 = vpack.c.bf16 %v1811, %v1810
        %v1833 = vpack.c.bf16 %v1813, %v1812
        %v1834 = vpack.c.bf16 %v1815, %v1814
        %v1835 = vpack.c.bf16 %v1817, %v1816
        %v1836 = vpack.c.bf16 %v1819, %v1818
        %v1837 = vpack.c.bf16 %v1820, %v1820
        %s1838 = scalar_lea.vmem %s2, 8
        %v1839 = vld [vmem:[%s1838] sm:$0xf]
        %vm1840 = vsmask.f32 7424
        %v1842 = vshrl.u32 %v1821, 16
        %v1844 = vshll.u32 %v1821, 16
        %v1846 = vrot.slane %v1844, 1
        %v1847 = vor.u32 %v1842, %v1846
        %v1849 = vshll.u32 %v1822, 16
        %v1851 = vrot.slane %v1849, 1
        %v1852 = vsel %vm1840, %v1847, %v1851
        %v1853 = vshrl.u32 %v1822, 16
        %v1855 = vor.u32 %v1853, %v1851
        %v1857 = vshll.u32 %v1823, 16
        %v1859 = vrot.slane %v1857, 1
        %v1860 = vsel %vm1840, %v1855, %v1859
        %v1861 = vshrl.u32 %v1823, 16
        %v1863 = vor.u32 %v1861, %v1859
        %v1865 = vshll.u32 %v1824, 16
        %v1867 = vrot.slane %v1865, 1
        %v1868 = vsel %vm1840, %v1863, %v1867
        %v1869 = vshrl.u32 %v1824, 16
        %v1871 = vor.u32 %v1869, %v1867
        %v1873 = vshll.u32 %v1825, 16
        %v1875 = vrot.slane %v1873, 1
        %v1876 = vsel %vm1840, %v1871, %v1875
        %v1877 = vshrl.u32 %v1825, 16
        %v1879 = vor.u32 %v1877, %v1875
        %v1881 = vshll.u32 %v1826, 16
        %v1883 = vrot.slane %v1881, 1
        %v1884 = vsel %vm1840, %v1879, %v1883
        %v1885 = vshrl.u32 %v1826, 16
        %v1887 = vor.u32 %v1885, %v1883
        %v1889 = vshll.u32 %v1827, 16
        %v1891 = vrot.slane %v1889, 1
        %v1892 = vsel %vm1840, %v1887, %v1891
        %v1893 = vshrl.u32 %v1827, 16
        %v1895 = vor.u32 %v1893, %v1891
        %v1897 = vshll.u32 %v1828, 16
        %v1899 = vrot.slane %v1897, 1
        %v1900 = vsel %vm1840, %v1895, %v1899
        %v1901 = vshrl.u32 %v1828, 16
        %v1903 = vor.u32 %v1901, %v1899
        %v1905 = vshll.u32 %v1829, 16
        %v1907 = vrot.slane %v1905, 1
        %v1908 = vsel %vm1840, %v1903, %v1907
        %v1909 = vshrl.u32 %v1829, 16
        %v1911 = vor.u32 %v1909, %v1907
        %v1913 = vshll.u32 %v1830, 16
        %v1915 = vrot.slane %v1913, 1
        %v1916 = vsel %vm1840, %v1911, %v1915
        %v1917 = vshrl.u32 %v1830, 16
        %v1919 = vor.u32 %v1917, %v1915
        %v1921 = vshll.u32 %v1831, 16
        %v1923 = vrot.slane %v1921, 1
        %v1924 = vsel %vm1840, %v1919, %v1923
        %v1925 = vshrl.u32 %v1831, 16
        %v1927 = vor.u32 %v1925, %v1923
        %v1929 = vshll.u32 %v1832, 16
        %v1931 = vrot.slane %v1929, 1
        %v1932 = vsel %vm1840, %v1927, %v1931
        %v1933 = vshrl.u32 %v1832, 16
        %v1935 = vor.u32 %v1933, %v1931
        %v1937 = vshll.u32 %v1833, 16
        %v1939 = vrot.slane %v1937, 1
        %v1940 = vsel %vm1840, %v1935, %v1939
        %v1941 = vshrl.u32 %v1833, 16
        %v1943 = vor.u32 %v1941, %v1939
        %v1945 = vshll.u32 %v1834, 16
        %v1947 = vrot.slane %v1945, 1
        %v1948 = vsel %vm1840, %v1943, %v1947
        %v1949 = vshrl.u32 %v1834, 16
        %v1951 = vor.u32 %v1949, %v1947
        %v1953 = vshll.u32 %v1835, 16
        %v1955 = vrot.slane %v1953, 1
        %v1956 = vsel %vm1840, %v1951, %v1955
        %v1957 = vshrl.u32 %v1835, 16
        %v1959 = vor.u32 %v1957, %v1955
        %v1961 = vshll.u32 %v1836, 16
        %v1963 = vrot.slane %v1961, 1
        %v1964 = vsel %vm1840, %v1959, %v1963
        %v1965 = vshrl.u32 %v1836, 16
        %v1967 = vor.u32 %v1965, %v1963
        %v1969 = vshll.u32 %v1837, 16
        %v1971 = vrot.slane %v1969, 1
        %v1972 = vsel %vm1840, %v1967, %v1971
        %v1974 = vsel %vm925, %v1852, 0
        %v1977 = vsel %vm925, %v1860, 0
        %v1980 = vsel %vm925, %v1868, 0
        %v1983 = vsel %vm925, %v1876, 0
        %v1986 = vsel %vm925, %v1884, 0
        %v1989 = vsel %vm925, %v1892, 0
        %v1992 = vsel %vm925, %v1900, 0
        %v1995 = vsel %vm925, %v1908, 0
        %v1998 = vsel %vm925, %v1916, 0
        %v2001 = vsel %vm925, %v1924, 0
        %v2004 = vsel %vm925, %v1932, 0
        %v2007 = vsel %vm925, %v1940, 0
        %v2010 = vsel %vm925, %v1948, 0
        %v2013 = vsel %vm925, %v1956, 0
        %v2016 = vsel %vm925, %v1964, 0
        %v2019 = vsel %vm925, %v1972, 0
        %v2022 = vsel %vm974, %v1839, 0
        %2024 = vmatprep.subr.bf16.mxu0 0
        %2025 = vmatpush1.bf16.msra.mxu0 %v2022
        %2026 = vmatprep.subr.bf16.mxu0 0
        %2027 = vmatpush1.bf16.msra.mxu0 0
        %2028 = vmatprep.subr.bf16.mxu0 0
        %2029 = vmatpush1.bf16.msra.mxu0 0
        %2030 = vmatprep.subr.bf16.mxu0 0
        %2031 = vmatpush1.bf16.msra.mxu0 0
        %2032 = vmatprep.subr.bf16.mxu0 0
        %2033 = vmatpush1.bf16.msra.mxu0 0
        %2034 = vmatprep.subr.bf16.mxu0 0
        %2035 = vmatpush1.bf16.msra.mxu0 0
        %2036 = vmatprep.subr.bf16.mxu0 0
        %2037 = vmatpush1.bf16.msra.mxu0 0
        %2038 = vmatprep.subr.bf16.mxu0 0
        %2039 = vmatpush1.bf16.msra.mxu0 0
        %2040 = vmatprep.subr.bf16.mxu0 0
        %2041 = vmatpush1.bf16.msra.mxu0 0
        %2042 = vmatprep.subr.bf16.mxu0 0
        %2043 = vmatpush1.bf16.msra.mxu0 0
        %2044 = vmatprep.subr.bf16.mxu0 0
        %2045 = vmatpush1.bf16.msra.mxu0 0
        %2046 = vmatprep.subr.bf16.mxu0 0
        %2047 = vmatpush1.bf16.msra.mxu0 0
        %2048 = vmatprep.subr.bf16.mxu0 0
        %2049 = vmatpush1.bf16.msra.mxu0 0
        %2050 = vmatprep.subr.bf16.mxu0 0
        %2051 = vmatpush1.bf16.msra.mxu0 0
        %2052 = vmatprep.subr.bf16.mxu0 0
        %2053 = vmatpush1.bf16.msra.mxu0 0
        %2054 = vmatprep.subr.bf16.mxu0 0
        %2055 = vmatpush1.bf16.msra.mxu0 0
        %2056 = vmatprep.mubr.bf16.mxu0 0
        %2057 = vmatmul.mubr.bf16.gmra.mrb[0].mxu0 %v1974
        %v2058 = vpop.f32.mrb[0].mxu0
        %v2059 = vadd.f32 0.0, %v2058
        %v2060 = vpop.f32.mrb[0].mxu0
        %v2061 = vpop.f32.mrb[0].mxu0
        %v2062 = vadd.f32 0.0, %v2061
        %v2063 = vpop.f32.mrb[0].mxu0
        %2064 = vmatprep.mubr.bf16.mxu0 0
        %2065 = vmatmul.mubr.bf16.gmra.mrb[0].mxu0 %v1977
        %v2066 = vpop.f32.mrb[0].mxu0
        %v2067 = vadd.f32 0.0, %v2066
        %v2068 = vpop.f32.mrb[0].mxu0
        %v2069 = vpop.f32.mrb[0].mxu0
        %v2070 = vadd.f32 0.0, %v2069
        %v2071 = vpop.f32.mrb[0].mxu0
        %2072 = vmatprep.mubr.bf16.mxu0 0
        %2073 = vmatmul.mubr.bf16.gmra.mrb[0].mxu0 %v1980
        %v2074 = vpop.f32.mrb[0].mxu0
        %v2075 = vadd.f32 0.0, %v2074
        %v2076 = vpop.f32.mrb[0].mxu0
        %v2077 = vpop.f32.mrb[0].mxu0
        %v2078 = vadd.f32 0.0, %v2077
        %v2079 = vpop.f32.mrb[0].mxu0
        %2080 = vmatprep.mubr.bf16.mxu0 0
        %2081 = vmatmul.mubr.bf16.gmra.mrb[0].mxu0 %v1983
        %v2082 = vpop.f32.mrb[0].mxu0
        %v2083 = vadd.f32 0.0, %v2082
        %v2084 = vpop.f32.mrb[0].mxu0
        %v2085 = vpop.f32.mrb[0].mxu0
        %v2086 = vadd.f32 0.0, %v2085
        %v2087 = vpop.f32.mrb[0].mxu0
        %2088 = vmatprep.mubr.bf16.mxu0 0
        %2089 = vmatmul.mubr.bf16.gmra.mrb[0].mxu0 %v1986
        %v2090 = vpop.f32.mrb[0].mxu0
        %v2091 = vadd.f32 0.0, %v2090
        %v2092 = vpop.f32.mrb[0].mxu0
        %v2093 = vpop.f32.mrb[0].mxu0
        %v2094 = vadd.f32 0.0, %v2093
        %v2095 = vpop.f32.mrb[0].mxu0
        %2096 = vmatprep.mubr.bf16.mxu0 0
        %2097 = vmatmul.mubr.bf16.gmra.mrb[0].mxu0 %v1989
        %v2098 = vpop.f32.mrb[0].mxu0
        %v2099 = vadd.f32 0.0, %v2098
        %v2100 = vpop.f32.mrb[0].mxu0
        %v2101 = vpop.f32.mrb[0].mxu0
        %v2102 = vadd.f32 0.0, %v2101
        %v2103 = vpop.f32.mrb[0].mxu0
        %2104 = vmatprep.mubr.bf16.mxu0 0
        %2105 = vmatmul.mubr.bf16.gmra.mrb[0].mxu0 %v1992
        %v2106 = vpop.f32.mrb[0].mxu0
        %v2107 = vadd.f32 0.0, %v2106
        %v2108 = vpop.f32.mrb[0].mxu0
        %v2109 = vpop.f32.mrb[0].mxu0
        %v2110 = vadd.f32 0.0, %v2109
        %v2111 = vpop.f32.mrb[0].mxu0
        %2112 = vmatprep.mubr.bf16.mxu0 0
        %2113 = vmatmul.mubr.bf16.gmra.mrb[0].mxu0 %v1995
        %v2114 = vpop.f32.mrb[0].mxu0
        %v2115 = vadd.f32 0.0, %v2114
        %v2116 = vpop.f32.mrb[0].mxu0
        %v2117 = vpop.f32.mrb[0].mxu0
        %v2118 = vadd.f32 0.0, %v2117
        %v2119 = vpop.f32.mrb[0].mxu0
        %2120 = vmatprep.mubr.bf16.mxu0 0
        %2121 = vmatmul.mubr.bf16.gmra.mrb[0].mxu0 %v1998
        %v2122 = vpop.f32.mrb[0].mxu0
        %v2123 = vadd.f32 0.0, %v2122
        %v2124 = vpop.f32.mrb[0].mxu0
        %v2125 = vpop.f32.mrb[0].mxu0
        %v2126 = vadd.f32 0.0, %v2125
        %v2127 = vpop.f32.mrb[0].mxu0
        %2128 = vmatprep.mubr.bf16.mxu0 0
        %2129 = vmatmul.mubr.bf16.gmra.mrb[0].mxu0 %v2001
        %v2130 = vpop.f32.mrb[0].mxu0
        %v2131 = vadd.f32 0.0, %v2130
        %v2132 = vpop.f32.mrb[0].mxu0
        %v2133 = vpop.f32.mrb[0].mxu0
        %v2134 = vadd.f32 0.0, %v2133
        %v2135 = vpop.f32.mrb[0].mxu0
        %2136 = vmatprep.mubr.bf16.mxu0 0
        %2137 = vmatmul.mubr.bf16.gmra.mrb[0].mxu0 %v2004
        %v2138 = vpop.f32.mrb[0].mxu0
        %v2139 = vadd.f32 0.0, %v2138
        %v2140 = vpop.f32.mrb[0].mxu0
        %v2141 = vpop.f32.mrb[0].mxu0
        %v2142 = vadd.f32 0.0, %v2141
        %v2143 = vpop.f32.mrb[0].mxu0
        %2144 = vmatprep.mubr.bf16.mxu0 0
        %2145 = vmatmul.mubr.bf16.gmra.mrb[0].mxu0 %v2007
        %v2146 = vpop.f32.mrb[0].mxu0
        %v2147 = vadd.f32 0.0, %v2146
        %v2148 = vpop.f32.mrb[0].mxu0
        %v2149 = vpop.f32.mrb[0].mxu0
        %v2150 = vadd.f32 0.0, %v2149
        %v2151 = vpop.f32.mrb[0].mxu0
        %2152 = vmatprep.mubr.bf16.mxu0 0
        %2153 = vmatmul.mubr.bf16.gmra.mrb[0].mxu0 %v2010
        %v2154 = vpop.f32.mrb[0].mxu0
        %v2155 = vadd.f32 0.0, %v2154
        %v2156 = vpop.f32.mrb[0].mxu0
        %v2157 = vpop.f32.mrb[0].mxu0
        %v2158 = vadd.f32 0.0, %v2157
        %v2159 = vpop.f32.mrb[0].mxu0
        %2160 = vmatprep.mubr.bf16.mxu0 0
        %2161 = vmatmul.mubr.bf16.gmra.mrb[0].mxu0 %v2013
        %v2162 = vpop.f32.mrb[0].mxu0
        %v2163 = vadd.f32 0.0, %v2162
        %v2164 = vpop.f32.mrb[0].mxu0
        %v2165 = vpop.f32.mrb[0].mxu0
        %v2166 = vadd.f32 0.0, %v2165
        %v2167 = vpop.f32.mrb[0].mxu0
        %2168 = vmatprep.mubr.bf16.mxu0 0
        %2169 = vmatmul.mubr.bf16.gmra.mrb[0].mxu0 %v2016
        %v2170 = vpop.f32.mrb[0].mxu0
        %v2171 = vadd.f32 0.0, %v2170
        %v2172 = vpop.f32.mrb[0].mxu0
        %v2173 = vpop.f32.mrb[0].mxu0
        %v2174 = vadd.f32 0.0, %v2173
        %v2175 = vpop.f32.mrb[0].mxu0
        %2176 = vmatprep.mubr.bf16.mxu0 0
        %2177 = vmatmul.mubr.bf16.gmra.mrb[0].mxu0 %v2019
        %v2178 = vpop.f32.mrb[0].mxu0
        %v2179 = vadd.f32 0.0, %v2178
        %v2180 = vpop.f32.mrb[0].mxu0
        %v2181 = vpop.f32.mrb[0].mxu0
        %v2182 = vadd.f32 0.0, %v2181
        %v2183 = vpop.f32.mrb[0].mxu0
        %2184 = vdwg.mxu0
        %v2185 = vadd.f32 %v1465, %v2059
        %v2186 = vadd.f32 %v1466, %v2062
        %v2187 = vadd.f32 %v1467, %v2067
        %v2188 = vadd.f32 %v1468, %v2070
        %v2189 = vadd.f32 %v1469, %v2075
        %v2190 = vadd.f32 %v1470, %v2078
        %v2191 = vadd.f32 %v1471, %v2083
        %v2192 = vadd.f32 %v1472, %v2086
        %v2193 = vadd.f32 %v1473, %v2091
        %v2194 = vadd.f32 %v1474, %v2094
        %v2195 = vadd.f32 %v1475, %v2099
        %v2196 = vadd.f32 %v1476, %v2102
        %v2197 = vadd.f32 %v1477, %v2107
        %v2198 = vadd.f32 %v1478, %v2110
        %v2199 = vadd.f32 %v1479, %v2115
        %v2200 = vadd.f32 %v1480, %v2118
        %v2201 = vadd.f32 %v1481, %v2123
        %v2202 = vadd.f32 %v1482, %v2126
        %v2203 = vadd.f32 %v1483, %v2131
        %v2204 = vadd.f32 %v1484, %v2134
        %v2205 = vadd.f32 %v1485, %v2139
        %v2206 = vadd.f32 %v1486, %v2142
        %v2207 = vadd.f32 %v1487, %v2147
        %v2208 = vadd.f32 %v1488, %v2150
        %v2209 = vadd.f32 %v1489, %v2155
        %v2210 = vadd.f32 %v1490, %v2158
        %v2211 = vadd.f32 %v1491, %v2163
        %v2212 = vadd.f32 %v1492, %v2166
        %v2213 = vadd.f32 %v1493, %v2171
        %v2214 = vadd.f32 %v1494, %v2174
        %v2215 = vadd.f32 %v1495, %v2179
        %v2216 = vadd.f32 %v1496, %v2182
        %v2217 = vld [vmem:[%s356 + $0x8] sm:$0x8]
        %v2218 = vld [vmem:[%s356 + $0xc] sm:$0xf]
        %v2219 = vld [vmem:[%s356 + $0x10] sm:$0xf]
        %v2220 = vld [vmem:[%s356 + $0x14] sm:$0xf]
        %v2221 = vld [vmem:[%s356 + $0x18] sm:$0xf]
        %v2222 = vld [vmem:[%s356 + $0x1c] sm:$0xf]
        %v2223 = vld [vmem:[%s356 + $0x20] sm:$0xf]
        %v2224 = vld [vmem:[%s356 + $0x24] sm:$0xf]
        %v2225 = vld [vmem:[%s356 + $0x28] sm:$0xf]
        %v2226 = vld [vmem:[%s356 + $0x2c] sm:$0xf]
        %v2227 = vld [vmem:[%s356 + $0x30] sm:$0xf]
        %v2228 = vld [vmem:[%s356 + $0x34] sm:$0xf]
        %v2229 = vld [vmem:[%s356 + $0x38] sm:$0xf]
        %v2230 = vld [vmem:[%s356 + $0x3c] sm:$0xf]
        %v2231 = vld [vmem:[%s356 + $0x40] sm:$0xf]
        %v2232 = vld [vmem:[%s356 + $0x44] sm:$0xf]
        %v2233 = vld [vmem:[%s356 + $0x48] sm:$0xf]
        %v2234 = vld [vmem:[%s356 + $0x4c] sm:$0xf]
        %v2235 = vld [vmem:[%s356 + $0x50] sm:$0xf]
        %v2236 = vld [vmem:[%s356 + $0x54] sm:$0xf]
        %v2237 = vld [vmem:[%s356 + $0x58] sm:$0xf]
        %v2238 = vld [vmem:[%s356 + $0x5c] sm:$0xf]
        %v2239 = vld [vmem:[%s356 + $0x60] sm:$0xf]
        %v2240 = vld [vmem:[%s356 + $0x64] sm:$0xf]
        %v2241 = vld [vmem:[%s356 + $0x68] sm:$0xf]
        %v2242 = vld [vmem:[%s356 + $0x6c] sm:$0xf]
        %v2243 = vld [vmem:[%s356 + $0x70] sm:$0xf]
        %v2244 = vld [vmem:[%s356 + $0x74] sm:$0xf]
        %v2245 = vld [vmem:[%s356 + $0x78] sm:$0xf]
        %v2246 = vld [vmem:[%s356 + $0x7c] sm:$0xf]
        %v2247 = vld [vmem:[%s356 + $0x80] sm:$0xf]
        %v2248 = vld [vmem:[%s356 + $0x84] sm:$0xf]
        %v2249 = vld [vmem:[%s356 + $0x88] sm:$0xf]
        %v2250 = vunpack.c.l.bf16 %v2217
        %v2251 = vunpack.c.l.bf16 %v2218
        %v2252 = vunpack.c.l.bf16 %v2219
        %v2253 = vunpack.c.l.bf16 %v2220
        %v2254 = vunpack.c.l.bf16 %v2221
        %v2255 = vunpack.c.l.bf16 %v2222
        %v2256 = vunpack.c.l.bf16 %v2223
        %v2257 = vunpack.c.l.bf16 %v2224
        %v2258 = vunpack.c.l.bf16 %v2225
        %v2259 = vunpack.c.l.bf16 %v2226
        %v2260 = vunpack.c.l.bf16 %v2227
        %v2261 = vunpack.c.l.bf16 %v2228
        %v2262 = vunpack.c.l.bf16 %v2229
        %v2263 = vunpack.c.l.bf16 %v2230
        %v2264 = vunpack.c.l.bf16 %v2231
        %v2265 = vunpack.c.l.bf16 %v2232
        %v2266 = vunpack.c.l.bf16 %v2233
        %v2267 = vunpack.c.l.bf16 %v2234
        %v2268 = vunpack.c.l.bf16 %v2235
        %v2269 = vunpack.c.l.bf16 %v2236
        %v2270 = vunpack.c.l.bf16 %v2237
        %v2271 = vunpack.c.l.bf16 %v2238
        %v2272 = vunpack.c.l.bf16 %v2239
        %v2273 = vunpack.c.l.bf16 %v2240
        %v2274 = vunpack.c.l.bf16 %v2241
        %v2275 = vunpack.c.l.bf16 %v2242
        %v2276 = vunpack.c.l.bf16 %v2243
        %v2277 = vunpack.c.l.bf16 %v2244
        %v2278 = vunpack.c.l.bf16 %v2245
        %v2279 = vunpack.c.l.bf16 %v2246
        %v2280 = vunpack.c.l.bf16 %v2247
        %v2281 = vunpack.c.l.bf16 %v2248
        %v2282 = vunpack.c.l.bf16 %v2249
        %v2283 = vmul.f32 %v2250, %v625
        %v2284 = vmul.f32 %v2251, %v627
        %v2285 = vmul.f32 %v2252, %v629
        %v2286 = vmul.f32 %v2253, %v631
        %v2287 = vmul.f32 %v2254, %v633
        %v2288 = vmul.f32 %v2255, %v635
        %v2289 = vmul.f32 %v2256, %v637
        %v2290 = vmul.f32 %v2257, %v639
        %v2291 = vmul.f32 %v2258, %v641
        %v2292 = vmul.f32 %v2259, %v643
        %v2293 = vmul.f32 %v2260, %v645
        %v2294 = vmul.f32 %v2261, %v647
        %v2295 = vmul.f32 %v2262, %v649
        %v2296 = vmul.f32 %v2263, %v651
        %v2297 = vmul.f32 %v2264, %v653
        %v2298 = vmul.f32 %v2265, %v655
        %v2299 = vmul.f32 %v2266, %v657
        %v2300 = vmul.f32 %v2267, %v659
        %v2301 = vmul.f32 %v2268, %v661
        %v2302 = vmul.f32 %v2269, %v663
        %v2303 = vmul.f32 %v2270, %v665
        %v2304 = vmul.f32 %v2271, %v667
        %v2305 = vmul.f32 %v2272, %v669
        %v2306 = vmul.f32 %v2273, %v671
        %v2307 = vmul.f32 %v2274, %v673
        %v2308 = vmul.f32 %v2275, %v675
        %v2309 = vmul.f32 %v2276, %v677
        %v2310 = vmul.f32 %v2277, %v679
        %v2311 = vmul.f32 %v2278, %v681
        %v2312 = vmul.f32 %v2279, %v683
        %v2313 = vmul.f32 %v2280, %v685
        %v2314 = vmul.f32 %v2281, %v687
        %v2315 = vmul.f32 %v2282, %v686
        %v2316 = vpack.c.bf16 %v2284, %v2283
        %v2317 = vpack.c.bf16 %v2286, %v2285
        %v2318 = vpack.c.bf16 %v2288, %v2287
        %v2319 = vpack.c.bf16 %v2290, %v2289
        %v2320 = vpack.c.bf16 %v2292, %v2291
        %v2321 = vpack.c.bf16 %v2294, %v2293
        %v2322 = vpack.c.bf16 %v2296, %v2295
        %v2323 = vpack.c.bf16 %v2298, %v2297
        %v2324 = vpack.c.bf16 %v2300, %v2299
        %v2325 = vpack.c.bf16 %v2302, %v2301
        %v2326 = vpack.c.bf16 %v2304, %v2303
        %v2327 = vpack.c.bf16 %v2306, %v2305
        %v2328 = vpack.c.bf16 %v2308, %v2307
        %v2329 = vpack.c.bf16 %v2310, %v2309
        %v2330 = vpack.c.bf16 %v2312, %v2311
        %v2331 = vpack.c.bf16 %v2314, %v2313
        %v2332 = vpack.c.bf16 %v2315, %v2315
        %s2333 = scalar_lea.vmem %s2, 12
        %v2334 = vld [vmem:[%s2333] sm:$0xf]
        %v2336 = vshrl.u32 %v2316, 16
        %v2338 = vrot.slane %v2336, 3
        %v2339 = vshll.u32 %v2316, 16
        %v2341 = vrot.slane %v2339, 4
        %v2342 = vor.u32 %v2338, %v2341
        %v2344 = vshrl.u32 %v2317, 16
        %v2346 = vrot.slane %v2344, 3
        %v2347 = vshll.u32 %v2317, 16
        %v2349 = vrot.slane %v2347, 4
        %v2350 = vor.u32 %v2346, %v2349
        %v2351 = vsel %vm772, %v2342, %v2350
        %v2353 = vshrl.u32 %v2318, 16
        %v2355 = vrot.slane %v2353, 3
        %v2356 = vshll.u32 %v2318, 16
        %v2358 = vrot.slane %v2356, 4
        %v2359 = vor.u32 %v2355, %v2358
        %v2360 = vsel %vm772, %v2350, %v2359
        %v2362 = vshrl.u32 %v2319, 16
        %v2364 = vrot.slane %v2362, 3
        %v2365 = vshll.u32 %v2319, 16
        %v2367 = vrot.slane %v2365, 4
        %v2368 = vor.u32 %v2364, %v2367
        %v2369 = vsel %vm772, %v2359, %v2368
        %v2371 = vshrl.u32 %v2320, 16
        %v2373 = vrot.slane %v2371, 3
        %v2374 = vshll.u32 %v2320, 16
        %v2376 = vrot.slane %v2374, 4
        %v2377 = vor.u32 %v2373, %v2376
        %v2378 = vsel %vm772, %v2368, %v2377
        %v2380 = vshrl.u32 %v2321, 16
        %v2382 = vrot.slane %v2380, 3
        %v2383 = vshll.u32 %v2321, 16
        %v2385 = vrot.slane %v2383, 4
        %v2386 = vor.u32 %v2382, %v2385
        %v2387 = vsel %vm772, %v2377, %v2386
        %v2389 = vshrl.u32 %v2322, 16
        %v2391 = vrot.slane %v2389, 3
        %v2392 = vshll.u32 %v2322, 16
        %v2394 = vrot.slane %v2392, 4
        %v2395 = vor.u32 %v2391, %v2394
        %v2396 = vsel %vm772, %v2386, %v2395
        %v2398 = vshrl.u32 %v2323, 16
        %v2400 = vrot.slane %v2398, 3
        %v2401 = vshll.u32 %v2323, 16
        %v2403 = vrot.slane %v2401, 4
        %v2404 = vor.u32 %v2400, %v2403
        %v2405 = vsel %vm772, %v2395, %v2404
        %v2407 = vshrl.u32 %v2324, 16
        %v2409 = vrot.slane %v2407, 3
        %v2410 = vshll.u32 %v2324, 16
        %v2412 = vrot.slane %v2410, 4
        %v2413 = vor.u32 %v2409, %v2412
        %v2414 = vsel %vm772, %v2404, %v2413
        %v2416 = vshrl.u32 %v2325, 16
        %v2418 = vrot.slane %v2416, 3
        %v2419 = vshll.u32 %v2325, 16
        %v2421 = vrot.slane %v2419, 4
        %v2422 = vor.u32 %v2418, %v2421
        %v2423 = vsel %vm772, %v2413, %v2422
        %v2425 = vshrl.u32 %v2326, 16
        %v2427 = vrot.slane %v2425, 3
        %v2428 = vshll.u32 %v2326, 16
        %v2430 = vrot.slane %v2428, 4
        %v2431 = vor.u32 %v2427, %v2430
        %v2432 = vsel %vm772, %v2422, %v2431
        %v2434 = vshrl.u32 %v2327, 16
        %v2436 = vrot.slane %v2434, 3
        %v2437 = vshll.u32 %v2327, 16
        %v2439 = vrot.slane %v2437, 4
        %v2440 = vor.u32 %v2436, %v2439
        %v2441 = vsel %vm772, %v2431, %v2440
        %v2443 = vshrl.u32 %v2328, 16
        %v2445 = vrot.slane %v2443, 3
        %v2446 = vshll.u32 %v2328, 16
        %v2448 = vrot.slane %v2446, 4
        %v2449 = vor.u32 %v2445, %v2448
        %v2450 = vsel %vm772, %v2440, %v2449
        %v2452 = vshrl.u32 %v2329, 16
        %v2454 = vrot.slane %v2452, 3
        %v2455 = vshll.u32 %v2329, 16
        %v2457 = vrot.slane %v2455, 4
        %v2458 = vor.u32 %v2454, %v2457
        %v2459 = vsel %vm772, %v2449, %v2458
        %v2461 = vshrl.u32 %v2330, 16
        %v2463 = vrot.slane %v2461, 3
        %v2464 = vshll.u32 %v2330, 16
        %v2466 = vrot.slane %v2464, 4
        %v2467 = vor.u32 %v2463, %v2466
        %v2468 = vsel %vm772, %v2458, %v2467
        %v2470 = vshrl.u32 %v2331, 16
        %v2472 = vrot.slane %v2470, 3
        %v2473 = vshll.u32 %v2331, 16
        %v2475 = vrot.slane %v2473, 4
        %v2476 = vor.u32 %v2472, %v2475
        %v2477 = vsel %vm772, %v2467, %v2476
        %v2479 = vshrl.u32 %v2332, 16
        %v2481 = vrot.slane %v2479, 3
        %v2482 = vshll.u32 %v2332, 16
        %v2484 = vrot.slane %v2482, 4
        %v2485 = vor.u32 %v2481, %v2484
        %v2486 = vsel %vm772, %v2476, %v2485
        %v2488 = vsel %vm925, %v2351, 0
        %v2491 = vsel %vm925, %v2360, 0
        %v2494 = vsel %vm925, %v2369, 0
        %v2497 = vsel %vm925, %v2378, 0
        %v2500 = vsel %vm925, %v2387, 0
        %v2503 = vsel %vm925, %v2396, 0
        %v2506 = vsel %vm925, %v2405, 0
        %v2509 = vsel %vm925, %v2414, 0
        %v2512 = vsel %vm925, %v2423, 0
        %v2515 = vsel %vm925, %v2432, 0
        %v2518 = vsel %vm925, %v2441, 0
        %v2521 = vsel %vm925, %v2450, 0
        %v2524 = vsel %vm925, %v2459, 0
        %v2527 = vsel %vm925, %v2468, 0
        %v2530 = vsel %vm925, %v2477, 0
        %v2533 = vsel %vm925, %v2486, 0
        %v2536 = vsel %vm974, %v2334, 0
        %2538 = vmatprep.subr.bf16.mxu0 0
        %2539 = vmatpush1.bf16.msra.mxu0 %v2536
        %2540 = vmatprep.subr.bf16.mxu0 0
        %2541 = vmatpush1.bf16.msra.mxu0 0
        %2542 = vmatprep.subr.bf16.mxu0 0
        %2543 = vmatpush1.bf16.msra.mxu0 0
        %2544 = vmatprep.subr.bf16.mxu0 0
        %2545 = vmatpush1.bf16.msra.mxu0 0
        %2546 = vmatprep.subr.bf16.mxu0 0
        %2547 = vmatpush1.bf16.msra.mxu0 0
        %2548 = vmatprep.subr.bf16.mxu0 0
        %2549 = vmatpush1.bf16.msra.mxu0 0
        %2550 = vmatprep.subr.bf16.mxu0 0
        %2551 = vmatpush1.bf16.msra.mxu0 0
        %2552 = vmatprep.subr.bf16.mxu0 0
        %2553 = vmatpush1.bf16.msra.mxu0 0
        %2554 = vmatprep.subr.bf16.mxu0 0
        %2555 = vmatpush1.bf16.msra.mxu0 0
        %2556 = vmatprep.subr.bf16.mxu0 0
        %2557 = vmatpush1.bf16.msra.mxu0 0
        %2558 = vmatprep.subr.bf16.mxu0 0
        %2559 = vmatpush1.bf16.msra.mxu0 0
        %2560 = vmatprep.subr.bf16.mxu0 0
        %2561 = vmatpush1.bf16.msra.mxu0 0
        %2562 = vmatprep.subr.bf16.mxu0 0
        %2563 = vmatpush1.bf16.msra.mxu0 0
        %2564 = vmatprep.subr.bf16.mxu0 0
        %2565 = vmatpush1.bf16.msra.mxu0 0
        %2566 = vmatprep.subr.bf16.mxu0 0
        %2567 = vmatpush1.bf16.msra.mxu0 0
        %2568 = vmatprep.subr.bf16.mxu0 0
        %2569 = vmatpush1.bf16.msra.mxu0 0
        %2570 = vmatprep.mubr.bf16.mxu0 0
        %2571 = vmatmul.mubr.bf16.gmra.mrb[0].mxu0 %v2488
        %v2572 = vpop.f32.mrb[0].mxu0
        %v2573 = vadd.f32 0.0, %v2572
        %v2574 = vpop.f32.mrb[0].mxu0
        %v2575 = vpop.f32.mrb[0].mxu0
        %v2576 = vadd.f32 0.0, %v2575
        %v2577 = vpop.f32.mrb[0].mxu0
        %2578 = vmatprep.mubr.bf16.mxu0 0
        %2579 = vmatmul.mubr.bf16.gmra.mrb[0].mxu0 %v2491
        %v2580 = vpop.f32.mrb[0].mxu0
        %v2581 = vadd.f32 0.0, %v2580
        %v2582 = vpop.f32.mrb[0].mxu0
        %v2583 = vpop.f32.mrb[0].mxu0
        %v2584 = vadd.f32 0.0, %v2583
        %v2585 = vpop.f32.mrb[0].mxu0
        %2586 = vmatprep.mubr.bf16.mxu0 0
        %2587 = vmatmul.mubr.bf16.gmra.mrb[0].mxu0 %v2494
        %v2588 = vpop.f32.mrb[0].mxu0
        %v2589 = vadd.f32 0.0, %v2588
        %v2590 = vpop.f32.mrb[0].mxu0
        %v2591 = vpop.f32.mrb[0].mxu0
        %v2592 = vadd.f32 0.0, %v2591
        %v2593 = vpop.f32.mrb[0].mxu0
        %2594 = vmatprep.mubr.bf16.mxu0 0
        %2595 = vmatmul.mubr.bf16.gmra.mrb[0].mxu0 %v2497
        %v2596 = vpop.f32.mrb[0].mxu0
        %v2597 = vadd.f32 0.0, %v2596
        %v2598 = vpop.f32.mrb[0].mxu0
        %v2599 = vpop.f32.mrb[0].mxu0
        %v2600 = vadd.f32 0.0, %v2599
        %v2601 = vpop.f32.mrb[0].mxu0
        %2602 = vmatprep.mubr.bf16.mxu0 0
        %2603 = vmatmul.mubr.bf16.gmra.mrb[0].mxu0 %v2500
        %v2604 = vpop.f32.mrb[0].mxu0
        %v2605 = vadd.f32 0.0, %v2604
        %v2606 = vpop.f32.mrb[0].mxu0
        %v2607 = vpop.f32.mrb[0].mxu0
        %v2608 = vadd.f32 0.0, %v2607
        %v2609 = vpop.f32.mrb[0].mxu0
        %2610 = vmatprep.mubr.bf16.mxu0 0
        %2611 = vmatmul.mubr.bf16.gmra.mrb[0].mxu0 %v2503
        %v2612 = vpop.f32.mrb[0].mxu0
        %v2613 = vadd.f32 0.0, %v2612
        %v2614 = vpop.f32.mrb[0].mxu0
        %v2615 = vpop.f32.mrb[0].mxu0
        %v2616 = vadd.f32 0.0, %v2615
        %v2617 = vpop.f32.mrb[0].mxu0
        %2618 = vmatprep.mubr.bf16.mxu0 0
        %2619 = vmatmul.mubr.bf16.gmra.mrb[0].mxu0 %v2506
        %v2620 = vpop.f32.mrb[0].mxu0
        %v2621 = vadd.f32 0.0, %v2620
        %v2622 = vpop.f32.mrb[0].mxu0
        %v2623 = vpop.f32.mrb[0].mxu0
        %v2624 = vadd.f32 0.0, %v2623
        %v2625 = vpop.f32.mrb[0].mxu0
        %2626 = vmatprep.mubr.bf16.mxu0 0
        %2627 = vmatmul.mubr.bf16.gmra.mrb[0].mxu0 %v2509
        %v2628 = vpop.f32.mrb[0].mxu0
        %v2629 = vadd.f32 0.0, %v2628
        %v2630 = vpop.f32.mrb[0].mxu0
        %v2631 = vpop.f32.mrb[0].mxu0
        %v2632 = vadd.f32 0.0, %v2631
        %v2633 = vpop.f32.mrb[0].mxu0
        %2634 = vmatprep.mubr.bf16.mxu0 0
        %2635 = vmatmul.mubr.bf16.gmra.mrb[0].mxu0 %v2512
        %v2636 = vpop.f32.mrb[0].mxu0
        %v2637 = vadd.f32 0.0, %v2636
        %v2638 = vpop.f32.mrb[0].mxu0
        %v2639 = vpop.f32.mrb[0].mxu0
        %v2640 = vadd.f32 0.0, %v2639
        %v2641 = vpop.f32.mrb[0].mxu0
        %2642 = vmatprep.mubr.bf16.mxu0 0
        %2643 = vmatmul.mubr.bf16.gmra.mrb[0].mxu0 %v2515
        %v2644 = vpop.f32.mrb[0].mxu0
        %v2645 = vadd.f32 0.0, %v2644
        %v2646 = vpop.f32.mrb[0].mxu0
        %v2647 = vpop.f32.mrb[0].mxu0
        %v2648 = vadd.f32 0.0, %v2647
        %v2649 = vpop.f32.mrb[0].mxu0
        %2650 = vmatprep.mubr.bf16.mxu0 0
        %2651 = vmatmul.mubr.bf16.gmra.mrb[0].mxu0 %v2518
        %v2652 = vpop.f32.mrb[0].mxu0
        %v2653 = vadd.f32 0.0, %v2652
        %v2654 = vpop.f32.mrb[0].mxu0
        %v2655 = vpop.f32.mrb[0].mxu0
        %v2656 = vadd.f32 0.0, %v2655
        %v2657 = vpop.f32.mrb[0].mxu0
        %2658 = vmatprep.mubr.bf16.mxu0 0
        %2659 = vmatmul.mubr.bf16.gmra.mrb[0].mxu0 %v2521
        %v2660 = vpop.f32.mrb[0].mxu0
        %v2661 = vadd.f32 0.0, %v2660
        %v2662 = vpop.f32.mrb[0].mxu0
        %v2663 = vpop.f32.mrb[0].mxu0
        %v2664 = vadd.f32 0.0, %v2663
        %v2665 = vpop.f32.mrb[0].mxu0
        %2666 = vmatprep.mubr.bf16.mxu0 0
        %2667 = vmatmul.mubr.bf16.gmra.mrb[0].mxu0 %v2524
        %v2668 = vpop.f32.mrb[0].mxu0
        %v2669 = vadd.f32 0.0, %v2668
        %v2670 = vpop.f32.mrb[0].mxu0
        %v2671 = vpop.f32.mrb[0].mxu0
        %v2672 = vadd.f32 0.0, %v2671
        %v2673 = vpop.f32.mrb[0].mxu0
        %2674 = vmatprep.mubr.bf16.mxu0 0
        %2675 = vmatmul.mubr.bf16.gmra.mrb[0].mxu0 %v2527
        %v2676 = vpop.f32.mrb[0].mxu0
        %v2677 = vadd.f32 0.0, %v2676
        %v2678 = vpop.f32.mrb[0].mxu0
        %v2679 = vpop.f32.mrb[0].mxu0
        %v2680 = vadd.f32 0.0, %v2679
        %v2681 = vpop.f32.mrb[0].mxu0
        %2682 = vmatprep.mubr.bf16.mxu0 0
        %2683 = vmatmul.mubr.bf16.gmra.mrb[0].mxu0 %v2530
        %v2684 = vpop.f32.mrb[0].mxu0
        %v2685 = vadd.f32 0.0, %v2684
        %v2686 = vpop.f32.mrb[0].mxu0
        %v2687 = vpop.f32.mrb[0].mxu0
        %v2688 = vadd.f32 0.0, %v2687
        %v2689 = vpop.f32.mrb[0].mxu0
        %2690 = vmatprep.mubr.bf16.mxu0 0
        %2691 = vmatmul.mubr.bf16.gmra.mrb[0].mxu0 %v2533
        %v2692 = vpop.f32.mrb[0].mxu0
        %v2693 = vadd.f32 0.0, %v2692
        %v2694 = vpop.f32.mrb[0].mxu0
        %v2695 = vpop.f32.mrb[0].mxu0
        %v2696 = vadd.f32 0.0, %v2695
        %v2697 = vpop.f32.mrb[0].mxu0
        %2698 = vdwg.mxu0
        %v2699 = vadd.f32 %v2185, %v2573
        %v2700 = vadd.f32 %v2186, %v2576
        %v2701 = vadd.f32 %v2187, %v2581
        %v2702 = vadd.f32 %v2188, %v2584
        %v2703 = vadd.f32 %v2189, %v2589
        %v2704 = vadd.f32 %v2190, %v2592
        %v2705 = vadd.f32 %v2191, %v2597
        %v2706 = vadd.f32 %v2192, %v2600
        %v2707 = vadd.f32 %v2193, %v2605
        %v2708 = vadd.f32 %v2194, %v2608
        %v2709 = vadd.f32 %v2195, %v2613
        %v2710 = vadd.f32 %v2196, %v2616
        %v2711 = vadd.f32 %v2197, %v2621
        %v2712 = vadd.f32 %v2198, %v2624
        %v2713 = vadd.f32 %v2199, %v2629
        %v2714 = vadd.f32 %v2200, %v2632
        %v2715 = vadd.f32 %v2201, %v2637
        %v2716 = vadd.f32 %v2202, %v2640
        %v2717 = vadd.f32 %v2203, %v2645
        %v2718 = vadd.f32 %v2204, %v2648
        %v2719 = vadd.f32 %v2205, %v2653
        %v2720 = vadd.f32 %v2206, %v2656
        %v2721 = vadd.f32 %v2207, %v2661
        %v2722 = vadd.f32 %v2208, %v2664
        %v2723 = vadd.f32 %v2209, %v2669
        %v2724 = vadd.f32 %v2210, %v2672
        %v2725 = vadd.f32 %v2211, %v2677
        %v2726 = vadd.f32 %v2212, %v2680
        %v2727 = vadd.f32 %v2213, %v2685
        %v2728 = vadd.f32 %v2214, %v2688
        %v2729 = vadd.f32 %v2215, %v2693
        %v2730 = vadd.f32 %v2216, %v2696
        %s2731 = scalar_lea.vmem %s2, 16
        %v2732 = vld [vmem:[%s2731] sm:$0xf]
        %v2765 = vunpack.c.l.b16 %v2218
        %v2766 = vunpack.c.l.b16 %v2219
        %v2767 = vunpack.c.l.b16 %v2220
        %v2768 = vunpack.c.l.b16 %v2221
        %v2769 = vunpack.c.l.b16 %v2222
        %v2770 = vunpack.c.l.b16 %v2223
        %v2771 = vunpack.c.l.b16 %v2224
        %v2772 = vunpack.c.l.b16 %v2225
        %v2773 = vunpack.c.l.b16 %v2226
        %v2774 = vunpack.c.l.b16 %v2227
        %v2775 = vunpack.c.l.b16 %v2228
        %v2776 = vunpack.c.l.b16 %v2229
        %v2777 = vunpack.c.l.b16 %v2230
        %v2778 = vunpack.c.l.b16 %v2231
        %v2779 = vunpack.c.l.b16 %v2232
        %v2780 = vunpack.c.l.b16 %v2233
        %v2781 = vunpack.c.l.b16 %v2234
        %v2782 = vunpack.c.l.b16 %v2235
        %v2783 = vunpack.c.l.b16 %v2236
        %v2784 = vunpack.c.l.b16 %v2237
        %v2785 = vunpack.c.l.b16 %v2238
        %v2786 = vunpack.c.l.b16 %v2239
        %v2787 = vunpack.c.l.b16 %v2240
        %v2788 = vunpack.c.l.b16 %v2241
        %v2789 = vunpack.c.l.b16 %v2242
        %v2790 = vunpack.c.l.b16 %v2243
        %v2791 = vunpack.c.l.b16 %v2244
        %v2792 = vunpack.c.l.b16 %v2245
        %v2793 = vunpack.c.l.b16 %v2246
        %v2794 = vunpack.c.l.b16 %v2247
        %v2795 = vunpack.c.l.b16 %v2248
        %v2796 = vunpack.c.l.b16 %v2249
        %v2797 = vpack.c.b16 %v2766, %v2765
        %v2798 = vpack.c.b16 %v2768, %v2767
        %v2799 = vpack.c.b16 %v2770, %v2769
        %v2800 = vpack.c.b16 %v2772, %v2771
        %v2801 = vpack.c.b16 %v2774, %v2773
        %v2802 = vpack.c.b16 %v2776, %v2775
        %v2803 = vpack.c.b16 %v2778, %v2777
        %v2804 = vpack.c.b16 %v2780, %v2779
        %v2805 = vpack.c.b16 %v2782, %v2781
        %v2806 = vpack.c.b16 %v2784, %v2783
        %v2807 = vpack.c.b16 %v2786, %v2785
        %v2808 = vpack.c.b16 %v2788, %v2787
        %v2809 = vpack.c.b16 %v2790, %v2789
        %v2810 = vpack.c.b16 %v2792, %v2791
        %v2811 = vpack.c.b16 %v2794, %v2793
        %v2812 = vpack.c.b16 %v2796, %v2795
        %v2814 = vsel %vm925, %v2797, 0
        %v2817 = vsel %vm925, %v2798, 0
        %v2820 = vsel %vm925, %v2799, 0
        %v2823 = vsel %vm925, %v2800, 0
        %v2826 = vsel %vm925, %v2801, 0
        %v2829 = vsel %vm925, %v2802, 0
        %v2832 = vsel %vm925, %v2803, 0
        %v2835 = vsel %vm925, %v2804, 0
        %v2838 = vsel %vm925, %v2805, 0
        %v2841 = vsel %vm925, %v2806, 0
        %v2844 = vsel %vm925, %v2807, 0
        %v2847 = vsel %vm925, %v2808, 0
        %v2850 = vsel %vm925, %v2809, 0
        %v2853 = vsel %vm925, %v2810, 0
        %v2856 = vsel %vm925, %v2811, 0
        %v2859 = vsel %vm925, %v2812, 0
        %v2862 = vsel %vm974, %v2732, 0
        %2864 = vmatprep.subr.bf16.mxu0 0
        %2865 = vmatpush1.bf16.msra.mxu0 %v2862
        %2866 = vmatprep.subr.bf16.mxu0 0
        %2867 = vmatpush1.bf16.msra.mxu0 0
        %2868 = vmatprep.subr.bf16.mxu0 0
        %2869 = vmatpush1.bf16.msra.mxu0 0
        %2870 = vmatprep.subr.bf16.mxu0 0
        %2871 = vmatpush1.bf16.msra.mxu0 0
        %2872 = vmatprep.subr.bf16.mxu0 0
        %2873 = vmatpush1.bf16.msra.mxu0 0
        %2874 = vmatprep.subr.bf16.mxu0 0
        %2875 = vmatpush1.bf16.msra.mxu0 0
        %2876 = vmatprep.subr.bf16.mxu0 0
        %2877 = vmatpush1.bf16.msra.mxu0 0
        %2878 = vmatprep.subr.bf16.mxu0 0
        %2879 = vmatpush1.bf16.msra.mxu0 0
        %2880 = vmatprep.subr.bf16.mxu0 0
        %2881 = vmatpush1.bf16.msra.mxu0 0
        %2882 = vmatprep.subr.bf16.mxu0 0
        %2883 = vmatpush1.bf16.msra.mxu0 0
        %2884 = vmatprep.subr.bf16.mxu0 0
        %2885 = vmatpush1.bf16.msra.mxu0 0
        %2886 = vmatprep.subr.bf16.mxu0 0
        %2887 = vmatpush1.bf16.msra.mxu0 0
        %2888 = vmatprep.subr.bf16.mxu0 0
        %2889 = vmatpush1.bf16.msra.mxu0 0
        %2890 = vmatprep.subr.bf16.mxu0 0
        %2891 = vmatpush1.bf16.msra.mxu0 0
        %2892 = vmatprep.subr.bf16.mxu0 0
        %2893 = vmatpush1.bf16.msra.mxu0 0
        %2894 = vmatprep.subr.bf16.mxu0 0
        %2895 = vmatpush1.bf16.msra.mxu0 0
        %2896 = vmatprep.mubr.bf16.mxu0 0
        %2897 = vmatmul.mubr.bf16.gmra.mrb[0].mxu0 %v2814
        %v2898 = vpop.f32.mrb[0].mxu0
        %v2899 = vadd.f32 0.0, %v2898
        %v2900 = vpop.f32.mrb[0].mxu0
        %v2901 = vpop.f32.mrb[0].mxu0
        %v2902 = vadd.f32 0.0, %v2901
        %v2903 = vpop.f32.mrb[0].mxu0
        %2904 = vmatprep.mubr.bf16.mxu0 0
        %2905 = vmatmul.mubr.bf16.gmra.mrb[0].mxu0 %v2817
        %v2906 = vpop.f32.mrb[0].mxu0
        %v2907 = vadd.f32 0.0, %v2906
        %v2908 = vpop.f32.mrb[0].mxu0
        %v2909 = vpop.f32.mrb[0].mxu0
        %v2910 = vadd.f32 0.0, %v2909
        %v2911 = vpop.f32.mrb[0].mxu0
        %2912 = vmatprep.mubr.bf16.mxu0 0
        %2913 = vmatmul.mubr.bf16.gmra.mrb[0].mxu0 %v2820
        %v2914 = vpop.f32.mrb[0].mxu0
        %v2915 = vadd.f32 0.0, %v2914
        %v2916 = vpop.f32.mrb[0].mxu0
        %v2917 = vpop.f32.mrb[0].mxu0
        %v2918 = vadd.f32 0.0, %v2917
        %v2919 = vpop.f32.mrb[0].mxu0
        %2920 = vmatprep.mubr.bf16.mxu0 0
        %2921 = vmatmul.mubr.bf16.gmra.mrb[0].mxu0 %v2823
        %v2922 = vpop.f32.mrb[0].mxu0
        %v2923 = vadd.f32 0.0, %v2922
        %v2924 = vpop.f32.mrb[0].mxu0
        %v2925 = vpop.f32.mrb[0].mxu0
        %v2926 = vadd.f32 0.0, %v2925
        %v2927 = vpop.f32.mrb[0].mxu0
        %2928 = vmatprep.mubr.bf16.mxu0 0
        %2929 = vmatmul.mubr.bf16.gmra.mrb[0].mxu0 %v2826
        %v2930 = vpop.f32.mrb[0].mxu0
        %v2931 = vadd.f32 0.0, %v2930
        %v2932 = vpop.f32.mrb[0].mxu0
        %v2933 = vpop.f32.mrb[0].mxu0
        %v2934 = vadd.f32 0.0, %v2933
        %v2935 = vpop.f32.mrb[0].mxu0
        %2936 = vmatprep.mubr.bf16.mxu0 0
        %2937 = vmatmul.mubr.bf16.gmra.mrb[0].mxu0 %v2829
        %v2938 = vpop.f32.mrb[0].mxu0
        %v2939 = vadd.f32 0.0, %v2938
        %v2940 = vpop.f32.mrb[0].mxu0
        %v2941 = vpop.f32.mrb[0].mxu0
        %v2942 = vadd.f32 0.0, %v2941
        %v2943 = vpop.f32.mrb[0].mxu0
        %2944 = vmatprep.mubr.bf16.mxu0 0
        %2945 = vmatmul.mubr.bf16.gmra.mrb[0].mxu0 %v2832
        %v2946 = vpop.f32.mrb[0].mxu0
        %v2947 = vadd.f32 0.0, %v2946
        %v2948 = vpop.f32.mrb[0].mxu0
        %v2949 = vpop.f32.mrb[0].mxu0
        %v2950 = vadd.f32 0.0, %v2949
        %v2951 = vpop.f32.mrb[0].mxu0
        %2952 = vmatprep.mubr.bf16.mxu0 0
        %2953 = vmatmul.mubr.bf16.gmra.mrb[0].mxu0 %v2835
        %v2954 = vpop.f32.mrb[0].mxu0
        %v2955 = vadd.f32 0.0, %v2954
        %v2956 = vpop.f32.mrb[0].mxu0
        %v2957 = vpop.f32.mrb[0].mxu0
        %v2958 = vadd.f32 0.0, %v2957
        %v2959 = vpop.f32.mrb[0].mxu0
        %2960 = vmatprep.mubr.bf16.mxu0 0
        %2961 = vmatmul.mubr.bf16.gmra.mrb[0].mxu0 %v2838
        %v2962 = vpop.f32.mrb[0].mxu0
        %v2963 = vadd.f32 0.0, %v2962
        %v2964 = vpop.f32.mrb[0].mxu0
        %v2965 = vpop.f32.mrb[0].mxu0
        %v2966 = vadd.f32 0.0, %v2965
        %v2967 = vpop.f32.mrb[0].mxu0
        %2968 = vmatprep.mubr.bf16.mxu0 0
        %2969 = vmatmul.mubr.bf16.gmra.mrb[0].mxu0 %v2841
        %v2970 = vpop.f32.mrb[0].mxu0
        %v2971 = vadd.f32 0.0, %v2970
        %v2972 = vpop.f32.mrb[0].mxu0
        %v2973 = vpop.f32.mrb[0].mxu0
        %v2974 = vadd.f32 0.0, %v2973
        %v2975 = vpop.f32.mrb[0].mxu0
        %2976 = vmatprep.mubr.bf16.mxu0 0
        %2977 = vmatmul.mubr.bf16.gmra.mrb[0].mxu0 %v2844
        %v2978 = vpop.f32.mrb[0].mxu0
        %v2979 = vadd.f32 0.0, %v2978
        %v2980 = vpop.f32.mrb[0].mxu0
        %v2981 = vpop.f32.mrb[0].mxu0
        %v2982 = vadd.f32 0.0, %v2981
        %v2983 = vpop.f32.mrb[0].mxu0
        %2984 = vmatprep.mubr.bf16.mxu0 0
        %2985 = vmatmul.mubr.bf16.gmra.mrb[0].mxu0 %v2847
        %v2986 = vpop.f32.mrb[0].mxu0
        %v2987 = vadd.f32 0.0, %v2986
        %v2988 = vpop.f32.mrb[0].mxu0
        %v2989 = vpop.f32.mrb[0].mxu0
        %v2990 = vadd.f32 0.0, %v2989
        %v2991 = vpop.f32.mrb[0].mxu0
        %2992 = vmatprep.mubr.bf16.mxu0 0
        %2993 = vmatmul.mubr.bf16.gmra.mrb[0].mxu0 %v2850
        %v2994 = vpop.f32.mrb[0].mxu0
        %v2995 = vadd.f32 0.0, %v2994
        %v2996 = vpop.f32.mrb[0].mxu0
        %v2997 = vpop.f32.mrb[0].mxu0
        %v2998 = vadd.f32 0.0, %v2997
        %v2999 = vpop.f32.mrb[0].mxu0
        %3000 = vmatprep.mubr.bf16.mxu0 0
        %3001 = vmatmul.mubr.bf16.gmra.mrb[0].mxu0 %v2853
        %v3002 = vpop.f32.mrb[0].mxu0
        %v3003 = vadd.f32 0.0, %v3002
        %v3004 = vpop.f32.mrb[0].mxu0
        %v3005 = vpop.f32.mrb[0].mxu0
        %v3006 = vadd.f32 0.0, %v3005
        %v3007 = vpop.f32.mrb[0].mxu0
        %3008 = vmatprep.mubr.bf16.mxu0 0
        %3009 = vmatmul.mubr.bf16.gmra.mrb[0].mxu0 %v2856
        %v3010 = vpop.f32.mrb[0].mxu0
        %v3011 = vadd.f32 0.0, %v3010
        %v3012 = vpop.f32.mrb[0].mxu0
        %v3013 = vpop.f32.mrb[0].mxu0
        %v3014 = vadd.f32 0.0, %v3013
        %v3015 = vpop.f32.mrb[0].mxu0
        %3016 = vmatprep.mubr.bf16.mxu0 0
        %3017 = vmatmul.mubr.bf16.gmra.mrb[0].mxu0 %v2859
        %v3018 = vpop.f32.mrb[0].mxu0
        %v3019 = vadd.f32 0.0, %v3018
        %v3020 = vpop.f32.mrb[0].mxu0
        %v3021 = vpop.f32.mrb[0].mxu0
        %v3022 = vadd.f32 0.0, %v3021
        %v3023 = vpop.f32.mrb[0].mxu0
        %3024 = vdwg.mxu0
        %v3025 = vadd.f32 %v2699, %v2899
        %v3026 = vadd.f32 %v2700, %v2902
        %v3027 = vadd.f32 %v2701, %v2907
        %v3028 = vadd.f32 %v2702, %v2910
        %v3029 = vadd.f32 %v2703, %v2915
        %v3030 = vadd.f32 %v2704, %v2918
        %v3031 = vadd.f32 %v2705, %v2923
        %v3032 = vadd.f32 %v2706, %v2926
        %v3033 = vadd.f32 %v2707, %v2931
        %v3034 = vadd.f32 %v2708, %v2934
        %v3035 = vadd.f32 %v2709, %v2939
        %v3036 = vadd.f32 %v2710, %v2942
        %v3037 = vadd.f32 %v2711, %v2947
        %v3038 = vadd.f32 %v2712, %v2950
        %v3039 = vadd.f32 %v2713, %v2955
        %v3040 = vadd.f32 %v2714, %v2958
        %v3041 = vadd.f32 %v2715, %v2963
        %v3042 = vadd.f32 %v2716, %v2966
        %v3043 = vadd.f32 %v2717, %v2971
        %v3044 = vadd.f32 %v2718, %v2974
        %v3045 = vadd.f32 %v2719, %v2979
        %v3046 = vadd.f32 %v2720, %v2982
        %v3047 = vadd.f32 %v2721, %v2987
        %v3048 = vadd.f32 %v2722, %v2990
        %v3049 = vadd.f32 %v2723, %v2995
        %v3050 = vadd.f32 %v2724, %v2998
        %v3051 = vadd.f32 %v2725, %v3003
        %v3052 = vadd.f32 %v2726, %v3006
        %v3053 = vadd.f32 %v2727, %v3011
        %v3054 = vadd.f32 %v2728, %v3014
        %v3055 = vadd.f32 %v2729, %v3019
        %v3056 = vadd.f32 %v2730, %v3022
        %v3057 = vld [vmem:[%s356 + $0xc] sm:$0xf]
        %v3058 = vld [vmem:[%s356 + $0x10] sm:$0xf]
        %v3059 = vld [vmem:[%s356 + $0x14] sm:$0xf]
        %v3060 = vld [vmem:[%s356 + $0x18] sm:$0xf]
        %v3061 = vld [vmem:[%s356 + $0x1c] sm:$0xf]
        %v3062 = vld [vmem:[%s356 + $0x20] sm:$0xf]
        %v3063 = vld [vmem:[%s356 + $0x24] sm:$0xf]
        %v3064 = vld [vmem:[%s356 + $0x28] sm:$0xf]
        %v3065 = vld [vmem:[%s356 + $0x2c] sm:$0xf]
        %v3066 = vld [vmem:[%s356 + $0x30] sm:$0xf]
        %v3067 = vld [vmem:[%s356 + $0x34] sm:$0xf]
        %v3068 = vld [vmem:[%s356 + $0x38] sm:$0xf]
        %v3069 = vld [vmem:[%s356 + $0x3c] sm:$0xf]
        %v3070 = vld [vmem:[%s356 + $0x40] sm:$0xf]
        %v3071 = vld [vmem:[%s356 + $0x44] sm:$0xf]
        %v3072 = vld [vmem:[%s356 + $0x48] sm:$0xf]
        %v3073 = vld [vmem:[%s356 + $0x4c] sm:$0xf]
        %v3074 = vld [vmem:[%s356 + $0x50] sm:$0xf]
        %v3075 = vld [vmem:[%s356 + $0x54] sm:$0xf]
        %v3076 = vld [vmem:[%s356 + $0x58] sm:$0xf]
        %v3077 = vld [vmem:[%s356 + $0x5c] sm:$0xf]
        %v3078 = vld [vmem:[%s356 + $0x60] sm:$0xf]
        %v3079 = vld [vmem:[%s356 + $0x64] sm:$0xf]
        %v3080 = vld [vmem:[%s356 + $0x68] sm:$0xf]
        %v3081 = vld [vmem:[%s356 + $0x6c] sm:$0xf]
        %v3082 = vld [vmem:[%s356 + $0x70] sm:$0xf]
        %v3083 = vld [vmem:[%s356 + $0x74] sm:$0xf]
        %v3084 = vld [vmem:[%s356 + $0x78] sm:$0xf]
        %v3085 = vld [vmem:[%s356 + $0x7c] sm:$0xf]
        %v3086 = vld [vmem:[%s356 + $0x80] sm:$0xf]
        %v3087 = vld [vmem:[%s356 + $0x84] sm:$0xf]
        %v3088 = vld [vmem:[%s356 + $0x88] sm:$0xf]
        %v3089 = vld [vmem:[%s356 + $0x8c] sm:$0x1]
        %v3090 = vunpack.c.l.bf16 %v3057
        %v3091 = vunpack.c.l.bf16 %v3058
        %v3092 = vunpack.c.l.bf16 %v3059
        %v3093 = vunpack.c.l.bf16 %v3060
        %v3094 = vunpack.c.l.bf16 %v3061
        %v3095 = vunpack.c.l.bf16 %v3062
        %v3096 = vunpack.c.l.bf16 %v3063
        %v3097 = vunpack.c.l.bf16 %v3064
        %v3098 = vunpack.c.l.bf16 %v3065
        %v3099 = vunpack.c.l.bf16 %v3066
        %v3100 = vunpack.c.l.bf16 %v3067
        %v3101 = vunpack.c.l.bf16 %v3068
        %v3102 = vunpack.c.l.bf16 %v3069
        %v3103 = vunpack.c.l.bf16 %v3070
        %v3104 = vunpack.c.l.bf16 %v3071
        %v3105 = vunpack.c.l.bf16 %v3072
        %v3106 = vunpack.c.l.bf16 %v3073
        %v3107 = vunpack.c.l.bf16 %v3074
        %v3108 = vunpack.c.l.bf16 %v3075
        %v3109 = vunpack.c.l.bf16 %v3076
        %v3110 = vunpack.c.l.bf16 %v3077
        %v3111 = vunpack.c.l.bf16 %v3078
        %v3112 = vunpack.c.l.bf16 %v3079
        %v3113 = vunpack.c.l.bf16 %v3080
        %v3114 = vunpack.c.l.bf16 %v3081
        %v3115 = vunpack.c.l.bf16 %v3082
        %v3116 = vunpack.c.l.bf16 %v3083
        %v3117 = vunpack.c.l.bf16 %v3084
        %v3118 = vunpack.c.l.bf16 %v3085
        %v3119 = vunpack.c.l.bf16 %v3086
        %v3120 = vunpack.c.l.bf16 %v3087
        %v3121 = vunpack.c.l.bf16 %v3088
        %v3122 = vunpack.c.l.bf16 %v3089
        %v3123 = vmul.f32 %v3090, %v1692
        %v3124 = vmul.f32 %v3091, %v1694
        %v3125 = vmul.f32 %v3092, %v1696
        %v3126 = vmul.f32 %v3093, %v1698
        %v3127 = vmul.f32 %v3094, %v1700
        %v3128 = vmul.f32 %v3095, %v1702
        %v3129 = vmul.f32 %v3096, %v1704
        %v3130 = vmul.f32 %v3097, %v1706
        %v3131 = vmul.f32 %v3098, %v1708
        %v3132 = vmul.f32 %v3099, %v1710
        %v3133 = vmul.f32 %v3100, %v1712
        %v3134 = vmul.f32 %v3101, %v1714
        %v3135 = vmul.f32 %v3102, %v1716
        %v3136 = vmul.f32 %v3103, %v1718
        %v3137 = vmul.f32 %v3104, %v1720
        %v3138 = vmul.f32 %v3105, %v1722
        %v3139 = vmul.f32 %v3106, %v1724
        %v3140 = vmul.f32 %v3107, %v1726
        %v3141 = vmul.f32 %v3108, %v1728
        %v3142 = vmul.f32 %v3109, %v1730
        %v3143 = vmul.f32 %v3110, %v1732
        %v3144 = vmul.f32 %v3111, %v1734
        %v3145 = vmul.f32 %v3112, %v1736
        %v3146 = vmul.f32 %v3113, %v1738
        %v3147 = vmul.f32 %v3114, %v1740
        %v3148 = vmul.f32 %v3115, %v1742
        %v3149 = vmul.f32 %v3116, %v1744
        %v3150 = vmul.f32 %v3117, %v1746
        %v3151 = vmul.f32 %v3118, %v1748
        %v3152 = vmul.f32 %v3119, %v1750
        %v3153 = vmul.f32 %v3120, %v1752
        %v3154 = vmul.f32 %v3121, %v1754
        %v3155 = vmul.f32 %v3122, %v1753
        %v3156 = vpack.c.bf16 %v3124, %v3123
        %v3157 = vpack.c.bf16 %v3126, %v3125
        %v3158 = vpack.c.bf16 %v3128, %v3127
        %v3159 = vpack.c.bf16 %v3130, %v3129
        %v3160 = vpack.c.bf16 %v3132, %v3131
        %v3161 = vpack.c.bf16 %v3134, %v3133
        %v3162 = vpack.c.bf16 %v3136, %v3135
        %v3163 = vpack.c.bf16 %v3138, %v3137
        %v3164 = vpack.c.bf16 %v3140, %v3139
        %v3165 = vpack.c.bf16 %v3142, %v3141
        %v3166 = vpack.c.bf16 %v3144, %v3143
        %v3167 = vpack.c.bf16 %v3146, %v3145
        %v3168 = vpack.c.bf16 %v3148, %v3147
        %v3169 = vpack.c.bf16 %v3150, %v3149
        %v3170 = vpack.c.bf16 %v3152, %v3151
        %v3171 = vpack.c.bf16 %v3154, %v3153
        %v3172 = vpack.c.bf16 %v3155, %v3155
        %s3173 = scalar_lea.vmem %s2, 20
        %v3174 = vld [vmem:[%s3173] sm:$0xf]
        %v3176 = vshrl.u32 %v3156, 16
        %v3178 = vshll.u32 %v3156, 16
        %v3180 = vrot.slane %v3178, 1
        %v3181 = vor.u32 %v3176, %v3180
        %v3183 = vshll.u32 %v3157, 16
        %v3185 = vrot.slane %v3183, 1
        %v3186 = vsel %vm1840, %v3181, %v3185
        %v3187 = vshrl.u32 %v3157, 16
        %v3189 = vor.u32 %v3187, %v3185
        %v3191 = vshll.u32 %v3158, 16
        %v3193 = vrot.slane %v3191, 1
        %v3194 = vsel %vm1840, %v3189, %v3193
        %v3195 = vshrl.u32 %v3158, 16
        %v3197 = vor.u32 %v3195, %v3193
        %v3199 = vshll.u32 %v3159, 16
        %v3201 = vrot.slane %v3199, 1
        %v3202 = vsel %vm1840, %v3197, %v3201
        %v3203 = vshrl.u32 %v3159, 16
        %v3205 = vor.u32 %v3203, %v3201
        %v3207 = vshll.u32 %v3160, 16
        %v3209 = vrot.slane %v3207, 1
        %v3210 = vsel %vm1840, %v3205, %v3209
        %v3211 = vshrl.u32 %v3160, 16
        %v3213 = vor.u32 %v3211, %v3209
        %v3215 = vshll.u32 %v3161, 16
        %v3217 = vrot.slane %v3215, 1
        %v3218 = vsel %vm1840, %v3213, %v3217
        %v3219 = vshrl.u32 %v3161, 16
        %v3221 = vor.u32 %v3219, %v3217
        %v3223 = vshll.u32 %v3162, 16
        %v3225 = vrot.slane %v3223, 1
        %v3226 = vsel %vm1840, %v3221, %v3225
        %v3227 = vshrl.u32 %v3162, 16
        %v3229 = vor.u32 %v3227, %v3225
        %v3231 = vshll.u32 %v3163, 16
        %v3233 = vrot.slane %v3231, 1
        %v3234 = vsel %vm1840, %v3229, %v3233
        %v3235 = vshrl.u32 %v3163, 16
        %v3237 = vor.u32 %v3235, %v3233
        %v3239 = vshll.u32 %v3164, 16
        %v3241 = vrot.slane %v3239, 1
        %v3242 = vsel %vm1840, %v3237, %v3241
        %v3243 = vshrl.u32 %v3164, 16
        %v3245 = vor.u32 %v3243, %v3241
        %v3247 = vshll.u32 %v3165, 16
        %v3249 = vrot.slane %v3247, 1
        %v3250 = vsel %vm1840, %v3245, %v3249
        %v3251 = vshrl.u32 %v3165, 16
        %v3253 = vor.u32 %v3251, %v3249
        %v3255 = vshll.u32 %v3166, 16
        %v3257 = vrot.slane %v3255, 1
        %v3258 = vsel %vm1840, %v3253, %v3257
        %v3259 = vshrl.u32 %v3166, 16
        %v3261 = vor.u32 %v3259, %v3257
        %v3263 = vshll.u32 %v3167, 16
        %v3265 = vrot.slane %v3263, 1
        %v3266 = vsel %vm1840, %v3261, %v3265
        %v3267 = vshrl.u32 %v3167, 16
        %v3269 = vor.u32 %v3267, %v3265
        %v3271 = vshll.u32 %v3168, 16
        %v3273 = vrot.slane %v3271, 1
        %v3274 = vsel %vm1840, %v3269, %v3273
        %v3275 = vshrl.u32 %v3168, 16
        %v3277 = vor.u32 %v3275, %v3273
        %v3279 = vshll.u32 %v3169, 16
        %v3281 = vrot.slane %v3279, 1
        %v3282 = vsel %vm1840, %v3277, %v3281
        %v3283 = vshrl.u32 %v3169, 16
        %v3285 = vor.u32 %v3283, %v3281
        %v3287 = vshll.u32 %v3170, 16
        %v3289 = vrot.slane %v3287, 1
        %v3290 = vsel %vm1840, %v3285, %v3289
        %v3291 = vshrl.u32 %v3170, 16
        %v3293 = vor.u32 %v3291, %v3289
        %v3295 = vshll.u32 %v3171, 16
        %v3297 = vrot.slane %v3295, 1
        %v3298 = vsel %vm1840, %v3293, %v3297
        %v3299 = vshrl.u32 %v3171, 16
        %v3301 = vor.u32 %v3299, %v3297
        %v3303 = vshll.u32 %v3172, 16
        %v3305 = vrot.slane %v3303, 1
        %v3306 = vsel %vm1840, %v3301, %v3305
        %v3308 = vsel %vm925, %v3186, 0
        %v3311 = vsel %vm925, %v3194, 0
        %v3314 = vsel %vm925, %v3202, 0
        %v3317 = vsel %vm925, %v3210, 0
        %v3320 = vsel %vm925, %v3218, 0
        %v3323 = vsel %vm925, %v3226, 0
        %v3326 = vsel %vm925, %v3234, 0
        %v3329 = vsel %vm925, %v3242, 0
        %v3332 = vsel %vm925, %v3250, 0
        %v3335 = vsel %vm925, %v3258, 0
        %v3338 = vsel %vm925, %v3266, 0
        %v3341 = vsel %vm925, %v3274, 0
        %v3344 = vsel %vm925, %v3282, 0
        %v3347 = vsel %vm925, %v3290, 0
        %v3350 = vsel %vm925, %v3298, 0
        %v3353 = vsel %vm925, %v3306, 0
        %v3356 = vsel %vm974, %v3174, 0
        %3358 = vmatprep.subr.bf16.mxu0 0
        %3359 = vmatpush1.bf16.msra.mxu0 %v3356
        %3360 = vmatprep.subr.bf16.mxu0 0
        %3361 = vmatpush1.bf16.msra.mxu0 0
        %3362 = vmatprep.subr.bf16.mxu0 0
        %3363 = vmatpush1.bf16.msra.mxu0 0
        %3364 = vmatprep.subr.bf16.mxu0 0
        %3365 = vmatpush1.bf16.msra.mxu0 0
        %3366 = vmatprep.subr.bf16.mxu0 0
        %3367 = vmatpush1.bf16.msra.mxu0 0
        %3368 = vmatprep.subr.bf16.mxu0 0
        %3369 = vmatpush1.bf16.msra.mxu0 0
        %3370 = vmatprep.subr.bf16.mxu0 0
        %3371 = vmatpush1.bf16.msra.mxu0 0
        %3372 = vmatprep.subr.bf16.mxu0 0
        %3373 = vmatpush1.bf16.msra.mxu0 0
        %3374 = vmatprep.subr.bf16.mxu0 0
        %3375 = vmatpush1.bf16.msra.mxu0 0
        %3376 = vmatprep.subr.bf16.mxu0 0
        %3377 = vmatpush1.bf16.msra.mxu0 0
        %3378 = vmatprep.subr.bf16.mxu0 0
        %3379 = vmatpush1.bf16.msra.mxu0 0
        %3380 = vmatprep.subr.bf16.mxu0 0
        %3381 = vmatpush1.bf16.msra.mxu0 0
        %3382 = vmatprep.subr.bf16.mxu0 0
        %3383 = vmatpush1.bf16.msra.mxu0 0
        %3384 = vmatprep.subr.bf16.mxu0 0
        %3385 = vmatpush1.bf16.msra.mxu0 0
        %3386 = vmatprep.subr.bf16.mxu0 0
        %3387 = vmatpush1.bf16.msra.mxu0 0
        %3388 = vmatprep.subr.bf16.mxu0 0
        %3389 = vmatpush1.bf16.msra.mxu0 0
        %3390 = vmatprep.mubr.bf16.mxu0 0
        %3391 = vmatmul.mubr.bf16.gmra.mrb[0].mxu0 %v3308
        %v3392 = vpop.f32.mrb[0].mxu0
        %v3393 = vadd.f32 0.0, %v3392
        %v3394 = vpop.f32.mrb[0].mxu0
        %v3395 = vpop.f32.mrb[0].mxu0
        %v3396 = vadd.f32 0.0, %v3395
        %v3397 = vpop.f32.mrb[0].mxu0
        %3398 = vmatprep.mubr.bf16.mxu0 0
        %3399 = vmatmul.mubr.bf16.gmra.mrb[0].mxu0 %v3311
        %v3400 = vpop.f32.mrb[0].mxu0
        %v3401 = vadd.f32 0.0, %v3400
        %v3402 = vpop.f32.mrb[0].mxu0
        %v3403 = vpop.f32.mrb[0].mxu0
        %v3404 = vadd.f32 0.0, %v3403
        %v3405 = vpop.f32.mrb[0].mxu0
        %3406 = vmatprep.mubr.bf16.mxu0 0
        %3407 = vmatmul.mubr.bf16.gmra.mrb[0].mxu0 %v3314
        %v3408 = vpop.f32.mrb[0].mxu0
        %v3409 = vadd.f32 0.0, %v3408
        %v3410 = vpop.f32.mrb[0].mxu0
        %v3411 = vpop.f32.mrb[0].mxu0
        %v3412 = vadd.f32 0.0, %v3411
        %v3413 = vpop.f32.mrb[0].mxu0
        %3414 = vmatprep.mubr.bf16.mxu0 0
        %3415 = vmatmul.mubr.bf16.gmra.mrb[0].mxu0 %v3317
        %v3416 = vpop.f32.mrb[0].mxu0
        %v3417 = vadd.f32 0.0, %v3416
        %v3418 = vpop.f32.mrb[0].mxu0
        %v3419 = vpop.f32.mrb[0].mxu0
        %v3420 = vadd.f32 0.0, %v3419
        %v3421 = vpop.f32.mrb[0].mxu0
        %3422 = vmatprep.mubr.bf16.mxu0 0
        %3423 = vmatmul.mubr.bf16.gmra.mrb[0].mxu0 %v3320
        %v3424 = vpop.f32.mrb[0].mxu0
        %v3425 = vadd.f32 0.0, %v3424
        %v3426 = vpop.f32.mrb[0].mxu0
        %v3427 = vpop.f32.mrb[0].mxu0
        %v3428 = vadd.f32 0.0, %v3427
        %v3429 = vpop.f32.mrb[0].mxu0
        %3430 = vmatprep.mubr.bf16.mxu0 0
        %3431 = vmatmul.mubr.bf16.gmra.mrb[0].mxu0 %v3323
        %v3432 = vpop.f32.mrb[0].mxu0
        %v3433 = vadd.f32 0.0, %v3432
        %v3434 = vpop.f32.mrb[0].mxu0
        %v3435 = vpop.f32.mrb[0].mxu0
        %v3436 = vadd.f32 0.0, %v3435
        %v3437 = vpop.f32.mrb[0].mxu0
        %3438 = vmatprep.mubr.bf16.mxu0 0
        %3439 = vmatmul.mubr.bf16.gmra.mrb[0].mxu0 %v3326
        %v3440 = vpop.f32.mrb[0].mxu0
        %v3441 = vadd.f32 0.0, %v3440
        %v3442 = vpop.f32.mrb[0].mxu0
        %v3443 = vpop.f32.mrb[0].mxu0
        %v3444 = vadd.f32 0.0, %v3443
        %v3445 = vpop.f32.mrb[0].mxu0
        %3446 = vmatprep.mubr.bf16.mxu0 0
        %3447 = vmatmul.mubr.bf16.gmra.mrb[0].mxu0 %v3329
        %v3448 = vpop.f32.mrb[0].mxu0
        %v3449 = vadd.f32 0.0, %v3448
        %v3450 = vpop.f32.mrb[0].mxu0
        %v3451 = vpop.f32.mrb[0].mxu0
        %v3452 = vadd.f32 0.0, %v3451
        %v3453 = vpop.f32.mrb[0].mxu0
        %3454 = vmatprep.mubr.bf16.mxu0 0
        %3455 = vmatmul.mubr.bf16.gmra.mrb[0].mxu0 %v3332
        %v3456 = vpop.f32.mrb[0].mxu0
        %v3457 = vadd.f32 0.0, %v3456
        %v3458 = vpop.f32.mrb[0].mxu0
        %v3459 = vpop.f32.mrb[0].mxu0
        %v3460 = vadd.f32 0.0, %v3459
        %v3461 = vpop.f32.mrb[0].mxu0
        %3462 = vmatprep.mubr.bf16.mxu0 0
        %3463 = vmatmul.mubr.bf16.gmra.mrb[0].mxu0 %v3335
        %v3464 = vpop.f32.mrb[0].mxu0
        %v3465 = vadd.f32 0.0, %v3464
        %v3466 = vpop.f32.mrb[0].mxu0
        %v3467 = vpop.f32.mrb[0].mxu0
        %v3468 = vadd.f32 0.0, %v3467
        %v3469 = vpop.f32.mrb[0].mxu0
        %3470 = vmatprep.mubr.bf16.mxu0 0
        %3471 = vmatmul.mubr.bf16.gmra.mrb[0].mxu0 %v3338
        %v3472 = vpop.f32.mrb[0].mxu0
        %v3473 = vadd.f32 0.0, %v3472
        %v3474 = vpop.f32.mrb[0].mxu0
        %v3475 = vpop.f32.mrb[0].mxu0
        %v3476 = vadd.f32 0.0, %v3475
        %v3477 = vpop.f32.mrb[0].mxu0
        %3478 = vmatprep.mubr.bf16.mxu0 0
        %3479 = vmatmul.mubr.bf16.gmra.mrb[0].mxu0 %v3341
        %v3480 = vpop.f32.mrb[0].mxu0
        %v3481 = vadd.f32 0.0, %v3480
        %v3482 = vpop.f32.mrb[0].mxu0
        %v3483 = vpop.f32.mrb[0].mxu0
        %v3484 = vadd.f32 0.0, %v3483
        %v3485 = vpop.f32.mrb[0].mxu0
        %3486 = vmatprep.mubr.bf16.mxu0 0
        %3487 = vmatmul.mubr.bf16.gmra.mrb[0].mxu0 %v3344
        %v3488 = vpop.f32.mrb[0].mxu0
        %v3489 = vadd.f32 0.0, %v3488
        %v3490 = vpop.f32.mrb[0].mxu0
        %v3491 = vpop.f32.mrb[0].mxu0
        %v3492 = vadd.f32 0.0, %v3491
        %v3493 = vpop.f32.mrb[0].mxu0
        %3494 = vmatprep.mubr.bf16.mxu0 0
        %3495 = vmatmul.mubr.bf16.gmra.mrb[0].mxu0 %v3347
        %v3496 = vpop.f32.mrb[0].mxu0
        %v3497 = vadd.f32 0.0, %v3496
        %v3498 = vpop.f32.mrb[0].mxu0
        %v3499 = vpop.f32.mrb[0].mxu0
        %v3500 = vadd.f32 0.0, %v3499
        %v3501 = vpop.f32.mrb[0].mxu0
        %3502 = vmatprep.mubr.bf16.mxu0 0
        %3503 = vmatmul.mubr.bf16.gmra.mrb[0].mxu0 %v3350
        %v3504 = vpop.f32.mrb[0].mxu0
        %v3505 = vadd.f32 0.0, %v3504
        %v3506 = vpop.f32.mrb[0].mxu0
        %v3507 = vpop.f32.mrb[0].mxu0
        %v3508 = vadd.f32 0.0, %v3507
        %v3509 = vpop.f32.mrb[0].mxu0
        %3510 = vmatprep.mubr.bf16.mxu0 0
        %3511 = vmatmul.mubr.bf16.gmra.mrb[0].mxu0 %v3353
        %v3512 = vpop.f32.mrb[0].mxu0
        %v3513 = vadd.f32 0.0, %v3512
        %v3514 = vpop.f32.mrb[0].mxu0
        %v3515 = vpop.f32.mrb[0].mxu0
        %v3516 = vadd.f32 0.0, %v3515
        %v3517 = vpop.f32.mrb[0].mxu0
        %3518 = vdwg.mxu0
        %v3519 = vadd.f32 %v3025, %v3393
        %v3520 = vadd.f32 %v3026, %v3396
        %v3521 = vadd.f32 %v3027, %v3401
        %v3522 = vadd.f32 %v3028, %v3404
        %v3523 = vadd.f32 %v3029, %v3409
        %v3524 = vadd.f32 %v3030, %v3412
        %v3525 = vadd.f32 %v3031, %v3417
        %v3526 = vadd.f32 %v3032, %v3420
        %v3527 = vadd.f32 %v3033, %v3425
        %v3528 = vadd.f32 %v3034, %v3428
        %v3529 = vadd.f32 %v3035, %v3433
        %v3530 = vadd.f32 %v3036, %v3436
        %v3531 = vadd.f32 %v3037, %v3441
        %v3532 = vadd.f32 %v3038, %v3444
        %v3533 = vadd.f32 %v3039, %v3449
        %v3534 = vadd.f32 %v3040, %v3452
        %v3535 = vadd.f32 %v3041, %v3457
        %v3536 = vadd.f32 %v3042, %v3460
        %v3537 = vadd.f32 %v3043, %v3465
        %v3538 = vadd.f32 %v3044, %v3468
        %v3539 = vadd.f32 %v3045, %v3473
        %v3540 = vadd.f32 %v3046, %v3476
        %v3541 = vadd.f32 %v3047, %v3481
        %v3542 = vadd.f32 %v3048, %v3484
        %v3543 = vadd.f32 %v3049, %v3489
        %v3544 = vadd.f32 %v3050, %v3492
        %v3545 = vadd.f32 %v3051, %v3497
        %v3546 = vadd.f32 %v3052, %v3500
        %v3547 = vadd.f32 %v3053, %v3505
        %v3548 = vadd.f32 %v3054, %v3508
        %v3549 = vadd.f32 %v3055, %v3513
        %v3550 = vadd.f32 %v3056, %v3516
        %v3551 = vld [vmem:[%s356 + $0x10] sm:$0x8]
        %v3552 = vld [vmem:[%s356 + $0x14] sm:$0xf]
        %v3553 = vld [vmem:[%s356 + $0x18] sm:$0xf]
        %v3554 = vld [vmem:[%s356 + $0x1c] sm:$0xf]
        %v3555 = vld [vmem:[%s356 + $0x20] sm:$0xf]
        %v3556 = vld [vmem:[%s356 + $0x24] sm:$0xf]
        %v3557 = vld [vmem:[%s356 + $0x28] sm:$0xf]
        %v3558 = vld [vmem:[%s356 + $0x2c] sm:$0xf]
        %v3559 = vld [vmem:[%s356 + $0x30] sm:$0xf]
        %v3560 = vld [vmem:[%s356 + $0x34] sm:$0xf]
        %v3561 = vld [vmem:[%s356 + $0x38] sm:$0xf]
        %v3562 = vld [vmem:[%s356 + $0x3c] sm:$0xf]
        %v3563 = vld [vmem:[%s356 + $0x40] sm:$0xf]
        %v3564 = vld [vmem:[%s356 + $0x44] sm:$0xf]
        %v3565 = vld [vmem:[%s356 + $0x48] sm:$0xf]
        %v3566 = vld [vmem:[%s356 + $0x4c] sm:$0xf]
        %v3567 = vld [vmem:[%s356 + $0x50] sm:$0xf]
        %v3568 = vld [vmem:[%s356 + $0x54] sm:$0xf]
        %v3569 = vld [vmem:[%s356 + $0x58] sm:$0xf]
        %v3570 = vld [vmem:[%s356 + $0x5c] sm:$0xf]
        %v3571 = vld [vmem:[%s356 + $0x60] sm:$0xf]
        %v3572 = vld [vmem:[%s356 + $0x64] sm:$0xf]
        %v3573 = vld [vmem:[%s356 + $0x68] sm:$0xf]
        %v3574 = vld [vmem:[%s356 + $0x6c] sm:$0xf]
        %v3575 = vld [vmem:[%s356 + $0x70] sm:$0xf]
        %v3576 = vld [vmem:[%s356 + $0x74] sm:$0xf]
        %v3577 = vld [vmem:[%s356 + $0x78] sm:$0xf]
        %v3578 = vld [vmem:[%s356 + $0x7c] sm:$0xf]
        %v3579 = vld [vmem:[%s356 + $0x80] sm:$0xf]
        %v3580 = vld [vmem:[%s356 + $0x84] sm:$0xf]
        %v3581 = vld [vmem:[%s356 + $0x88] sm:$0xf]
        %v3582 = vld [vmem:[%s356 + $0x8c] sm:$0xf]
        %v3583 = vld [vmem:[%s356 + $0x90] sm:$0xf]
        %v3584 = vunpack.c.l.bf16 %v3551
        %v3585 = vunpack.c.l.bf16 %v3552
        %v3586 = vunpack.c.l.bf16 %v3553
        %v3587 = vunpack.c.l.bf16 %v3554
        %v3588 = vunpack.c.l.bf16 %v3555
        %v3589 = vunpack.c.l.bf16 %v3556
        %v3590 = vunpack.c.l.bf16 %v3557
        %v3591 = vunpack.c.l.bf16 %v3558
        %v3592 = vunpack.c.l.bf16 %v3559
        %v3593 = vunpack.c.l.bf16 %v3560
        %v3594 = vunpack.c.l.bf16 %v3561
        %v3595 = vunpack.c.l.bf16 %v3562
        %v3596 = vunpack.c.l.bf16 %v3563
        %v3597 = vunpack.c.l.bf16 %v3564
        %v3598 = vunpack.c.l.bf16 %v3565
        %v3599 = vunpack.c.l.bf16 %v3566
        %v3600 = vunpack.c.l.bf16 %v3567
        %v3601 = vunpack.c.l.bf16 %v3568
        %v3602 = vunpack.c.l.bf16 %v3569
        %v3603 = vunpack.c.l.bf16 %v3570
        %v3604 = vunpack.c.l.bf16 %v3571
        %v3605 = vunpack.c.l.bf16 %v3572
        %v3606 = vunpack.c.l.bf16 %v3573
        %v3607 = vunpack.c.l.bf16 %v3574
        %v3608 = vunpack.c.l.bf16 %v3575
        %v3609 = vunpack.c.l.bf16 %v3576
        %v3610 = vunpack.c.l.bf16 %v3577
        %v3611 = vunpack.c.l.bf16 %v3578
        %v3612 = vunpack.c.l.bf16 %v3579
        %v3613 = vunpack.c.l.bf16 %v3580
        %v3614 = vunpack.c.l.bf16 %v3581
        %v3615 = vunpack.c.l.bf16 %v3582
        %v3616 = vunpack.c.l.bf16 %v3583
        %v3617 = vmul.f32 %v3584, %v625
        %v3618 = vmul.f32 %v3585, %v627
        %v3619 = vmul.f32 %v3586, %v629
        %v3620 = vmul.f32 %v3587, %v631
        %v3621 = vmul.f32 %v3588, %v633
        %v3622 = vmul.f32 %v3589, %v635
        %v3623 = vmul.f32 %v3590, %v637
        %v3624 = vmul.f32 %v3591, %v639
        %v3625 = vmul.f32 %v3592, %v641
        %v3626 = vmul.f32 %v3593, %v643
        %v3627 = vmul.f32 %v3594, %v645
        %v3628 = vmul.f32 %v3595, %v647
        %v3629 = vmul.f32 %v3596, %v649
        %v3630 = vmul.f32 %v3597, %v651
        %v3631 = vmul.f32 %v3598, %v653
        %v3632 = vmul.f32 %v3599, %v655
        %v3633 = vmul.f32 %v3600, %v657
        %v3634 = vmul.f32 %v3601, %v659
        %v3635 = vmul.f32 %v3602, %v661
        %v3636 = vmul.f32 %v3603, %v663
        %v3637 = vmul.f32 %v3604, %v665
        %v3638 = vmul.f32 %v3605, %v667
        %v3639 = vmul.f32 %v3606, %v669
        %v3640 = vmul.f32 %v3607, %v671
        %v3641 = vmul.f32 %v3608, %v673
        %v3642 = vmul.f32 %v3609, %v675
        %v3643 = vmul.f32 %v3610, %v677
        %v3644 = vmul.f32 %v3611, %v679
        %v3645 = vmul.f32 %v3612, %v681
        %v3646 = vmul.f32 %v3613, %v683
        %v3647 = vmul.f32 %v3614, %v685
        %v3648 = vmul.f32 %v3615, %v687
        %v3649 = vmul.f32 %v3616, %v686
        %v3650 = vpack.c.bf16 %v3618, %v3617
        %v3651 = vpack.c.bf16 %v3620, %v3619
        %v3652 = vpack.c.bf16 %v3622, %v3621
        %v3653 = vpack.c.bf16 %v3624, %v3623
        %v3654 = vpack.c.bf16 %v3626, %v3625
        %v3655 = vpack.c.bf16 %v3628, %v3627
        %v3656 = vpack.c.bf16 %v3630, %v3629
        %v3657 = vpack.c.bf16 %v3632, %v3631
        %v3658 = vpack.c.bf16 %v3634, %v3633
        %v3659 = vpack.c.bf16 %v3636, %v3635
        %v3660 = vpack.c.bf16 %v3638, %v3637
        %v3661 = vpack.c.bf16 %v3640, %v3639
        %v3662 = vpack.c.bf16 %v3642, %v3641
        %v3663 = vpack.c.bf16 %v3644, %v3643
        %v3664 = vpack.c.bf16 %v3646, %v3645
        %v3665 = vpack.c.bf16 %v3648, %v3647
        %v3666 = vpack.c.bf16 %v3649, %v3649
        %s3667 = scalar_lea.vmem %s2, 24
        %v3668 = vld [vmem:[%s3667] sm:$0xf]
        %v3670 = vshrl.u32 %v3650, 16
        %v3672 = vrot.slane %v3670, 3
        %v3673 = vshll.u32 %v3650, 16
        %v3675 = vrot.slane %v3673, 4
        %v3676 = vor.u32 %v3672, %v3675
        %v3678 = vshrl.u32 %v3651, 16
        %v3680 = vrot.slane %v3678, 3
        %v3681 = vshll.u32 %v3651, 16
        %v3683 = vrot.slane %v3681, 4
        %v3684 = vor.u32 %v3680, %v3683
        %v3685 = vsel %vm772, %v3676, %v3684
        %v3687 = vshrl.u32 %v3652, 16
        %v3689 = vrot.slane %v3687, 3
        %v3690 = vshll.u32 %v3652, 16
        %v3692 = vrot.slane %v3690, 4
        %v3693 = vor.u32 %v3689, %v3692
        %v3694 = vsel %vm772, %v3684, %v3693
        %v3696 = vshrl.u32 %v3653, 16
        %v3698 = vrot.slane %v3696, 3
        %v3699 = vshll.u32 %v3653, 16
        %v3701 = vrot.slane %v3699, 4
        %v3702 = vor.u32 %v3698, %v3701
        %v3703 = vsel %vm772, %v3693, %v3702
        %v3705 = vshrl.u32 %v3654, 16
        %v3707 = vrot.slane %v3705, 3
        %v3708 = vshll.u32 %v3654, 16
        %v3710 = vrot.slane %v3708, 4
        %v3711 = vor.u32 %v3707, %v3710
        %v3712 = vsel %vm772, %v3702, %v3711
        %v3714 = vshrl.u32 %v3655, 16
        %v3716 = vrot.slane %v3714, 3
        %v3717 = vshll.u32 %v3655, 16
        %v3719 = vrot.slane %v3717, 4
        %v3720 = vor.u32 %v3716, %v3719
        %v3721 = vsel %vm772, %v3711, %v3720
        %v3723 = vshrl.u32 %v3656, 16
        %v3725 = vrot.slane %v3723, 3
        %v3726 = vshll.u32 %v3656, 16
        %v3728 = vrot.slane %v3726, 4
        %v3729 = vor.u32 %v3725, %v3728
        %v3730 = vsel %vm772, %v3720, %v3729
        %v3732 = vshrl.u32 %v3657, 16
        %v3734 = vrot.slane %v3732, 3
        %v3735 = vshll.u32 %v3657, 16
        %v3737 = vrot.slane %v3735, 4
        %v3738 = vor.u32 %v3734, %v3737
        %v3739 = vsel %vm772, %v3729, %v3738
        %v3741 = vshrl.u32 %v3658, 16
        %v3743 = vrot.slane %v3741, 3
        %v3744 = vshll.u32 %v3658, 16
        %v3746 = vrot.slane %v3744, 4
        %v3747 = vor.u32 %v3743, %v3746
        %v3748 = vsel %vm772, %v3738, %v3747
        %v3750 = vshrl.u32 %v3659, 16
        %v3752 = vrot.slane %v3750, 3
        %v3753 = vshll.u32 %v3659, 16
        %v3755 = vrot.slane %v3753, 4
        %v3756 = vor.u32 %v3752, %v3755
        %v3757 = vsel %vm772, %v3747, %v3756
        %v3759 = vshrl.u32 %v3660, 16
        %v3761 = vrot.slane %v3759, 3
        %v3762 = vshll.u32 %v3660, 16
        %v3764 = vrot.slane %v3762, 4
        %v3765 = vor.u32 %v3761, %v3764
        %v3766 = vsel %vm772, %v3756, %v3765
        %v3768 = vshrl.u32 %v3661, 16
        %v3770 = vrot.slane %v3768, 3
        %v3771 = vshll.u32 %v3661, 16
        %v3773 = vrot.slane %v3771, 4
        %v3774 = vor.u32 %v3770, %v3773
        %v3775 = vsel %vm772, %v3765, %v3774
        %v3777 = vshrl.u32 %v3662, 16
        %v3779 = vrot.slane %v3777, 3
        %v3780 = vshll.u32 %v3662, 16
        %v3782 = vrot.slane %v3780, 4
        %v3783 = vor.u32 %v3779, %v3782
        %v3784 = vsel %vm772, %v3774, %v3783
        %v3786 = vshrl.u32 %v3663, 16
        %v3788 = vrot.slane %v3786, 3
        %v3789 = vshll.u32 %v3663, 16
        %v3791 = vrot.slane %v3789, 4
        %v3792 = vor.u32 %v3788, %v3791
        %v3793 = vsel %vm772, %v3783, %v3792
        %v3795 = vshrl.u32 %v3664, 16
        %v3797 = vrot.slane %v3795, 3
        %v3798 = vshll.u32 %v3664, 16
        %v3800 = vrot.slane %v3798, 4
        %v3801 = vor.u32 %v3797, %v3800
        %v3802 = vsel %vm772, %v3792, %v3801
        %v3804 = vshrl.u32 %v3665, 16
        %v3806 = vrot.slane %v3804, 3
        %v3807 = vshll.u32 %v3665, 16
        %v3809 = vrot.slane %v3807, 4
        %v3810 = vor.u32 %v3806, %v3809
        %v3811 = vsel %vm772, %v3801, %v3810
        %v3813 = vshrl.u32 %v3666, 16
        %v3815 = vrot.slane %v3813, 3
        %v3816 = vshll.u32 %v3666, 16
        %v3818 = vrot.slane %v3816, 4
        %v3819 = vor.u32 %v3815, %v3818
        %v3820 = vsel %vm772, %v3810, %v3819
        %v3822 = vsel %vm925, %v3685, 0
        %v3825 = vsel %vm925, %v3694, 0
        %v3828 = vsel %vm925, %v3703, 0
        %v3831 = vsel %vm925, %v3712, 0
        %v3834 = vsel %vm925, %v3721, 0
        %v3837 = vsel %vm925, %v3730, 0
        %v3840 = vsel %vm925, %v3739, 0
        %v3843 = vsel %vm925, %v3748, 0
        %v3846 = vsel %vm925, %v3757, 0
        %v3849 = vsel %vm925, %v3766, 0
        %v3852 = vsel %vm925, %v3775, 0
        %v3855 = vsel %vm925, %v3784, 0
        %v3858 = vsel %vm925, %v3793, 0
        %v3861 = vsel %vm925, %v3802, 0
        %v3864 = vsel %vm925, %v3811, 0
        %v3867 = vsel %vm925, %v3820, 0
        %v3870 = vsel %vm974, %v3668, 0
        %3872 = vmatprep.subr.bf16.mxu0 0
        %3873 = vmatpush1.bf16.msra.mxu0 %v3870
        %3874 = vmatprep.subr.bf16.mxu0 0
        %3875 = vmatpush1.bf16.msra.mxu0 0
        %3876 = vmatprep.subr.bf16.mxu0 0
        %3877 = vmatpush1.bf16.msra.mxu0 0
        %3878 = vmatprep.subr.bf16.mxu0 0
        %3879 = vmatpush1.bf16.msra.mxu0 0
        %3880 = vmatprep.subr.bf16.mxu0 0
        %3881 = vmatpush1.bf16.msra.mxu0 0
        %3882 = vmatprep.subr.bf16.mxu0 0
        %3883 = vmatpush1.bf16.msra.mxu0 0
        %3884 = vmatprep.subr.bf16.mxu0 0
        %3885 = vmatpush1.bf16.msra.mxu0 0
        %3886 = vmatprep.subr.bf16.mxu0 0
        %3887 = vmatpush1.bf16.msra.mxu0 0
        %3888 = vmatprep.subr.bf16.mxu0 0
        %3889 = vmatpush1.bf16.msra.mxu0 0
        %3890 = vmatprep.subr.bf16.mxu0 0
        %3891 = vmatpush1.bf16.msra.mxu0 0
        %3892 = vmatprep.subr.bf16.mxu0 0
        %3893 = vmatpush1.bf16.msra.mxu0 0
        %3894 = vmatprep.subr.bf16.mxu0 0
        %3895 = vmatpush1.bf16.msra.mxu0 0
        %3896 = vmatprep.subr.bf16.mxu0 0
        %3897 = vmatpush1.bf16.msra.mxu0 0
        %3898 = vmatprep.subr.bf16.mxu0 0
        %3899 = vmatpush1.bf16.msra.mxu0 0
        %3900 = vmatprep.subr.bf16.mxu0 0
        %3901 = vmatpush1.bf16.msra.mxu0 0
        %3902 = vmatprep.subr.bf16.mxu0 0
        %3903 = vmatpush1.bf16.msra.mxu0 0
        %3904 = vmatprep.mubr.bf16.mxu0 0
        %3905 = vmatmul.mubr.bf16.gmra.mrb[0].mxu0 %v3822
        %v3906 = vpop.f32.mrb[0].mxu0
        %v3907 = vadd.f32 0.0, %v3906
        %v3908 = vpop.f32.mrb[0].mxu0
        %v3909 = vpop.f32.mrb[0].mxu0
        %v3910 = vadd.f32 0.0, %v3909
        %v3911 = vpop.f32.mrb[0].mxu0
        %3912 = vmatprep.mubr.bf16.mxu0 0
        %3913 = vmatmul.mubr.bf16.gmra.mrb[0].mxu0 %v3825
        %v3914 = vpop.f32.mrb[0].mxu0
        %v3915 = vadd.f32 0.0, %v3914
        %v3916 = vpop.f32.mrb[0].mxu0
        %v3917 = vpop.f32.mrb[0].mxu0
        %v3918 = vadd.f32 0.0, %v3917
        %v3919 = vpop.f32.mrb[0].mxu0
        %3920 = vmatprep.mubr.bf16.mxu0 0
        %3921 = vmatmul.mubr.bf16.gmra.mrb[0].mxu0 %v3828
        %v3922 = vpop.f32.mrb[0].mxu0
        %v3923 = vadd.f32 0.0, %v3922
        %v3924 = vpop.f32.mrb[0].mxu0
        %v3925 = vpop.f32.mrb[0].mxu0
        %v3926 = vadd.f32 0.0, %v3925
        %v3927 = vpop.f32.mrb[0].mxu0
        %3928 = vmatprep.mubr.bf16.mxu0 0
        %3929 = vmatmul.mubr.bf16.gmra.mrb[0].mxu0 %v3831
        %v3930 = vpop.f32.mrb[0].mxu0
        %v3931 = vadd.f32 0.0, %v3930
        %v3932 = vpop.f32.mrb[0].mxu0
        %v3933 = vpop.f32.mrb[0].mxu0
        %v3934 = vadd.f32 0.0, %v3933
        %v3935 = vpop.f32.mrb[0].mxu0
        %3936 = vmatprep.mubr.bf16.mxu0 0
        %3937 = vmatmul.mubr.bf16.gmra.mrb[0].mxu0 %v3834
        %v3938 = vpop.f32.mrb[0].mxu0
        %v3939 = vadd.f32 0.0, %v3938
        %v3940 = vpop.f32.mrb[0].mxu0
        %v3941 = vpop.f32.mrb[0].mxu0
        %v3942 = vadd.f32 0.0, %v3941
        %v3943 = vpop.f32.mrb[0].mxu0
        %3944 = vmatprep.mubr.bf16.mxu0 0
        %3945 = vmatmul.mubr.bf16.gmra.mrb[0].mxu0 %v3837
        %v3946 = vpop.f32.mrb[0].mxu0
        %v3947 = vadd.f32 0.0, %v3946
        %v3948 = vpop.f32.mrb[0].mxu0
        %v3949 = vpop.f32.mrb[0].mxu0
        %v3950 = vadd.f32 0.0, %v3949
        %v3951 = vpop.f32.mrb[0].mxu0
        %3952 = vmatprep.mubr.bf16.mxu0 0
        %3953 = vmatmul.mubr.bf16.gmra.mrb[0].mxu0 %v3840
        %v3954 = vpop.f32.mrb[0].mxu0
        %v3955 = vadd.f32 0.0, %v3954
        %v3956 = vpop.f32.mrb[0].mxu0
        %v3957 = vpop.f32.mrb[0].mxu0
        %v3958 = vadd.f32 0.0, %v3957
        %v3959 = vpop.f32.mrb[0].mxu0
        %3960 = vmatprep.mubr.bf16.mxu0 0
        %3961 = vmatmul.mubr.bf16.gmra.mrb[0].mxu0 %v3843
        %v3962 = vpop.f32.mrb[0].mxu0
        %v3963 = vadd.f32 0.0, %v3962
        %v3964 = vpop.f32.mrb[0].mxu0
        %v3965 = vpop.f32.mrb[0].mxu0
        %v3966 = vadd.f32 0.0, %v3965
        %v3967 = vpop.f32.mrb[0].mxu0
        %3968 = vmatprep.mubr.bf16.mxu0 0
        %3969 = vmatmul.mubr.bf16.gmra.mrb[0].mxu0 %v3846
        %v3970 = vpop.f32.mrb[0].mxu0
        %v3971 = vadd.f32 0.0, %v3970
        %v3972 = vpop.f32.mrb[0].mxu0
        %v3973 = vpop.f32.mrb[0].mxu0
        %v3974 = vadd.f32 0.0, %v3973
        %v3975 = vpop.f32.mrb[0].mxu0
        %3976 = vmatprep.mubr.bf16.mxu0 0
        %3977 = vmatmul.mubr.bf16.gmra.mrb[0].mxu0 %v3849
        %v3978 = vpop.f32.mrb[0].mxu0
        %v3979 = vadd.f32 0.0, %v3978
        %v3980 = vpop.f32.mrb[0].mxu0
        %v3981 = vpop.f32.mrb[0].mxu0
        %v3982 = vadd.f32 0.0, %v3981
        %v3983 = vpop.f32.mrb[0].mxu0
        %3984 = vmatprep.mubr.bf16.mxu0 0
        %3985 = vmatmul.mubr.bf16.gmra.mrb[0].mxu0 %v3852
        %v3986 = vpop.f32.mrb[0].mxu0
        %v3987 = vadd.f32 0.0, %v3986
        %v3988 = vpop.f32.mrb[0].mxu0
        %v3989 = vpop.f32.mrb[0].mxu0
        %v3990 = vadd.f32 0.0, %v3989
        %v3991 = vpop.f32.mrb[0].mxu0
        %3992 = vmatprep.mubr.bf16.mxu0 0
        %3993 = vmatmul.mubr.bf16.gmra.mrb[0].mxu0 %v3855
        %v3994 = vpop.f32.mrb[0].mxu0
        %v3995 = vadd.f32 0.0, %v3994
        %v3996 = vpop.f32.mrb[0].mxu0
        %v3997 = vpop.f32.mrb[0].mxu0
        %v3998 = vadd.f32 0.0, %v3997
        %v3999 = vpop.f32.mrb[0].mxu0
        %4000 = vmatprep.mubr.bf16.mxu0 0
        %4001 = vmatmul.mubr.bf16.gmra.mrb[0].mxu0 %v3858
        %v4002 = vpop.f32.mrb[0].mxu0
        %v4003 = vadd.f32 0.0, %v4002
        %v4004 = vpop.f32.mrb[0].mxu0
        %v4005 = vpop.f32.mrb[0].mxu0
        %v4006 = vadd.f32 0.0, %v4005
        %v4007 = vpop.f32.mrb[0].mxu0
        %4008 = vmatprep.mubr.bf16.mxu0 0
        %4009 = vmatmul.mubr.bf16.gmra.mrb[0].mxu0 %v3861
        %v4010 = vpop.f32.mrb[0].mxu0
        %v4011 = vadd.f32 0.0, %v4010
        %v4012 = vpop.f32.mrb[0].mxu0
        %v4013 = vpop.f32.mrb[0].mxu0
        %v4014 = vadd.f32 0.0, %v4013
        %v4015 = vpop.f32.mrb[0].mxu0
        %4016 = vmatprep.mubr.bf16.mxu0 0
        %4017 = vmatmul.mubr.bf16.gmra.mrb[0].mxu0 %v3864
        %v4018 = vpop.f32.mrb[0].mxu0
        %v4019 = vadd.f32 0.0, %v4018
        %v4020 = vpop.f32.mrb[0].mxu0
        %v4021 = vpop.f32.mrb[0].mxu0
        %v4022 = vadd.f32 0.0, %v4021
        %v4023 = vpop.f32.mrb[0].mxu0
        %4024 = vmatprep.mubr.bf16.mxu0 0
        %4025 = vmatmul.mubr.bf16.gmra.mrb[0].mxu0 %v3867
        %v4026 = vpop.f32.mrb[0].mxu0
        %v4027 = vadd.f32 0.0, %v4026
        %v4028 = vpop.f32.mrb[0].mxu0
        %v4029 = vpop.f32.mrb[0].mxu0
        %v4030 = vadd.f32 0.0, %v4029
        %v4031 = vpop.f32.mrb[0].mxu0
        %4032 = vdwg.mxu0
        %v4033 = vadd.f32 %v3519, %v3907
        %v4034 = vadd.f32 %v3520, %v3910
        %v4035 = vadd.f32 %v3521, %v3915
        %v4036 = vadd.f32 %v3522, %v3918
        %v4037 = vadd.f32 %v3523, %v3923
        %v4038 = vadd.f32 %v3524, %v3926
        %v4039 = vadd.f32 %v3525, %v3931
        %v4040 = vadd.f32 %v3526, %v3934
        %v4041 = vadd.f32 %v3527, %v3939
        %v4042 = vadd.f32 %v3528, %v3942
        %v4043 = vadd.f32 %v3529, %v3947
        %v4044 = vadd.f32 %v3530, %v3950
        %v4045 = vadd.f32 %v3531, %v3955
        %v4046 = vadd.f32 %v3532, %v3958
        %v4047 = vadd.f32 %v3533, %v3963
        %v4048 = vadd.f32 %v3534, %v3966
        %v4049 = vadd.f32 %v3535, %v3971
        %v4050 = vadd.f32 %v3536, %v3974
        %v4051 = vadd.f32 %v3537, %v3979
        %v4052 = vadd.f32 %v3538, %v3982
        %v4053 = vadd.f32 %v3539, %v3987
        %v4054 = vadd.f32 %v3540, %v3990
        %v4055 = vadd.f32 %v3541, %v3995
        %v4056 = vadd.f32 %v3542, %v3998
        %v4057 = vadd.f32 %v3543, %v4003
        %v4058 = vadd.f32 %v3544, %v4006
        %v4059 = vadd.f32 %v3545, %v4011
        %v4060 = vadd.f32 %v3546, %v4014
        %v4061 = vadd.f32 %v3547, %v4019
        %v4062 = vadd.f32 %v3548, %v4022
        %v4063 = vadd.f32 %v3549, %v4027
        %v4064 = vadd.f32 %v3550, %v4030
        %s4065 = scalar_lea.vmem %s2, 28
        %v4066 = vld [vmem:[%s4065] sm:$0xf]
        %v4099 = vunpack.c.l.b16 %v3552
        %v4100 = vunpack.c.l.b16 %v3553
        %v4101 = vunpack.c.l.b16 %v3554
        %v4102 = vunpack.c.l.b16 %v3555
        %v4103 = vunpack.c.l.b16 %v3556
        %v4104 = vunpack.c.l.b16 %v3557
        %v4105 = vunpack.c.l.b16 %v3558
        %v4106 = vunpack.c.l.b16 %v3559
        %v4107 = vunpack.c.l.b16 %v3560
        %v4108 = vunpack.c.l.b16 %v3561
        %v4109 = vunpack.c.l.b16 %v3562
        %v4110 = vunpack.c.l.b16 %v3563
        %v4111 = vunpack.c.l.b16 %v3564
        %v4112 = vunpack.c.l.b16 %v3565
        %v4113 = vunpack.c.l.b16 %v3566
        %v4114 = vunpack.c.l.b16 %v3567
        %v4115 = vunpack.c.l.b16 %v3568
        %v4116 = vunpack.c.l.b16 %v3569
        %v4117 = vunpack.c.l.b16 %v3570
        %v4118 = vunpack.c.l.b16 %v3571
        %v4119 = vunpack.c.l.b16 %v3572
        %v4120 = vunpack.c.l.b16 %v3573
        %v4121 = vunpack.c.l.b16 %v3574
        %v4122 = vunpack.c.l.b16 %v3575
        %v4123 = vunpack.c.l.b16 %v3576
        %v4124 = vunpack.c.l.b16 %v3577
        %v4125 = vunpack.c.l.b16 %v3578
        %v4126 = vunpack.c.l.b16 %v3579
        %v4127 = vunpack.c.l.b16 %v3580
        %v4128 = vunpack.c.l.b16 %v3581
        %v4129 = vunpack.c.l.b16 %v3582
        %v4130 = vunpack.c.l.b16 %v3583
        %v4131 = vpack.c.b16 %v4100, %v4099
        %v4132 = vpack.c.b16 %v4102, %v4101
        %v4133 = vpack.c.b16 %v4104, %v4103
        %v4134 = vpack.c.b16 %v4106, %v4105
        %v4135 = vpack.c.b16 %v4108, %v4107
        %v4136 = vpack.c.b16 %v4110, %v4109
        %v4137 = vpack.c.b16 %v4112, %v4111
        %v4138 = vpack.c.b16 %v4114, %v4113
        %v4139 = vpack.c.b16 %v4116, %v4115
        %v4140 = vpack.c.b16 %v4118, %v4117
        %v4141 = vpack.c.b16 %v4120, %v4119
        %v4142 = vpack.c.b16 %v4122, %v4121
        %v4143 = vpack.c.b16 %v4124, %v4123
        %v4144 = vpack.c.b16 %v4126, %v4125
        %v4145 = vpack.c.b16 %v4128, %v4127
        %v4146 = vpack.c.b16 %v4130, %v4129
        %v4148 = vsel %vm925, %v4131, 0
        %v4151 = vsel %vm925, %v4132, 0
        %v4154 = vsel %vm925, %v4133, 0
        %v4157 = vsel %vm925, %v4134, 0
        %v4160 = vsel %vm925, %v4135, 0
        %v4163 = vsel %vm925, %v4136, 0
        %v4166 = vsel %vm925, %v4137, 0
        %v4169 = vsel %vm925, %v4138, 0
        %v4172 = vsel %vm925, %v4139, 0
        %v4175 = vsel %vm925, %v4140, 0
        %v4178 = vsel %vm925, %v4141, 0
        %v4181 = vsel %vm925, %v4142, 0
        %v4184 = vsel %vm925, %v4143, 0
        %v4187 = vsel %vm925, %v4144, 0
        %v4190 = vsel %vm925, %v4145, 0
        %v4193 = vsel %vm925, %v4146, 0
        %v4196 = vsel %vm974, %v4066, 0
        %4198 = vmatprep.subr.bf16.mxu0 0
        %4199 = vmatpush1.bf16.msra.mxu0 %v4196
        %4200 = vmatprep.subr.bf16.mxu0 0
        %4201 = vmatpush1.bf16.msra.mxu0 0
        %4202 = vmatprep.subr.bf16.mxu0 0
        %4203 = vmatpush1.bf16.msra.mxu0 0
        %4204 = vmatprep.subr.bf16.mxu0 0
        %4205 = vmatpush1.bf16.msra.mxu0 0
        %4206 = vmatprep.subr.bf16.mxu0 0
        %4207 = vmatpush1.bf16.msra.mxu0 0
        %4208 = vmatprep.subr.bf16.mxu0 0
        %4209 = vmatpush1.bf16.msra.mxu0 0
        %4210 = vmatprep.subr.bf16.mxu0 0
        %4211 = vmatpush1.bf16.msra.mxu0 0
        %4212 = vmatprep.subr.bf16.mxu0 0
        %4213 = vmatpush1.bf16.msra.mxu0 0
        %4214 = vmatprep.subr.bf16.mxu0 0
        %4215 = vmatpush1.bf16.msra.mxu0 0
        %4216 = vmatprep.subr.bf16.mxu0 0
        %4217 = vmatpush1.bf16.msra.mxu0 0
        %4218 = vmatprep.subr.bf16.mxu0 0
        %4219 = vmatpush1.bf16.msra.mxu0 0
        %4220 = vmatprep.subr.bf16.mxu0 0
        %4221 = vmatpush1.bf16.msra.mxu0 0
        %4222 = vmatprep.subr.bf16.mxu0 0
        %4223 = vmatpush1.bf16.msra.mxu0 0
        %4224 = vmatprep.subr.bf16.mxu0 0
        %4225 = vmatpush1.bf16.msra.mxu0 0
        %4226 = vmatprep.subr.bf16.mxu0 0
        %4227 = vmatpush1.bf16.msra.mxu0 0
        %4228 = vmatprep.subr.bf16.mxu0 0
        %4229 = vmatpush1.bf16.msra.mxu0 0
        %4230 = vmatprep.mubr.bf16.mxu0 0
        %4231 = vmatmul.mubr.bf16.gmra.mrb[0].mxu0 %v4148
        %v4232 = vpop.f32.mrb[0].mxu0
        %v4233 = vadd.f32 0.0, %v4232
        %v4234 = vpop.f32.mrb[0].mxu0
        %v4235 = vpop.f32.mrb[0].mxu0
        %v4236 = vadd.f32 0.0, %v4235
        %v4237 = vpop.f32.mrb[0].mxu0
        %4238 = vmatprep.mubr.bf16.mxu0 0
        %4239 = vmatmul.mubr.bf16.gmra.mrb[0].mxu0 %v4151
        %v4240 = vpop.f32.mrb[0].mxu0
        %v4241 = vadd.f32 0.0, %v4240
        %v4242 = vpop.f32.mrb[0].mxu0
        %v4243 = vpop.f32.mrb[0].mxu0
        %v4244 = vadd.f32 0.0, %v4243
        %v4245 = vpop.f32.mrb[0].mxu0
        %4246 = vmatprep.mubr.bf16.mxu0 0
        %4247 = vmatmul.mubr.bf16.gmra.mrb[0].mxu0 %v4154
        %v4248 = vpop.f32.mrb[0].mxu0
        %v4249 = vadd.f32 0.0, %v4248
        %v4250 = vpop.f32.mrb[0].mxu0
        %v4251 = vpop.f32.mrb[0].mxu0
        %v4252 = vadd.f32 0.0, %v4251
        %v4253 = vpop.f32.mrb[0].mxu0
        %4254 = vmatprep.mubr.bf16.mxu0 0
        %4255 = vmatmul.mubr.bf16.gmra.mrb[0].mxu0 %v4157
        %v4256 = vpop.f32.mrb[0].mxu0
        %v4257 = vadd.f32 0.0, %v4256
        %v4258 = vpop.f32.mrb[0].mxu0
        %v4259 = vpop.f32.mrb[0].mxu0
        %v4260 = vadd.f32 0.0, %v4259
        %v4261 = vpop.f32.mrb[0].mxu0
        %4262 = vmatprep.mubr.bf16.mxu0 0
        %4263 = vmatmul.mubr.bf16.gmra.mrb[0].mxu0 %v4160
        %v4264 = vpop.f32.mrb[0].mxu0
        %v4265 = vadd.f32 0.0, %v4264
        %v4266 = vpop.f32.mrb[0].mxu0
        %v4267 = vpop.f32.mrb[0].mxu0
        %v4268 = vadd.f32 0.0, %v4267
        %v4269 = vpop.f32.mrb[0].mxu0
        %4270 = vmatprep.mubr.bf16.mxu0 0
        %4271 = vmatmul.mubr.bf16.gmra.mrb[0].mxu0 %v4163
        %v4272 = vpop.f32.mrb[0].mxu0
        %v4273 = vadd.f32 0.0, %v4272
        %v4274 = vpop.f32.mrb[0].mxu0
        %v4275 = vpop.f32.mrb[0].mxu0
        %v4276 = vadd.f32 0.0, %v4275
        %v4277 = vpop.f32.mrb[0].mxu0
        %4278 = vmatprep.mubr.bf16.mxu0 0
        %4279 = vmatmul.mubr.bf16.gmra.mrb[0].mxu0 %v4166
        %v4280 = vpop.f32.mrb[0].mxu0
        %v4281 = vadd.f32 0.0, %v4280
        %v4282 = vpop.f32.mrb[0].mxu0
        %v4283 = vpop.f32.mrb[0].mxu0
        %v4284 = vadd.f32 0.0, %v4283
        %v4285 = vpop.f32.mrb[0].mxu0
        %4286 = vmatprep.mubr.bf16.mxu0 0
        %4287 = vmatmul.mubr.bf16.gmra.mrb[0].mxu0 %v4169
        %v4288 = vpop.f32.mrb[0].mxu0
        %v4289 = vadd.f32 0.0, %v4288
        %v4290 = vpop.f32.mrb[0].mxu0
        %v4291 = vpop.f32.mrb[0].mxu0
        %v4292 = vadd.f32 0.0, %v4291
        %v4293 = vpop.f32.mrb[0].mxu0
        %4294 = vmatprep.mubr.bf16.mxu0 0
        %4295 = vmatmul.mubr.bf16.gmra.mrb[0].mxu0 %v4172
        %v4296 = vpop.f32.mrb[0].mxu0
        %v4297 = vadd.f32 0.0, %v4296
        %v4298 = vpop.f32.mrb[0].mxu0
        %v4299 = vpop.f32.mrb[0].mxu0
        %v4300 = vadd.f32 0.0, %v4299
        %v4301 = vpop.f32.mrb[0].mxu0
        %4302 = vmatprep.mubr.bf16.mxu0 0
        %4303 = vmatmul.mubr.bf16.gmra.mrb[0].mxu0 %v4175
        %v4304 = vpop.f32.mrb[0].mxu0
        %v4305 = vadd.f32 0.0, %v4304
        %v4306 = vpop.f32.mrb[0].mxu0
        %v4307 = vpop.f32.mrb[0].mxu0
        %v4308 = vadd.f32 0.0, %v4307
        %v4309 = vpop.f32.mrb[0].mxu0
        %4310 = vmatprep.mubr.bf16.mxu0 0
        %4311 = vmatmul.mubr.bf16.gmra.mrb[0].mxu0 %v4178
        %v4312 = vpop.f32.mrb[0].mxu0
        %v4313 = vadd.f32 0.0, %v4312
        %v4314 = vpop.f32.mrb[0].mxu0
        %v4315 = vpop.f32.mrb[0].mxu0
        %v4316 = vadd.f32 0.0, %v4315
        %v4317 = vpop.f32.mrb[0].mxu0
        %4318 = vmatprep.mubr.bf16.mxu0 0
        %4319 = vmatmul.mubr.bf16.gmra.mrb[0].mxu0 %v4181
        %v4320 = vpop.f32.mrb[0].mxu0
        %v4321 = vadd.f32 0.0, %v4320
        %v4322 = vpop.f32.mrb[0].mxu0
        %v4323 = vpop.f32.mrb[0].mxu0
        %v4324 = vadd.f32 0.0, %v4323
        %v4325 = vpop.f32.mrb[0].mxu0
        %4326 = vmatprep.mubr.bf16.mxu0 0
        %4327 = vmatmul.mubr.bf16.gmra.mrb[0].mxu0 %v4184
        %v4328 = vpop.f32.mrb[0].mxu0
        %v4329 = vadd.f32 0.0, %v4328
        %v4330 = vpop.f32.mrb[0].mxu0
        %v4331 = vpop.f32.mrb[0].mxu0
        %v4332 = vadd.f32 0.0, %v4331
        %v4333 = vpop.f32.mrb[0].mxu0
        %4334 = vmatprep.mubr.bf16.mxu0 0
        %4335 = vmatmul.mubr.bf16.gmra.mrb[0].mxu0 %v4187
        %v4336 = vpop.f32.mrb[0].mxu0
        %v4337 = vadd.f32 0.0, %v4336
        %v4338 = vpop.f32.mrb[0].mxu0
        %v4339 = vpop.f32.mrb[0].mxu0
        %v4340 = vadd.f32 0.0, %v4339
        %v4341 = vpop.f32.mrb[0].mxu0
        %4342 = vmatprep.mubr.bf16.mxu0 0
        %4343 = vmatmul.mubr.bf16.gmra.mrb[0].mxu0 %v4190
        %v4344 = vpop.f32.mrb[0].mxu0
        %v4345 = vadd.f32 0.0, %v4344
        %v4346 = vpop.f32.mrb[0].mxu0
        %v4347 = vpop.f32.mrb[0].mxu0
        %v4348 = vadd.f32 0.0, %v4347
        %v4349 = vpop.f32.mrb[0].mxu0
        %4350 = vmatprep.mubr.bf16.mxu0 0
        %4351 = vmatmul.mubr.bf16.gmra.mrb[0].mxu0 %v4193
        %v4352 = vpop.f32.mrb[0].mxu0
        %v4353 = vadd.f32 0.0, %v4352
        %v4354 = vpop.f32.mrb[0].mxu0
        %v4355 = vpop.f32.mrb[0].mxu0
        %v4356 = vadd.f32 0.0, %v4355
        %v4357 = vpop.f32.mrb[0].mxu0
        %4358 = vdwg.mxu0
        %v4359 = vadd.f32 %v4033, %v4233
        %v4360 = vadd.f32 %v4034, %v4236
        %v4361 = vadd.f32 %v4035, %v4241
        %v4362 = vadd.f32 %v4036, %v4244
        %v4363 = vadd.f32 %v4037, %v4249
        %v4364 = vadd.f32 %v4038, %v4252
        %v4365 = vadd.f32 %v4039, %v4257
        %v4366 = vadd.f32 %v4040, %v4260
        %v4367 = vadd.f32 %v4041, %v4265
        %v4368 = vadd.f32 %v4042, %v4268
        %v4369 = vadd.f32 %v4043, %v4273
        %v4370 = vadd.f32 %v4044, %v4276
        %v4371 = vadd.f32 %v4045, %v4281
        %v4372 = vadd.f32 %v4046, %v4284
        %v4373 = vadd.f32 %v4047, %v4289
        %v4374 = vadd.f32 %v4048, %v4292
        %v4375 = vadd.f32 %v4049, %v4297
        %v4376 = vadd.f32 %v4050, %v4300
        %v4377 = vadd.f32 %v4051, %v4305
        %v4378 = vadd.f32 %v4052, %v4308
        %v4379 = vadd.f32 %v4053, %v4313
        %v4380 = vadd.f32 %v4054, %v4316
        %v4381 = vadd.f32 %v4055, %v4321
        %v4382 = vadd.f32 %v4056, %v4324
        %v4383 = vadd.f32 %v4057, %v4329
        %v4384 = vadd.f32 %v4058, %v4332
        %v4385 = vadd.f32 %v4059, %v4337
        %v4386 = vadd.f32 %v4060, %v4340
        %v4387 = vadd.f32 %v4061, %v4345
        %v4388 = vadd.f32 %v4062, %v4348
        %v4389 = vadd.f32 %v4063, %v4353
        %v4390 = vadd.f32 %v4064, %v4356
        %v4391 = vld [vmem:[%s356 + $0x14] sm:$0xf]
        %v4392 = vld [vmem:[%s356 + $0x18] sm:$0xf]
        %v4393 = vld [vmem:[%s356 + $0x1c] sm:$0xf]
        %v4394 = vld [vmem:[%s356 + $0x20] sm:$0xf]
        %v4395 = vld [vmem:[%s356 + $0x24] sm:$0xf]
        %v4396 = vld [vmem:[%s356 + $0x28] sm:$0xf]
        %v4397 = vld [vmem:[%s356 + $0x2c] sm:$0xf]
        %v4398 = vld [vmem:[%s356 + $0x30] sm:$0xf]
        %v4399 = vld [vmem:[%s356 + $0x34] sm:$0xf]
        %v4400 = vld [vmem:[%s356 + $0x38] sm:$0xf]
        %v4401 = vld [vmem:[%s356 + $0x3c] sm:$0xf]
        %v4402 = vld [vmem:[%s356 + $0x40] sm:$0xf]
        %v4403 = vld [vmem:[%s356 + $0x44] sm:$0xf]
        %v4404 = vld [vmem:[%s356 + $0x48] sm:$0xf]
        %v4405 = vld [vmem:[%s356 + $0x4c] sm:$0xf]
        %v4406 = vld [vmem:[%s356 + $0x50] sm:$0xf]
        %v4407 = vld [vmem:[%s356 + $0x54] sm:$0xf]
        %v4408 = vld [vmem:[%s356 + $0x58] sm:$0xf]
        %v4409 = vld [vmem:[%s356 + $0x5c] sm:$0xf]
        %v4410 = vld [vmem:[%s356 + $0x60] sm:$0xf]
        %v4411 = vld [vmem:[%s356 + $0x64] sm:$0xf]
        %v4412 = vld [vmem:[%s356 + $0x68] sm:$0xf]
        %v4413 = vld [vmem:[%s356 + $0x6c] sm:$0xf]
        %v4414 = vld [vmem:[%s356 + $0x70] sm:$0xf]
        %v4415 = vld [vmem:[%s356 + $0x74] sm:$0xf]
        %v4416 = vld [vmem:[%s356 + $0x78] sm:$0xf]
        %v4417 = vld [vmem:[%s356 + $0x7c] sm:$0xf]
        %v4418 = vld [vmem:[%s356 + $0x80] sm:$0xf]
        %v4419 = vld [vmem:[%s356 + $0x84] sm:$0xf]
        %v4420 = vld [vmem:[%s356 + $0x88] sm:$0xf]
        %v4421 = vld [vmem:[%s356 + $0x8c] sm:$0xf]
        %v4422 = vld [vmem:[%s356 + $0x90] sm:$0xf]
        %v4423 = vld [vmem:[%s356 + $0x94] sm:$0x1]
        %v4424 = vunpack.c.l.bf16 %v4391
        %v4425 = vunpack.c.l.bf16 %v4392
        %v4426 = vunpack.c.l.bf16 %v4393
        %v4427 = vunpack.c.l.bf16 %v4394
        %v4428 = vunpack.c.l.bf16 %v4395
        %v4429 = vunpack.c.l.bf16 %v4396
        %v4430 = vunpack.c.l.bf16 %v4397
        %v4431 = vunpack.c.l.bf16 %v4398
        %v4432 = vunpack.c.l.bf16 %v4399
        %v4433 = vunpack.c.l.bf16 %v4400
        %v4434 = vunpack.c.l.bf16 %v4401
        %v4435 = vunpack.c.l.bf16 %v4402
        %v4436 = vunpack.c.l.bf16 %v4403
        %v4437 = vunpack.c.l.bf16 %v4404
        %v4438 = vunpack.c.l.bf16 %v4405
        %v4439 = vunpack.c.l.bf16 %v4406
        %v4440 = vunpack.c.l.bf16 %v4407
        %v4441 = vunpack.c.l.bf16 %v4408
        %v4442 = vunpack.c.l.bf16 %v4409
        %v4443 = vunpack.c.l.bf16 %v4410
        %v4444 = vunpack.c.l.bf16 %v4411
        %v4445 = vunpack.c.l.bf16 %v4412
        %v4446 = vunpack.c.l.bf16 %v4413
        %v4447 = vunpack.c.l.bf16 %v4414
        %v4448 = vunpack.c.l.bf16 %v4415
        %v4449 = vunpack.c.l.bf16 %v4416
        %v4450 = vunpack.c.l.bf16 %v4417
        %v4451 = vunpack.c.l.bf16 %v4418
        %v4452 = vunpack.c.l.bf16 %v4419
        %v4453 = vunpack.c.l.bf16 %v4420
        %v4454 = vunpack.c.l.bf16 %v4421
        %v4455 = vunpack.c.l.bf16 %v4422
        %v4456 = vunpack.c.l.bf16 %v4423
        %v4457 = vmul.f32 %v4424, %v1692
        %v4458 = vmul.f32 %v4425, %v1694
        %v4459 = vmul.f32 %v4426, %v1696
        %v4460 = vmul.f32 %v4427, %v1698
        %v4461 = vmul.f32 %v4428, %v1700
        %v4462 = vmul.f32 %v4429, %v1702
        %v4463 = vmul.f32 %v4430, %v1704
        %v4464 = vmul.f32 %v4431, %v1706
        %v4465 = vmul.f32 %v4432, %v1708
        %v4466 = vmul.f32 %v4433, %v1710
        %v4467 = vmul.f32 %v4434, %v1712
        %v4468 = vmul.f32 %v4435, %v1714
        %v4469 = vmul.f32 %v4436, %v1716
        %v4470 = vmul.f32 %v4437, %v1718
        %v4471 = vmul.f32 %v4438, %v1720
        %v4472 = vmul.f32 %v4439, %v1722
        %v4473 = vmul.f32 %v4440, %v1724
        %v4474 = vmul.f32 %v4441, %v1726
        %v4475 = vmul.f32 %v4442, %v1728
        %v4476 = vmul.f32 %v4443, %v1730
        %v4477 = vmul.f32 %v4444, %v1732
        %v4478 = vmul.f32 %v4445, %v1734
        %v4479 = vmul.f32 %v4446, %v1736
        %v4480 = vmul.f32 %v4447, %v1738
        %v4481 = vmul.f32 %v4448, %v1740
        %v4482 = vmul.f32 %v4449, %v1742
        %v4483 = vmul.f32 %v4450, %v1744
        %v4484 = vmul.f32 %v4451, %v1746
        %v4485 = vmul.f32 %v4452, %v1748
        %v4486 = vmul.f32 %v4453, %v1750
        %v4487 = vmul.f32 %v4454, %v1752
        %v4488 = vmul.f32 %v4455, %v1754
        %v4489 = vmul.f32 %v4456, %v1753
        %v4490 = vpack.c.bf16 %v4458, %v4457
        %v4491 = vpack.c.bf16 %v4460, %v4459
        %v4492 = vpack.c.bf16 %v4462, %v4461
        %v4493 = vpack.c.bf16 %v4464, %v4463
        %v4494 = vpack.c.bf16 %v4466, %v4465
        %v4495 = vpack.c.bf16 %v4468, %v4467
        %v4496 = vpack.c.bf16 %v4470, %v4469
        %v4497 = vpack.c.bf16 %v4472, %v4471
        %v4498 = vpack.c.bf16 %v4474, %v4473
        %v4499 = vpack.c.bf16 %v4476, %v4475
        %v4500 = vpack.c.bf16 %v4478, %v4477
        %v4501 = vpack.c.bf16 %v4480, %v4479
        %v4502 = vpack.c.bf16 %v4482, %v4481
        %v4503 = vpack.c.bf16 %v4484, %v4483
        %v4504 = vpack.c.bf16 %v4486, %v4485
        %v4505 = vpack.c.bf16 %v4488, %v4487
        %v4506 = vpack.c.bf16 %v4489, %v4489
        %s4507 = scalar_lea.vmem %s2, 32
        %v4508 = vld [vmem:[%s4507] sm:$0xf]
        %v4510 = vshrl.u32 %v4490, 16
        %v4512 = vshll.u32 %v4490, 16
        %v4514 = vrot.slane %v4512, 1
        %v4515 = vor.u32 %v4510, %v4514
        %v4517 = vshll.u32 %v4491, 16
        %v4519 = vrot.slane %v4517, 1
        %v4520 = vsel %vm1840, %v4515, %v4519
        %v4521 = vshrl.u32 %v4491, 16
        %v4523 = vor.u32 %v4521, %v4519
        %v4525 = vshll.u32 %v4492, 16
        %v4527 = vrot.slane %v4525, 1
        %v4528 = vsel %vm1840, %v4523, %v4527
        %v4529 = vshrl.u32 %v4492, 16
        %v4531 = vor.u32 %v4529, %v4527
        %v4533 = vshll.u32 %v4493, 16
        %v4535 = vrot.slane %v4533, 1
        %v4536 = vsel %vm1840, %v4531, %v4535
        %v4537 = vshrl.u32 %v4493, 16
        %v4539 = vor.u32 %v4537, %v4535
        %v4541 = vshll.u32 %v4494, 16
        %v4543 = vrot.slane %v4541, 1
        %v4544 = vsel %vm1840, %v4539, %v4543
        %v4545 = vshrl.u32 %v4494, 16
        %v4547 = vor.u32 %v4545, %v4543
        %v4549 = vshll.u32 %v4495, 16
        %v4551 = vrot.slane %v4549, 1
        %v4552 = vsel %vm1840, %v4547, %v4551
        %v4553 = vshrl.u32 %v4495, 16
        %v4555 = vor.u32 %v4553, %v4551
        %v4557 = vshll.u32 %v4496, 16
        %v4559 = vrot.slane %v4557, 1
        %v4560 = vsel %vm1840, %v4555, %v4559
        %v4561 = vshrl.u32 %v4496, 16
        %v4563 = vor.u32 %v4561, %v4559
        %v4565 = vshll.u32 %v4497, 16
        %v4567 = vrot.slane %v4565, 1
        %v4568 = vsel %vm1840, %v4563, %v4567
        %v4569 = vshrl.u32 %v4497, 16
        %v4571 = vor.u32 %v4569, %v4567
        %v4573 = vshll.u32 %v4498, 16
        %v4575 = vrot.slane %v4573, 1
        %v4576 = vsel %vm1840, %v4571, %v4575
        %v4577 = vshrl.u32 %v4498, 16
        %v4579 = vor.u32 %v4577, %v4575
        %v4581 = vshll.u32 %v4499, 16
        %v4583 = vrot.slane %v4581, 1
        %v4584 = vsel %vm1840, %v4579, %v4583
        %v4585 = vshrl.u32 %v4499, 16
        %v4587 = vor.u32 %v4585, %v4583
        %v4589 = vshll.u32 %v4500, 16
        %v4591 = vrot.slane %v4589, 1
        %v4592 = vsel %vm1840, %v4587, %v4591
        %v4593 = vshrl.u32 %v4500, 16
        %v4595 = vor.u32 %v4593, %v4591
        %v4597 = vshll.u32 %v4501, 16
        %v4599 = vrot.slane %v4597, 1
        %v4600 = vsel %vm1840, %v4595, %v4599
        %v4601 = vshrl.u32 %v4501, 16
        %v4603 = vor.u32 %v4601, %v4599
        %v4605 = vshll.u32 %v4502, 16
        %v4607 = vrot.slane %v4605, 1
        %v4608 = vsel %vm1840, %v4603, %v4607
        %v4609 = vshrl.u32 %v4502, 16
        %v4611 = vor.u32 %v4609, %v4607
        %v4613 = vshll.u32 %v4503, 16
        %v4615 = vrot.slane %v4613, 1
        %v4616 = vsel %vm1840, %v4611, %v4615
        %v4617 = vshrl.u32 %v4503, 16
        %v4619 = vor.u32 %v4617, %v4615
        %v4621 = vshll.u32 %v4504, 16
        %v4623 = vrot.slane %v4621, 1
        %v4624 = vsel %vm1840, %v4619, %v4623
        %v4625 = vshrl.u32 %v4504, 16
        %v4627 = vor.u32 %v4625, %v4623
        %v4629 = vshll.u32 %v4505, 16
        %v4631 = vrot.slane %v4629, 1
        %v4632 = vsel %vm1840, %v4627, %v4631
        %v4633 = vshrl.u32 %v4505, 16
        %v4635 = vor.u32 %v4633, %v4631
        %v4637 = vshll.u32 %v4506, 16
        %v4639 = vrot.slane %v4637, 1
        %v4640 = vsel %vm1840, %v4635, %v4639
        %v4642 = vsel %vm925, %v4520, 0
        %v4645 = vsel %vm925, %v4528, 0
        %v4648 = vsel %vm925, %v4536, 0
        %v4651 = vsel %vm925, %v4544, 0
        %v4654 = vsel %vm925, %v4552, 0
        %v4657 = vsel %vm925, %v4560, 0
        %v4660 = vsel %vm925, %v4568, 0
        %v4663 = vsel %vm925, %v4576, 0
        %v4666 = vsel %vm925, %v4584, 0
        %v4669 = vsel %vm925, %v4592, 0
        %v4672 = vsel %vm925, %v4600, 0
        %v4675 = vsel %vm925, %v4608, 0
        %v4678 = vsel %vm925, %v4616, 0
        %v4681 = vsel %vm925, %v4624, 0
        %v4684 = vsel %vm925, %v4632, 0
        %v4687 = vsel %vm925, %v4640, 0
        %v4690 = vsel %vm974, %v4508, 0
        %4692 = vmatprep.subr.bf16.mxu0 0
        %4693 = vmatpush1.bf16.msra.mxu0 %v4690
        %4694 = vmatprep.subr.bf16.mxu0 0
        %4695 = vmatpush1.bf16.msra.mxu0 0
        %4696 = vmatprep.subr.bf16.mxu0 0
        %4697 = vmatpush1.bf16.msra.mxu0 0
        %4698 = vmatprep.subr.bf16.mxu0 0
        %4699 = vmatpush1.bf16.msra.mxu0 0
        %4700 = vmatprep.subr.bf16.mxu0 0
        %4701 = vmatpush1.bf16.msra.mxu0 0
        %4702 = vmatprep.subr.bf16.mxu0 0
        %4703 = vmatpush1.bf16.msra.mxu0 0
        %4704 = vmatprep.subr.bf16.mxu0 0
        %4705 = vmatpush1.bf16.msra.mxu0 0
        %4706 = vmatprep.subr.bf16.mxu0 0
        %4707 = vmatpush1.bf16.msra.mxu0 0
        %4708 = vmatprep.subr.bf16.mxu0 0
        %4709 = vmatpush1.bf16.msra.mxu0 0
        %4710 = vmatprep.subr.bf16.mxu0 0
        %4711 = vmatpush1.bf16.msra.mxu0 0
        %4712 = vmatprep.subr.bf16.mxu0 0
        %4713 = vmatpush1.bf16.msra.mxu0 0
        %4714 = vmatprep.subr.bf16.mxu0 0
        %4715 = vmatpush1.bf16.msra.mxu0 0
        %4716 = vmatprep.subr.bf16.mxu0 0
        %4717 = vmatpush1.bf16.msra.mxu0 0
        %4718 = vmatprep.subr.bf16.mxu0 0
        %4719 = vmatpush1.bf16.msra.mxu0 0
        %4720 = vmatprep.subr.bf16.mxu0 0
        %4721 = vmatpush1.bf16.msra.mxu0 0
        %4722 = vmatprep.subr.bf16.mxu0 0
        %4723 = vmatpush1.bf16.msra.mxu0 0
        %4724 = vmatprep.mubr.bf16.mxu0 0
        %4725 = vmatmul.mubr.bf16.gmra.mrb[0].mxu0 %v4642
        %v4726 = vpop.f32.mrb[0].mxu0
        %v4727 = vadd.f32 0.0, %v4726
        %v4728 = vpop.f32.mrb[0].mxu0
        %v4729 = vpop.f32.mrb[0].mxu0
        %v4730 = vadd.f32 0.0, %v4729
        %v4731 = vpop.f32.mrb[0].mxu0
        %4732 = vmatprep.mubr.bf16.mxu0 0
        %4733 = vmatmul.mubr.bf16.gmra.mrb[0].mxu0 %v4645
        %v4734 = vpop.f32.mrb[0].mxu0
        %v4735 = vadd.f32 0.0, %v4734
        %v4736 = vpop.f32.mrb[0].mxu0
        %v4737 = vpop.f32.mrb[0].mxu0
        %v4738 = vadd.f32 0.0, %v4737
        %v4739 = vpop.f32.mrb[0].mxu0
        %4740 = vmatprep.mubr.bf16.mxu0 0
        %4741 = vmatmul.mubr.bf16.gmra.mrb[0].mxu0 %v4648
        %v4742 = vpop.f32.mrb[0].mxu0
        %v4743 = vadd.f32 0.0, %v4742
        %v4744 = vpop.f32.mrb[0].mxu0
        %v4745 = vpop.f32.mrb[0].mxu0
        %v4746 = vadd.f32 0.0, %v4745
        %v4747 = vpop.f32.mrb[0].mxu0
        %4748 = vmatprep.mubr.bf16.mxu0 0
        %4749 = vmatmul.mubr.bf16.gmra.mrb[0].mxu0 %v4651
        %v4750 = vpop.f32.mrb[0].mxu0
        %v4751 = vadd.f32 0.0, %v4750
        %v4752 = vpop.f32.mrb[0].mxu0
        %v4753 = vpop.f32.mrb[0].mxu0
        %v4754 = vadd.f32 0.0, %v4753
        %v4755 = vpop.f32.mrb[0].mxu0
        %4756 = vmatprep.mubr.bf16.mxu0 0
        %4757 = vmatmul.mubr.bf16.gmra.mrb[0].mxu0 %v4654
        %v4758 = vpop.f32.mrb[0].mxu0
        %v4759 = vadd.f32 0.0, %v4758
        %v4760 = vpop.f32.mrb[0].mxu0
        %v4761 = vpop.f32.mrb[0].mxu0
        %v4762 = vadd.f32 0.0, %v4761
        %v4763 = vpop.f32.mrb[0].mxu0
        %4764 = vmatprep.mubr.bf16.mxu0 0
        %4765 = vmatmul.mubr.bf16.gmra.mrb[0].mxu0 %v4657
        %v4766 = vpop.f32.mrb[0].mxu0
        %v4767 = vadd.f32 0.0, %v4766
        %v4768 = vpop.f32.mrb[0].mxu0
        %v4769 = vpop.f32.mrb[0].mxu0
        %v4770 = vadd.f32 0.0, %v4769
        %v4771 = vpop.f32.mrb[0].mxu0
        %4772 = vmatprep.mubr.bf16.mxu0 0
        %4773 = vmatmul.mubr.bf16.gmra.mrb[0].mxu0 %v4660
        %v4774 = vpop.f32.mrb[0].mxu0
        %v4775 = vadd.f32 0.0, %v4774
        %v4776 = vpop.f32.mrb[0].mxu0
        %v4777 = vpop.f32.mrb[0].mxu0
        %v4778 = vadd.f32 0.0, %v4777
        %v4779 = vpop.f32.mrb[0].mxu0
        %4780 = vmatprep.mubr.bf16.mxu0 0
        %4781 = vmatmul.mubr.bf16.gmra.mrb[0].mxu0 %v4663
        %v4782 = vpop.f32.mrb[0].mxu0
        %v4783 = vadd.f32 0.0, %v4782
        %v4784 = vpop.f32.mrb[0].mxu0
        %v4785 = vpop.f32.mrb[0].mxu0
        %v4786 = vadd.f32 0.0, %v4785
        %v4787 = vpop.f32.mrb[0].mxu0
        %4788 = vmatprep.mubr.bf16.mxu0 0
        %4789 = vmatmul.mubr.bf16.gmra.mrb[0].mxu0 %v4666
        %v4790 = vpop.f32.mrb[0].mxu0
        %v4791 = vadd.f32 0.0, %v4790
        %v4792 = vpop.f32.mrb[0].mxu0
        %v4793 = vpop.f32.mrb[0].mxu0
        %v4794 = vadd.f32 0.0, %v4793
        %v4795 = vpop.f32.mrb[0].mxu0
        %4796 = vmatprep.mubr.bf16.mxu0 0
        %4797 = vmatmul.mubr.bf16.gmra.mrb[0].mxu0 %v4669
        %v4798 = vpop.f32.mrb[0].mxu0
        %v4799 = vadd.f32 0.0, %v4798
        %v4800 = vpop.f32.mrb[0].mxu0
        %v4801 = vpop.f32.mrb[0].mxu0
        %v4802 = vadd.f32 0.0, %v4801
        %v4803 = vpop.f32.mrb[0].mxu0
        %4804 = vmatprep.mubr.bf16.mxu0 0
        %4805 = vmatmul.mubr.bf16.gmra.mrb[0].mxu0 %v4672
        %v4806 = vpop.f32.mrb[0].mxu0
        %v4807 = vadd.f32 0.0, %v4806
        %v4808 = vpop.f32.mrb[0].mxu0
        %v4809 = vpop.f32.mrb[0].mxu0
        %v4810 = vadd.f32 0.0, %v4809
        %v4811 = vpop.f32.mrb[0].mxu0
        %4812 = vmatprep.mubr.bf16.mxu0 0
        %4813 = vmatmul.mubr.bf16.gmra.mrb[0].mxu0 %v4675
        %v4814 = vpop.f32.mrb[0].mxu0
        %v4815 = vadd.f32 0.0, %v4814
        %v4816 = vpop.f32.mrb[0].mxu0
        %v4817 = vpop.f32.mrb[0].mxu0
        %v4818 = vadd.f32 0.0, %v4817
        %v4819 = vpop.f32.mrb[0].mxu0
        %4820 = vmatprep.mubr.bf16.mxu0 0
        %4821 = vmatmul.mubr.bf16.gmra.mrb[0].mxu0 %v4678
        %v4822 = vpop.f32.mrb[0].mxu0
        %v4823 = vadd.f32 0.0, %v4822
        %v4824 = vpop.f32.mrb[0].mxu0
        %v4825 = vpop.f32.mrb[0].mxu0
        %v4826 = vadd.f32 0.0, %v4825
        %v4827 = vpop.f32.mrb[0].mxu0
        %4828 = vmatprep.mubr.bf16.mxu0 0
        %4829 = vmatmul.mubr.bf16.gmra.mrb[0].mxu0 %v4681
        %v4830 = vpop.f32.mrb[0].mxu0
        %v4831 = vadd.f32 0.0, %v4830
        %v4832 = vpop.f32.mrb[0].mxu0
        %v4833 = vpop.f32.mrb[0].mxu0
        %v4834 = vadd.f32 0.0, %v4833
        %v4835 = vpop.f32.mrb[0].mxu0
        %4836 = vmatprep.mubr.bf16.mxu0 0
        %4837 = vmatmul.mubr.bf16.gmra.mrb[0].mxu0 %v4684
        %v4838 = vpop.f32.mrb[0].mxu0
        %v4839 = vadd.f32 0.0, %v4838
        %v4840 = vpop.f32.mrb[0].mxu0
        %v4841 = vpop.f32.mrb[0].mxu0
        %v4842 = vadd.f32 0.0, %v4841
        %v4843 = vpop.f32.mrb[0].mxu0
        %4844 = vmatprep.mubr.bf16.mxu0 0
        %4845 = vmatmul.mubr.bf16.gmra.mrb[0].mxu0 %v4687
        %v4846 = vpop.f32.mrb[0].mxu0
        %v4847 = vadd.f32 0.0, %v4846
        %v4848 = vpop.f32.mrb[0].mxu0
        %v4849 = vpop.f32.mrb[0].mxu0
        %v4850 = vadd.f32 0.0, %v4849
        %v4851 = vpop.f32.mrb[0].mxu0
        %4852 = vdwg.mxu0
        %v4853 = vadd.f32 %v4359, %v4727
        %v4854 = vadd.f32 %v4360, %v4730
        %v4855 = vadd.f32 %v4361, %v4735
        %v4856 = vadd.f32 %v4362, %v4738
        %v4857 = vadd.f32 %v4363, %v4743
        %v4858 = vadd.f32 %v4364, %v4746
        %v4859 = vadd.f32 %v4365, %v4751
        %v4860 = vadd.f32 %v4366, %v4754
        %v4861 = vadd.f32 %v4367, %v4759
        %v4862 = vadd.f32 %v4368, %v4762
        %v4863 = vadd.f32 %v4369, %v4767
        %v4864 = vadd.f32 %v4370, %v4770
        %v4865 = vadd.f32 %v4371, %v4775
        %v4866 = vadd.f32 %v4372, %v4778
        %v4867 = vadd.f32 %v4373, %v4783
        %v4868 = vadd.f32 %v4374, %v4786
        %v4869 = vadd.f32 %v4375, %v4791
        %v4870 = vadd.f32 %v4376, %v4794
        %v4871 = vadd.f32 %v4377, %v4799
        %v4872 = vadd.f32 %v4378, %v4802
        %v4873 = vadd.f32 %v4379, %v4807
        %v4874 = vadd.f32 %v4380, %v4810
        %v4875 = vadd.f32 %v4381, %v4815
        %v4876 = vadd.f32 %v4382, %v4818
        %v4877 = vadd.f32 %v4383, %v4823
        %v4878 = vadd.f32 %v4384, %v4826
        %v4879 = vadd.f32 %v4385, %v4831
        %v4880 = vadd.f32 %v4386, %v4834
        %v4881 = vadd.f32 %v4387, %v4839
        %v4882 = vadd.f32 %v4388, %v4842
        %v4883 = vadd.f32 %v4389, %v4847
        %v4884 = vadd.f32 %v4390, %v4850
        %v4885 = vmax.f32 %v4853, 0.0
        %v4886 = vmax.f32 %v4854, 0.0
        %v4887 = vmax.f32 %v4855, 0.0
        %v4888 = vmax.f32 %v4856, 0.0
        %v4889 = vmax.f32 %v4857, 0.0
        %v4890 = vmax.f32 %v4858, 0.0
        %v4891 = vmax.f32 %v4859, 0.0
        %v4892 = vmax.f32 %v4860, 0.0
        %v4893 = vmax.f32 %v4861, 0.0
        %v4894 = vmax.f32 %v4862, 0.0
        %v4895 = vmax.f32 %v4863, 0.0
        %v4896 = vmax.f32 %v4864, 0.0
        %v4897 = vmax.f32 %v4865, 0.0
        %v4898 = vmax.f32 %v4866, 0.0
        %v4899 = vmax.f32 %v4867, 0.0
        %v4900 = vmax.f32 %v4868, 0.0
        %v4901 = vmax.f32 %v4869, 0.0
        %v4902 = vmax.f32 %v4870, 0.0
        %v4903 = vmax.f32 %v4871, 0.0
        %v4904 = vmax.f32 %v4872, 0.0
        %v4905 = vmax.f32 %v4873, 0.0
        %v4906 = vmax.f32 %v4874, 0.0
        %v4907 = vmax.f32 %v4875, 0.0
        %v4908 = vmax.f32 %v4876, 0.0
        %v4909 = vmax.f32 %v4877, 0.0
        %v4910 = vmax.f32 %v4878, 0.0
        %v4911 = vmax.f32 %v4879, 0.0
        %v4912 = vmax.f32 %v4880, 0.0
        %v4913 = vmax.f32 %v4881, 0.0
        %v4914 = vmax.f32 %v4882, 0.0
        %v4915 = vmax.f32 %v4883, 0.0
        %v4916 = vmax.f32 %v4884, 0.0
        %4917 = vst [vmem:[#allocation2] sm:$0xff] 0.0
        %4918 = vst [vmem:[#allocation2 + $0x8] sm:$0xff] 0.0
        %4919 = vst [vmem:[#allocation2 + $0x10] sm:$0xff] 0.0
        %4920 = vst [vmem:[#allocation2 + $0x18] sm:$0xff] 0.0
        %4921 = vst [vmem:[#allocation2 + $0x20] sm:$0xff] 0.0
        %4922 = vst [vmem:[#allocation2 + $0x28] sm:$0xff] 0.0
        %4923 = vst [vmem:[#allocation2 + $0x30] sm:$0xff] 0.0
        %4924 = vst [vmem:[#allocation2 + $0x38] sm:$0xff] 0.0
        %4925 = vst [vmem:[#allocation2 + $0x40] sm:$0xff] 0.0
        %4926 = vst [vmem:[#allocation2 + $0x48] sm:$0xff] 0.0
        %4927 = vst [vmem:[#allocation2 + $0x50] sm:$0xff] 0.0
        %4928 = vst [vmem:[#allocation2 + $0x58] sm:$0xff] 0.0
        %4929 = vst [vmem:[#allocation2 + $0x60] sm:$0xff] 0.0
        %4930 = vst [vmem:[#allocation2 + $0x68] sm:$0xff] 0.0
        %4931 = vst [vmem:[#allocation2 + $0x70] sm:$0xff] 0.0
        %4932 = vst [vmem:[#allocation2 + $0x78] sm:$0xff] 0.0
        %4933 = vst [vmem:[#allocation2 + $0x80] sm:$0xff] 0.0
        %4934 = vst [vmem:[#allocation2 + $0x88] sm:$0xff] 0.0
        %4935 = vst [vmem:[#allocation2 + $0x90] sm:$0xff] 0.0
        %4936 = vst [vmem:[#allocation2 + $0x98] sm:$0xff] 0.0
        %4937 = vst [vmem:[#allocation2 + $0xa0] sm:$0xff] 0.0
        %4938 = vst [vmem:[#allocation2 + $0xa8] sm:$0xff] 0.0
        %4939 = vst [vmem:[#allocation2 + $0xb0] sm:$0xff] 0.0
        %4940 = vst [vmem:[#allocation2 + $0xb8] sm:$0xff] 0.0
        %4941 = vst [vmem:[#allocation2 + $0xc0] sm:$0xff] 0.0
        %4942 = vst [vmem:[#allocation2 + $0xc8] sm:$0xff] 0.0
        %4943 = vst [vmem:[#allocation2 + $0xd0] sm:$0xff] 0.0
        %4944 = vst [vmem:[#allocation2 + $0xd8] sm:$0xff] 0.0
        %4945 = vst [vmem:[#allocation2 + $0xe0] sm:$0xff] 0.0
        %4946 = vst [vmem:[#allocation2 + $0xe8] sm:$0xff] 0.0
        %4947 = vst [vmem:[#allocation2 + $0xf0] sm:$0xff] 0.0
        %4948 = vst [vmem:[#allocation2 + $0xf8] sm:$0xff] 0.0
        %4949 = vst [vmem:[#allocation2 + $0x100] sm:$0xff] 0.0
        %4950 = vst [vmem:[#allocation2 + $0x108] sm:$0xff] 0.0
        %4951 = vst [vmem:[#allocation2 + $0x110] sm:$0xff] 0.0
        %4952 = vst [vmem:[#allocation2 + $0x118] sm:$0xff] 0.0
        %4953 = vst [vmem:[#allocation2 + $0x120] sm:$0xff] 0.0
        %4954 = vst [vmem:[#allocation2 + $0x128] sm:$0xff] 0.0
        %4955 = vst [vmem:[#allocation2 + $0x18] sm:$0xff] %v4885
        %4956 = vst [vmem:[#allocation2 + $0x20] sm:$0xff] %v4886
        %4957 = vst [vmem:[#allocation2 + $0x28] sm:$0xff] %v4887
        %4958 = vst [vmem:[#allocation2 + $0x30] sm:$0xff] %v4888
        %4959 = vst [vmem:[#allocation2 + $0x38] sm:$0xff] %v4889
        %4960 = vst [vmem:[#allocation2 + $0x40] sm:$0xff] %v4890
        %4961 = vst [vmem:[#allocation2 + $0x48] sm:$0xff] %v4891
        %4962 = vst [vmem:[#allocation2 + $0x50] sm:$0xff] %v4892
        %4963 = vst [vmem:[#allocation2 + $0x58] sm:$0xff] %v4893
        %4964 = vst [vmem:[#allocation2 + $0x60] sm:$0xff] %v4894
        %4965 = vst [vmem:[#allocation2 + $0x68] sm:$0xff] %v4895
        %4966 = vst [vmem:[#allocation2 + $0x70] sm:$0xff] %v4896
        %4967 = vst [vmem:[#allocation2 + $0x78] sm:$0xff] %v4897
        %4968 = vst [vmem:[#allocation2 + $0x80] sm:$0xff] %v4898
        %4969 = vst [vmem:[#allocation2 + $0x88] sm:$0xff] %v4899
        %4970 = vst [vmem:[#allocation2 + $0x90] sm:$0xff] %v4900
        %4971 = vst [vmem:[#allocation2 + $0x98] sm:$0xff] %v4901
        %4972 = vst [vmem:[#allocation2 + $0xa0] sm:$0xff] %v4902
        %4973 = vst [vmem:[#allocation2 + $0xa8] sm:$0xff] %v4903
        %4974 = vst [vmem:[#allocation2 + $0xb0] sm:$0xff] %v4904
        %4975 = vst [vmem:[#allocation2 + $0xb8] sm:$0xff] %v4905
        %4976 = vst [vmem:[#allocation2 + $0xc0] sm:$0xff] %v4906
        %4977 = vst [vmem:[#allocation2 + $0xc8] sm:$0xff] %v4907
        %4978 = vst [vmem:[#allocation2 + $0xd0] sm:$0xff] %v4908
        %4979 = vst [vmem:[#allocation2 + $0xd8] sm:$0xff] %v4909
        %4980 = vst [vmem:[#allocation2 + $0xe0] sm:$0xff] %v4910
        %4981 = vst [vmem:[#allocation2 + $0xe8] sm:$0xff] %v4911
        %4982 = vst [vmem:[#allocation2 + $0xf0] sm:$0xff] %v4912
        %4983 = vst [vmem:[#allocation2 + $0xf8] sm:$0xff] %v4913
        %4984 = vst [vmem:[#allocation2 + $0x100] sm:$0xff] %v4914
        %4985 = vst [vmem:[#allocation2 + $0x108] sm:$0xff] %v4915
        %4986 = vst [vmem:[#allocation2 + $0x110] sm:$0xff] %v4916
        %v4987 = vld [vmem:[%s5] sm:$0x1]
        %v4989 = vlaneseq
        %v4990 = vshrl.u32 %v4989, 7
        %v4991 = vsub.s32 0, %v4990
        %v4992 = vrot.slane %v4987, %v4991
        %v4994 = vld [vmem:[#allocation2 + $0x7] sm:$0xff]
        %v4995 = vld [vmem:[#allocation2 + $0xf] sm:$0xff]
        %v4996 = vld [vmem:[#allocation2 + $0x17] sm:$0xff]
        %v4997 = vld [vmem:[#allocation2 + $0x1f] sm:$0xff]
        %v4998 = vld [vmem:[#allocation2 + $0x27] sm:$0xff]
        %v4999 = vld [vmem:[#allocation2 + $0x2f] sm:$0xff]
        %v5000 = vld [vmem:[#allocation2 + $0x37] sm:$0xff]
        %v5001 = vld [vmem:[#allocation2 + $0x3f] sm:$0xff]
        %v5002 = vld [vmem:[#allocation2 + $0x47] sm:$0xff]
        %v5003 = vld [vmem:[#allocation2 + $0x4f] sm:$0xff]
        %v5004 = vld [vmem:[#allocation2 + $0x57] sm:$0xff]
        %v5005 = vld [vmem:[#allocation2 + $0x5f] sm:$0xff]
        %v5006 = vld [vmem:[#allocation2 + $0x67] sm:$0xff]
        %v5007 = vld [vmem:[#allocation2 + $0x6f] sm:$0xff]
        %v5008 = vld [vmem:[#allocation2 + $0x77] sm:$0xff]
        %v5009 = vld [vmem:[#allocation2 + $0x7f] sm:$0xff]
        %v5010 = vld [vmem:[#allocation2 + $0x87] sm:$0xff]
        %v5011 = vld [vmem:[#allocation2 + $0x8f] sm:$0xff]
        %v5012 = vld [vmem:[#allocation2 + $0x97] sm:$0xff]
        %v5013 = vld [vmem:[#allocation2 + $0x9f] sm:$0xff]
        %v5014 = vld [vmem:[#allocation2 + $0xa7] sm:$0xff]
        %v5015 = vld [vmem:[#allocation2 + $0xaf] sm:$0xff]
        %v5016 = vld [vmem:[#allocation2 + $0xb7] sm:$0xff]
        %v5017 = vld [vmem:[#allocation2 + $0xbf] sm:$0xff]
        %v5018 = vld [vmem:[#allocation2 + $0xc7] sm:$0xff]
        %v5019 = vld [vmem:[#allocation2 + $0xcf] sm:$0xff]
        %v5020 = vld [vmem:[#allocation2 + $0xd7] sm:$0xff]
        %v5021 = vld [vmem:[#allocation2 + $0xdf] sm:$0xff]
        %v5022 = vld [vmem:[#allocation2 + $0xe7] sm:$0xff]
        %v5023 = vld [vmem:[#allocation2 + $0xef] sm:$0xff]
        %v5024 = vld [vmem:[#allocation2 + $0xf7] sm:$0xff]
        %v5025 = vld [vmem:[#allocation2 + $0xff] sm:$0xff]
        %v5058 = vmul.f32 %v4994, %v499
        %v5059 = vmul.f32 %v4995, %v503
        %v5060 = vmul.f32 %v4996, %v507
        %v5061 = vmul.f32 %v4997, %v511
        %v5062 = vmul.f32 %v4998, %v515
        %v5063 = vmul.f32 %v4999, %v519
        %v5064 = vmul.f32 %v5000, %v523
        %v5065 = vmul.f32 %v5001, %v527
        %v5066 = vmul.f32 %v5002, %v531
        %v5067 = vmul.f32 %v5003, %v535
        %v5068 = vmul.f32 %v5004, %v539
        %v5069 = vmul.f32 %v5005, %v543
        %v5070 = vmul.f32 %v5006, %v547
        %v5071 = vmul.f32 %v5007, %v551
        %v5072 = vmul.f32 %v5008, %v555
        %v5073 = vmul.f32 %v5009, %v559
        %v5074 = vmul.f32 %v5010, %v563
        %v5075 = vmul.f32 %v5011, %v567
        %v5076 = vmul.f32 %v5012, %v571
        %v5077 = vmul.f32 %v5013, %v575
        %v5078 = vmul.f32 %v5014, %v579
        %v5079 = vmul.f32 %v5015, %v583
        %v5080 = vmul.f32 %v5016, %v587
        %v5081 = vmul.f32 %v5017, %v591
        %v5082 = vmul.f32 %v5018, %v595
        %v5083 = vmul.f32 %v5019, %v599
        %v5084 = vmul.f32 %v5020, %v603
        %v5085 = vmul.f32 %v5021, %v607
        %v5086 = vmul.f32 %v5022, %v611
        %v5087 = vmul.f32 %v5023, %v615
        %v5088 = vmul.f32 %v5024, %v619
        %v5089 = vmul.f32 %v5025, %v623
        %v5090 = vpack.c.bf16 %v5059, %v5058
        %v5091 = vpack.c.bf16 %v5061, %v5060
        %v5092 = vpack.c.bf16 %v5063, %v5062
        %v5093 = vpack.c.bf16 %v5065, %v5064
        %v5094 = vpack.c.bf16 %v5067, %v5066
        %v5095 = vpack.c.bf16 %v5069, %v5068
        %v5096 = vpack.c.bf16 %v5071, %v5070
        %v5097 = vpack.c.bf16 %v5073, %v5072
        %v5098 = vpack.c.bf16 %v5075, %v5074
        %v5099 = vpack.c.bf16 %v5077, %v5076
        %v5100 = vpack.c.bf16 %v5079, %v5078
        %v5101 = vpack.c.bf16 %v5081, %v5080
        %v5102 = vpack.c.bf16 %v5083, %v5082
        %v5103 = vpack.c.bf16 %v5085, %v5084
        %v5104 = vpack.c.bf16 %v5087, %v5086
        %v5105 = vpack.c.bf16 %v5089, %v5088
        %v5106 = vld [vmem:[%s4] sm:$0xf]
        %v5107 = vld [vmem:[%s4 + $0x4] sm:$0xf]
        %v5108 = vld [vmem:[%s4 + $0x8] sm:$0xf]
        %v5109 = vld [vmem:[%s4 + $0xc] sm:$0xf]
        %v5110 = vld [vmem:[%s4 + $0x10] sm:$0xf]
        %v5111 = vld [vmem:[%s4 + $0x14] sm:$0xf]
        %v5112 = vld [vmem:[%s4 + $0x18] sm:$0xf]
        %v5113 = vld [vmem:[%s4 + $0x1c] sm:$0xf]
        %v5114 = vld [vmem:[%s4 + $0x20] sm:$0xf]
        %v5115 = vld [vmem:[%s4 + $0x24] sm:$0xf]
        %v5116 = vld [vmem:[%s4 + $0x28] sm:$0xf]
        %v5117 = vld [vmem:[%s4 + $0x2c] sm:$0xf]
        %v5118 = vld [vmem:[%s4 + $0x30] sm:$0xf]
        %v5119 = vld [vmem:[%s4 + $0x34] sm:$0xf]
        %v5120 = vld [vmem:[%s4 + $0x38] sm:$0xf]
        %v5121 = vld [vmem:[%s4 + $0x3c] sm:$0xf]
        %v5138 = vunpack.c.l.b16 %v5106
        %v5139 = vunpack.c.l.b16 %v5107
        %v5140 = vunpack.c.l.b16 %v5108
        %v5141 = vunpack.c.l.b16 %v5109
        %v5142 = vunpack.c.l.b16 %v5110
        %v5143 = vunpack.c.l.b16 %v5111
        %v5144 = vunpack.c.l.b16 %v5112
        %v5145 = vunpack.c.l.b16 %v5113
        %v5146 = vunpack.c.l.b16 %v5114
        %v5147 = vunpack.c.l.b16 %v5115
        %v5148 = vunpack.c.l.b16 %v5116
        %v5149 = vunpack.c.l.b16 %v5117
        %v5150 = vunpack.c.l.b16 %v5118
        %v5151 = vunpack.c.l.b16 %v5119
        %v5152 = vunpack.c.l.b16 %v5120
        %v5153 = vunpack.c.l.b16 %v5121
        %v5154 = vpack.c.b16 %v5139, %v5138
        %v5155 = vpack.c.b16 %v5141, %v5140
        %v5156 = vpack.c.b16 %v5143, %v5142
        %v5157 = vpack.c.b16 %v5145, %v5144
        %v5158 = vpack.c.b16 %v5147, %v5146
        %v5159 = vpack.c.b16 %v5149, %v5148
        %v5160 = vpack.c.b16 %v5151, %v5150
        %v5161 = vpack.c.b16 %v5153, %v5152
        %5170 = vmatprep.subr.bf16.mxu0 0
        %5171 = vmatpush1.bf16.msra.mxu0 %v5154
        %5172 = vmatprep.subr.bf16.mxu0 0
        %5173 = vmatpush1.bf16.msra.mxu0 %v5155
        %5174 = vmatprep.subr.bf16.mxu0 0
        %5175 = vmatpush1.bf16.msra.mxu0 %v5156
        %5176 = vmatprep.subr.bf16.mxu0 0
        %5177 = vmatpush1.bf16.msra.mxu0 %v5157
        %5178 = vmatprep.subr.bf16.mxu0 0
        %5179 = vmatpush1.bf16.msra.mxu0 %v5158
        %5180 = vmatprep.subr.bf16.mxu0 0
        %5181 = vmatpush1.bf16.msra.mxu0 %v5159
        %5182 = vmatprep.subr.bf16.mxu0 0
        %5183 = vmatpush1.bf16.msra.mxu0 %v5160
        %5184 = vmatprep.subr.bf16.mxu0 0
        %5185 = vmatpush1.bf16.msra.mxu0 %v5161
        %5186 = vmatprep.subr.bf16.mxu0 0
        %5187 = vmatpush1.bf16.msra.mxu0 0
        %5188 = vmatprep.subr.bf16.mxu0 0
        %5189 = vmatpush1.bf16.msra.mxu0 0
        %5190 = vmatprep.subr.bf16.mxu0 0
        %5191 = vmatpush1.bf16.msra.mxu0 0
        %5192 = vmatprep.subr.bf16.mxu0 0
        %5193 = vmatpush1.bf16.msra.mxu0 0
        %5194 = vmatprep.subr.bf16.mxu0 0
        %5195 = vmatpush1.bf16.msra.mxu0 0
        %5196 = vmatprep.subr.bf16.mxu0 0
        %5197 = vmatpush1.bf16.msra.mxu0 0
        %5198 = vmatprep.subr.bf16.mxu0 0
        %5199 = vmatpush1.bf16.msra.mxu0 0
        %5200 = vmatprep.subr.bf16.mxu0 0
        %5201 = vmatpush1.bf16.msra.mxu0 0
        %5202 = vmatprep.mubr.bf16.mxu0 0
        %5203 = vmatmul.mubr.bf16.gmra.mrb[0].mxu0 %v5090
        %v5204 = vpop.f32.mrb[0].mxu0
        %v5205 = vadd.f32 0.0, %v5204
        %v5206 = vpop.f32.mrb[0].mxu0
        %v5207 = vpop.f32.mrb[0].mxu0
        %v5208 = vadd.f32 0.0, %v5207
        %v5209 = vpop.f32.mrb[0].mxu0
        %5210 = vmatprep.mubr.bf16.mxu0 0
        %5211 = vmatmul.mubr.bf16.gmra.mrb[0].mxu0 %v5091
        %v5212 = vpop.f32.mrb[0].mxu0
        %v5213 = vadd.f32 0.0, %v5212
        %v5214 = vpop.f32.mrb[0].mxu0
        %v5215 = vpop.f32.mrb[0].mxu0
        %v5216 = vadd.f32 0.0, %v5215
        %v5217 = vpop.f32.mrb[0].mxu0
        %5218 = vmatprep.mubr.bf16.mxu0 0
        %5219 = vmatmul.mubr.bf16.gmra.mrb[0].mxu0 %v5092
        %v5220 = vpop.f32.mrb[0].mxu0
        %v5221 = vadd.f32 0.0, %v5220
        %v5222 = vpop.f32.mrb[0].mxu0
        %v5223 = vpop.f32.mrb[0].mxu0
        %v5224 = vadd.f32 0.0, %v5223
        %v5225 = vpop.f32.mrb[0].mxu0
        %5226 = vmatprep.mubr.bf16.mxu0 0
        %5227 = vmatmul.mubr.bf16.gmra.mrb[0].mxu0 %v5093
        %v5228 = vpop.f32.mrb[0].mxu0
        %v5229 = vadd.f32 0.0, %v5228
        %v5230 = vpop.f32.mrb[0].mxu0
        %v5231 = vpop.f32.mrb[0].mxu0
        %v5232 = vadd.f32 0.0, %v5231
        %v5233 = vpop.f32.mrb[0].mxu0
        %5234 = vmatprep.mubr.bf16.mxu0 0
        %5235 = vmatmul.mubr.bf16.gmra.mrb[0].mxu0 %v5094
        %v5236 = vpop.f32.mrb[0].mxu0
        %v5237 = vadd.f32 0.0, %v5236
        %v5238 = vpop.f32.mrb[0].mxu0
        %v5239 = vpop.f32.mrb[0].mxu0
        %v5240 = vadd.f32 0.0, %v5239
        %v5241 = vpop.f32.mrb[0].mxu0
        %5242 = vmatprep.mubr.bf16.mxu0 0
        %5243 = vmatmul.mubr.bf16.gmra.mrb[0].mxu0 %v5095
        %v5244 = vpop.f32.mrb[0].mxu0
        %v5245 = vadd.f32 0.0, %v5244
        %v5246 = vpop.f32.mrb[0].mxu0
        %v5247 = vpop.f32.mrb[0].mxu0
        %v5248 = vadd.f32 0.0, %v5247
        %v5249 = vpop.f32.mrb[0].mxu0
        %5250 = vmatprep.mubr.bf16.mxu0 0
        %5251 = vmatmul.mubr.bf16.gmra.mrb[0].mxu0 %v5096
        %v5252 = vpop.f32.mrb[0].mxu0
        %v5253 = vadd.f32 0.0, %v5252
        %v5254 = vpop.f32.mrb[0].mxu0
        %v5255 = vpop.f32.mrb[0].mxu0
        %v5256 = vadd.f32 0.0, %v5255
        %v5257 = vpop.f32.mrb[0].mxu0
        %5258 = vmatprep.mubr.bf16.mxu0 0
        %5259 = vmatmul.mubr.bf16.gmra.mrb[0].mxu0 %v5097
        %v5260 = vpop.f32.mrb[0].mxu0
        %v5261 = vadd.f32 0.0, %v5260
        %v5262 = vpop.f32.mrb[0].mxu0
        %v5263 = vpop.f32.mrb[0].mxu0
        %v5264 = vadd.f32 0.0, %v5263
        %v5265 = vpop.f32.mrb[0].mxu0
        %5266 = vmatprep.mubr.bf16.mxu0 0
        %5267 = vmatmul.mubr.bf16.gmra.mrb[0].mxu0 %v5098
        %v5268 = vpop.f32.mrb[0].mxu0
        %v5269 = vadd.f32 0.0, %v5268
        %v5270 = vpop.f32.mrb[0].mxu0
        %v5271 = vpop.f32.mrb[0].mxu0
        %v5272 = vadd.f32 0.0, %v5271
        %v5273 = vpop.f32.mrb[0].mxu0
        %5274 = vmatprep.mubr.bf16.mxu0 0
        %5275 = vmatmul.mubr.bf16.gmra.mrb[0].mxu0 %v5099
        %v5276 = vpop.f32.mrb[0].mxu0
        %v5277 = vadd.f32 0.0, %v5276
        %v5278 = vpop.f32.mrb[0].mxu0
        %v5279 = vpop.f32.mrb[0].mxu0
        %v5280 = vadd.f32 0.0, %v5279
        %v5281 = vpop.f32.mrb[0].mxu0
        %5282 = vmatprep.mubr.bf16.mxu0 0
        %5283 = vmatmul.mubr.bf16.gmra.mrb[0].mxu0 %v5100
        %v5284 = vpop.f32.mrb[0].mxu0
        %v5285 = vadd.f32 0.0, %v5284
        %v5286 = vpop.f32.mrb[0].mxu0
        %v5287 = vpop.f32.mrb[0].mxu0
        %v5288 = vadd.f32 0.0, %v5287
        %v5289 = vpop.f32.mrb[0].mxu0
        %5290 = vmatprep.mubr.bf16.mxu0 0
        %5291 = vmatmul.mubr.bf16.gmra.mrb[0].mxu0 %v5101
        %v5292 = vpop.f32.mrb[0].mxu0
        %v5293 = vadd.f32 0.0, %v5292
        %v5294 = vpop.f32.mrb[0].mxu0
        %v5295 = vpop.f32.mrb[0].mxu0
        %v5296 = vadd.f32 0.0, %v5295
        %v5297 = vpop.f32.mrb[0].mxu0
        %5298 = vmatprep.mubr.bf16.mxu0 0
        %5299 = vmatmul.mubr.bf16.gmra.mrb[0].mxu0 %v5102
        %v5300 = vpop.f32.mrb[0].mxu0
        %v5301 = vadd.f32 0.0, %v5300
        %v5302 = vpop.f32.mrb[0].mxu0
        %v5303 = vpop.f32.mrb[0].mxu0
        %v5304 = vadd.f32 0.0, %v5303
        %v5305 = vpop.f32.mrb[0].mxu0
        %5306 = vmatprep.mubr.bf16.mxu0 0
        %5307 = vmatmul.mubr.bf16.gmra.mrb[0].mxu0 %v5103
        %v5308 = vpop.f32.mrb[0].mxu0
        %v5309 = vadd.f32 0.0, %v5308
        %v5310 = vpop.f32.mrb[0].mxu0
        %v5311 = vpop.f32.mrb[0].mxu0
        %v5312 = vadd.f32 0.0, %v5311
        %v5313 = vpop.f32.mrb[0].mxu0
        %5314 = vmatprep.mubr.bf16.mxu0 0
        %5315 = vmatmul.mubr.bf16.gmra.mrb[0].mxu0 %v5104
        %v5316 = vpop.f32.mrb[0].mxu0
        %v5317 = vadd.f32 0.0, %v5316
        %v5318 = vpop.f32.mrb[0].mxu0
        %v5319 = vpop.f32.mrb[0].mxu0
        %v5320 = vadd.f32 0.0, %v5319
        %v5321 = vpop.f32.mrb[0].mxu0
        %5322 = vmatprep.mubr.bf16.mxu0 0
        %5323 = vmatmul.mubr.bf16.gmra.mrb[0].mxu0 %v5105
        %v5324 = vpop.f32.mrb[0].mxu0
        %v5325 = vadd.f32 0.0, %v5324
        %v5326 = vpop.f32.mrb[0].mxu0
        %v5327 = vpop.f32.mrb[0].mxu0
        %v5328 = vadd.f32 0.0, %v5327
        %v5329 = vpop.f32.mrb[0].mxu0
        %5330 = vdwg.mxu0
        %v5331 = vadd.f32 %v4992, %v5205
        %v5332 = vadd.f32 %v4992, %v5208
        %v5333 = vadd.f32 %v4992, %v5213
        %v5334 = vadd.f32 %v4992, %v5216
        %v5335 = vadd.f32 %v4992, %v5221
        %v5336 = vadd.f32 %v4992, %v5224
        %v5337 = vadd.f32 %v4992, %v5229
        %v5338 = vadd.f32 %v4992, %v5232
        %v5339 = vadd.f32 %v4992, %v5237
        %v5340 = vadd.f32 %v4992, %v5240
        %v5341 = vadd.f32 %v4992, %v5245
        %v5342 = vadd.f32 %v4992, %v5248
        %v5343 = vadd.f32 %v4992, %v5253
        %v5344 = vadd.f32 %v4992, %v5256
        %v5345 = vadd.f32 %v4992, %v5261
        %v5346 = vadd.f32 %v4992, %v5264
        %v5347 = vadd.f32 %v4992, %v5269
        %v5348 = vadd.f32 %v4992, %v5272
        %v5349 = vadd.f32 %v4992, %v5277
        %v5350 = vadd.f32 %v4992, %v5280
        %v5351 = vadd.f32 %v4992, %v5285
        %v5352 = vadd.f32 %v4992, %v5288
        %v5353 = vadd.f32 %v4992, %v5293
        %v5354 = vadd.f32 %v4992, %v5296
        %v5355 = vadd.f32 %v4992, %v5301
        %v5356 = vadd.f32 %v4992, %v5304
        %v5357 = vadd.f32 %v4992, %v5309
        %v5358 = vadd.f32 %v4992, %v5312
        %v5359 = vadd.f32 %v4992, %v5317
        %v5360 = vadd.f32 %v4992, %v5320
        %v5361 = vadd.f32 %v4992, %v5325
        %v5362 = vadd.f32 %v4992, %v5328
        %v5363 = vld [vmem:[#allocation2 + $0x8] sm:$0xff]
        %v5364 = vld [vmem:[#allocation2 + $0x10] sm:$0xff]
        %v5365 = vld [vmem:[#allocation2 + $0x18] sm:$0xff]
        %v5366 = vld [vmem:[#allocation2 + $0x20] sm:$0xff]
        %v5367 = vld [vmem:[#allocation2 + $0x28] sm:$0xff]
        %v5368 = vld [vmem:[#allocation2 + $0x30] sm:$0xff]
        %v5369 = vld [vmem:[#allocation2 + $0x38] sm:$0xff]
        %v5370 = vld [vmem:[#allocation2 + $0x40] sm:$0xff]
        %v5371 = vld [vmem:[#allocation2 + $0x48] sm:$0xff]
        %v5372 = vld [vmem:[#allocation2 + $0x50] sm:$0xff]
        %v5373 = vld [vmem:[#allocation2 + $0x58] sm:$0xff]
        %v5374 = vld [vmem:[#allocation2 + $0x60] sm:$0xff]
        %v5375 = vld [vmem:[#allocation2 + $0x68] sm:$0xff]
        %v5376 = vld [vmem:[#allocation2 + $0x70] sm:$0xff]
        %v5377 = vld [vmem:[#allocation2 + $0x78] sm:$0xff]
        %v5378 = vld [vmem:[#allocation2 + $0x80] sm:$0xff]
        %v5379 = vld [vmem:[#allocation2 + $0x88] sm:$0xff]
        %v5380 = vld [vmem:[#allocation2 + $0x90] sm:$0xff]
        %v5381 = vld [vmem:[#allocation2 + $0x98] sm:$0xff]
        %v5382 = vld [vmem:[#allocation2 + $0xa0] sm:$0xff]
        %v5383 = vld [vmem:[#allocation2 + $0xa8] sm:$0xff]
        %v5384 = vld [vmem:[#allocation2 + $0xb0] sm:$0xff]
        %v5385 = vld [vmem:[#allocation2 + $0xb8] sm:$0xff]
        %v5386 = vld [vmem:[#allocation2 + $0xc0] sm:$0xff]
        %v5387 = vld [vmem:[#allocation2 + $0xc8] sm:$0xff]
        %v5388 = vld [vmem:[#allocation2 + $0xd0] sm:$0xff]
        %v5389 = vld [vmem:[#allocation2 + $0xd8] sm:$0xff]
        %v5390 = vld [vmem:[#allocation2 + $0xe0] sm:$0xff]
        %v5391 = vld [vmem:[#allocation2 + $0xe8] sm:$0xff]
        %v5392 = vld [vmem:[#allocation2 + $0xf0] sm:$0xff]
        %v5393 = vld [vmem:[#allocation2 + $0xf8] sm:$0xff]
        %v5394 = vld [vmem:[#allocation2 + $0x100] sm:$0xff]
        %v5395 = vpack.c.bf16 %v5364, %v5363
        %v5396 = vpack.c.bf16 %v5366, %v5365
        %v5397 = vpack.c.bf16 %v5368, %v5367
        %v5398 = vpack.c.bf16 %v5370, %v5369
        %v5399 = vpack.c.bf16 %v5372, %v5371
        %v5400 = vpack.c.bf16 %v5374, %v5373
        %v5401 = vpack.c.bf16 %v5376, %v5375
        %v5402 = vpack.c.bf16 %v5378, %v5377
        %v5403 = vpack.c.bf16 %v5380, %v5379
        %v5404 = vpack.c.bf16 %v5382, %v5381
        %v5405 = vpack.c.bf16 %v5384, %v5383
        %v5406 = vpack.c.bf16 %v5386, %v5385
        %v5407 = vpack.c.bf16 %v5388, %v5387
        %v5408 = vpack.c.bf16 %v5390, %v5389
        %v5409 = vpack.c.bf16 %v5392, %v5391
        %v5410 = vpack.c.bf16 %v5394, %v5393
        %s5411 = scalar_lea.vmem %s4, 64
        %v5412 = vld [vmem:[%s5411] sm:$0xf]
        %v5413 = vld [vmem:[%s5411 + $0x4] sm:$0xf]
        %v5414 = vld [vmem:[%s5411 + $0x8] sm:$0xf]
        %v5415 = vld [vmem:[%s5411 + $0xc] sm:$0xf]
        %v5416 = vld [vmem:[%s5411 + $0x10] sm:$0xf]
        %v5417 = vld [vmem:[%s5411 + $0x14] sm:$0xf]
        %v5418 = vld [vmem:[%s5411 + $0x18] sm:$0xf]
        %v5419 = vld [vmem:[%s5411 + $0x1c] sm:$0xf]
        %v5420 = vld [vmem:[%s5411 + $0x20] sm:$0xf]
        %v5421 = vld [vmem:[%s5411 + $0x24] sm:$0xf]
        %v5422 = vld [vmem:[%s5411 + $0x28] sm:$0xf]
        %v5423 = vld [vmem:[%s5411 + $0x2c] sm:$0xf]
        %v5424 = vld [vmem:[%s5411 + $0x30] sm:$0xf]
        %v5425 = vld [vmem:[%s5411 + $0x34] sm:$0xf]
        %v5426 = vld [vmem:[%s5411 + $0x38] sm:$0xf]
        %v5427 = vld [vmem:[%s5411 + $0x3c] sm:$0xf]
        %v5444 = vunpack.c.l.b16 %v5412
        %v5445 = vunpack.c.l.b16 %v5413
        %v5446 = vunpack.c.l.b16 %v5414
        %v5447 = vunpack.c.l.b16 %v5415
        %v5448 = vunpack.c.l.b16 %v5416
        %v5449 = vunpack.c.l.b16 %v5417
        %v5450 = vunpack.c.l.b16 %v5418
        %v5451 = vunpack.c.l.b16 %v5419
        %v5452 = vunpack.c.l.b16 %v5420
        %v5453 = vunpack.c.l.b16 %v5421
        %v5454 = vunpack.c.l.b16 %v5422
        %v5455 = vunpack.c.l.b16 %v5423
        %v5456 = vunpack.c.l.b16 %v5424
        %v5457 = vunpack.c.l.b16 %v5425
        %v5458 = vunpack.c.l.b16 %v5426
        %v5459 = vunpack.c.l.b16 %v5427
        %v5460 = vpack.c.b16 %v5445, %v5444
        %v5461 = vpack.c.b16 %v5447, %v5446
        %v5462 = vpack.c.b16 %v5449, %v5448
        %v5463 = vpack.c.b16 %v5451, %v5450
        %v5464 = vpack.c.b16 %v5453, %v5452
        %v5465 = vpack.c.b16 %v5455, %v5454
        %v5466 = vpack.c.b16 %v5457, %v5456
        %v5467 = vpack.c.b16 %v5459, %v5458
        %5476 = vmatprep.subr.bf16.mxu0 0
        %5477 = vmatpush1.bf16.msra.mxu0 %v5460
        %5478 = vmatprep.subr.bf16.mxu0 0
        %5479 = vmatpush1.bf16.msra.mxu0 %v5461
        %5480 = vmatprep.subr.bf16.mxu0 0
        %5481 = vmatpush1.bf16.msra.mxu0 %v5462
        %5482 = vmatprep.subr.bf16.mxu0 0
        %5483 = vmatpush1.bf16.msra.mxu0 %v5463
        %5484 = vmatprep.subr.bf16.mxu0 0
        %5485 = vmatpush1.bf16.msra.mxu0 %v5464
        %5486 = vmatprep.subr.bf16.mxu0 0
        %5487 = vmatpush1.bf16.msra.mxu0 %v5465
        %5488 = vmatprep.subr.bf16.mxu0 0
        %5489 = vmatpush1.bf16.msra.mxu0 %v5466
        %5490 = vmatprep.subr.bf16.mxu0 0
        %5491 = vmatpush1.bf16.msra.mxu0 %v5467
        %5492 = vmatprep.subr.bf16.mxu0 0
        %5493 = vmatpush1.bf16.msra.mxu0 0
        %5494 = vmatprep.subr.bf16.mxu0 0
        %5495 = vmatpush1.bf16.msra.mxu0 0
        %5496 = vmatprep.subr.bf16.mxu0 0
        %5497 = vmatpush1.bf16.msra.mxu0 0
        %5498 = vmatprep.subr.bf16.mxu0 0
        %5499 = vmatpush1.bf16.msra.mxu0 0
        %5500 = vmatprep.subr.bf16.mxu0 0
        %5501 = vmatpush1.bf16.msra.mxu0 0
        %5502 = vmatprep.subr.bf16.mxu0 0
        %5503 = vmatpush1.bf16.msra.mxu0 0
        %5504 = vmatprep.subr.bf16.mxu0 0
        %5505 = vmatpush1.bf16.msra.mxu0 0
        %5506 = vmatprep.subr.bf16.mxu0 0
        %5507 = vmatpush1.bf16.msra.mxu0 0
        %5508 = vmatprep.mubr.bf16.mxu0 0
        %5509 = vmatmul.mubr.bf16.gmra.mrb[0].mxu0 %v5395
        %v5510 = vpop.f32.mrb[0].mxu0
        %v5511 = vadd.f32 0.0, %v5510
        %v5512 = vpop.f32.mrb[0].mxu0
        %v5513 = vpop.f32.mrb[0].mxu0
        %v5514 = vadd.f32 0.0, %v5513
        %v5515 = vpop.f32.mrb[0].mxu0
        %5516 = vmatprep.mubr.bf16.mxu0 0
        %5517 = vmatmul.mubr.bf16.gmra.mrb[0].mxu0 %v5396
        %v5518 = vpop.f32.mrb[0].mxu0
        %v5519 = vadd.f32 0.0, %v5518
        %v5520 = vpop.f32.mrb[0].mxu0
        %v5521 = vpop.f32.mrb[0].mxu0
        %v5522 = vadd.f32 0.0, %v5521
        %v5523 = vpop.f32.mrb[0].mxu0
        %5524 = vmatprep.mubr.bf16.mxu0 0
        %5525 = vmatmul.mubr.bf16.gmra.mrb[0].mxu0 %v5397
        %v5526 = vpop.f32.mrb[0].mxu0
        %v5527 = vadd.f32 0.0, %v5526
        %v5528 = vpop.f32.mrb[0].mxu0
        %v5529 = vpop.f32.mrb[0].mxu0
        %v5530 = vadd.f32 0.0, %v5529
        %v5531 = vpop.f32.mrb[0].mxu0
        %5532 = vmatprep.mubr.bf16.mxu0 0
        %5533 = vmatmul.mubr.bf16.gmra.mrb[0].mxu0 %v5398
        %v5534 = vpop.f32.mrb[0].mxu0
        %v5535 = vadd.f32 0.0, %v5534
        %v5536 = vpop.f32.mrb[0].mxu0
        %v5537 = vpop.f32.mrb[0].mxu0
        %v5538 = vadd.f32 0.0, %v5537
        %v5539 = vpop.f32.mrb[0].mxu0
        %5540 = vmatprep.mubr.bf16.mxu0 0
        %5541 = vmatmul.mubr.bf16.gmra.mrb[0].mxu0 %v5399
        %v5542 = vpop.f32.mrb[0].mxu0
        %v5543 = vadd.f32 0.0, %v5542
        %v5544 = vpop.f32.mrb[0].mxu0
        %v5545 = vpop.f32.mrb[0].mxu0
        %v5546 = vadd.f32 0.0, %v5545
        %v5547 = vpop.f32.mrb[0].mxu0
        %5548 = vmatprep.mubr.bf16.mxu0 0
        %5549 = vmatmul.mubr.bf16.gmra.mrb[0].mxu0 %v5400
        %v5550 = vpop.f32.mrb[0].mxu0
        %v5551 = vadd.f32 0.0, %v5550
        %v5552 = vpop.f32.mrb[0].mxu0
        %v5553 = vpop.f32.mrb[0].mxu0
        %v5554 = vadd.f32 0.0, %v5553
        %v5555 = vpop.f32.mrb[0].mxu0
        %5556 = vmatprep.mubr.bf16.mxu0 0
        %5557 = vmatmul.mubr.bf16.gmra.mrb[0].mxu0 %v5401
        %v5558 = vpop.f32.mrb[0].mxu0
        %v5559 = vadd.f32 0.0, %v5558
        %v5560 = vpop.f32.mrb[0].mxu0
        %v5561 = vpop.f32.mrb[0].mxu0
        %v5562 = vadd.f32 0.0, %v5561
        %v5563 = vpop.f32.mrb[0].mxu0
        %5564 = vmatprep.mubr.bf16.mxu0 0
        %5565 = vmatmul.mubr.bf16.gmra.mrb[0].mxu0 %v5402
        %v5566 = vpop.f32.mrb[0].mxu0
        %v5567 = vadd.f32 0.0, %v5566
        %v5568 = vpop.f32.mrb[0].mxu0
        %v5569 = vpop.f32.mrb[0].mxu0
        %v5570 = vadd.f32 0.0, %v5569
        %v5571 = vpop.f32.mrb[0].mxu0
        %5572 = vmatprep.mubr.bf16.mxu0 0
        %5573 = vmatmul.mubr.bf16.gmra.mrb[0].mxu0 %v5403
        %v5574 = vpop.f32.mrb[0].mxu0
        %v5575 = vadd.f32 0.0, %v5574
        %v5576 = vpop.f32.mrb[0].mxu0
        %v5577 = vpop.f32.mrb[0].mxu0
        %v5578 = vadd.f32 0.0, %v5577
        %v5579 = vpop.f32.mrb[0].mxu0
        %5580 = vmatprep.mubr.bf16.mxu0 0
        %5581 = vmatmul.mubr.bf16.gmra.mrb[0].mxu0 %v5404
        %v5582 = vpop.f32.mrb[0].mxu0
        %v5583 = vadd.f32 0.0, %v5582
        %v5584 = vpop.f32.mrb[0].mxu0
        %v5585 = vpop.f32.mrb[0].mxu0
        %v5586 = vadd.f32 0.0, %v5585
        %v5587 = vpop.f32.mrb[0].mxu0
        %5588 = vmatprep.mubr.bf16.mxu0 0
        %5589 = vmatmul.mubr.bf16.gmra.mrb[0].mxu0 %v5405
        %v5590 = vpop.f32.mrb[0].mxu0
        %v5591 = vadd.f32 0.0, %v5590
        %v5592 = vpop.f32.mrb[0].mxu0
        %v5593 = vpop.f32.mrb[0].mxu0
        %v5594 = vadd.f32 0.0, %v5593
        %v5595 = vpop.f32.mrb[0].mxu0
        %5596 = vmatprep.mubr.bf16.mxu0 0
        %5597 = vmatmul.mubr.bf16.gmra.mrb[0].mxu0 %v5406
        %v5598 = vpop.f32.mrb[0].mxu0
        %v5599 = vadd.f32 0.0, %v5598
        %v5600 = vpop.f32.mrb[0].mxu0
        %v5601 = vpop.f32.mrb[0].mxu0
        %v5602 = vadd.f32 0.0, %v5601
        %v5603 = vpop.f32.mrb[0].mxu0
        %5604 = vmatprep.mubr.bf16.mxu0 0
        %5605 = vmatmul.mubr.bf16.gmra.mrb[0].mxu0 %v5407
        %v5606 = vpop.f32.mrb[0].mxu0
        %v5607 = vadd.f32 0.0, %v5606
        %v5608 = vpop.f32.mrb[0].mxu0
        %v5609 = vpop.f32.mrb[0].mxu0
        %v5610 = vadd.f32 0.0, %v5609
        %v5611 = vpop.f32.mrb[0].mxu0
        %5612 = vmatprep.mubr.bf16.mxu0 0
        %5613 = vmatmul.mubr.bf16.gmra.mrb[0].mxu0 %v5408
        %v5614 = vpop.f32.mrb[0].mxu0
        %v5615 = vadd.f32 0.0, %v5614
        %v5616 = vpop.f32.mrb[0].mxu0
        %v5617 = vpop.f32.mrb[0].mxu0
        %v5618 = vadd.f32 0.0, %v5617
        %v5619 = vpop.f32.mrb[0].mxu0
        %5620 = vmatprep.mubr.bf16.mxu0 0
        %5621 = vmatmul.mubr.bf16.gmra.mrb[0].mxu0 %v5409
        %v5622 = vpop.f32.mrb[0].mxu0
        %v5623 = vadd.f32 0.0, %v5622
        %v5624 = vpop.f32.mrb[0].mxu0
        %v5625 = vpop.f32.mrb[0].mxu0
        %v5626 = vadd.f32 0.0, %v5625
        %v5627 = vpop.f32.mrb[0].mxu0
        %5628 = vmatprep.mubr.bf16.mxu0 0
        %5629 = vmatmul.mubr.bf16.gmra.mrb[0].mxu0 %v5410
        %v5630 = vpop.f32.mrb[0].mxu0
        %v5631 = vadd.f32 0.0, %v5630
        %v5632 = vpop.f32.mrb[0].mxu0
        %v5633 = vpop.f32.mrb[0].mxu0
        %v5634 = vadd.f32 0.0, %v5633
        %v5635 = vpop.f32.mrb[0].mxu0
        %5636 = vdwg.mxu0
        %v5637 = vadd.f32 %v5331, %v5511
        %v5638 = vadd.f32 %v5332, %v5514
        %v5639 = vadd.f32 %v5333, %v5519
        %v5640 = vadd.f32 %v5334, %v5522
        %v5641 = vadd.f32 %v5335, %v5527
        %v5642 = vadd.f32 %v5336, %v5530
        %v5643 = vadd.f32 %v5337, %v5535
        %v5644 = vadd.f32 %v5338, %v5538
        %v5645 = vadd.f32 %v5339, %v5543
        %v5646 = vadd.f32 %v5340, %v5546
        %v5647 = vadd.f32 %v5341, %v5551
        %v5648 = vadd.f32 %v5342, %v5554
        %v5649 = vadd.f32 %v5343, %v5559
        %v5650 = vadd.f32 %v5344, %v5562
        %v5651 = vadd.f32 %v5345, %v5567
        %v5652 = vadd.f32 %v5346, %v5570
        %v5653 = vadd.f32 %v5347, %v5575
        %v5654 = vadd.f32 %v5348, %v5578
        %v5655 = vadd.f32 %v5349, %v5583
        %v5656 = vadd.f32 %v5350, %v5586
        %v5657 = vadd.f32 %v5351, %v5591
        %v5658 = vadd.f32 %v5352, %v5594
        %v5659 = vadd.f32 %v5353, %v5599
        %v5660 = vadd.f32 %v5354, %v5602
        %v5661 = vadd.f32 %v5355, %v5607
        %v5662 = vadd.f32 %v5356, %v5610
        %v5663 = vadd.f32 %v5357, %v5615
        %v5664 = vadd.f32 %v5358, %v5618
        %v5665 = vadd.f32 %v5359, %v5623
        %v5666 = vadd.f32 %v5360, %v5626
        %v5667 = vadd.f32 %v5361, %v5631
        %v5668 = vadd.f32 %v5362, %v5634
        %v5669 = vld [vmem:[#allocation2 + $0x9] sm:$0xff]
        %v5670 = vld [vmem:[#allocation2 + $0x11] sm:$0xff]
        %v5671 = vld [vmem:[#allocation2 + $0x19] sm:$0xff]
        %v5672 = vld [vmem:[#allocation2 + $0x21] sm:$0xff]
        %v5673 = vld [vmem:[#allocation2 + $0x29] sm:$0xff]
        %v5674 = vld [vmem:[#allocation2 + $0x31] sm:$0xff]
        %v5675 = vld [vmem:[#allocation2 + $0x39] sm:$0xff]
        %v5676 = vld [vmem:[#allocation2 + $0x41] sm:$0xff]
        %v5677 = vld [vmem:[#allocation2 + $0x49] sm:$0xff]
        %v5678 = vld [vmem:[#allocation2 + $0x51] sm:$0xff]
        %v5679 = vld [vmem:[#allocation2 + $0x59] sm:$0xff]
        %v5680 = vld [vmem:[#allocation2 + $0x61] sm:$0xff]
        %v5681 = vld [vmem:[#allocation2 + $0x69] sm:$0xff]
        %v5682 = vld [vmem:[#allocation2 + $0x71] sm:$0xff]
        %v5683 = vld [vmem:[#allocation2 + $0x79] sm:$0xff]
        %v5684 = vld [vmem:[#allocation2 + $0x81] sm:$0xff]
        %v5685 = vld [vmem:[#allocation2 + $0x89] sm:$0xff]
        %v5686 = vld [vmem:[#allocation2 + $0x91] sm:$0xff]
        %v5687 = vld [vmem:[#allocation2 + $0x99] sm:$0xff]
        %v5688 = vld [vmem:[#allocation2 + $0xa1] sm:$0xff]
        %v5689 = vld [vmem:[#allocation2 + $0xa9] sm:$0xff]
        %v5690 = vld [vmem:[#allocation2 + $0xb1] sm:$0xff]
        %v5691 = vld [vmem:[#allocation2 + $0xb9] sm:$0xff]
        %v5692 = vld [vmem:[#allocation2 + $0xc1] sm:$0xff]
        %v5693 = vld [vmem:[#allocation2 + $0xc9] sm:$0xff]
        %v5694 = vld [vmem:[#allocation2 + $0xd1] sm:$0xff]
        %v5695 = vld [vmem:[#allocation2 + $0xd9] sm:$0xff]
        %v5696 = vld [vmem:[#allocation2 + $0xe1] sm:$0xff]
        %v5697 = vld [vmem:[#allocation2 + $0xe9] sm:$0xff]
        %v5698 = vld [vmem:[#allocation2 + $0xf1] sm:$0xff]
        %v5699 = vld [vmem:[#allocation2 + $0xf9] sm:$0xff]
        %v5700 = vld [vmem:[#allocation2 + $0x101] sm:$0xff]
        %v5733 = vmul.f32 %v5669, %v1566
        %v5734 = vmul.f32 %v5670, %v1570
        %v5735 = vmul.f32 %v5671, %v1574
        %v5736 = vmul.f32 %v5672, %v1578
        %v5737 = vmul.f32 %v5673, %v1582
        %v5738 = vmul.f32 %v5674, %v1586
        %v5739 = vmul.f32 %v5675, %v1590
        %v5740 = vmul.f32 %v5676, %v1594
        %v5741 = vmul.f32 %v5677, %v1598
        %v5742 = vmul.f32 %v5678, %v1602
        %v5743 = vmul.f32 %v5679, %v1606
        %v5744 = vmul.f32 %v5680, %v1610
        %v5745 = vmul.f32 %v5681, %v1614
        %v5746 = vmul.f32 %v5682, %v1618
        %v5747 = vmul.f32 %v5683, %v1622
        %v5748 = vmul.f32 %v5684, %v1626
        %v5749 = vmul.f32 %v5685, %v1630
        %v5750 = vmul.f32 %v5686, %v1634
        %v5751 = vmul.f32 %v5687, %v1638
        %v5752 = vmul.f32 %v5688, %v1642
        %v5753 = vmul.f32 %v5689, %v1646
        %v5754 = vmul.f32 %v5690, %v1650
        %v5755 = vmul.f32 %v5691, %v1654
        %v5756 = vmul.f32 %v5692, %v1658
        %v5757 = vmul.f32 %v5693, %v1662
        %v5758 = vmul.f32 %v5694, %v1666
        %v5759 = vmul.f32 %v5695, %v1670
        %v5760 = vmul.f32 %v5696, %v1674
        %v5761 = vmul.f32 %v5697, %v1678
        %v5762 = vmul.f32 %v5698, %v1682
        %v5763 = vmul.f32 %v5699, %v1686
        %v5764 = vmul.f32 %v5700, %v1690
        %v5765 = vpack.c.bf16 %v5734, %v5733
        %v5766 = vpack.c.bf16 %v5736, %v5735
        %v5767 = vpack.c.bf16 %v5738, %v5737
        %v5768 = vpack.c.bf16 %v5740, %v5739
        %v5769 = vpack.c.bf16 %v5742, %v5741
        %v5770 = vpack.c.bf16 %v5744, %v5743
        %v5771 = vpack.c.bf16 %v5746, %v5745
        %v5772 = vpack.c.bf16 %v5748, %v5747
        %v5773 = vpack.c.bf16 %v5750, %v5749
        %v5774 = vpack.c.bf16 %v5752, %v5751
        %v5775 = vpack.c.bf16 %v5754, %v5753
        %v5776 = vpack.c.bf16 %v5756, %v5755
        %v5777 = vpack.c.bf16 %v5758, %v5757
        %v5778 = vpack.c.bf16 %v5760, %v5759
        %v5779 = vpack.c.bf16 %v5762, %v5761
        %v5780 = vpack.c.bf16 %v5764, %v5763
        %s5781 = scalar_lea.vmem %s4, 128
        %v5782 = vld [vmem:[%s5781] sm:$0xf]
        %v5783 = vld [vmem:[%s5781 + $0x4] sm:$0xf]
        %v5784 = vld [vmem:[%s5781 + $0x8] sm:$0xf]
        %v5785 = vld [vmem:[%s5781 + $0xc] sm:$0xf]
        %v5786 = vld [vmem:[%s5781 + $0x10] sm:$0xf]
        %v5787 = vld [vmem:[%s5781 + $0x14] sm:$0xf]
        %v5788 = vld [vmem:[%s5781 + $0x18] sm:$0xf]
        %v5789 = vld [vmem:[%s5781 + $0x1c] sm:$0xf]
        %v5790 = vld [vmem:[%s5781 + $0x20] sm:$0xf]
        %v5791 = vld [vmem:[%s5781 + $0x24] sm:$0xf]
        %v5792 = vld [vmem:[%s5781 + $0x28] sm:$0xf]
        %v5793 = vld [vmem:[%s5781 + $0x2c] sm:$0xf]
        %v5794 = vld [vmem:[%s5781 + $0x30] sm:$0xf]
        %v5795 = vld [vmem:[%s5781 + $0x34] sm:$0xf]
        %v5796 = vld [vmem:[%s5781 + $0x38] sm:$0xf]
        %v5797 = vld [vmem:[%s5781 + $0x3c] sm:$0xf]
        %v5814 = vunpack.c.l.b16 %v5782
        %v5815 = vunpack.c.l.b16 %v5783
        %v5816 = vunpack.c.l.b16 %v5784
        %v5817 = vunpack.c.l.b16 %v5785
        %v5818 = vunpack.c.l.b16 %v5786
        %v5819 = vunpack.c.l.b16 %v5787
        %v5820 = vunpack.c.l.b16 %v5788
        %v5821 = vunpack.c.l.b16 %v5789
        %v5822 = vunpack.c.l.b16 %v5790
        %v5823 = vunpack.c.l.b16 %v5791
        %v5824 = vunpack.c.l.b16 %v5792
        %v5825 = vunpack.c.l.b16 %v5793
        %v5826 = vunpack.c.l.b16 %v5794
        %v5827 = vunpack.c.l.b16 %v5795
        %v5828 = vunpack.c.l.b16 %v5796
        %v5829 = vunpack.c.l.b16 %v5797
        %v5830 = vpack.c.b16 %v5815, %v5814
        %v5831 = vpack.c.b16 %v5817, %v5816
        %v5832 = vpack.c.b16 %v5819, %v5818
        %v5833 = vpack.c.b16 %v5821, %v5820
        %v5834 = vpack.c.b16 %v5823, %v5822
        %v5835 = vpack.c.b16 %v5825, %v5824
        %v5836 = vpack.c.b16 %v5827, %v5826
        %v5837 = vpack.c.b16 %v5829, %v5828
        %5846 = vmatprep.subr.bf16.mxu0 0
        %5847 = vmatpush1.bf16.msra.mxu0 %v5830
        %5848 = vmatprep.subr.bf16.mxu0 0
        %5849 = vmatpush1.bf16.msra.mxu0 %v5831
        %5850 = vmatprep.subr.bf16.mxu0 0
        %5851 = vmatpush1.bf16.msra.mxu0 %v5832
        %5852 = vmatprep.subr.bf16.mxu0 0
        %5853 = vmatpush1.bf16.msra.mxu0 %v5833
        %5854 = vmatprep.subr.bf16.mxu0 0
        %5855 = vmatpush1.bf16.msra.mxu0 %v5834
        %5856 = vmatprep.subr.bf16.mxu0 0
        %5857 = vmatpush1.bf16.msra.mxu0 %v5835
        %5858 = vmatprep.subr.bf16.mxu0 0
        %5859 = vmatpush1.bf16.msra.mxu0 %v5836
        %5860 = vmatprep.subr.bf16.mxu0 0
        %5861 = vmatpush1.bf16.msra.mxu0 %v5837
        %5862 = vmatprep.subr.bf16.mxu0 0
        %5863 = vmatpush1.bf16.msra.mxu0 0
        %5864 = vmatprep.subr.bf16.mxu0 0
        %5865 = vmatpush1.bf16.msra.mxu0 0
        %5866 = vmatprep.subr.bf16.mxu0 0
        %5867 = vmatpush1.bf16.msra.mxu0 0
        %5868 = vmatprep.subr.bf16.mxu0 0
        %5869 = vmatpush1.bf16.msra.mxu0 0
        %5870 = vmatprep.subr.bf16.mxu0 0
        %5871 = vmatpush1.bf16.msra.mxu0 0
        %5872 = vmatprep.subr.bf16.mxu0 0
        %5873 = vmatpush1.bf16.msra.mxu0 0
        %5874 = vmatprep.subr.bf16.mxu0 0
        %5875 = vmatpush1.bf16.msra.mxu0 0
        %5876 = vmatprep.subr.bf16.mxu0 0
        %5877 = vmatpush1.bf16.msra.mxu0 0
        %5878 = vmatprep.mubr.bf16.mxu0 0
        %5879 = vmatmul.mubr.bf16.gmra.mrb[0].mxu0 %v5765
        %v5880 = vpop.f32.mrb[0].mxu0
        %v5881 = vadd.f32 0.0, %v5880
        %v5882 = vpop.f32.mrb[0].mxu0
        %v5883 = vpop.f32.mrb[0].mxu0
        %v5884 = vadd.f32 0.0, %v5883
        %v5885 = vpop.f32.mrb[0].mxu0
        %5886 = vmatprep.mubr.bf16.mxu0 0
        %5887 = vmatmul.mubr.bf16.gmra.mrb[0].mxu0 %v5766
        %v5888 = vpop.f32.mrb[0].mxu0
        %v5889 = vadd.f32 0.0, %v5888
        %v5890 = vpop.f32.mrb[0].mxu0
        %v5891 = vpop.f32.mrb[0].mxu0
        %v5892 = vadd.f32 0.0, %v5891
        %v5893 = vpop.f32.mrb[0].mxu0
        %5894 = vmatprep.mubr.bf16.mxu0 0
        %5895 = vmatmul.mubr.bf16.gmra.mrb[0].mxu0 %v5767
        %v5896 = vpop.f32.mrb[0].mxu0
        %v5897 = vadd.f32 0.0, %v5896
        %v5898 = vpop.f32.mrb[0].mxu0
        %v5899 = vpop.f32.mrb[0].mxu0
        %v5900 = vadd.f32 0.0, %v5899
        %v5901 = vpop.f32.mrb[0].mxu0
        %5902 = vmatprep.mubr.bf16.mxu0 0
        %5903 = vmatmul.mubr.bf16.gmra.mrb[0].mxu0 %v5768
        %v5904 = vpop.f32.mrb[0].mxu0
        %v5905 = vadd.f32 0.0, %v5904
        %v5906 = vpop.f32.mrb[0].mxu0
        %v5907 = vpop.f32.mrb[0].mxu0
        %v5908 = vadd.f32 0.0, %v5907
        %v5909 = vpop.f32.mrb[0].mxu0
        %5910 = vmatprep.mubr.bf16.mxu0 0
        %5911 = vmatmul.mubr.bf16.gmra.mrb[0].mxu0 %v5769
        %v5912 = vpop.f32.mrb[0].mxu0
        %v5913 = vadd.f32 0.0, %v5912
        %v5914 = vpop.f32.mrb[0].mxu0
        %v5915 = vpop.f32.mrb[0].mxu0
        %v5916 = vadd.f32 0.0, %v5915
        %v5917 = vpop.f32.mrb[0].mxu0
        %5918 = vmatprep.mubr.bf16.mxu0 0
        %5919 = vmatmul.mubr.bf16.gmra.mrb[0].mxu0 %v5770
        %v5920 = vpop.f32.mrb[0].mxu0
        %v5921 = vadd.f32 0.0, %v5920
        %v5922 = vpop.f32.mrb[0].mxu0
        %v5923 = vpop.f32.mrb[0].mxu0
        %v5924 = vadd.f32 0.0, %v5923
        %v5925 = vpop.f32.mrb[0].mxu0
        %5926 = vmatprep.mubr.bf16.mxu0 0
        %5927 = vmatmul.mubr.bf16.gmra.mrb[0].mxu0 %v5771
        %v5928 = vpop.f32.mrb[0].mxu0
        %v5929 = vadd.f32 0.0, %v5928
        %v5930 = vpop.f32.mrb[0].mxu0
        %v5931 = vpop.f32.mrb[0].mxu0
        %v5932 = vadd.f32 0.0, %v5931
        %v5933 = vpop.f32.mrb[0].mxu0
        %5934 = vmatprep.mubr.bf16.mxu0 0
        %5935 = vmatmul.mubr.bf16.gmra.mrb[0].mxu0 %v5772
        %v5936 = vpop.f32.mrb[0].mxu0
        %v5937 = vadd.f32 0.0, %v5936
        %v5938 = vpop.f32.mrb[0].mxu0
        %v5939 = vpop.f32.mrb[0].mxu0
        %v5940 = vadd.f32 0.0, %v5939
        %v5941 = vpop.f32.mrb[0].mxu0
        %5942 = vmatprep.mubr.bf16.mxu0 0
        %5943 = vmatmul.mubr.bf16.gmra.mrb[0].mxu0 %v5773
        %v5944 = vpop.f32.mrb[0].mxu0
        %v5945 = vadd.f32 0.0, %v5944
        %v5946 = vpop.f32.mrb[0].mxu0
        %v5947 = vpop.f32.mrb[0].mxu0
        %v5948 = vadd.f32 0.0, %v5947
        %v5949 = vpop.f32.mrb[0].mxu0
        %5950 = vmatprep.mubr.bf16.mxu0 0
        %5951 = vmatmul.mubr.bf16.gmra.mrb[0].mxu0 %v5774
        %v5952 = vpop.f32.mrb[0].mxu0
        %v5953 = vadd.f32 0.0, %v5952
        %v5954 = vpop.f32.mrb[0].mxu0
        %v5955 = vpop.f32.mrb[0].mxu0
        %v5956 = vadd.f32 0.0, %v5955
        %v5957 = vpop.f32.mrb[0].mxu0
        %5958 = vmatprep.mubr.bf16.mxu0 0
        %5959 = vmatmul.mubr.bf16.gmra.mrb[0].mxu0 %v5775
        %v5960 = vpop.f32.mrb[0].mxu0
        %v5961 = vadd.f32 0.0, %v5960
        %v5962 = vpop.f32.mrb[0].mxu0
        %v5963 = vpop.f32.mrb[0].mxu0
        %v5964 = vadd.f32 0.0, %v5963
        %v5965 = vpop.f32.mrb[0].mxu0
        %5966 = vmatprep.mubr.bf16.mxu0 0
        %5967 = vmatmul.mubr.bf16.gmra.mrb[0].mxu0 %v5776
        %v5968 = vpop.f32.mrb[0].mxu0
        %v5969 = vadd.f32 0.0, %v5968
        %v5970 = vpop.f32.mrb[0].mxu0
        %v5971 = vpop.f32.mrb[0].mxu0
        %v5972 = vadd.f32 0.0, %v5971
        %v5973 = vpop.f32.mrb[0].mxu0
        %5974 = vmatprep.mubr.bf16.mxu0 0
        %5975 = vmatmul.mubr.bf16.gmra.mrb[0].mxu0 %v5777
        %v5976 = vpop.f32.mrb[0].mxu0
        %v5977 = vadd.f32 0.0, %v5976
        %v5978 = vpop.f32.mrb[0].mxu0
        %v5979 = vpop.f32.mrb[0].mxu0
        %v5980 = vadd.f32 0.0, %v5979
        %v5981 = vpop.f32.mrb[0].mxu0
        %5982 = vmatprep.mubr.bf16.mxu0 0
        %5983 = vmatmul.mubr.bf16.gmra.mrb[0].mxu0 %v5778
        %v5984 = vpop.f32.mrb[0].mxu0
        %v5985 = vadd.f32 0.0, %v5984
        %v5986 = vpop.f32.mrb[0].mxu0
        %v5987 = vpop.f32.mrb[0].mxu0
        %v5988 = vadd.f32 0.0, %v5987
        %v5989 = vpop.f32.mrb[0].mxu0
        %5990 = vmatprep.mubr.bf16.mxu0 0
        %5991 = vmatmul.mubr.bf16.gmra.mrb[0].mxu0 %v5779
        %v5992 = vpop.f32.mrb[0].mxu0
        %v5993 = vadd.f32 0.0, %v5992
        %v5994 = vpop.f32.mrb[0].mxu0
        %v5995 = vpop.f32.mrb[0].mxu0
        %v5996 = vadd.f32 0.0, %v5995
        %v5997 = vpop.f32.mrb[0].mxu0
        %5998 = vmatprep.mubr.bf16.mxu0 0
        %5999 = vmatmul.mubr.bf16.gmra.mrb[0].mxu0 %v5780
        %v6000 = vpop.f32.mrb[0].mxu0
        %v6001 = vadd.f32 0.0, %v6000
        %v6002 = vpop.f32.mrb[0].mxu0
        %v6003 = vpop.f32.mrb[0].mxu0
        %v6004 = vadd.f32 0.0, %v6003
        %v6005 = vpop.f32.mrb[0].mxu0
        %6006 = vdwg.mxu0
        %v6007 = vadd.f32 %v5637, %v5881
        %v6008 = vadd.f32 %v5638, %v5884
        %v6009 = vadd.f32 %v5639, %v5889
        %v6010 = vadd.f32 %v5640, %v5892
        %v6011 = vadd.f32 %v5641, %v5897
        %v6012 = vadd.f32 %v5642, %v5900
        %v6013 = vadd.f32 %v5643, %v5905
        %v6014 = vadd.f32 %v5644, %v5908
        %v6015 = vadd.f32 %v5645, %v5913
        %v6016 = vadd.f32 %v5646, %v5916
        %v6017 = vadd.f32 %v5647, %v5921
        %v6018 = vadd.f32 %v5648, %v5924
        %v6019 = vadd.f32 %v5649, %v5929
        %v6020 = vadd.f32 %v5650, %v5932
        %v6021 = vadd.f32 %v5651, %v5937
        %v6022 = vadd.f32 %v5652, %v5940
        %v6023 = vadd.f32 %v5653, %v5945
        %v6024 = vadd.f32 %v5654, %v5948
        %v6025 = vadd.f32 %v5655, %v5953
        %v6026 = vadd.f32 %v5656, %v5956
        %v6027 = vadd.f32 %v5657, %v5961
        %v6028 = vadd.f32 %v5658, %v5964
        %v6029 = vadd.f32 %v5659, %v5969
        %v6030 = vadd.f32 %v5660, %v5972
        %v6031 = vadd.f32 %v5661, %v5977
        %v6032 = vadd.f32 %v5662, %v5980
        %v6033 = vadd.f32 %v5663, %v5985
        %v6034 = vadd.f32 %v5664, %v5988
        %v6035 = vadd.f32 %v5665, %v5993
        %v6036 = vadd.f32 %v5666, %v5996
        %v6037 = vadd.f32 %v5667, %v6001
        %v6038 = vadd.f32 %v5668, %v6004
        %v6039 = vld [vmem:[#allocation2 + $0x17] sm:$0xff]
        %v6040 = vld [vmem:[#allocation2 + $0x1f] sm:$0xff]
        %v6041 = vld [vmem:[#allocation2 + $0x27] sm:$0xff]
        %v6042 = vld [vmem:[#allocation2 + $0x2f] sm:$0xff]
        %v6043 = vld [vmem:[#allocation2 + $0x37] sm:$0xff]
        %v6044 = vld [vmem:[#allocation2 + $0x3f] sm:$0xff]
        %v6045 = vld [vmem:[#allocation2 + $0x47] sm:$0xff]
        %v6046 = vld [vmem:[#allocation2 + $0x4f] sm:$0xff]
        %v6047 = vld [vmem:[#allocation2 + $0x57] sm:$0xff]
        %v6048 = vld [vmem:[#allocation2 + $0x5f] sm:$0xff]
        %v6049 = vld [vmem:[#allocation2 + $0x67] sm:$0xff]
        %v6050 = vld [vmem:[#allocation2 + $0x6f] sm:$0xff]
        %v6051 = vld [vmem:[#allocation2 + $0x77] sm:$0xff]
        %v6052 = vld [vmem:[#allocation2 + $0x7f] sm:$0xff]
        %v6053 = vld [vmem:[#allocation2 + $0x87] sm:$0xff]
        %v6054 = vld [vmem:[#allocation2 + $0x8f] sm:$0xff]
        %v6055 = vld [vmem:[#allocation2 + $0x97] sm:$0xff]
        %v6056 = vld [vmem:[#allocation2 + $0x9f] sm:$0xff]
        %v6057 = vld [vmem:[#allocation2 + $0xa7] sm:$0xff]
        %v6058 = vld [vmem:[#allocation2 + $0xaf] sm:$0xff]
        %v6059 = vld [vmem:[#allocation2 + $0xb7] sm:$0xff]
        %v6060 = vld [vmem:[#allocation2 + $0xbf] sm:$0xff]
        %v6061 = vld [vmem:[#allocation2 + $0xc7] sm:$0xff]
        %v6062 = vld [vmem:[#allocation2 + $0xcf] sm:$0xff]
        %v6063 = vld [vmem:[#allocation2 + $0xd7] sm:$0xff]
        %v6064 = vld [vmem:[#allocation2 + $0xdf] sm:$0xff]
        %v6065 = vld [vmem:[#allocation2 + $0xe7] sm:$0xff]
        %v6066 = vld [vmem:[#allocation2 + $0xef] sm:$0xff]
        %v6067 = vld [vmem:[#allocation2 + $0xf7] sm:$0xff]
        %v6068 = vld [vmem:[#allocation2 + $0xff] sm:$0xff]
        %v6069 = vld [vmem:[#allocation2 + $0x107] sm:$0xff]
        %v6070 = vld [vmem:[#allocation2 + $0x10f] sm:$0xff]
        %v6071 = vmul.f32 %v6039, %v499
        %v6072 = vmul.f32 %v6040, %v503
        %v6073 = vmul.f32 %v6041, %v507
        %v6074 = vmul.f32 %v6042, %v511
        %v6075 = vmul.f32 %v6043, %v515
        %v6076 = vmul.f32 %v6044, %v519
        %v6077 = vmul.f32 %v6045, %v523
        %v6078 = vmul.f32 %v6046, %v527
        %v6079 = vmul.f32 %v6047, %v531
        %v6080 = vmul.f32 %v6048, %v535
        %v6081 = vmul.f32 %v6049, %v539
        %v6082 = vmul.f32 %v6050, %v543
        %v6083 = vmul.f32 %v6051, %v547
        %v6084 = vmul.f32 %v6052, %v551
        %v6085 = vmul.f32 %v6053, %v555
        %v6086 = vmul.f32 %v6054, %v559
        %v6087 = vmul.f32 %v6055, %v563
        %v6088 = vmul.f32 %v6056, %v567
        %v6089 = vmul.f32 %v6057, %v571
        %v6090 = vmul.f32 %v6058, %v575
        %v6091 = vmul.f32 %v6059, %v579
        %v6092 = vmul.f32 %v6060, %v583
        %v6093 = vmul.f32 %v6061, %v587
        %v6094 = vmul.f32 %v6062, %v591
        %v6095 = vmul.f32 %v6063, %v595
        %v6096 = vmul.f32 %v6064, %v599
        %v6097 = vmul.f32 %v6065, %v603
        %v6098 = vmul.f32 %v6066, %v607
        %v6099 = vmul.f32 %v6067, %v611
        %v6100 = vmul.f32 %v6068, %v615
        %v6101 = vmul.f32 %v6069, %v619
        %v6102 = vmul.f32 %v6070, %v623
        %v6103 = vpack.c.bf16 %v6072, %v6071
        %v6104 = vpack.c.bf16 %v6074, %v6073
        %v6105 = vpack.c.bf16 %v6076, %v6075
        %v6106 = vpack.c.bf16 %v6078, %v6077
        %v6107 = vpack.c.bf16 %v6080, %v6079
        %v6108 = vpack.c.bf16 %v6082, %v6081
        %v6109 = vpack.c.bf16 %v6084, %v6083
        %v6110 = vpack.c.bf16 %v6086, %v6085
        %v6111 = vpack.c.bf16 %v6088, %v6087
        %v6112 = vpack.c.bf16 %v6090, %v6089
        %v6113 = vpack.c.bf16 %v6092, %v6091
        %v6114 = vpack.c.bf16 %v6094, %v6093
        %v6115 = vpack.c.bf16 %v6096, %v6095
        %v6116 = vpack.c.bf16 %v6098, %v6097
        %v6117 = vpack.c.bf16 %v6100, %v6099
        %v6118 = vpack.c.bf16 %v6102, %v6101
        %s6119 = scalar_lea.vmem %s4, 192
        %v6120 = vld [vmem:[%s6119] sm:$0xf]
        %v6121 = vld [vmem:[%s6119 + $0x4] sm:$0xf]
        %v6122 = vld [vmem:[%s6119 + $0x8] sm:$0xf]
        %v6123 = vld [vmem:[%s6119 + $0xc] sm:$0xf]
        %v6124 = vld [vmem:[%s6119 + $0x10] sm:$0xf]
        %v6125 = vld [vmem:[%s6119 + $0x14] sm:$0xf]
        %v6126 = vld [vmem:[%s6119 + $0x18] sm:$0xf]
        %v6127 = vld [vmem:[%s6119 + $0x1c] sm:$0xf]
        %v6128 = vld [vmem:[%s6119 + $0x20] sm:$0xf]
        %v6129 = vld [vmem:[%s6119 + $0x24] sm:$0xf]
        %v6130 = vld [vmem:[%s6119 + $0x28] sm:$0xf]
        %v6131 = vld [vmem:[%s6119 + $0x2c] sm:$0xf]
        %v6132 = vld [vmem:[%s6119 + $0x30] sm:$0xf]
        %v6133 = vld [vmem:[%s6119 + $0x34] sm:$0xf]
        %v6134 = vld [vmem:[%s6119 + $0x38] sm:$0xf]
        %v6135 = vld [vmem:[%s6119 + $0x3c] sm:$0xf]
        %v6152 = vunpack.c.l.b16 %v6120
        %v6153 = vunpack.c.l.b16 %v6121
        %v6154 = vunpack.c.l.b16 %v6122
        %v6155 = vunpack.c.l.b16 %v6123
        %v6156 = vunpack.c.l.b16 %v6124
        %v6157 = vunpack.c.l.b16 %v6125
        %v6158 = vunpack.c.l.b16 %v6126
        %v6159 = vunpack.c.l.b16 %v6127
        %v6160 = vunpack.c.l.b16 %v6128
        %v6161 = vunpack.c.l.b16 %v6129
        %v6162 = vunpack.c.l.b16 %v6130
        %v6163 = vunpack.c.l.b16 %v6131
        %v6164 = vunpack.c.l.b16 %v6132
        %v6165 = vunpack.c.l.b16 %v6133
        %v6166 = vunpack.c.l.b16 %v6134
        %v6167 = vunpack.c.l.b16 %v6135
        %v6168 = vpack.c.b16 %v6153, %v6152
        %v6169 = vpack.c.b16 %v6155, %v6154
        %v6170 = vpack.c.b16 %v6157, %v6156
        %v6171 = vpack.c.b16 %v6159, %v6158
        %v6172 = vpack.c.b16 %v6161, %v6160
        %v6173 = vpack.c.b16 %v6163, %v6162
        %v6174 = vpack.c.b16 %v6165, %v6164
        %v6175 = vpack.c.b16 %v6167, %v6166
        %6184 = vmatprep.subr.bf16.mxu0 0
        %6185 = vmatpush1.bf16.msra.mxu0 %v6168
        %6186 = vmatprep.subr.bf16.mxu0 0
        %6187 = vmatpush1.bf16.msra.mxu0 %v6169
        %6188 = vmatprep.subr.bf16.mxu0 0
        %6189 = vmatpush1.bf16.msra.mxu0 %v6170
        %6190 = vmatprep.subr.bf16.mxu0 0
        %6191 = vmatpush1.bf16.msra.mxu0 %v6171
        %6192 = vmatprep.subr.bf16.mxu0 0
        %6193 = vmatpush1.bf16.msra.mxu0 %v6172
        %6194 = vmatprep.subr.bf16.mxu0 0
        %6195 = vmatpush1.bf16.msra.mxu0 %v6173
        %6196 = vmatprep.subr.bf16.mxu0 0
        %6197 = vmatpush1.bf16.msra.mxu0 %v6174
        %6198 = vmatprep.subr.bf16.mxu0 0
        %6199 = vmatpush1.bf16.msra.mxu0 %v6175
        %6200 = vmatprep.subr.bf16.mxu0 0
        %6201 = vmatpush1.bf16.msra.mxu0 0
        %6202 = vmatprep.subr.bf16.mxu0 0
        %6203 = vmatpush1.bf16.msra.mxu0 0
        %6204 = vmatprep.subr.bf16.mxu0 0
        %6205 = vmatpush1.bf16.msra.mxu0 0
        %6206 = vmatprep.subr.bf16.mxu0 0
        %6207 = vmatpush1.bf16.msra.mxu0 0
        %6208 = vmatprep.subr.bf16.mxu0 0
        %6209 = vmatpush1.bf16.msra.mxu0 0
        %6210 = vmatprep.subr.bf16.mxu0 0
        %6211 = vmatpush1.bf16.msra.mxu0 0
        %6212 = vmatprep.subr.bf16.mxu0 0
        %6213 = vmatpush1.bf16.msra.mxu0 0
        %6214 = vmatprep.subr.bf16.mxu0 0
        %6215 = vmatpush1.bf16.msra.mxu0 0
        %6216 = vmatprep.mubr.bf16.mxu0 0
        %6217 = vmatmul.mubr.bf16.gmra.mrb[0].mxu0 %v6103
        %v6218 = vpop.f32.mrb[0].mxu0
        %v6219 = vadd.f32 0.0, %v6218
        %v6220 = vpop.f32.mrb[0].mxu0
        %v6221 = vpop.f32.mrb[0].mxu0
        %v6222 = vadd.f32 0.0, %v6221
        %v6223 = vpop.f32.mrb[0].mxu0
        %6224 = vmatprep.mubr.bf16.mxu0 0
        %6225 = vmatmul.mubr.bf16.gmra.mrb[0].mxu0 %v6104
        %v6226 = vpop.f32.mrb[0].mxu0
        %v6227 = vadd.f32 0.0, %v6226
        %v6228 = vpop.f32.mrb[0].mxu0
        %v6229 = vpop.f32.mrb[0].mxu0
        %v6230 = vadd.f32 0.0, %v6229
        %v6231 = vpop.f32.mrb[0].mxu0
        %6232 = vmatprep.mubr.bf16.mxu0 0
        %6233 = vmatmul.mubr.bf16.gmra.mrb[0].mxu0 %v6105
        %v6234 = vpop.f32.mrb[0].mxu0
        %v6235 = vadd.f32 0.0, %v6234
        %v6236 = vpop.f32.mrb[0].mxu0
        %v6237 = vpop.f32.mrb[0].mxu0
        %v6238 = vadd.f32 0.0, %v6237
        %v6239 = vpop.f32.mrb[0].mxu0
        %6240 = vmatprep.mubr.bf16.mxu0 0
        %6241 = vmatmul.mubr.bf16.gmra.mrb[0].mxu0 %v6106
        %v6242 = vpop.f32.mrb[0].mxu0
        %v6243 = vadd.f32 0.0, %v6242
        %v6244 = vpop.f32.mrb[0].mxu0
        %v6245 = vpop.f32.mrb[0].mxu0
        %v6246 = vadd.f32 0.0, %v6245
        %v6247 = vpop.f32.mrb[0].mxu0
        %6248 = vmatprep.mubr.bf16.mxu0 0
        %6249 = vmatmul.mubr.bf16.gmra.mrb[0].mxu0 %v6107
        %v6250 = vpop.f32.mrb[0].mxu0
        %v6251 = vadd.f32 0.0, %v6250
        %v6252 = vpop.f32.mrb[0].mxu0
        %v6253 = vpop.f32.mrb[0].mxu0
        %v6254 = vadd.f32 0.0, %v6253
        %v6255 = vpop.f32.mrb[0].mxu0
        %6256 = vmatprep.mubr.bf16.mxu0 0
        %6257 = vmatmul.mubr.bf16.gmra.mrb[0].mxu0 %v6108
        %v6258 = vpop.f32.mrb[0].mxu0
        %v6259 = vadd.f32 0.0, %v6258
        %v6260 = vpop.f32.mrb[0].mxu0
        %v6261 = vpop.f32.mrb[0].mxu0
        %v6262 = vadd.f32 0.0, %v6261
        %v6263 = vpop.f32.mrb[0].mxu0
        %6264 = vmatprep.mubr.bf16.mxu0 0
        %6265 = vmatmul.mubr.bf16.gmra.mrb[0].mxu0 %v6109
        %v6266 = vpop.f32.mrb[0].mxu0
        %v6267 = vadd.f32 0.0, %v6266
        %v6268 = vpop.f32.mrb[0].mxu0
        %v6269 = vpop.f32.mrb[0].mxu0
        %v6270 = vadd.f32 0.0, %v6269
        %v6271 = vpop.f32.mrb[0].mxu0
        %6272 = vmatprep.mubr.bf16.mxu0 0
        %6273 = vmatmul.mubr.bf16.gmra.mrb[0].mxu0 %v6110
        %v6274 = vpop.f32.mrb[0].mxu0
        %v6275 = vadd.f32 0.0, %v6274
        %v6276 = vpop.f32.mrb[0].mxu0
        %v6277 = vpop.f32.mrb[0].mxu0
        %v6278 = vadd.f32 0.0, %v6277
        %v6279 = vpop.f32.mrb[0].mxu0
        %6280 = vmatprep.mubr.bf16.mxu0 0
        %6281 = vmatmul.mubr.bf16.gmra.mrb[0].mxu0 %v6111
        %v6282 = vpop.f32.mrb[0].mxu0
        %v6283 = vadd.f32 0.0, %v6282
        %v6284 = vpop.f32.mrb[0].mxu0
        %v6285 = vpop.f32.mrb[0].mxu0
        %v6286 = vadd.f32 0.0, %v6285
        %v6287 = vpop.f32.mrb[0].mxu0
        %6288 = vmatprep.mubr.bf16.mxu0 0
        %6289 = vmatmul.mubr.bf16.gmra.mrb[0].mxu0 %v6112
        %v6290 = vpop.f32.mrb[0].mxu0
        %v6291 = vadd.f32 0.0, %v6290
        %v6292 = vpop.f32.mrb[0].mxu0
        %v6293 = vpop.f32.mrb[0].mxu0
        %v6294 = vadd.f32 0.0, %v6293
        %v6295 = vpop.f32.mrb[0].mxu0
        %6296 = vmatprep.mubr.bf16.mxu0 0
        %6297 = vmatmul.mubr.bf16.gmra.mrb[0].mxu0 %v6113
        %v6298 = vpop.f32.mrb[0].mxu0
        %v6299 = vadd.f32 0.0, %v6298
        %v6300 = vpop.f32.mrb[0].mxu0
        %v6301 = vpop.f32.mrb[0].mxu0
        %v6302 = vadd.f32 0.0, %v6301
        %v6303 = vpop.f32.mrb[0].mxu0
        %6304 = vmatprep.mubr.bf16.mxu0 0
        %6305 = vmatmul.mubr.bf16.gmra.mrb[0].mxu0 %v6114
        %v6306 = vpop.f32.mrb[0].mxu0
        %v6307 = vadd.f32 0.0, %v6306
        %v6308 = vpop.f32.mrb[0].mxu0
        %v6309 = vpop.f32.mrb[0].mxu0
        %v6310 = vadd.f32 0.0, %v6309
        %v6311 = vpop.f32.mrb[0].mxu0
        %6312 = vmatprep.mubr.bf16.mxu0 0
        %6313 = vmatmul.mubr.bf16.gmra.mrb[0].mxu0 %v6115
        %v6314 = vpop.f32.mrb[0].mxu0
        %v6315 = vadd.f32 0.0, %v6314
        %v6316 = vpop.f32.mrb[0].mxu0
        %v6317 = vpop.f32.mrb[0].mxu0
        %v6318 = vadd.f32 0.0, %v6317
        %v6319 = vpop.f32.mrb[0].mxu0
        %6320 = vmatprep.mubr.bf16.mxu0 0
        %6321 = vmatmul.mubr.bf16.gmra.mrb[0].mxu0 %v6116
        %v6322 = vpop.f32.mrb[0].mxu0
        %v6323 = vadd.f32 0.0, %v6322
        %v6324 = vpop.f32.mrb[0].mxu0
        %v6325 = vpop.f32.mrb[0].mxu0
        %v6326 = vadd.f32 0.0, %v6325
        %v6327 = vpop.f32.mrb[0].mxu0
        %6328 = vmatprep.mubr.bf16.mxu0 0
        %6329 = vmatmul.mubr.bf16.gmra.mrb[0].mxu0 %v6117
        %v6330 = vpop.f32.mrb[0].mxu0
        %v6331 = vadd.f32 0.0, %v6330
        %v6332 = vpop.f32.mrb[0].mxu0
        %v6333 = vpop.f32.mrb[0].mxu0
        %v6334 = vadd.f32 0.0, %v6333
        %v6335 = vpop.f32.mrb[0].mxu0
        %6336 = vmatprep.mubr.bf16.mxu0 0
        %6337 = vmatmul.mubr.bf16.gmra.mrb[0].mxu0 %v6118
        %v6338 = vpop.f32.mrb[0].mxu0
        %v6339 = vadd.f32 0.0, %v6338
        %v6340 = vpop.f32.mrb[0].mxu0
        %v6341 = vpop.f32.mrb[0].mxu0
        %v6342 = vadd.f32 0.0, %v6341
        %v6343 = vpop.f32.mrb[0].mxu0
        %6344 = vdwg.mxu0
        %v6345 = vadd.f32 %v6007, %v6219
        %v6346 = vadd.f32 %v6008, %v6222
        %v6347 = vadd.f32 %v6009, %v6227
        %v6348 = vadd.f32 %v6010, %v6230
        %v6349 = vadd.f32 %v6011, %v6235
        %v6350 = vadd.f32 %v6012, %v6238
        %v6351 = vadd.f32 %v6013, %v6243
        %v6352 = vadd.f32 %v6014, %v6246
        %v6353 = vadd.f32 %v6015, %v6251
        %v6354 = vadd.f32 %v6016, %v6254
        %v6355 = vadd.f32 %v6017, %v6259
        %v6356 = vadd.f32 %v6018, %v6262
        %v6357 = vadd.f32 %v6019, %v6267
        %v6358 = vadd.f32 %v6020, %v6270
        %v6359 = vadd.f32 %v6021, %v6275
        %v6360 = vadd.f32 %v6022, %v6278
        %v6361 = vadd.f32 %v6023, %v6283
        %v6362 = vadd.f32 %v6024, %v6286
        %v6363 = vadd.f32 %v6025, %v6291
        %v6364 = vadd.f32 %v6026, %v6294
        %v6365 = vadd.f32 %v6027, %v6299
        %v6366 = vadd.f32 %v6028, %v6302
        %v6367 = vadd.f32 %v6029, %v6307
        %v6368 = vadd.f32 %v6030, %v6310
        %v6369 = vadd.f32 %v6031, %v6315
        %v6370 = vadd.f32 %v6032, %v6318
        %v6371 = vadd.f32 %v6033, %v6323
        %v6372 = vadd.f32 %v6034, %v6326
        %v6373 = vadd.f32 %v6035, %v6331
        %v6374 = vadd.f32 %v6036, %v6334
        %v6375 = vadd.f32 %v6037, %v6339
        %v6376 = vadd.f32 %v6038, %v6342
        %v6377 = vld [vmem:[#allocation2 + $0x18] sm:$0xff]
        %v6378 = vld [vmem:[#allocation2 + $0x20] sm:$0xff]
        %v6379 = vld [vmem:[#allocation2 + $0x28] sm:$0xff]
        %v6380 = vld [vmem:[#allocation2 + $0x30] sm:$0xff]
        %v6381 = vld [vmem:[#allocation2 + $0x38] sm:$0xff]
        %v6382 = vld [vmem:[#allocation2 + $0x40] sm:$0xff]
        %v6383 = vld [vmem:[#allocation2 + $0x48] sm:$0xff]
        %v6384 = vld [vmem:[#allocation2 + $0x50] sm:$0xff]
        %v6385 = vld [vmem:[#allocation2 + $0x58] sm:$0xff]
        %v6386 = vld [vmem:[#allocation2 + $0x60] sm:$0xff]
        %v6387 = vld [vmem:[#allocation2 + $0x68] sm:$0xff]
        %v6388 = vld [vmem:[#allocation2 + $0x70] sm:$0xff]
        %v6389 = vld [vmem:[#allocation2 + $0x78] sm:$0xff]
        %v6390 = vld [vmem:[#allocation2 + $0x80] sm:$0xff]
        %v6391 = vld [vmem:[#allocation2 + $0x88] sm:$0xff]
        %v6392 = vld [vmem:[#allocation2 + $0x90] sm:$0xff]
        %v6393 = vld [vmem:[#allocation2 + $0x98] sm:$0xff]
        %v6394 = vld [vmem:[#allocation2 + $0xa0] sm:$0xff]
        %v6395 = vld [vmem:[#allocation2 + $0xa8] sm:$0xff]
        %v6396 = vld [vmem:[#allocation2 + $0xb0] sm:$0xff]
        %v6397 = vld [vmem:[#allocation2 + $0xb8] sm:$0xff]
        %v6398 = vld [vmem:[#allocation2 + $0xc0] sm:$0xff]
        %v6399 = vld [vmem:[#allocation2 + $0xc8] sm:$0xff]
        %v6400 = vld [vmem:[#allocation2 + $0xd0] sm:$0xff]
        %v6401 = vld [vmem:[#allocation2 + $0xd8] sm:$0xff]
        %v6402 = vld [vmem:[#allocation2 + $0xe0] sm:$0xff]
        %v6403 = vld [vmem:[#allocation2 + $0xe8] sm:$0xff]
        %v6404 = vld [vmem:[#allocation2 + $0xf0] sm:$0xff]
        %v6405 = vld [vmem:[#allocation2 + $0xf8] sm:$0xff]
        %v6406 = vld [vmem:[#allocation2 + $0x100] sm:$0xff]
        %v6407 = vld [vmem:[#allocation2 + $0x108] sm:$0xff]
        %v6408 = vld [vmem:[#allocation2 + $0x110] sm:$0xff]
        %v6409 = vpack.c.bf16 %v6378, %v6377
        %v6410 = vpack.c.bf16 %v6380, %v6379
        %v6411 = vpack.c.bf16 %v6382, %v6381
        %v6412 = vpack.c.bf16 %v6384, %v6383
        %v6413 = vpack.c.bf16 %v6386, %v6385
        %v6414 = vpack.c.bf16 %v6388, %v6387
        %v6415 = vpack.c.bf16 %v6390, %v6389
        %v6416 = vpack.c.bf16 %v6392, %v6391
        %v6417 = vpack.c.bf16 %v6394, %v6393
        %v6418 = vpack.c.bf16 %v6396, %v6395
        %v6419 = vpack.c.bf16 %v6398, %v6397
        %v6420 = vpack.c.bf16 %v6400, %v6399
        %v6421 = vpack.c.bf16 %v6402, %v6401
        %v6422 = vpack.c.bf16 %v6404, %v6403
        %v6423 = vpack.c.bf16 %v6406, %v6405
        %v6424 = vpack.c.bf16 %v6408, %v6407
        %s6425 = scalar_lea.vmem %s4, 256
        %v6426 = vld [vmem:[%s6425] sm:$0xf]
        %v6427 = vld [vmem:[%s6425 + $0x4] sm:$0xf]
        %v6428 = vld [vmem:[%s6425 + $0x8] sm:$0xf]
        %v6429 = vld [vmem:[%s6425 + $0xc] sm:$0xf]
        %v6430 = vld [vmem:[%s6425 + $0x10] sm:$0xf]
        %v6431 = vld [vmem:[%s6425 + $0x14] sm:$0xf]
        %v6432 = vld [vmem:[%s6425 + $0x18] sm:$0xf]
        %v6433 = vld [vmem:[%s6425 + $0x1c] sm:$0xf]
        %v6434 = vld [vmem:[%s6425 + $0x20] sm:$0xf]
        %v6435 = vld [vmem:[%s6425 + $0x24] sm:$0xf]
        %v6436 = vld [vmem:[%s6425 + $0x28] sm:$0xf]
        %v6437 = vld [vmem:[%s6425 + $0x2c] sm:$0xf]
        %v6438 = vld [vmem:[%s6425 + $0x30] sm:$0xf]
        %v6439 = vld [vmem:[%s6425 + $0x34] sm:$0xf]
        %v6440 = vld [vmem:[%s6425 + $0x38] sm:$0xf]
        %v6441 = vld [vmem:[%s6425 + $0x3c] sm:$0xf]
        %v6458 = vunpack.c.l.b16 %v6426
        %v6459 = vunpack.c.l.b16 %v6427
        %v6460 = vunpack.c.l.b16 %v6428
        %v6461 = vunpack.c.l.b16 %v6429
        %v6462 = vunpack.c.l.b16 %v6430
        %v6463 = vunpack.c.l.b16 %v6431
        %v6464 = vunpack.c.l.b16 %v6432
        %v6465 = vunpack.c.l.b16 %v6433
        %v6466 = vunpack.c.l.b16 %v6434
        %v6467 = vunpack.c.l.b16 %v6435
        %v6468 = vunpack.c.l.b16 %v6436
        %v6469 = vunpack.c.l.b16 %v6437
        %v6470 = vunpack.c.l.b16 %v6438
        %v6471 = vunpack.c.l.b16 %v6439
        %v6472 = vunpack.c.l.b16 %v6440
        %v6473 = vunpack.c.l.b16 %v6441
        %v6474 = vpack.c.b16 %v6459, %v6458
        %v6475 = vpack.c.b16 %v6461, %v6460
        %v6476 = vpack.c.b16 %v6463, %v6462
        %v6477 = vpack.c.b16 %v6465, %v6464
        %v6478 = vpack.c.b16 %v6467, %v6466
        %v6479 = vpack.c.b16 %v6469, %v6468
        %v6480 = vpack.c.b16 %v6471, %v6470
        %v6481 = vpack.c.b16 %v6473, %v6472
        %6490 = vmatprep.subr.bf16.mxu0 0
        %6491 = vmatpush1.bf16.msra.mxu0 %v6474
        %6492 = vmatprep.subr.bf16.mxu0 0
        %6493 = vmatpush1.bf16.msra.mxu0 %v6475
        %6494 = vmatprep.subr.bf16.mxu0 0
        %6495 = vmatpush1.bf16.msra.mxu0 %v6476
        %6496 = vmatprep.subr.bf16.mxu0 0
        %6497 = vmatpush1.bf16.msra.mxu0 %v6477
        %6498 = vmatprep.subr.bf16.mxu0 0
        %6499 = vmatpush1.bf16.msra.mxu0 %v6478
        %6500 = vmatprep.subr.bf16.mxu0 0
        %6501 = vmatpush1.bf16.msra.mxu0 %v6479
        %6502 = vmatprep.subr.bf16.mxu0 0
        %6503 = vmatpush1.bf16.msra.mxu0 %v6480
        %6504 = vmatprep.subr.bf16.mxu0 0
        %6505 = vmatpush1.bf16.msra.mxu0 %v6481
        %6506 = vmatprep.subr.bf16.mxu0 0
        %6507 = vmatpush1.bf16.msra.mxu0 0
        %6508 = vmatprep.subr.bf16.mxu0 0
        %6509 = vmatpush1.bf16.msra.mxu0 0
        %6510 = vmatprep.subr.bf16.mxu0 0
        %6511 = vmatpush1.bf16.msra.mxu0 0
        %6512 = vmatprep.subr.bf16.mxu0 0
        %6513 = vmatpush1.bf16.msra.mxu0 0
        %6514 = vmatprep.subr.bf16.mxu0 0
        %6515 = vmatpush1.bf16.msra.mxu0 0
        %6516 = vmatprep.subr.bf16.mxu0 0
        %6517 = vmatpush1.bf16.msra.mxu0 0
        %6518 = vmatprep.subr.bf16.mxu0 0
        %6519 = vmatpush1.bf16.msra.mxu0 0
        %6520 = vmatprep.subr.bf16.mxu0 0
        %6521 = vmatpush1.bf16.msra.mxu0 0
        %6522 = vmatprep.mubr.bf16.mxu0 0
        %6523 = vmatmul.mubr.bf16.gmra.mrb[0].mxu0 %v6409
        %v6524 = vpop.f32.mrb[0].mxu0
        %v6525 = vadd.f32 0.0, %v6524
        %v6526 = vpop.f32.mrb[0].mxu0
        %v6527 = vpop.f32.mrb[0].mxu0
        %v6528 = vadd.f32 0.0, %v6527
        %v6529 = vpop.f32.mrb[0].mxu0
        %6530 = vmatprep.mubr.bf16.mxu0 0
        %6531 = vmatmul.mubr.bf16.gmra.mrb[0].mxu0 %v6410
        %v6532 = vpop.f32.mrb[0].mxu0
        %v6533 = vadd.f32 0.0, %v6532
        %v6534 = vpop.f32.mrb[0].mxu0
        %v6535 = vpop.f32.mrb[0].mxu0
        %v6536 = vadd.f32 0.0, %v6535
        %v6537 = vpop.f32.mrb[0].mxu0
        %6538 = vmatprep.mubr.bf16.mxu0 0
        %6539 = vmatmul.mubr.bf16.gmra.mrb[0].mxu0 %v6411
        %v6540 = vpop.f32.mrb[0].mxu0
        %v6541 = vadd.f32 0.0, %v6540
        %v6542 = vpop.f32.mrb[0].mxu0
        %v6543 = vpop.f32.mrb[0].mxu0
        %v6544 = vadd.f32 0.0, %v6543
        %v6545 = vpop.f32.mrb[0].mxu0
        %6546 = vmatprep.mubr.bf16.mxu0 0
        %6547 = vmatmul.mubr.bf16.gmra.mrb[0].mxu0 %v6412
        %v6548 = vpop.f32.mrb[0].mxu0
        %v6549 = vadd.f32 0.0, %v6548
        %v6550 = vpop.f32.mrb[0].mxu0
        %v6551 = vpop.f32.mrb[0].mxu0
        %v6552 = vadd.f32 0.0, %v6551
        %v6553 = vpop.f32.mrb[0].mxu0
        %6554 = vmatprep.mubr.bf16.mxu0 0
        %6555 = vmatmul.mubr.bf16.gmra.mrb[0].mxu0 %v6413
        %v6556 = vpop.f32.mrb[0].mxu0
        %v6557 = vadd.f32 0.0, %v6556
        %v6558 = vpop.f32.mrb[0].mxu0
        %v6559 = vpop.f32.mrb[0].mxu0
        %v6560 = vadd.f32 0.0, %v6559
        %v6561 = vpop.f32.mrb[0].mxu0
        %6562 = vmatprep.mubr.bf16.mxu0 0
        %6563 = vmatmul.mubr.bf16.gmra.mrb[0].mxu0 %v6414
        %v6564 = vpop.f32.mrb[0].mxu0
        %v6565 = vadd.f32 0.0, %v6564
        %v6566 = vpop.f32.mrb[0].mxu0
        %v6567 = vpop.f32.mrb[0].mxu0
        %v6568 = vadd.f32 0.0, %v6567
        %v6569 = vpop.f32.mrb[0].mxu0
        %6570 = vmatprep.mubr.bf16.mxu0 0
        %6571 = vmatmul.mubr.bf16.gmra.mrb[0].mxu0 %v6415
        %v6572 = vpop.f32.mrb[0].mxu0
        %v6573 = vadd.f32 0.0, %v6572
        %v6574 = vpop.f32.mrb[0].mxu0
        %v6575 = vpop.f32.mrb[0].mxu0
        %v6576 = vadd.f32 0.0, %v6575
        %v6577 = vpop.f32.mrb[0].mxu0
        %6578 = vmatprep.mubr.bf16.mxu0 0
        %6579 = vmatmul.mubr.bf16.gmra.mrb[0].mxu0 %v6416
        %v6580 = vpop.f32.mrb[0].mxu0
        %v6581 = vadd.f32 0.0, %v6580
        %v6582 = vpop.f32.mrb[0].mxu0
        %v6583 = vpop.f32.mrb[0].mxu0
        %v6584 = vadd.f32 0.0, %v6583
        %v6585 = vpop.f32.mrb[0].mxu0
        %6586 = vmatprep.mubr.bf16.mxu0 0
        %6587 = vmatmul.mubr.bf16.gmra.mrb[0].mxu0 %v6417
        %v6588 = vpop.f32.mrb[0].mxu0
        %v6589 = vadd.f32 0.0, %v6588
        %v6590 = vpop.f32.mrb[0].mxu0
        %v6591 = vpop.f32.mrb[0].mxu0
        %v6592 = vadd.f32 0.0, %v6591
        %v6593 = vpop.f32.mrb[0].mxu0
        %6594 = vmatprep.mubr.bf16.mxu0 0
        %6595 = vmatmul.mubr.bf16.gmra.mrb[0].mxu0 %v6418
        %v6596 = vpop.f32.mrb[0].mxu0
        %v6597 = vadd.f32 0.0, %v6596
        %v6598 = vpop.f32.mrb[0].mxu0
        %v6599 = vpop.f32.mrb[0].mxu0
        %v6600 = vadd.f32 0.0, %v6599
        %v6601 = vpop.f32.mrb[0].mxu0
        %6602 = vmatprep.mubr.bf16.mxu0 0
        %6603 = vmatmul.mubr.bf16.gmra.mrb[0].mxu0 %v6419
        %v6604 = vpop.f32.mrb[0].mxu0
        %v6605 = vadd.f32 0.0, %v6604
        %v6606 = vpop.f32.mrb[0].mxu0
        %v6607 = vpop.f32.mrb[0].mxu0
        %v6608 = vadd.f32 0.0, %v6607
        %v6609 = vpop.f32.mrb[0].mxu0
        %6610 = vmatprep.mubr.bf16.mxu0 0
        %6611 = vmatmul.mubr.bf16.gmra.mrb[0].mxu0 %v6420
        %v6612 = vpop.f32.mrb[0].mxu0
        %v6613 = vadd.f32 0.0, %v6612
        %v6614 = vpop.f32.mrb[0].mxu0
        %v6615 = vpop.f32.mrb[0].mxu0
        %v6616 = vadd.f32 0.0, %v6615
        %v6617 = vpop.f32.mrb[0].mxu0
        %6618 = vmatprep.mubr.bf16.mxu0 0
        %6619 = vmatmul.mubr.bf16.gmra.mrb[0].mxu0 %v6421
        %v6620 = vpop.f32.mrb[0].mxu0
        %v6621 = vadd.f32 0.0, %v6620
        %v6622 = vpop.f32.mrb[0].mxu0
        %v6623 = vpop.f32.mrb[0].mxu0
        %v6624 = vadd.f32 0.0, %v6623
        %v6625 = vpop.f32.mrb[0].mxu0
        %6626 = vmatprep.mubr.bf16.mxu0 0
        %6627 = vmatmul.mubr.bf16.gmra.mrb[0].mxu0 %v6422
        %v6628 = vpop.f32.mrb[0].mxu0
        %v6629 = vadd.f32 0.0, %v6628
        %v6630 = vpop.f32.mrb[0].mxu0
        %v6631 = vpop.f32.mrb[0].mxu0
        %v6632 = vadd.f32 0.0, %v6631
        %v6633 = vpop.f32.mrb[0].mxu0
        %6634 = vmatprep.mubr.bf16.mxu0 0
        %6635 = vmatmul.mubr.bf16.gmra.mrb[0].mxu0 %v6423
        %v6636 = vpop.f32.mrb[0].mxu0
        %v6637 = vadd.f32 0.0, %v6636
        %v6638 = vpop.f32.mrb[0].mxu0
        %v6639 = vpop.f32.mrb[0].mxu0
        %v6640 = vadd.f32 0.0, %v6639
        %v6641 = vpop.f32.mrb[0].mxu0
        %6642 = vmatprep.mubr.bf16.mxu0 0
        %6643 = vmatmul.mubr.bf16.gmra.mrb[0].mxu0 %v6424
        %v6644 = vpop.f32.mrb[0].mxu0
        %v6645 = vadd.f32 0.0, %v6644
        %v6646 = vpop.f32.mrb[0].mxu0
        %v6647 = vpop.f32.mrb[0].mxu0
        %v6648 = vadd.f32 0.0, %v6647
        %v6649 = vpop.f32.mrb[0].mxu0
        %6650 = vdwg.mxu0
        %v6651 = vadd.f32 %v6345, %v6525
        %v6652 = vadd.f32 %v6346, %v6528
        %v6653 = vadd.f32 %v6347, %v6533
        %v6654 = vadd.f32 %v6348, %v6536
        %v6655 = vadd.f32 %v6349, %v6541
        %v6656 = vadd.f32 %v6350, %v6544
        %v6657 = vadd.f32 %v6351, %v6549
        %v6658 = vadd.f32 %v6352, %v6552
        %v6659 = vadd.f32 %v6353, %v6557
        %v6660 = vadd.f32 %v6354, %v6560
        %v6661 = vadd.f32 %v6355, %v6565
        %v6662 = vadd.f32 %v6356, %v6568
        %v6663 = vadd.f32 %v6357, %v6573
        %v6664 = vadd.f32 %v6358, %v6576
        %v6665 = vadd.f32 %v6359, %v6581
        %v6666 = vadd.f32 %v6360, %v6584
        %v6667 = vadd.f32 %v6361, %v6589
        %v6668 = vadd.f32 %v6362, %v6592
        %v6669 = vadd.f32 %v6363, %v6597
        %v6670 = vadd.f32 %v6364, %v6600
        %v6671 = vadd.f32 %v6365, %v6605
        %v6672 = vadd.f32 %v6366, %v6608
        %v6673 = vadd.f32 %v6367, %v6613
        %v6674 = vadd.f32 %v6368, %v6616
        %v6675 = vadd.f32 %v6369, %v6621
        %v6676 = vadd.f32 %v6370, %v6624
        %v6677 = vadd.f32 %v6371, %v6629
        %v6678 = vadd.f32 %v6372, %v6632
        %v6679 = vadd.f32 %v6373, %v6637
        %v6680 = vadd.f32 %v6374, %v6640
        %v6681 = vadd.f32 %v6375, %v6645
        %v6682 = vadd.f32 %v6376, %v6648
        %v6683 = vld [vmem:[#allocation2 + $0x19] sm:$0xff]
        %v6684 = vld [vmem:[#allocation2 + $0x21] sm:$0xff]
        %v6685 = vld [vmem:[#allocation2 + $0x29] sm:$0xff]
        %v6686 = vld [vmem:[#allocation2 + $0x31] sm:$0xff]
        %v6687 = vld [vmem:[#allocation2 + $0x39] sm:$0xff]
        %v6688 = vld [vmem:[#allocation2 + $0x41] sm:$0xff]
        %v6689 = vld [vmem:[#allocation2 + $0x49] sm:$0xff]
        %v6690 = vld [vmem:[#allocation2 + $0x51] sm:$0xff]
        %v6691 = vld [vmem:[#allocation2 + $0x59] sm:$0xff]
        %v6692 = vld [vmem:[#allocation2 + $0x61] sm:$0xff]
        %v6693 = vld [vmem:[#allocation2 + $0x69] sm:$0xff]
        %v6694 = vld [vmem:[#allocation2 + $0x71] sm:$0xff]
        %v6695 = vld [vmem:[#allocation2 + $0x79] sm:$0xff]
        %v6696 = vld [vmem:[#allocation2 + $0x81] sm:$0xff]
        %v6697 = vld [vmem:[#allocation2 + $0x89] sm:$0xff]
        %v6698 = vld [vmem:[#allocation2 + $0x91] sm:$0xff]
        %v6699 = vld [vmem:[#allocation2 + $0x99] sm:$0xff]
        %v6700 = vld [vmem:[#allocation2 + $0xa1] sm:$0xff]
        %v6701 = vld [vmem:[#allocation2 + $0xa9] sm:$0xff]
        %v6702 = vld [vmem:[#allocation2 + $0xb1] sm:$0xff]
        %v6703 = vld [vmem:[#allocation2 + $0xb9] sm:$0xff]
        %v6704 = vld [vmem:[#allocation2 + $0xc1] sm:$0xff]
        %v6705 = vld [vmem:[#allocation2 + $0xc9] sm:$0xff]
        %v6706 = vld [vmem:[#allocation2 + $0xd1] sm:$0xff]
        %v6707 = vld [vmem:[#allocation2 + $0xd9] sm:$0xff]
        %v6708 = vld [vmem:[#allocation2 + $0xe1] sm:$0xff]
        %v6709 = vld [vmem:[#allocation2 + $0xe9] sm:$0xff]
        %v6710 = vld [vmem:[#allocation2 + $0xf1] sm:$0xff]
        %v6711 = vld [vmem:[#allocation2 + $0xf9] sm:$0xff]
        %v6712 = vld [vmem:[#allocation2 + $0x101] sm:$0xff]
        %v6713 = vld [vmem:[#allocation2 + $0x109] sm:$0xff]
        %v6714 = vld [vmem:[#allocation2 + $0x111] sm:$0xff]
        %v6715 = vmul.f32 %v6683, %v1566
        %v6716 = vmul.f32 %v6684, %v1570
        %v6717 = vmul.f32 %v6685, %v1574
        %v6718 = vmul.f32 %v6686, %v1578
        %v6719 = vmul.f32 %v6687, %v1582
        %v6720 = vmul.f32 %v6688, %v1586
        %v6721 = vmul.f32 %v6689, %v1590
        %v6722 = vmul.f32 %v6690, %v1594
        %v6723 = vmul.f32 %v6691, %v1598
        %v6724 = vmul.f32 %v6692, %v1602
        %v6725 = vmul.f32 %v6693, %v1606
        %v6726 = vmul.f32 %v6694, %v1610
        %v6727 = vmul.f32 %v6695, %v1614
        %v6728 = vmul.f32 %v6696, %v1618
        %v6729 = vmul.f32 %v6697, %v1622
        %v6730 = vmul.f32 %v6698, %v1626
        %v6731 = vmul.f32 %v6699, %v1630
        %v6732 = vmul.f32 %v6700, %v1634
        %v6733 = vmul.f32 %v6701, %v1638
        %v6734 = vmul.f32 %v6702, %v1642
        %v6735 = vmul.f32 %v6703, %v1646
        %v6736 = vmul.f32 %v6704, %v1650
        %v6737 = vmul.f32 %v6705, %v1654
        %v6738 = vmul.f32 %v6706, %v1658
        %v6739 = vmul.f32 %v6707, %v1662
        %v6740 = vmul.f32 %v6708, %v1666
        %v6741 = vmul.f32 %v6709, %v1670
        %v6742 = vmul.f32 %v6710, %v1674
        %v6743 = vmul.f32 %v6711, %v1678
        %v6744 = vmul.f32 %v6712, %v1682
        %v6745 = vmul.f32 %v6713, %v1686
        %v6746 = vmul.f32 %v6714, %v1690
        %v6747 = vpack.c.bf16 %v6716, %v6715
        %v6748 = vpack.c.bf16 %v6718, %v6717
        %v6749 = vpack.c.bf16 %v6720, %v6719
        %v6750 = vpack.c.bf16 %v6722, %v6721
        %v6751 = vpack.c.bf16 %v6724, %v6723
        %v6752 = vpack.c.bf16 %v6726, %v6725
        %v6753 = vpack.c.bf16 %v6728, %v6727
        %v6754 = vpack.c.bf16 %v6730, %v6729
        %v6755 = vpack.c.bf16 %v6732, %v6731
        %v6756 = vpack.c.bf16 %v6734, %v6733
        %v6757 = vpack.c.bf16 %v6736, %v6735
        %v6758 = vpack.c.bf16 %v6738, %v6737
        %v6759 = vpack.c.bf16 %v6740, %v6739
        %v6760 = vpack.c.bf16 %v6742, %v6741
        %v6761 = vpack.c.bf16 %v6744, %v6743
        %v6762 = vpack.c.bf16 %v6746, %v6745
        %s6763 = scalar_lea.vmem %s4, 320
        %v6764 = vld [vmem:[%s6763] sm:$0xf]
        %v6765 = vld [vmem:[%s6763 + $0x4] sm:$0xf]
        %v6766 = vld [vmem:[%s6763 + $0x8] sm:$0xf]
        %v6767 = vld [vmem:[%s6763 + $0xc] sm:$0xf]
        %v6768 = vld [vmem:[%s6763 + $0x10] sm:$0xf]
        %v6769 = vld [vmem:[%s6763 + $0x14] sm:$0xf]
        %v6770 = vld [vmem:[%s6763 + $0x18] sm:$0xf]
        %v6771 = vld [vmem:[%s6763 + $0x1c] sm:$0xf]
        %v6772 = vld [vmem:[%s6763 + $0x20] sm:$0xf]
        %v6773 = vld [vmem:[%s6763 + $0x24] sm:$0xf]
        %v6774 = vld [vmem:[%s6763 + $0x28] sm:$0xf]
        %v6775 = vld [vmem:[%s6763 + $0x2c] sm:$0xf]
        %v6776 = vld [vmem:[%s6763 + $0x30] sm:$0xf]
        %v6777 = vld [vmem:[%s6763 + $0x34] sm:$0xf]
        %v6778 = vld [vmem:[%s6763 + $0x38] sm:$0xf]
        %v6779 = vld [vmem:[%s6763 + $0x3c] sm:$0xf]
        %v6796 = vunpack.c.l.b16 %v6764
        %v6797 = vunpack.c.l.b16 %v6765
        %v6798 = vunpack.c.l.b16 %v6766
        %v6799 = vunpack.c.l.b16 %v6767
        %v6800 = vunpack.c.l.b16 %v6768
        %v6801 = vunpack.c.l.b16 %v6769
        %v6802 = vunpack.c.l.b16 %v6770
        %v6803 = vunpack.c.l.b16 %v6771
        %v6804 = vunpack.c.l.b16 %v6772
        %v6805 = vunpack.c.l.b16 %v6773
        %v6806 = vunpack.c.l.b16 %v6774
        %v6807 = vunpack.c.l.b16 %v6775
        %v6808 = vunpack.c.l.b16 %v6776
        %v6809 = vunpack.c.l.b16 %v6777
        %v6810 = vunpack.c.l.b16 %v6778
        %v6811 = vunpack.c.l.b16 %v6779
        %v6812 = vpack.c.b16 %v6797, %v6796
        %v6813 = vpack.c.b16 %v6799, %v6798
        %v6814 = vpack.c.b16 %v6801, %v6800
        %v6815 = vpack.c.b16 %v6803, %v6802
        %v6816 = vpack.c.b16 %v6805, %v6804
        %v6817 = vpack.c.b16 %v6807, %v6806
        %v6818 = vpack.c.b16 %v6809, %v6808
        %v6819 = vpack.c.b16 %v6811, %v6810
        %6828 = vmatprep.subr.bf16.mxu0 0
        %6829 = vmatpush1.bf16.msra.mxu0 %v6812
        %6830 = vmatprep.subr.bf16.mxu0 0
        %6831 = vmatpush1.bf16.msra.mxu0 %v6813
        %6832 = vmatprep.subr.bf16.mxu0 0
        %6833 = vmatpush1.bf16.msra.mxu0 %v6814
        %6834 = vmatprep.subr.bf16.mxu0 0
        %6835 = vmatpush1.bf16.msra.mxu0 %v6815
        %6836 = vmatprep.subr.bf16.mxu0 0
        %6837 = vmatpush1.bf16.msra.mxu0 %v6816
        %6838 = vmatprep.subr.bf16.mxu0 0
        %6839 = vmatpush1.bf16.msra.mxu0 %v6817
        %6840 = vmatprep.subr.bf16.mxu0 0
        %6841 = vmatpush1.bf16.msra.mxu0 %v6818
        %6842 = vmatprep.subr.bf16.mxu0 0
        %6843 = vmatpush1.bf16.msra.mxu0 %v6819
        %6844 = vmatprep.subr.bf16.mxu0 0
        %6845 = vmatpush1.bf16.msra.mxu0 0
        %6846 = vmatprep.subr.bf16.mxu0 0
        %6847 = vmatpush1.bf16.msra.mxu0 0
        %6848 = vmatprep.subr.bf16.mxu0 0
        %6849 = vmatpush1.bf16.msra.mxu0 0
        %6850 = vmatprep.subr.bf16.mxu0 0
        %6851 = vmatpush1.bf16.msra.mxu0 0
        %6852 = vmatprep.subr.bf16.mxu0 0
        %6853 = vmatpush1.bf16.msra.mxu0 0
        %6854 = vmatprep.subr.bf16.mxu0 0
        %6855 = vmatpush1.bf16.msra.mxu0 0
        %6856 = vmatprep.subr.bf16.mxu0 0
        %6857 = vmatpush1.bf16.msra.mxu0 0
        %6858 = vmatprep.subr.bf16.mxu0 0
        %6859 = vmatpush1.bf16.msra.mxu0 0
        %6860 = vmatprep.mubr.bf16.mxu0 0
        %6861 = vmatmul.mubr.bf16.gmra.mrb[0].mxu0 %v6747
        %v6862 = vpop.f32.mrb[0].mxu0
        %v6863 = vadd.f32 0.0, %v6862
        %v6864 = vpop.f32.mrb[0].mxu0
        %v6865 = vpop.f32.mrb[0].mxu0
        %v6866 = vadd.f32 0.0, %v6865
        %v6867 = vpop.f32.mrb[0].mxu0
        %6868 = vmatprep.mubr.bf16.mxu0 0
        %6869 = vmatmul.mubr.bf16.gmra.mrb[0].mxu0 %v6748
        %v6870 = vpop.f32.mrb[0].mxu0
        %v6871 = vadd.f32 0.0, %v6870
        %v6872 = vpop.f32.mrb[0].mxu0
        %v6873 = vpop.f32.mrb[0].mxu0
        %v6874 = vadd.f32 0.0, %v6873
        %v6875 = vpop.f32.mrb[0].mxu0
        %6876 = vmatprep.mubr.bf16.mxu0 0
        %6877 = vmatmul.mubr.bf16.gmra.mrb[0].mxu0 %v6749
        %v6878 = vpop.f32.mrb[0].mxu0
        %v6879 = vadd.f32 0.0, %v6878
        %v6880 = vpop.f32.mrb[0].mxu0
        %v6881 = vpop.f32.mrb[0].mxu0
        %v6882 = vadd.f32 0.0, %v6881
        %v6883 = vpop.f32.mrb[0].mxu0
        %6884 = vmatprep.mubr.bf16.mxu0 0
        %6885 = vmatmul.mubr.bf16.gmra.mrb[0].mxu0 %v6750
        %v6886 = vpop.f32.mrb[0].mxu0
        %v6887 = vadd.f32 0.0, %v6886
        %v6888 = vpop.f32.mrb[0].mxu0
        %v6889 = vpop.f32.mrb[0].mxu0
        %v6890 = vadd.f32 0.0, %v6889
        %v6891 = vpop.f32.mrb[0].mxu0
        %6892 = vmatprep.mubr.bf16.mxu0 0
        %6893 = vmatmul.mubr.bf16.gmra.mrb[0].mxu0 %v6751
        %v6894 = vpop.f32.mrb[0].mxu0
        %v6895 = vadd.f32 0.0, %v6894
        %v6896 = vpop.f32.mrb[0].mxu0
        %v6897 = vpop.f32.mrb[0].mxu0
        %v6898 = vadd.f32 0.0, %v6897
        %v6899 = vpop.f32.mrb[0].mxu0
        %6900 = vmatprep.mubr.bf16.mxu0 0
        %6901 = vmatmul.mubr.bf16.gmra.mrb[0].mxu0 %v6752
        %v6902 = vpop.f32.mrb[0].mxu0
        %v6903 = vadd.f32 0.0, %v6902
        %v6904 = vpop.f32.mrb[0].mxu0
        %v6905 = vpop.f32.mrb[0].mxu0
        %v6906 = vadd.f32 0.0, %v6905
        %v6907 = vpop.f32.mrb[0].mxu0
        %6908 = vmatprep.mubr.bf16.mxu0 0
        %6909 = vmatmul.mubr.bf16.gmra.mrb[0].mxu0 %v6753
        %v6910 = vpop.f32.mrb[0].mxu0
        %v6911 = vadd.f32 0.0, %v6910
        %v6912 = vpop.f32.mrb[0].mxu0
        %v6913 = vpop.f32.mrb[0].mxu0
        %v6914 = vadd.f32 0.0, %v6913
        %v6915 = vpop.f32.mrb[0].mxu0
        %6916 = vmatprep.mubr.bf16.mxu0 0
        %6917 = vmatmul.mubr.bf16.gmra.mrb[0].mxu0 %v6754
        %v6918 = vpop.f32.mrb[0].mxu0
        %v6919 = vadd.f32 0.0, %v6918
        %v6920 = vpop.f32.mrb[0].mxu0
        %v6921 = vpop.f32.mrb[0].mxu0
        %v6922 = vadd.f32 0.0, %v6921
        %v6923 = vpop.f32.mrb[0].mxu0
        %6924 = vmatprep.mubr.bf16.mxu0 0
        %6925 = vmatmul.mubr.bf16.gmra.mrb[0].mxu0 %v6755
        %v6926 = vpop.f32.mrb[0].mxu0
        %v6927 = vadd.f32 0.0, %v6926
        %v6928 = vpop.f32.mrb[0].mxu0
        %v6929 = vpop.f32.mrb[0].mxu0
        %v6930 = vadd.f32 0.0, %v6929
        %v6931 = vpop.f32.mrb[0].mxu0
        %6932 = vmatprep.mubr.bf16.mxu0 0
        %6933 = vmatmul.mubr.bf16.gmra.mrb[0].mxu0 %v6756
        %v6934 = vpop.f32.mrb[0].mxu0
        %v6935 = vadd.f32 0.0, %v6934
        %v6936 = vpop.f32.mrb[0].mxu0
        %v6937 = vpop.f32.mrb[0].mxu0
        %v6938 = vadd.f32 0.0, %v6937
        %v6939 = vpop.f32.mrb[0].mxu0
        %6940 = vmatprep.mubr.bf16.mxu0 0
        %6941 = vmatmul.mubr.bf16.gmra.mrb[0].mxu0 %v6757
        %v6942 = vpop.f32.mrb[0].mxu0
        %v6943 = vadd.f32 0.0, %v6942
        %v6944 = vpop.f32.mrb[0].mxu0
        %v6945 = vpop.f32.mrb[0].mxu0
        %v6946 = vadd.f32 0.0, %v6945
        %v6947 = vpop.f32.mrb[0].mxu0
        %6948 = vmatprep.mubr.bf16.mxu0 0
        %6949 = vmatmul.mubr.bf16.gmra.mrb[0].mxu0 %v6758
        %v6950 = vpop.f32.mrb[0].mxu0
        %v6951 = vadd.f32 0.0, %v6950
        %v6952 = vpop.f32.mrb[0].mxu0
        %v6953 = vpop.f32.mrb[0].mxu0
        %v6954 = vadd.f32 0.0, %v6953
        %v6955 = vpop.f32.mrb[0].mxu0
        %6956 = vmatprep.mubr.bf16.mxu0 0
        %6957 = vmatmul.mubr.bf16.gmra.mrb[0].mxu0 %v6759
        %v6958 = vpop.f32.mrb[0].mxu0
        %v6959 = vadd.f32 0.0, %v6958
        %v6960 = vpop.f32.mrb[0].mxu0
        %v6961 = vpop.f32.mrb[0].mxu0
        %v6962 = vadd.f32 0.0, %v6961
        %v6963 = vpop.f32.mrb[0].mxu0
        %6964 = vmatprep.mubr.bf16.mxu0 0
        %6965 = vmatmul.mubr.bf16.gmra.mrb[0].mxu0 %v6760
        %v6966 = vpop.f32.mrb[0].mxu0
        %v6967 = vadd.f32 0.0, %v6966
        %v6968 = vpop.f32.mrb[0].mxu0
        %v6969 = vpop.f32.mrb[0].mxu0
        %v6970 = vadd.f32 0.0, %v6969
        %v6971 = vpop.f32.mrb[0].mxu0
        %6972 = vmatprep.mubr.bf16.mxu0 0
        %6973 = vmatmul.mubr.bf16.gmra.mrb[0].mxu0 %v6761
        %v6974 = vpop.f32.mrb[0].mxu0
        %v6975 = vadd.f32 0.0, %v6974
        %v6976 = vpop.f32.mrb[0].mxu0
        %v6977 = vpop.f32.mrb[0].mxu0
        %v6978 = vadd.f32 0.0, %v6977
        %v6979 = vpop.f32.mrb[0].mxu0
        %6980 = vmatprep.mubr.bf16.mxu0 0
        %6981 = vmatmul.mubr.bf16.gmra.mrb[0].mxu0 %v6762
        %v6982 = vpop.f32.mrb[0].mxu0
        %v6983 = vadd.f32 0.0, %v6982
        %v6984 = vpop.f32.mrb[0].mxu0
        %v6985 = vpop.f32.mrb[0].mxu0
        %v6986 = vadd.f32 0.0, %v6985
        %v6987 = vpop.f32.mrb[0].mxu0
        %6988 = vdwg.mxu0
        %v6989 = vadd.f32 %v6651, %v6863
        %v6990 = vadd.f32 %v6652, %v6866
        %v6991 = vadd.f32 %v6653, %v6871
        %v6992 = vadd.f32 %v6654, %v6874
        %v6993 = vadd.f32 %v6655, %v6879
        %v6994 = vadd.f32 %v6656, %v6882
        %v6995 = vadd.f32 %v6657, %v6887
        %v6996 = vadd.f32 %v6658, %v6890
        %v6997 = vadd.f32 %v6659, %v6895
        %v6998 = vadd.f32 %v6660, %v6898
        %v6999 = vadd.f32 %v6661, %v6903
        %v7000 = vadd.f32 %v6662, %v6906
        %v7001 = vadd.f32 %v6663, %v6911
        %v7002 = vadd.f32 %v6664, %v6914
        %v7003 = vadd.f32 %v6665, %v6919
        %v7004 = vadd.f32 %v6666, %v6922
        %v7005 = vadd.f32 %v6667, %v6927
        %v7006 = vadd.f32 %v6668, %v6930
        %v7007 = vadd.f32 %v6669, %v6935
        %v7008 = vadd.f32 %v6670, %v6938
        %v7009 = vadd.f32 %v6671, %v6943
        %v7010 = vadd.f32 %v6672, %v6946
        %v7011 = vadd.f32 %v6673, %v6951
        %v7012 = vadd.f32 %v6674, %v6954
        %v7013 = vadd.f32 %v6675, %v6959
        %v7014 = vadd.f32 %v6676, %v6962
        %v7015 = vadd.f32 %v6677, %v6967
        %v7016 = vadd.f32 %v6678, %v6970
        %v7017 = vadd.f32 %v6679, %v6975
        %v7018 = vadd.f32 %v6680, %v6978
        %v7019 = vadd.f32 %v6681, %v6983
        %v7020 = vadd.f32 %v6682, %v6986
        %v7021 = vld [vmem:[#allocation2 + $0x27] sm:$0xff]
        %v7022 = vld [vmem:[#allocation2 + $0x2f] sm:$0xff]
        %v7023 = vld [vmem:[#allocation2 + $0x37] sm:$0xff]
        %v7024 = vld [vmem:[#allocation2 + $0x3f] sm:$0xff]
        %v7025 = vld [vmem:[#allocation2 + $0x47] sm:$0xff]
        %v7026 = vld [vmem:[#allocation2 + $0x4f] sm:$0xff]
        %v7027 = vld [vmem:[#allocation2 + $0x57] sm:$0xff]
        %v7028 = vld [vmem:[#allocation2 + $0x5f] sm:$0xff]
        %v7029 = vld [vmem:[#allocation2 + $0x67] sm:$0xff]
        %v7030 = vld [vmem:[#allocation2 + $0x6f] sm:$0xff]
        %v7031 = vld [vmem:[#allocation2 + $0x77] sm:$0xff]
        %v7032 = vld [vmem:[#allocation2 + $0x7f] sm:$0xff]
        %v7033 = vld [vmem:[#allocation2 + $0x87] sm:$0xff]
        %v7034 = vld [vmem:[#allocation2 + $0x8f] sm:$0xff]
        %v7035 = vld [vmem:[#allocation2 + $0x97] sm:$0xff]
        %v7036 = vld [vmem:[#allocation2 + $0x9f] sm:$0xff]
        %v7037 = vld [vmem:[#allocation2 + $0xa7] sm:$0xff]
        %v7038 = vld [vmem:[#allocation2 + $0xaf] sm:$0xff]
        %v7039 = vld [vmem:[#allocation2 + $0xb7] sm:$0xff]
        %v7040 = vld [vmem:[#allocation2 + $0xbf] sm:$0xff]
        %v7041 = vld [vmem:[#allocation2 + $0xc7] sm:$0xff]
        %v7042 = vld [vmem:[#allocation2 + $0xcf] sm:$0xff]
        %v7043 = vld [vmem:[#allocation2 + $0xd7] sm:$0xff]
        %v7044 = vld [vmem:[#allocation2 + $0xdf] sm:$0xff]
        %v7045 = vld [vmem:[#allocation2 + $0xe7] sm:$0xff]
        %v7046 = vld [vmem:[#allocation2 + $0xef] sm:$0xff]
        %v7047 = vld [vmem:[#allocation2 + $0xf7] sm:$0xff]
        %v7048 = vld [vmem:[#allocation2 + $0xff] sm:$0xff]
        %v7049 = vld [vmem:[#allocation2 + $0x107] sm:$0xff]
        %v7050 = vld [vmem:[#allocation2 + $0x10f] sm:$0xff]
        %v7051 = vld [vmem:[#allocation2 + $0x117] sm:$0xff]
        %v7052 = vld [vmem:[#allocation2 + $0x11f] sm:$0xff]
        %v7053 = vmul.f32 %v7021, %v499
        %v7054 = vmul.f32 %v7022, %v503
        %v7055 = vmul.f32 %v7023, %v507
        %v7056 = vmul.f32 %v7024, %v511
        %v7057 = vmul.f32 %v7025, %v515
        %v7058 = vmul.f32 %v7026, %v519
        %v7059 = vmul.f32 %v7027, %v523
        %v7060 = vmul.f32 %v7028, %v527
        %v7061 = vmul.f32 %v7029, %v531
        %v7062 = vmul.f32 %v7030, %v535
        %v7063 = vmul.f32 %v7031, %v539
        %v7064 = vmul.f32 %v7032, %v543
        %v7065 = vmul.f32 %v7033, %v547
        %v7066 = vmul.f32 %v7034, %v551
        %v7067 = vmul.f32 %v7035, %v555
        %v7068 = vmul.f32 %v7036, %v559
        %v7069 = vmul.f32 %v7037, %v563
        %v7070 = vmul.f32 %v7038, %v567
        %v7071 = vmul.f32 %v7039, %v571
        %v7072 = vmul.f32 %v7040, %v575
        %v7073 = vmul.f32 %v7041, %v579
        %v7074 = vmul.f32 %v7042, %v583
        %v7075 = vmul.f32 %v7043, %v587
        %v7076 = vmul.f32 %v7044, %v591
        %v7077 = vmul.f32 %v7045, %v595
        %v7078 = vmul.f32 %v7046, %v599
        %v7079 = vmul.f32 %v7047, %v603
        %v7080 = vmul.f32 %v7048, %v607
        %v7081 = vmul.f32 %v7049, %v611
        %v7082 = vmul.f32 %v7050, %v615
        %v7083 = vmul.f32 %v7051, %v619
        %v7084 = vmul.f32 %v7052, %v623
        %v7085 = vpack.c.bf16 %v7054, %v7053
        %v7086 = vpack.c.bf16 %v7056, %v7055
        %v7087 = vpack.c.bf16 %v7058, %v7057
        %v7088 = vpack.c.bf16 %v7060, %v7059
        %v7089 = vpack.c.bf16 %v7062, %v7061
        %v7090 = vpack.c.bf16 %v7064, %v7063
        %v7091 = vpack.c.bf16 %v7066, %v7065
        %v7092 = vpack.c.bf16 %v7068, %v7067
        %v7093 = vpack.c.bf16 %v7070, %v7069
        %v7094 = vpack.c.bf16 %v7072, %v7071
        %v7095 = vpack.c.bf16 %v7074, %v7073
        %v7096 = vpack.c.bf16 %v7076, %v7075
        %v7097 = vpack.c.bf16 %v7078, %v7077
        %v7098 = vpack.c.bf16 %v7080, %v7079
        %v7099 = vpack.c.bf16 %v7082, %v7081
        %v7100 = vpack.c.bf16 %v7084, %v7083
        %s7101 = scalar_lea.vmem %s4, 384
        %v7102 = vld [vmem:[%s7101] sm:$0xf]
        %v7103 = vld [vmem:[%s7101 + $0x4] sm:$0xf]
        %v7104 = vld [vmem:[%s7101 + $0x8] sm:$0xf]
        %v7105 = vld [vmem:[%s7101 + $0xc] sm:$0xf]
        %v7106 = vld [vmem:[%s7101 + $0x10] sm:$0xf]
        %v7107 = vld [vmem:[%s7101 + $0x14] sm:$0xf]
        %v7108 = vld [vmem:[%s7101 + $0x18] sm:$0xf]
        %v7109 = vld [vmem:[%s7101 + $0x1c] sm:$0xf]
        %v7110 = vld [vmem:[%s7101 + $0x20] sm:$0xf]
        %v7111 = vld [vmem:[%s7101 + $0x24] sm:$0xf]
        %v7112 = vld [vmem:[%s7101 + $0x28] sm:$0xf]
        %v7113 = vld [vmem:[%s7101 + $0x2c] sm:$0xf]
        %v7114 = vld [vmem:[%s7101 + $0x30] sm:$0xf]
        %v7115 = vld [vmem:[%s7101 + $0x34] sm:$0xf]
        %v7116 = vld [vmem:[%s7101 + $0x38] sm:$0xf]
        %v7117 = vld [vmem:[%s7101 + $0x3c] sm:$0xf]
        %v7134 = vunpack.c.l.b16 %v7102
        %v7135 = vunpack.c.l.b16 %v7103
        %v7136 = vunpack.c.l.b16 %v7104
        %v7137 = vunpack.c.l.b16 %v7105
        %v7138 = vunpack.c.l.b16 %v7106
        %v7139 = vunpack.c.l.b16 %v7107
        %v7140 = vunpack.c.l.b16 %v7108
        %v7141 = vunpack.c.l.b16 %v7109
        %v7142 = vunpack.c.l.b16 %v7110
        %v7143 = vunpack.c.l.b16 %v7111
        %v7144 = vunpack.c.l.b16 %v7112
        %v7145 = vunpack.c.l.b16 %v7113
        %v7146 = vunpack.c.l.b16 %v7114
        %v7147 = vunpack.c.l.b16 %v7115
        %v7148 = vunpack.c.l.b16 %v7116
        %v7149 = vunpack.c.l.b16 %v7117
        %v7150 = vpack.c.b16 %v7135, %v7134
        %v7151 = vpack.c.b16 %v7137, %v7136
        %v7152 = vpack.c.b16 %v7139, %v7138
        %v7153 = vpack.c.b16 %v7141, %v7140
        %v7154 = vpack.c.b16 %v7143, %v7142
        %v7155 = vpack.c.b16 %v7145, %v7144
        %v7156 = vpack.c.b16 %v7147, %v7146
        %v7157 = vpack.c.b16 %v7149, %v7148
        %7166 = vmatprep.subr.bf16.mxu0 0
        %7167 = vmatpush1.bf16.msra.mxu0 %v7150
        %7168 = vmatprep.subr.bf16.mxu0 0
        %7169 = vmatpush1.bf16.msra.mxu0 %v7151
        %7170 = vmatprep.subr.bf16.mxu0 0
        %7171 = vmatpush1.bf16.msra.mxu0 %v7152
        %7172 = vmatprep.subr.bf16.mxu0 0
        %7173 = vmatpush1.bf16.msra.mxu0 %v7153
        %7174 = vmatprep.subr.bf16.mxu0 0
        %7175 = vmatpush1.bf16.msra.mxu0 %v7154
        %7176 = vmatprep.subr.bf16.mxu0 0
        %7177 = vmatpush1.bf16.msra.mxu0 %v7155
        %7178 = vmatprep.subr.bf16.mxu0 0
        %7179 = vmatpush1.bf16.msra.mxu0 %v7156
        %7180 = vmatprep.subr.bf16.mxu0 0
        %7181 = vmatpush1.bf16.msra.mxu0 %v7157
        %7182 = vmatprep.subr.bf16.mxu0 0
        %7183 = vmatpush1.bf16.msra.mxu0 0
        %7184 = vmatprep.subr.bf16.mxu0 0
        %7185 = vmatpush1.bf16.msra.mxu0 0
        %7186 = vmatprep.subr.bf16.mxu0 0
        %7187 = vmatpush1.bf16.msra.mxu0 0
        %7188 = vmatprep.subr.bf16.mxu0 0
        %7189 = vmatpush1.bf16.msra.mxu0 0
        %7190 = vmatprep.subr.bf16.mxu0 0
        %7191 = vmatpush1.bf16.msra.mxu0 0
        %7192 = vmatprep.subr.bf16.mxu0 0
        %7193 = vmatpush1.bf16.msra.mxu0 0
        %7194 = vmatprep.subr.bf16.mxu0 0
        %7195 = vmatpush1.bf16.msra.mxu0 0
        %7196 = vmatprep.subr.bf16.mxu0 0
        %7197 = vmatpush1.bf16.msra.mxu0 0
        %7198 = vmatprep.mubr.bf16.mxu0 0
        %7199 = vmatmul.mubr.bf16.gmra.mrb[0].mxu0 %v7085
        %v7200 = vpop.f32.mrb[0].mxu0
        %v7201 = vadd.f32 0.0, %v7200
        %v7202 = vpop.f32.mrb[0].mxu0
        %v7203 = vpop.f32.mrb[0].mxu0
        %v7204 = vadd.f32 0.0, %v7203
        %v7205 = vpop.f32.mrb[0].mxu0
        %7206 = vmatprep.mubr.bf16.mxu0 0
        %7207 = vmatmul.mubr.bf16.gmra.mrb[0].mxu0 %v7086
        %v7208 = vpop.f32.mrb[0].mxu0
        %v7209 = vadd.f32 0.0, %v7208
        %v7210 = vpop.f32.mrb[0].mxu0
        %v7211 = vpop.f32.mrb[0].mxu0
        %v7212 = vadd.f32 0.0, %v7211
        %v7213 = vpop.f32.mrb[0].mxu0
        %7214 = vmatprep.mubr.bf16.mxu0 0
        %7215 = vmatmul.mubr.bf16.gmra.mrb[0].mxu0 %v7087
        %v7216 = vpop.f32.mrb[0].mxu0
        %v7217 = vadd.f32 0.0, %v7216
        %v7218 = vpop.f32.mrb[0].mxu0
        %v7219 = vpop.f32.mrb[0].mxu0
        %v7220 = vadd.f32 0.0, %v7219
        %v7221 = vpop.f32.mrb[0].mxu0
        %7222 = vmatprep.mubr.bf16.mxu0 0
        %7223 = vmatmul.mubr.bf16.gmra.mrb[0].mxu0 %v7088
        %v7224 = vpop.f32.mrb[0].mxu0
        %v7225 = vadd.f32 0.0, %v7224
        %v7226 = vpop.f32.mrb[0].mxu0
        %v7227 = vpop.f32.mrb[0].mxu0
        %v7228 = vadd.f32 0.0, %v7227
        %v7229 = vpop.f32.mrb[0].mxu0
        %7230 = vmatprep.mubr.bf16.mxu0 0
        %7231 = vmatmul.mubr.bf16.gmra.mrb[0].mxu0 %v7089
        %v7232 = vpop.f32.mrb[0].mxu0
        %v7233 = vadd.f32 0.0, %v7232
        %v7234 = vpop.f32.mrb[0].mxu0
        %v7235 = vpop.f32.mrb[0].mxu0
        %v7236 = vadd.f32 0.0, %v7235
        %v7237 = vpop.f32.mrb[0].mxu0
        %7238 = vmatprep.mubr.bf16.mxu0 0
        %7239 = vmatmul.mubr.bf16.gmra.mrb[0].mxu0 %v7090
        %v7240 = vpop.f32.mrb[0].mxu0
        %v7241 = vadd.f32 0.0, %v7240
        %v7242 = vpop.f32.mrb[0].mxu0
        %v7243 = vpop.f32.mrb[0].mxu0
        %v7244 = vadd.f32 0.0, %v7243
        %v7245 = vpop.f32.mrb[0].mxu0
        %7246 = vmatprep.mubr.bf16.mxu0 0
        %7247 = vmatmul.mubr.bf16.gmra.mrb[0].mxu0 %v7091
        %v7248 = vpop.f32.mrb[0].mxu0
        %v7249 = vadd.f32 0.0, %v7248
        %v7250 = vpop.f32.mrb[0].mxu0
        %v7251 = vpop.f32.mrb[0].mxu0
        %v7252 = vadd.f32 0.0, %v7251
        %v7253 = vpop.f32.mrb[0].mxu0
        %7254 = vmatprep.mubr.bf16.mxu0 0
        %7255 = vmatmul.mubr.bf16.gmra.mrb[0].mxu0 %v7092
        %v7256 = vpop.f32.mrb[0].mxu0
        %v7257 = vadd.f32 0.0, %v7256
        %v7258 = vpop.f32.mrb[0].mxu0
        %v7259 = vpop.f32.mrb[0].mxu0
        %v7260 = vadd.f32 0.0, %v7259
        %v7261 = vpop.f32.mrb[0].mxu0
        %7262 = vmatprep.mubr.bf16.mxu0 0
        %7263 = vmatmul.mubr.bf16.gmra.mrb[0].mxu0 %v7093
        %v7264 = vpop.f32.mrb[0].mxu0
        %v7265 = vadd.f32 0.0, %v7264
        %v7266 = vpop.f32.mrb[0].mxu0
        %v7267 = vpop.f32.mrb[0].mxu0
        %v7268 = vadd.f32 0.0, %v7267
        %v7269 = vpop.f32.mrb[0].mxu0
        %7270 = vmatprep.mubr.bf16.mxu0 0
        %7271 = vmatmul.mubr.bf16.gmra.mrb[0].mxu0 %v7094
        %v7272 = vpop.f32.mrb[0].mxu0
        %v7273 = vadd.f32 0.0, %v7272
        %v7274 = vpop.f32.mrb[0].mxu0
        %v7275 = vpop.f32.mrb[0].mxu0
        %v7276 = vadd.f32 0.0, %v7275
        %v7277 = vpop.f32.mrb[0].mxu0
        %7278 = vmatprep.mubr.bf16.mxu0 0
        %7279 = vmatmul.mubr.bf16.gmra.mrb[0].mxu0 %v7095
        %v7280 = vpop.f32.mrb[0].mxu0
        %v7281 = vadd.f32 0.0, %v7280
        %v7282 = vpop.f32.mrb[0].mxu0
        %v7283 = vpop.f32.mrb[0].mxu0
        %v7284 = vadd.f32 0.0, %v7283
        %v7285 = vpop.f32.mrb[0].mxu0
        %7286 = vmatprep.mubr.bf16.mxu0 0
        %7287 = vmatmul.mubr.bf16.gmra.mrb[0].mxu0 %v7096
        %v7288 = vpop.f32.mrb[0].mxu0
        %v7289 = vadd.f32 0.0, %v7288
        %v7290 = vpop.f32.mrb[0].mxu0
        %v7291 = vpop.f32.mrb[0].mxu0
        %v7292 = vadd.f32 0.0, %v7291
        %v7293 = vpop.f32.mrb[0].mxu0
        %7294 = vmatprep.mubr.bf16.mxu0 0
        %7295 = vmatmul.mubr.bf16.gmra.mrb[0].mxu0 %v7097
        %v7296 = vpop.f32.mrb[0].mxu0
        %v7297 = vadd.f32 0.0, %v7296
        %v7298 = vpop.f32.mrb[0].mxu0
        %v7299 = vpop.f32.mrb[0].mxu0
        %v7300 = vadd.f32 0.0, %v7299
        %v7301 = vpop.f32.mrb[0].mxu0
        %7302 = vmatprep.mubr.bf16.mxu0 0
        %7303 = vmatmul.mubr.bf16.gmra.mrb[0].mxu0 %v7098
        %v7304 = vpop.f32.mrb[0].mxu0
        %v7305 = vadd.f32 0.0, %v7304
        %v7306 = vpop.f32.mrb[0].mxu0
        %v7307 = vpop.f32.mrb[0].mxu0
        %v7308 = vadd.f32 0.0, %v7307
        %v7309 = vpop.f32.mrb[0].mxu0
        %7310 = vmatprep.mubr.bf16.mxu0 0
        %7311 = vmatmul.mubr.bf16.gmra.mrb[0].mxu0 %v7099
        %v7312 = vpop.f32.mrb[0].mxu0
        %v7313 = vadd.f32 0.0, %v7312
        %v7314 = vpop.f32.mrb[0].mxu0
        %v7315 = vpop.f32.mrb[0].mxu0
        %v7316 = vadd.f32 0.0, %v7315
        %v7317 = vpop.f32.mrb[0].mxu0
        %7318 = vmatprep.mubr.bf16.mxu0 0
        %7319 = vmatmul.mubr.bf16.gmra.mrb[0].mxu0 %v7100
        %v7320 = vpop.f32.mrb[0].mxu0
        %v7321 = vadd.f32 0.0, %v7320
        %v7322 = vpop.f32.mrb[0].mxu0
        %v7323 = vpop.f32.mrb[0].mxu0
        %v7324 = vadd.f32 0.0, %v7323
        %v7325 = vpop.f32.mrb[0].mxu0
        %7326 = vdwg.mxu0
        %v7327 = vadd.f32 %v6989, %v7201
        %v7328 = vadd.f32 %v6990, %v7204
        %v7329 = vadd.f32 %v6991, %v7209
        %v7330 = vadd.f32 %v6992, %v7212
        %v7331 = vadd.f32 %v6993, %v7217
        %v7332 = vadd.f32 %v6994, %v7220
        %v7333 = vadd.f32 %v6995, %v7225
        %v7334 = vadd.f32 %v6996, %v7228
        %v7335 = vadd.f32 %v6997, %v7233
        %v7336 = vadd.f32 %v6998, %v7236
        %v7337 = vadd.f32 %v6999, %v7241
        %v7338 = vadd.f32 %v7000, %v7244
        %v7339 = vadd.f32 %v7001, %v7249
        %v7340 = vadd.f32 %v7002, %v7252
        %v7341 = vadd.f32 %v7003, %v7257
        %v7342 = vadd.f32 %v7004, %v7260
        %v7343 = vadd.f32 %v7005, %v7265
        %v7344 = vadd.f32 %v7006, %v7268
        %v7345 = vadd.f32 %v7007, %v7273
        %v7346 = vadd.f32 %v7008, %v7276
        %v7347 = vadd.f32 %v7009, %v7281
        %v7348 = vadd.f32 %v7010, %v7284
        %v7349 = vadd.f32 %v7011, %v7289
        %v7350 = vadd.f32 %v7012, %v7292
        %v7351 = vadd.f32 %v7013, %v7297
        %v7352 = vadd.f32 %v7014, %v7300
        %v7353 = vadd.f32 %v7015, %v7305
        %v7354 = vadd.f32 %v7016, %v7308
        %v7355 = vadd.f32 %v7017, %v7313
        %v7356 = vadd.f32 %v7018, %v7316
        %v7357 = vadd.f32 %v7019, %v7321
        %v7358 = vadd.f32 %v7020, %v7324
        %v7359 = vld [vmem:[#allocation2 + $0x28] sm:$0xff]
        %v7360 = vld [vmem:[#allocation2 + $0x30] sm:$0xff]
        %v7361 = vld [vmem:[#allocation2 + $0x38] sm:$0xff]
        %v7362 = vld [vmem:[#allocation2 + $0x40] sm:$0xff]
        %v7363 = vld [vmem:[#allocation2 + $0x48] sm:$0xff]
        %v7364 = vld [vmem:[#allocation2 + $0x50] sm:$0xff]
        %v7365 = vld [vmem:[#allocation2 + $0x58] sm:$0xff]
        %v7366 = vld [vmem:[#allocation2 + $0x60] sm:$0xff]
        %v7367 = vld [vmem:[#allocation2 + $0x68] sm:$0xff]
        %v7368 = vld [vmem:[#allocation2 + $0x70] sm:$0xff]
        %v7369 = vld [vmem:[#allocation2 + $0x78] sm:$0xff]
        %v7370 = vld [vmem:[#allocation2 + $0x80] sm:$0xff]
        %v7371 = vld [vmem:[#allocation2 + $0x88] sm:$0xff]
        %v7372 = vld [vmem:[#allocation2 + $0x90] sm:$0xff]
        %v7373 = vld [vmem:[#allocation2 + $0x98] sm:$0xff]
        %v7374 = vld [vmem:[#allocation2 + $0xa0] sm:$0xff]
        %v7375 = vld [vmem:[#allocation2 + $0xa8] sm:$0xff]
        %v7376 = vld [vmem:[#allocation2 + $0xb0] sm:$0xff]
        %v7377 = vld [vmem:[#allocation2 + $0xb8] sm:$0xff]
        %v7378 = vld [vmem:[#allocation2 + $0xc0] sm:$0xff]
        %v7379 = vld [vmem:[#allocation2 + $0xc8] sm:$0xff]
        %v7380 = vld [vmem:[#allocation2 + $0xd0] sm:$0xff]
        %v7381 = vld [vmem:[#allocation2 + $0xd8] sm:$0xff]
        %v7382 = vld [vmem:[#allocation2 + $0xe0] sm:$0xff]
        %v7383 = vld [vmem:[#allocation2 + $0xe8] sm:$0xff]
        %v7384 = vld [vmem:[#allocation2 + $0xf0] sm:$0xff]
        %v7385 = vld [vmem:[#allocation2 + $0xf8] sm:$0xff]
        %v7386 = vld [vmem:[#allocation2 + $0x100] sm:$0xff]
        %v7387 = vld [vmem:[#allocation2 + $0x108] sm:$0xff]
        %v7388 = vld [vmem:[#allocation2 + $0x110] sm:$0xff]
        %v7389 = vld [vmem:[#allocation2 + $0x118] sm:$0xff]
        %v7390 = vld [vmem:[#allocation2 + $0x120] sm:$0xff]
        %v7391 = vpack.c.bf16 %v7360, %v7359
        %v7392 = vpack.c.bf16 %v7362, %v7361
        %v7393 = vpack.c.bf16 %v7364, %v7363
        %v7394 = vpack.c.bf16 %v7366, %v7365
        %v7395 = vpack.c.bf16 %v7368, %v7367
        %v7396 = vpack.c.bf16 %v7370, %v7369
        %v7397 = vpack.c.bf16 %v7372, %v7371
        %v7398 = vpack.c.bf16 %v7374, %v7373
        %v7399 = vpack.c.bf16 %v7376, %v7375
        %v7400 = vpack.c.bf16 %v7378, %v7377
        %v7401 = vpack.c.bf16 %v7380, %v7379
        %v7402 = vpack.c.bf16 %v7382, %v7381
        %v7403 = vpack.c.bf16 %v7384, %v7383
        %v7404 = vpack.c.bf16 %v7386, %v7385
        %v7405 = vpack.c.bf16 %v7388, %v7387
        %v7406 = vpack.c.bf16 %v7390, %v7389
        %s7407 = scalar_lea.vmem %s4, 448
        %v7408 = vld [vmem:[%s7407] sm:$0xf]
        %v7409 = vld [vmem:[%s7407 + $0x4] sm:$0xf]
        %v7410 = vld [vmem:[%s7407 + $0x8] sm:$0xf]
        %v7411 = vld [vmem:[%s7407 + $0xc] sm:$0xf]
        %v7412 = vld [vmem:[%s7407 + $0x10] sm:$0xf]
        %v7413 = vld [vmem:[%s7407 + $0x14] sm:$0xf]
        %v7414 = vld [vmem:[%s7407 + $0x18] sm:$0xf]
        %v7415 = vld [vmem:[%s7407 + $0x1c] sm:$0xf]
        %v7416 = vld [vmem:[%s7407 + $0x20] sm:$0xf]
        %v7417 = vld [vmem:[%s7407 + $0x24] sm:$0xf]
        %v7418 = vld [vmem:[%s7407 + $0x28] sm:$0xf]
        %v7419 = vld [vmem:[%s7407 + $0x2c] sm:$0xf]
        %v7420 = vld [vmem:[%s7407 + $0x30] sm:$0xf]
        %v7421 = vld [vmem:[%s7407 + $0x34] sm:$0xf]
        %v7422 = vld [vmem:[%s7407 + $0x38] sm:$0xf]
        %v7423 = vld [vmem:[%s7407 + $0x3c] sm:$0xf]
        %v7440 = vunpack.c.l.b16 %v7408
        %v7441 = vunpack.c.l.b16 %v7409
        %v7442 = vunpack.c.l.b16 %v7410
        %v7443 = vunpack.c.l.b16 %v7411
        %v7444 = vunpack.c.l.b16 %v7412
        %v7445 = vunpack.c.l.b16 %v7413
        %v7446 = vunpack.c.l.b16 %v7414
        %v7447 = vunpack.c.l.b16 %v7415
        %v7448 = vunpack.c.l.b16 %v7416
        %v7449 = vunpack.c.l.b16 %v7417
        %v7450 = vunpack.c.l.b16 %v7418
        %v7451 = vunpack.c.l.b16 %v7419
        %v7452 = vunpack.c.l.b16 %v7420
        %v7453 = vunpack.c.l.b16 %v7421
        %v7454 = vunpack.c.l.b16 %v7422
        %v7455 = vunpack.c.l.b16 %v7423
        %v7456 = vpack.c.b16 %v7441, %v7440
        %v7457 = vpack.c.b16 %v7443, %v7442
        %v7458 = vpack.c.b16 %v7445, %v7444
        %v7459 = vpack.c.b16 %v7447, %v7446
        %v7460 = vpack.c.b16 %v7449, %v7448
        %v7461 = vpack.c.b16 %v7451, %v7450
        %v7462 = vpack.c.b16 %v7453, %v7452
        %v7463 = vpack.c.b16 %v7455, %v7454
        %7472 = vmatprep.subr.bf16.mxu0 0
        %7473 = vmatpush1.bf16.msra.mxu0 %v7456
        %7474 = vmatprep.subr.bf16.mxu0 0
        %7475 = vmatpush1.bf16.msra.mxu0 %v7457
        %7476 = vmatprep.subr.bf16.mxu0 0
        %7477 = vmatpush1.bf16.msra.mxu0 %v7458
        %7478 = vmatprep.subr.bf16.mxu0 0
        %7479 = vmatpush1.bf16.msra.mxu0 %v7459
        %7480 = vmatprep.subr.bf16.mxu0 0
        %7481 = vmatpush1.bf16.msra.mxu0 %v7460
        %7482 = vmatprep.subr.bf16.mxu0 0
        %7483 = vmatpush1.bf16.msra.mxu0 %v7461
        %7484 = vmatprep.subr.bf16.mxu0 0
        %7485 = vmatpush1.bf16.msra.mxu0 %v7462
        %7486 = vmatprep.subr.bf16.mxu0 0
        %7487 = vmatpush1.bf16.msra.mxu0 %v7463
        %7488 = vmatprep.subr.bf16.mxu0 0
        %7489 = vmatpush1.bf16.msra.mxu0 0
        %7490 = vmatprep.subr.bf16.mxu0 0
        %7491 = vmatpush1.bf16.msra.mxu0 0
        %7492 = vmatprep.subr.bf16.mxu0 0
        %7493 = vmatpush1.bf16.msra.mxu0 0
        %7494 = vmatprep.subr.bf16.mxu0 0
        %7495 = vmatpush1.bf16.msra.mxu0 0
        %7496 = vmatprep.subr.bf16.mxu0 0
        %7497 = vmatpush1.bf16.msra.mxu0 0
        %7498 = vmatprep.subr.bf16.mxu0 0
        %7499 = vmatpush1.bf16.msra.mxu0 0
        %7500 = vmatprep.subr.bf16.mxu0 0
        %7501 = vmatpush1.bf16.msra.mxu0 0
        %7502 = vmatprep.subr.bf16.mxu0 0
        %7503 = vmatpush1.bf16.msra.mxu0 0
        %7504 = vmatprep.mubr.bf16.mxu0 0
        %7505 = vmatmul.mubr.bf16.gmra.mrb[0].mxu0 %v7391
        %v7506 = vpop.f32.mrb[0].mxu0
        %v7507 = vadd.f32 0.0, %v7506
        %v7508 = vpop.f32.mrb[0].mxu0
        %v7509 = vpop.f32.mrb[0].mxu0
        %v7510 = vadd.f32 0.0, %v7509
        %v7511 = vpop.f32.mrb[0].mxu0
        %7512 = vmatprep.mubr.bf16.mxu0 0
        %7513 = vmatmul.mubr.bf16.gmra.mrb[0].mxu0 %v7392
        %v7514 = vpop.f32.mrb[0].mxu0
        %v7515 = vadd.f32 0.0, %v7514
        %v7516 = vpop.f32.mrb[0].mxu0
        %v7517 = vpop.f32.mrb[0].mxu0
        %v7518 = vadd.f32 0.0, %v7517
        %v7519 = vpop.f32.mrb[0].mxu0
        %7520 = vmatprep.mubr.bf16.mxu0 0
        %7521 = vmatmul.mubr.bf16.gmra.mrb[0].mxu0 %v7393
        %v7522 = vpop.f32.mrb[0].mxu0
        %v7523 = vadd.f32 0.0, %v7522
        %v7524 = vpop.f32.mrb[0].mxu0
        %v7525 = vpop.f32.mrb[0].mxu0
        %v7526 = vadd.f32 0.0, %v7525
        %v7527 = vpop.f32.mrb[0].mxu0
        %7528 = vmatprep.mubr.bf16.mxu0 0
        %7529 = vmatmul.mubr.bf16.gmra.mrb[0].mxu0 %v7394
        %v7530 = vpop.f32.mrb[0].mxu0
        %v7531 = vadd.f32 0.0, %v7530
        %v7532 = vpop.f32.mrb[0].mxu0
        %v7533 = vpop.f32.mrb[0].mxu0
        %v7534 = vadd.f32 0.0, %v7533
        %v7535 = vpop.f32.mrb[0].mxu0
        %7536 = vmatprep.mubr.bf16.mxu0 0
        %7537 = vmatmul.mubr.bf16.gmra.mrb[0].mxu0 %v7395
        %v7538 = vpop.f32.mrb[0].mxu0
        %v7539 = vadd.f32 0.0, %v7538
        %v7540 = vpop.f32.mrb[0].mxu0
        %v7541 = vpop.f32.mrb[0].mxu0
        %v7542 = vadd.f32 0.0, %v7541
        %v7543 = vpop.f32.mrb[0].mxu0
        %7544 = vmatprep.mubr.bf16.mxu0 0
        %7545 = vmatmul.mubr.bf16.gmra.mrb[0].mxu0 %v7396
        %v7546 = vpop.f32.mrb[0].mxu0
        %v7547 = vadd.f32 0.0, %v7546
        %v7548 = vpop.f32.mrb[0].mxu0
        %v7549 = vpop.f32.mrb[0].mxu0
        %v7550 = vadd.f32 0.0, %v7549
        %v7551 = vpop.f32.mrb[0].mxu0
        %7552 = vmatprep.mubr.bf16.mxu0 0
        %7553 = vmatmul.mubr.bf16.gmra.mrb[0].mxu0 %v7397
        %v7554 = vpop.f32.mrb[0].mxu0
        %v7555 = vadd.f32 0.0, %v7554
        %v7556 = vpop.f32.mrb[0].mxu0
        %v7557 = vpop.f32.mrb[0].mxu0
        %v7558 = vadd.f32 0.0, %v7557
        %v7559 = vpop.f32.mrb[0].mxu0
        %7560 = vmatprep.mubr.bf16.mxu0 0
        %7561 = vmatmul.mubr.bf16.gmra.mrb[0].mxu0 %v7398
        %v7562 = vpop.f32.mrb[0].mxu0
        %v7563 = vadd.f32 0.0, %v7562
        %v7564 = vpop.f32.mrb[0].mxu0
        %v7565 = vpop.f32.mrb[0].mxu0
        %v7566 = vadd.f32 0.0, %v7565
        %v7567 = vpop.f32.mrb[0].mxu0
        %7568 = vmatprep.mubr.bf16.mxu0 0
        %7569 = vmatmul.mubr.bf16.gmra.mrb[0].mxu0 %v7399
        %v7570 = vpop.f32.mrb[0].mxu0
        %v7571 = vadd.f32 0.0, %v7570
        %v7572 = vpop.f32.mrb[0].mxu0
        %v7573 = vpop.f32.mrb[0].mxu0
        %v7574 = vadd.f32 0.0, %v7573
        %v7575 = vpop.f32.mrb[0].mxu0
        %7576 = vmatprep.mubr.bf16.mxu0 0
        %7577 = vmatmul.mubr.bf16.gmra.mrb[0].mxu0 %v7400
        %v7578 = vpop.f32.mrb[0].mxu0
        %v7579 = vadd.f32 0.0, %v7578
        %v7580 = vpop.f32.mrb[0].mxu0
        %v7581 = vpop.f32.mrb[0].mxu0
        %v7582 = vadd.f32 0.0, %v7581
        %v7583 = vpop.f32.mrb[0].mxu0
        %7584 = vmatprep.mubr.bf16.mxu0 0
        %7585 = vmatmul.mubr.bf16.gmra.mrb[0].mxu0 %v7401
        %v7586 = vpop.f32.mrb[0].mxu0
        %v7587 = vadd.f32 0.0, %v7586
        %v7588 = vpop.f32.mrb[0].mxu0
        %v7589 = vpop.f32.mrb[0].mxu0
        %v7590 = vadd.f32 0.0, %v7589
        %v7591 = vpop.f32.mrb[0].mxu0
        %7592 = vmatprep.mubr.bf16.mxu0 0
        %7593 = vmatmul.mubr.bf16.gmra.mrb[0].mxu0 %v7402
        %v7594 = vpop.f32.mrb[0].mxu0
        %v7595 = vadd.f32 0.0, %v7594
        %v7596 = vpop.f32.mrb[0].mxu0
        %v7597 = vpop.f32.mrb[0].mxu0
        %v7598 = vadd.f32 0.0, %v7597
        %v7599 = vpop.f32.mrb[0].mxu0
        %7600 = vmatprep.mubr.bf16.mxu0 0
        %7601 = vmatmul.mubr.bf16.gmra.mrb[0].mxu0 %v7403
        %v7602 = vpop.f32.mrb[0].mxu0
        %v7603 = vadd.f32 0.0, %v7602
        %v7604 = vpop.f32.mrb[0].mxu0
        %v7605 = vpop.f32.mrb[0].mxu0
        %v7606 = vadd.f32 0.0, %v7605
        %v7607 = vpop.f32.mrb[0].mxu0
        %7608 = vmatprep.mubr.bf16.mxu0 0
        %7609 = vmatmul.mubr.bf16.gmra.mrb[0].mxu0 %v7404
        %v7610 = vpop.f32.mrb[0].mxu0
        %v7611 = vadd.f32 0.0, %v7610
        %v7612 = vpop.f32.mrb[0].mxu0
        %v7613 = vpop.f32.mrb[0].mxu0
        %v7614 = vadd.f32 0.0, %v7613
        %v7615 = vpop.f32.mrb[0].mxu0
        %7616 = vmatprep.mubr.bf16.mxu0 0
        %7617 = vmatmul.mubr.bf16.gmra.mrb[0].mxu0 %v7405
        %v7618 = vpop.f32.mrb[0].mxu0
        %v7619 = vadd.f32 0.0, %v7618
        %v7620 = vpop.f32.mrb[0].mxu0
        %v7621 = vpop.f32.mrb[0].mxu0
        %v7622 = vadd.f32 0.0, %v7621
        %v7623 = vpop.f32.mrb[0].mxu0
        %7624 = vmatprep.mubr.bf16.mxu0 0
        %7625 = vmatmul.mubr.bf16.gmra.mrb[0].mxu0 %v7406
        %v7626 = vpop.f32.mrb[0].mxu0
        %v7627 = vadd.f32 0.0, %v7626
        %v7628 = vpop.f32.mrb[0].mxu0
        %v7629 = vpop.f32.mrb[0].mxu0
        %v7630 = vadd.f32 0.0, %v7629
        %v7631 = vpop.f32.mrb[0].mxu0
        %7632 = vdwg.mxu0
        %v7633 = vadd.f32 %v7327, %v7507
        %v7634 = vadd.f32 %v7328, %v7510
        %v7635 = vadd.f32 %v7329, %v7515
        %v7636 = vadd.f32 %v7330, %v7518
        %v7637 = vadd.f32 %v7331, %v7523
        %v7638 = vadd.f32 %v7332, %v7526
        %v7639 = vadd.f32 %v7333, %v7531
        %v7640 = vadd.f32 %v7334, %v7534
        %v7641 = vadd.f32 %v7335, %v7539
        %v7642 = vadd.f32 %v7336, %v7542
        %v7643 = vadd.f32 %v7337, %v7547
        %v7644 = vadd.f32 %v7338, %v7550
        %v7645 = vadd.f32 %v7339, %v7555
        %v7646 = vadd.f32 %v7340, %v7558
        %v7647 = vadd.f32 %v7341, %v7563
        %v7648 = vadd.f32 %v7342, %v7566
        %v7649 = vadd.f32 %v7343, %v7571
        %v7650 = vadd.f32 %v7344, %v7574
        %v7651 = vadd.f32 %v7345, %v7579
        %v7652 = vadd.f32 %v7346, %v7582
        %v7653 = vadd.f32 %v7347, %v7587
        %v7654 = vadd.f32 %v7348, %v7590
        %v7655 = vadd.f32 %v7349, %v7595
        %v7656 = vadd.f32 %v7350, %v7598
        %v7657 = vadd.f32 %v7351, %v7603
        %v7658 = vadd.f32 %v7352, %v7606
        %v7659 = vadd.f32 %v7353, %v7611
        %v7660 = vadd.f32 %v7354, %v7614
        %v7661 = vadd.f32 %v7355, %v7619
        %v7662 = vadd.f32 %v7356, %v7622
        %v7663 = vadd.f32 %v7357, %v7627
        %v7664 = vadd.f32 %v7358, %v7630
        %v7665 = vld [vmem:[#allocation2 + $0x29] sm:$0xff]
        %v7666 = vld [vmem:[#allocation2 + $0x31] sm:$0xff]
        %v7667 = vld [vmem:[#allocation2 + $0x39] sm:$0xff]
        %v7668 = vld [vmem:[#allocation2 + $0x41] sm:$0xff]
        %v7669 = vld [vmem:[#allocation2 + $0x49] sm:$0xff]
        %v7670 = vld [vmem:[#allocation2 + $0x51] sm:$0xff]
        %v7671 = vld [vmem:[#allocation2 + $0x59] sm:$0xff]
        %v7672 = vld [vmem:[#allocation2 + $0x61] sm:$0xff]
        %v7673 = vld [vmem:[#allocation2 + $0x69] sm:$0xff]
        %v7674 = vld [vmem:[#allocation2 + $0x71] sm:$0xff]
        %v7675 = vld [vmem:[#allocation2 + $0x79] sm:$0xff]
        %v7676 = vld [vmem:[#allocation2 + $0x81] sm:$0xff]
        %v7677 = vld [vmem:[#allocation2 + $0x89] sm:$0xff]
        %v7678 = vld [vmem:[#allocation2 + $0x91] sm:$0xff]
        %v7679 = vld [vmem:[#allocation2 + $0x99] sm:$0xff]
        %v7680 = vld [vmem:[#allocation2 + $0xa1] sm:$0xff]
        %v7681 = vld [vmem:[#allocation2 + $0xa9] sm:$0xff]
        %v7682 = vld [vmem:[#allocation2 + $0xb1] sm:$0xff]
        %v7683 = vld [vmem:[#allocation2 + $0xb9] sm:$0xff]
        %v7684 = vld [vmem:[#allocation2 + $0xc1] sm:$0xff]
        %v7685 = vld [vmem:[#allocation2 + $0xc9] sm:$0xff]
        %v7686 = vld [vmem:[#allocation2 + $0xd1] sm:$0xff]
        %v7687 = vld [vmem:[#allocation2 + $0xd9] sm:$0xff]
        %v7688 = vld [vmem:[#allocation2 + $0xe1] sm:$0xff]
        %v7689 = vld [vmem:[#allocation2 + $0xe9] sm:$0xff]
        %v7690 = vld [vmem:[#allocation2 + $0xf1] sm:$0xff]
        %v7691 = vld [vmem:[#allocation2 + $0xf9] sm:$0xff]
        %v7692 = vld [vmem:[#allocation2 + $0x101] sm:$0xff]
        %v7693 = vld [vmem:[#allocation2 + $0x109] sm:$0xff]
        %v7694 = vld [vmem:[#allocation2 + $0x111] sm:$0xff]
        %v7695 = vld [vmem:[#allocation2 + $0x119] sm:$0xff]
        %v7696 = vld [vmem:[#allocation2 + $0x121] sm:$0xff]
        %v7697 = vmul.f32 %v7665, %v1566
        %v7698 = vmul.f32 %v7666, %v1570
        %v7699 = vmul.f32 %v7667, %v1574
        %v7700 = vmul.f32 %v7668, %v1578
        %v7701 = vmul.f32 %v7669, %v1582
        %v7702 = vmul.f32 %v7670, %v1586
        %v7703 = vmul.f32 %v7671, %v1590
        %v7704 = vmul.f32 %v7672, %v1594
        %v7705 = vmul.f32 %v7673, %v1598
        %v7706 = vmul.f32 %v7674, %v1602
        %v7707 = vmul.f32 %v7675, %v1606
        %v7708 = vmul.f32 %v7676, %v1610
        %v7709 = vmul.f32 %v7677, %v1614
        %v7710 = vmul.f32 %v7678, %v1618
        %v7711 = vmul.f32 %v7679, %v1622
        %v7712 = vmul.f32 %v7680, %v1626
        %v7713 = vmul.f32 %v7681, %v1630
        %v7714 = vmul.f32 %v7682, %v1634
        %v7715 = vmul.f32 %v7683, %v1638
        %v7716 = vmul.f32 %v7684, %v1642
        %v7717 = vmul.f32 %v7685, %v1646
        %v7718 = vmul.f32 %v7686, %v1650
        %v7719 = vmul.f32 %v7687, %v1654
        %v7720 = vmul.f32 %v7688, %v1658
        %v7721 = vmul.f32 %v7689, %v1662
        %v7722 = vmul.f32 %v7690, %v1666
        %v7723 = vmul.f32 %v7691, %v1670
        %v7724 = vmul.f32 %v7692, %v1674
        %v7725 = vmul.f32 %v7693, %v1678
        %v7726 = vmul.f32 %v7694, %v1682
        %v7727 = vmul.f32 %v7695, %v1686
        %v7728 = vmul.f32 %v7696, %v1690
        %v7729 = vpack.c.bf16 %v7698, %v7697
        %v7730 = vpack.c.bf16 %v7700, %v7699
        %v7731 = vpack.c.bf16 %v7702, %v7701
        %v7732 = vpack.c.bf16 %v7704, %v7703
        %v7733 = vpack.c.bf16 %v7706, %v7705
        %v7734 = vpack.c.bf16 %v7708, %v7707
        %v7735 = vpack.c.bf16 %v7710, %v7709
        %v7736 = vpack.c.bf16 %v7712, %v7711
        %v7737 = vpack.c.bf16 %v7714, %v7713
        %v7738 = vpack.c.bf16 %v7716, %v7715
        %v7739 = vpack.c.bf16 %v7718, %v7717
        %v7740 = vpack.c.bf16 %v7720, %v7719
        %v7741 = vpack.c.bf16 %v7722, %v7721
        %v7742 = vpack.c.bf16 %v7724, %v7723
        %v7743 = vpack.c.bf16 %v7726, %v7725
        %v7744 = vpack.c.bf16 %v7728, %v7727
        %s7745 = scalar_lea.vmem %s4, 512
        %v7746 = vld [vmem:[%s7745] sm:$0xf]
        %v7747 = vld [vmem:[%s7745 + $0x4] sm:$0xf]
        %v7748 = vld [vmem:[%s7745 + $0x8] sm:$0xf]
        %v7749 = vld [vmem:[%s7745 + $0xc] sm:$0xf]
        %v7750 = vld [vmem:[%s7745 + $0x10] sm:$0xf]
        %v7751 = vld [vmem:[%s7745 + $0x14] sm:$0xf]
        %v7752 = vld [vmem:[%s7745 + $0x18] sm:$0xf]
        %v7753 = vld [vmem:[%s7745 + $0x1c] sm:$0xf]
        %v7754 = vld [vmem:[%s7745 + $0x20] sm:$0xf]
        %v7755 = vld [vmem:[%s7745 + $0x24] sm:$0xf]
        %v7756 = vld [vmem:[%s7745 + $0x28] sm:$0xf]
        %v7757 = vld [vmem:[%s7745 + $0x2c] sm:$0xf]
        %v7758 = vld [vmem:[%s7745 + $0x30] sm:$0xf]
        %v7759 = vld [vmem:[%s7745 + $0x34] sm:$0xf]
        %v7760 = vld [vmem:[%s7745 + $0x38] sm:$0xf]
        %v7761 = vld [vmem:[%s7745 + $0x3c] sm:$0xf]
        %v7778 = vunpack.c.l.b16 %v7746
        %v7779 = vunpack.c.l.b16 %v7747
        %v7780 = vunpack.c.l.b16 %v7748
        %v7781 = vunpack.c.l.b16 %v7749
        %v7782 = vunpack.c.l.b16 %v7750
        %v7783 = vunpack.c.l.b16 %v7751
        %v7784 = vunpack.c.l.b16 %v7752
        %v7785 = vunpack.c.l.b16 %v7753
        %v7786 = vunpack.c.l.b16 %v7754
        %v7787 = vunpack.c.l.b16 %v7755
        %v7788 = vunpack.c.l.b16 %v7756
        %v7789 = vunpack.c.l.b16 %v7757
        %v7790 = vunpack.c.l.b16 %v7758
        %v7791 = vunpack.c.l.b16 %v7759
        %v7792 = vunpack.c.l.b16 %v7760
        %v7793 = vunpack.c.l.b16 %v7761
        %v7794 = vpack.c.b16 %v7779, %v7778
        %v7795 = vpack.c.b16 %v7781, %v7780
        %v7796 = vpack.c.b16 %v7783, %v7782
        %v7797 = vpack.c.b16 %v7785, %v7784
        %v7798 = vpack.c.b16 %v7787, %v7786
        %v7799 = vpack.c.b16 %v7789, %v7788
        %v7800 = vpack.c.b16 %v7791, %v7790
        %v7801 = vpack.c.b16 %v7793, %v7792
        %7810 = vmatprep.subr.bf16.mxu0 0
        %7811 = vmatpush1.bf16.msra.mxu0 %v7794
        %7812 = vmatprep.subr.bf16.mxu0 0
        %7813 = vmatpush1.bf16.msra.mxu0 %v7795
        %7814 = vmatprep.subr.bf16.mxu0 0
        %7815 = vmatpush1.bf16.msra.mxu0 %v7796
        %7816 = vmatprep.subr.bf16.mxu0 0
        %7817 = vmatpush1.bf16.msra.mxu0 %v7797
        %7818 = vmatprep.subr.bf16.mxu0 0
        %7819 = vmatpush1.bf16.msra.mxu0 %v7798
        %7820 = vmatprep.subr.bf16.mxu0 0
        %7821 = vmatpush1.bf16.msra.mxu0 %v7799
        %7822 = vmatprep.subr.bf16.mxu0 0
        %7823 = vmatpush1.bf16.msra.mxu0 %v7800
        %7824 = vmatprep.subr.bf16.mxu0 0
        %7825 = vmatpush1.bf16.msra.mxu0 %v7801
        %7826 = vmatprep.subr.bf16.mxu0 0
        %7827 = vmatpush1.bf16.msra.mxu0 0
        %7828 = vmatprep.subr.bf16.mxu0 0
        %7829 = vmatpush1.bf16.msra.mxu0 0
        %7830 = vmatprep.subr.bf16.mxu0 0
        %7831 = vmatpush1.bf16.msra.mxu0 0
        %7832 = vmatprep.subr.bf16.mxu0 0
        %7833 = vmatpush1.bf16.msra.mxu0 0
        %7834 = vmatprep.subr.bf16.mxu0 0
        %7835 = vmatpush1.bf16.msra.mxu0 0
        %7836 = vmatprep.subr.bf16.mxu0 0
        %7837 = vmatpush1.bf16.msra.mxu0 0
        %7838 = vmatprep.subr.bf16.mxu0 0
        %7839 = vmatpush1.bf16.msra.mxu0 0
        %7840 = vmatprep.subr.bf16.mxu0 0
        %7841 = vmatpush1.bf16.msra.mxu0 0
        %7842 = vmatprep.mubr.bf16.mxu0 0
        %7843 = vmatmul.mubr.bf16.gmra.mrb[0].mxu0 %v7729
        %v7844 = vpop.f32.mrb[0].mxu0
        %v7845 = vadd.f32 0.0, %v7844
        %v7846 = vpop.f32.mrb[0].mxu0
        %v7847 = vpop.f32.mrb[0].mxu0
        %v7848 = vadd.f32 0.0, %v7847
        %v7849 = vpop.f32.mrb[0].mxu0
        %7850 = vmatprep.mubr.bf16.mxu0 0
        %7851 = vmatmul.mubr.bf16.gmra.mrb[0].mxu0 %v7730
        %v7852 = vpop.f32.mrb[0].mxu0
        %v7853 = vadd.f32 0.0, %v7852
        %v7854 = vpop.f32.mrb[0].mxu0
        %v7855 = vpop.f32.mrb[0].mxu0
        %v7856 = vadd.f32 0.0, %v7855
        %v7857 = vpop.f32.mrb[0].mxu0
        %7858 = vmatprep.mubr.bf16.mxu0 0
        %7859 = vmatmul.mubr.bf16.gmra.mrb[0].mxu0 %v7731
        %v7860 = vpop.f32.mrb[0].mxu0
        %v7861 = vadd.f32 0.0, %v7860
        %v7862 = vpop.f32.mrb[0].mxu0
        %v7863 = vpop.f32.mrb[0].mxu0
        %v7864 = vadd.f32 0.0, %v7863
        %v7865 = vpop.f32.mrb[0].mxu0
        %7866 = vmatprep.mubr.bf16.mxu0 0
        %7867 = vmatmul.mubr.bf16.gmra.mrb[0].mxu0 %v7732
        %v7868 = vpop.f32.mrb[0].mxu0
        %v7869 = vadd.f32 0.0, %v7868
        %v7870 = vpop.f32.mrb[0].mxu0
        %v7871 = vpop.f32.mrb[0].mxu0
        %v7872 = vadd.f32 0.0, %v7871
        %v7873 = vpop.f32.mrb[0].mxu0
        %7874 = vmatprep.mubr.bf16.mxu0 0
        %7875 = vmatmul.mubr.bf16.gmra.mrb[0].mxu0 %v7733
        %v7876 = vpop.f32.mrb[0].mxu0
        %v7877 = vadd.f32 0.0, %v7876
        %v7878 = vpop.f32.mrb[0].mxu0
        %v7879 = vpop.f32.mrb[0].mxu0
        %v7880 = vadd.f32 0.0, %v7879
        %v7881 = vpop.f32.mrb[0].mxu0
        %7882 = vmatprep.mubr.bf16.mxu0 0
        %7883 = vmatmul.mubr.bf16.gmra.mrb[0].mxu0 %v7734
        %v7884 = vpop.f32.mrb[0].mxu0
        %v7885 = vadd.f32 0.0, %v7884
        %v7886 = vpop.f32.mrb[0].mxu0
        %v7887 = vpop.f32.mrb[0].mxu0
        %v7888 = vadd.f32 0.0, %v7887
        %v7889 = vpop.f32.mrb[0].mxu0
        %7890 = vmatprep.mubr.bf16.mxu0 0
        %7891 = vmatmul.mubr.bf16.gmra.mrb[0].mxu0 %v7735
        %v7892 = vpop.f32.mrb[0].mxu0
        %v7893 = vadd.f32 0.0, %v7892
        %v7894 = vpop.f32.mrb[0].mxu0
        %v7895 = vpop.f32.mrb[0].mxu0
        %v7896 = vadd.f32 0.0, %v7895
        %v7897 = vpop.f32.mrb[0].mxu0
        %7898 = vmatprep.mubr.bf16.mxu0 0
        %7899 = vmatmul.mubr.bf16.gmra.mrb[0].mxu0 %v7736
        %v7900 = vpop.f32.mrb[0].mxu0
        %v7901 = vadd.f32 0.0, %v7900
        %v7902 = vpop.f32.mrb[0].mxu0
        %v7903 = vpop.f32.mrb[0].mxu0
        %v7904 = vadd.f32 0.0, %v7903
        %v7905 = vpop.f32.mrb[0].mxu0
        %7906 = vmatprep.mubr.bf16.mxu0 0
        %7907 = vmatmul.mubr.bf16.gmra.mrb[0].mxu0 %v7737
        %v7908 = vpop.f32.mrb[0].mxu0
        %v7909 = vadd.f32 0.0, %v7908
        %v7910 = vpop.f32.mrb[0].mxu0
        %v7911 = vpop.f32.mrb[0].mxu0
        %v7912 = vadd.f32 0.0, %v7911
        %v7913 = vpop.f32.mrb[0].mxu0
        %7914 = vmatprep.mubr.bf16.mxu0 0
        %7915 = vmatmul.mubr.bf16.gmra.mrb[0].mxu0 %v7738
        %v7916 = vpop.f32.mrb[0].mxu0
        %v7917 = vadd.f32 0.0, %v7916
        %v7918 = vpop.f32.mrb[0].mxu0
        %v7919 = vpop.f32.mrb[0].mxu0
        %v7920 = vadd.f32 0.0, %v7919
        %v7921 = vpop.f32.mrb[0].mxu0
        %7922 = vmatprep.mubr.bf16.mxu0 0
        %7923 = vmatmul.mubr.bf16.gmra.mrb[0].mxu0 %v7739
        %v7924 = vpop.f32.mrb[0].mxu0
        %v7925 = vadd.f32 0.0, %v7924
        %v7926 = vpop.f32.mrb[0].mxu0
        %v7927 = vpop.f32.mrb[0].mxu0
        %v7928 = vadd.f32 0.0, %v7927
        %v7929 = vpop.f32.mrb[0].mxu0
        %7930 = vmatprep.mubr.bf16.mxu0 0
        %7931 = vmatmul.mubr.bf16.gmra.mrb[0].mxu0 %v7740
        %v7932 = vpop.f32.mrb[0].mxu0
        %v7933 = vadd.f32 0.0, %v7932
        %v7934 = vpop.f32.mrb[0].mxu0
        %v7935 = vpop.f32.mrb[0].mxu0
        %v7936 = vadd.f32 0.0, %v7935
        %v7937 = vpop.f32.mrb[0].mxu0
        %7938 = vmatprep.mubr.bf16.mxu0 0
        %7939 = vmatmul.mubr.bf16.gmra.mrb[0].mxu0 %v7741
        %v7940 = vpop.f32.mrb[0].mxu0
        %v7941 = vadd.f32 0.0, %v7940
        %v7942 = vpop.f32.mrb[0].mxu0
        %v7943 = vpop.f32.mrb[0].mxu0
        %v7944 = vadd.f32 0.0, %v7943
        %v7945 = vpop.f32.mrb[0].mxu0
        %7946 = vmatprep.mubr.bf16.mxu0 0
        %7947 = vmatmul.mubr.bf16.gmra.mrb[0].mxu0 %v7742
        %v7948 = vpop.f32.mrb[0].mxu0
        %v7949 = vadd.f32 0.0, %v7948
        %v7950 = vpop.f32.mrb[0].mxu0
        %v7951 = vpop.f32.mrb[0].mxu0
        %v7952 = vadd.f32 0.0, %v7951
        %v7953 = vpop.f32.mrb[0].mxu0
        %7954 = vmatprep.mubr.bf16.mxu0 0
        %7955 = vmatmul.mubr.bf16.gmra.mrb[0].mxu0 %v7743
        %v7956 = vpop.f32.mrb[0].mxu0
        %v7957 = vadd.f32 0.0, %v7956
        %v7958 = vpop.f32.mrb[0].mxu0
        %v7959 = vpop.f32.mrb[0].mxu0
        %v7960 = vadd.f32 0.0, %v7959
        %v7961 = vpop.f32.mrb[0].mxu0
        %7962 = vmatprep.mubr.bf16.mxu0 0
        %7963 = vmatmul.mubr.bf16.gmra.mrb[0].mxu0 %v7744
        %v7964 = vpop.f32.mrb[0].mxu0
        %v7965 = vadd.f32 0.0, %v7964
        %v7966 = vpop.f32.mrb[0].mxu0
        %v7967 = vpop.f32.mrb[0].mxu0
        %v7968 = vadd.f32 0.0, %v7967
        %v7969 = vpop.f32.mrb[0].mxu0
        %7970 = vdwg.mxu0
        %v7971 = vadd.f32 %v7633, %v7845
        %v7972 = vadd.f32 %v7634, %v7848
        %v7973 = vadd.f32 %v7635, %v7853
        %v7974 = vadd.f32 %v7636, %v7856
        %v7975 = vadd.f32 %v7637, %v7861
        %v7976 = vadd.f32 %v7638, %v7864
        %v7977 = vadd.f32 %v7639, %v7869
        %v7978 = vadd.f32 %v7640, %v7872
        %v7979 = vadd.f32 %v7641, %v7877
        %v7980 = vadd.f32 %v7642, %v7880
        %v7981 = vadd.f32 %v7643, %v7885
        %v7982 = vadd.f32 %v7644, %v7888
        %v7983 = vadd.f32 %v7645, %v7893
        %v7984 = vadd.f32 %v7646, %v7896
        %v7985 = vadd.f32 %v7647, %v7901
        %v7986 = vadd.f32 %v7648, %v7904
        %v7987 = vadd.f32 %v7649, %v7909
        %v7988 = vadd.f32 %v7650, %v7912
        %v7989 = vadd.f32 %v7651, %v7917
        %v7990 = vadd.f32 %v7652, %v7920
        %v7991 = vadd.f32 %v7653, %v7925
        %v7992 = vadd.f32 %v7654, %v7928
        %v7993 = vadd.f32 %v7655, %v7933
        %v7994 = vadd.f32 %v7656, %v7936
        %v7995 = vadd.f32 %v7657, %v7941
        %v7996 = vadd.f32 %v7658, %v7944
        %v7997 = vadd.f32 %v7659, %v7949
        %v7998 = vadd.f32 %v7660, %v7952
        %v7999 = vadd.f32 %v7661, %v7957
        %v8000 = vadd.f32 %v7662, %v7960
        %v8001 = vadd.f32 %v7663, %v7965
        %v8002 = vadd.f32 %v7664, %v7968
        %v8003 = vmax.f32 %v7971, 0.0
        %v8004 = vmax.f32 %v7972, 0.0
        %v8005 = vmax.f32 %v7973, 0.0
        %v8006 = vmax.f32 %v7974, 0.0
        %v8007 = vmax.f32 %v7975, 0.0
        %v8008 = vmax.f32 %v7976, 0.0
        %v8009 = vmax.f32 %v7977, 0.0
        %v8010 = vmax.f32 %v7978, 0.0
        %v8011 = vmax.f32 %v7979, 0.0
        %v8012 = vmax.f32 %v7980, 0.0
        %v8013 = vmax.f32 %v7981, 0.0
        %v8014 = vmax.f32 %v7982, 0.0
        %v8015 = vmax.f32 %v7983, 0.0
        %v8016 = vmax.f32 %v7984, 0.0
        %v8017 = vmax.f32 %v7985, 0.0
        %v8018 = vmax.f32 %v7986, 0.0
        %v8019 = vmax.f32 %v7987, 0.0
        %v8020 = vmax.f32 %v7988, 0.0
        %v8021 = vmax.f32 %v7989, 0.0
        %v8022 = vmax.f32 %v7990, 0.0
        %v8023 = vmax.f32 %v7991, 0.0
        %v8024 = vmax.f32 %v7992, 0.0
        %v8025 = vmax.f32 %v7993, 0.0
        %v8026 = vmax.f32 %v7994, 0.0
        %v8027 = vmax.f32 %v7995, 0.0
        %v8028 = vmax.f32 %v7996, 0.0
        %v8029 = vmax.f32 %v7997, 0.0
        %v8030 = vmax.f32 %v7998, 0.0
        %v8031 = vmax.f32 %v7999, 0.0
        %v8032 = vmax.f32 %v8000, 0.0
        %v8033 = vmax.f32 %v8001, 0.0
        %v8034 = vmax.f32 %v8002, 0.0
        %8035 = vst [vmem:[#allocation3] sm:$0xff] 0.0
        %8036 = vst [vmem:[#allocation3 + $0x8] sm:$0xff] 0.0
        %8037 = vst [vmem:[#allocation3 + $0x10] sm:$0xff] 0.0
        %8038 = vst [vmem:[#allocation3 + $0x18] sm:$0xff] 0.0
        %8039 = vst [vmem:[#allocation3 + $0x20] sm:$0xff] 0.0
        %8040 = vst [vmem:[#allocation3 + $0x28] sm:$0xff] 0.0
        %8041 = vst [vmem:[#allocation3 + $0x30] sm:$0xff] 0.0
        %8042 = vst [vmem:[#allocation3 + $0x38] sm:$0xff] 0.0
        %8043 = vst [vmem:[#allocation3 + $0x40] sm:$0xff] 0.0
        %8044 = vst [vmem:[#allocation3 + $0x48] sm:$0xff] 0.0
        %8045 = vst [vmem:[#allocation3 + $0x50] sm:$0xff] 0.0
        %8046 = vst [vmem:[#allocation3 + $0x58] sm:$0xff] 0.0
        %8047 = vst [vmem:[#allocation3 + $0x60] sm:$0xff] 0.0
        %8048 = vst [vmem:[#allocation3 + $0x68] sm:$0xff] 0.0
        %8049 = vst [vmem:[#allocation3 + $0x70] sm:$0xff] 0.0
        %8050 = vst [vmem:[#allocation3 + $0x78] sm:$0xff] 0.0
        %8051 = vst [vmem:[#allocation3 + $0x80] sm:$0xff] 0.0
        %8052 = vst [vmem:[#allocation3 + $0x88] sm:$0xff] 0.0
        %8053 = vst [vmem:[#allocation3 + $0x90] sm:$0xff] 0.0
        %8054 = vst [vmem:[#allocation3 + $0x98] sm:$0xff] 0.0
        %8055 = vst [vmem:[#allocation3 + $0xa0] sm:$0xff] 0.0
        %8056 = vst [vmem:[#allocation3 + $0xa8] sm:$0xff] 0.0
        %8057 = vst [vmem:[#allocation3 + $0xb0] sm:$0xff] 0.0
        %8058 = vst [vmem:[#allocation3 + $0xb8] sm:$0xff] 0.0
        %8059 = vst [vmem:[#allocation3 + $0xc0] sm:$0xff] 0.0
        %8060 = vst [vmem:[#allocation3 + $0xc8] sm:$0xff] 0.0
        %8061 = vst [vmem:[#allocation3 + $0xd0] sm:$0xff] 0.0
        %8062 = vst [vmem:[#allocation3 + $0xd8] sm:$0xff] 0.0
        %8063 = vst [vmem:[#allocation3 + $0xe0] sm:$0xff] 0.0
        %8064 = vst [vmem:[#allocation3 + $0xe8] sm:$0xff] 0.0
        %8065 = vst [vmem:[#allocation3 + $0xf0] sm:$0xff] 0.0
        %8066 = vst [vmem:[#allocation3 + $0xf8] sm:$0xff] 0.0
        %8067 = vst [vmem:[#allocation3 + $0x100] sm:$0xff] 0.0
        %8068 = vst [vmem:[#allocation3 + $0x108] sm:$0xff] 0.0
        %8069 = vst [vmem:[#allocation3 + $0x110] sm:$0xff] 0.0
        %8070 = vst [vmem:[#allocation3 + $0x118] sm:$0xff] 0.0
        %8071 = vst [vmem:[#allocation3 + $0x120] sm:$0xff] 0.0
        %8072 = vst [vmem:[#allocation3 + $0x128] sm:$0xff] 0.0
        %8073 = vst [vmem:[#allocation3 + $0x18] sm:$0xff] %v8003
        %8074 = vst [vmem:[#allocation3 + $0x20] sm:$0xff] %v8004
        %8075 = vst [vmem:[#allocation3 + $0x28] sm:$0xff] %v8005
        %8076 = vst [vmem:[#allocation3 + $0x30] sm:$0xff] %v8006
        %8077 = vst [vmem:[#allocation3 + $0x38] sm:$0xff] %v8007
        %8078 = vst [vmem:[#allocation3 + $0x40] sm:$0xff] %v8008
        %8079 = vst [vmem:[#allocation3 + $0x48] sm:$0xff] %v8009
        %8080 = vst [vmem:[#allocation3 + $0x50] sm:$0xff] %v8010
        %8081 = vst [vmem:[#allocation3 + $0x58] sm:$0xff] %v8011
        %8082 = vst [vmem:[#allocation3 + $0x60] sm:$0xff] %v8012
        %8083 = vst [vmem:[#allocation3 + $0x68] sm:$0xff] %v8013
        %8084 = vst [vmem:[#allocation3 + $0x70] sm:$0xff] %v8014
        %8085 = vst [vmem:[#allocation3 + $0x78] sm:$0xff] %v8015
        %8086 = vst [vmem:[#allocation3 + $0x80] sm:$0xff] %v8016
        %8087 = vst [vmem:[#allocation3 + $0x88] sm:$0xff] %v8017
        %8088 = vst [vmem:[#allocation3 + $0x90] sm:$0xff] %v8018
        %8089 = vst [vmem:[#allocation3 + $0x98] sm:$0xff] %v8019
        %8090 = vst [vmem:[#allocation3 + $0xa0] sm:$0xff] %v8020
        %8091 = vst [vmem:[#allocation3 + $0xa8] sm:$0xff] %v8021
        %8092 = vst [vmem:[#allocation3 + $0xb0] sm:$0xff] %v8022
        %8093 = vst [vmem:[#allocation3 + $0xb8] sm:$0xff] %v8023
        %8094 = vst [vmem:[#allocation3 + $0xc0] sm:$0xff] %v8024
        %8095 = vst [vmem:[#allocation3 + $0xc8] sm:$0xff] %v8025
        %8096 = vst [vmem:[#allocation3 + $0xd0] sm:$0xff] %v8026
        %8097 = vst [vmem:[#allocation3 + $0xd8] sm:$0xff] %v8027
        %8098 = vst [vmem:[#allocation3 + $0xe0] sm:$0xff] %v8028
        %8099 = vst [vmem:[#allocation3 + $0xe8] sm:$0xff] %v8029
        %8100 = vst [vmem:[#allocation3 + $0xf0] sm:$0xff] %v8030
        %8101 = vst [vmem:[#allocation3 + $0xf8] sm:$0xff] %v8031
        %8102 = vst [vmem:[#allocation3 + $0x100] sm:$0xff] %v8032
        %8103 = vst [vmem:[#allocation3 + $0x108] sm:$0xff] %v8033
        %8104 = vst [vmem:[#allocation3 + $0x110] sm:$0xff] %v8034
        %v8105 = vld [vmem:[%s7] sm:$0x1]
        %v8107 = vlaneseq
        %v8108 = vshrl.u32 %v8107, 7
        %v8109 = vsub.s32 0, %v8108
        %v8110 = vrot.slane %v8105, %v8109
        %v8112 = vld [vmem:[#allocation3 + $0x7] sm:$0xff]
        %v8113 = vld [vmem:[#allocation3 + $0xf] sm:$0xff]
        %v8114 = vld [vmem:[#allocation3 + $0x17] sm:$0xff]
        %v8115 = vld [vmem:[#allocation3 + $0x1f] sm:$0xff]
        %v8116 = vld [vmem:[#allocation3 + $0x27] sm:$0xff]
        %v8117 = vld [vmem:[#allocation3 + $0x2f] sm:$0xff]
        %v8118 = vld [vmem:[#allocation3 + $0x37] sm:$0xff]
        %v8119 = vld [vmem:[#allocation3 + $0x3f] sm:$0xff]
        %v8120 = vld [vmem:[#allocation3 + $0x47] sm:$0xff]
        %v8121 = vld [vmem:[#allocation3 + $0x4f] sm:$0xff]
        %v8122 = vld [vmem:[#allocation3 + $0x57] sm:$0xff]
        %v8123 = vld [vmem:[#allocation3 + $0x5f] sm:$0xff]
        %v8124 = vld [vmem:[#allocation3 + $0x67] sm:$0xff]
        %v8125 = vld [vmem:[#allocation3 + $0x6f] sm:$0xff]
        %v8126 = vld [vmem:[#allocation3 + $0x77] sm:$0xff]
        %v8127 = vld [vmem:[#allocation3 + $0x7f] sm:$0xff]
        %v8128 = vld [vmem:[#allocation3 + $0x87] sm:$0xff]
        %v8129 = vld [vmem:[#allocation3 + $0x8f] sm:$0xff]
        %v8130 = vld [vmem:[#allocation3 + $0x97] sm:$0xff]
        %v8131 = vld [vmem:[#allocation3 + $0x9f] sm:$0xff]
        %v8132 = vld [vmem:[#allocation3 + $0xa7] sm:$0xff]
        %v8133 = vld [vmem:[#allocation3 + $0xaf] sm:$0xff]
        %v8134 = vld [vmem:[#allocation3 + $0xb7] sm:$0xff]
        %v8135 = vld [vmem:[#allocation3 + $0xbf] sm:$0xff]
        %v8136 = vld [vmem:[#allocation3 + $0xc7] sm:$0xff]
        %v8137 = vld [vmem:[#allocation3 + $0xcf] sm:$0xff]
        %v8138 = vld [vmem:[#allocation3 + $0xd7] sm:$0xff]
        %v8139 = vld [vmem:[#allocation3 + $0xdf] sm:$0xff]
        %v8140 = vld [vmem:[#allocation3 + $0xe7] sm:$0xff]
        %v8141 = vld [vmem:[#allocation3 + $0xef] sm:$0xff]
        %v8142 = vld [vmem:[#allocation3 + $0xf7] sm:$0xff]
        %v8143 = vld [vmem:[#allocation3 + $0xff] sm:$0xff]
        %v8144 = vmul.f32 %v8112, %v499
        %v8145 = vmul.f32 %v8113, %v503
        %v8146 = vmul.f32 %v8114, %v507
        %v8147 = vmul.f32 %v8115, %v511
        %v8148 = vmul.f32 %v8116, %v515
        %v8149 = vmul.f32 %v8117, %v519
        %v8150 = vmul.f32 %v8118, %v523
        %v8151 = vmul.f32 %v8119, %v527
        %v8152 = vmul.f32 %v8120, %v531
        %v8153 = vmul.f32 %v8121, %v535
        %v8154 = vmul.f32 %v8122, %v539
        %v8155 = vmul.f32 %v8123, %v543
        %v8156 = vmul.f32 %v8124, %v547
        %v8157 = vmul.f32 %v8125, %v551
        %v8158 = vmul.f32 %v8126, %v555
        %v8159 = vmul.f32 %v8127, %v559
        %v8160 = vmul.f32 %v8128, %v563
        %v8161 = vmul.f32 %v8129, %v567
        %v8162 = vmul.f32 %v8130, %v571
        %v8163 = vmul.f32 %v8131, %v575
        %v8164 = vmul.f32 %v8132, %v579
        %v8165 = vmul.f32 %v8133, %v583
        %v8166 = vmul.f32 %v8134, %v587
        %v8167 = vmul.f32 %v8135, %v591
        %v8168 = vmul.f32 %v8136, %v595
        %v8169 = vmul.f32 %v8137, %v599
        %v8170 = vmul.f32 %v8138, %v603
        %v8171 = vmul.f32 %v8139, %v607
        %v8172 = vmul.f32 %v8140, %v611
        %v8173 = vmul.f32 %v8141, %v615
        %v8174 = vmul.f32 %v8142, %v619
        %v8175 = vmul.f32 %v8143, %v623
        %v8176 = vpack.c.bf16 %v8145, %v8144
        %v8177 = vpack.c.bf16 %v8147, %v8146
        %v8178 = vpack.c.bf16 %v8149, %v8148
        %v8179 = vpack.c.bf16 %v8151, %v8150
        %v8180 = vpack.c.bf16 %v8153, %v8152
        %v8181 = vpack.c.bf16 %v8155, %v8154
        %v8182 = vpack.c.bf16 %v8157, %v8156
        %v8183 = vpack.c.bf16 %v8159, %v8158
        %v8184 = vpack.c.bf16 %v8161, %v8160
        %v8185 = vpack.c.bf16 %v8163, %v8162
        %v8186 = vpack.c.bf16 %v8165, %v8164
        %v8187 = vpack.c.bf16 %v8167, %v8166
        %v8188 = vpack.c.bf16 %v8169, %v8168
        %v8189 = vpack.c.bf16 %v8171, %v8170
        %v8190 = vpack.c.bf16 %v8173, %v8172
        %v8191 = vpack.c.bf16 %v8175, %v8174
        %v8192 = vld [vmem:[%s6] sm:$0xf]
        %v8193 = vld [vmem:[%s6 + $0x4] sm:$0xf]
        %v8194 = vld [vmem:[%s6 + $0x8] sm:$0xf]
        %v8195 = vld [vmem:[%s6 + $0xc] sm:$0xf]
        %v8196 = vld [vmem:[%s6 + $0x10] sm:$0xf]
        %v8197 = vld [vmem:[%s6 + $0x14] sm:$0xf]
        %v8198 = vld [vmem:[%s6 + $0x18] sm:$0xf]
        %v8199 = vld [vmem:[%s6 + $0x1c] sm:$0xf]
        %v8200 = vld [vmem:[%s6 + $0x20] sm:$0xf]
        %v8201 = vld [vmem:[%s6 + $0x24] sm:$0xf]
        %v8202 = vld [vmem:[%s6 + $0x28] sm:$0xf]
        %v8203 = vld [vmem:[%s6 + $0x2c] sm:$0xf]
        %v8204 = vld [vmem:[%s6 + $0x30] sm:$0xf]
        %v8205 = vld [vmem:[%s6 + $0x34] sm:$0xf]
        %v8206 = vld [vmem:[%s6 + $0x38] sm:$0xf]
        %v8207 = vld [vmem:[%s6 + $0x3c] sm:$0xf]
        %v8224 = vunpack.c.l.b16 %v8192
        %v8225 = vunpack.c.l.b16 %v8193
        %v8226 = vunpack.c.l.b16 %v8194
        %v8227 = vunpack.c.l.b16 %v8195
        %v8228 = vunpack.c.l.b16 %v8196
        %v8229 = vunpack.c.l.b16 %v8197
        %v8230 = vunpack.c.l.b16 %v8198
        %v8231 = vunpack.c.l.b16 %v8199
        %v8232 = vunpack.c.l.b16 %v8200
        %v8233 = vunpack.c.l.b16 %v8201
        %v8234 = vunpack.c.l.b16 %v8202
        %v8235 = vunpack.c.l.b16 %v8203
        %v8236 = vunpack.c.l.b16 %v8204
        %v8237 = vunpack.c.l.b16 %v8205
        %v8238 = vunpack.c.l.b16 %v8206
        %v8239 = vunpack.c.l.b16 %v8207
        %v8240 = vpack.c.b16 %v8225, %v8224
        %v8241 = vpack.c.b16 %v8227, %v8226
        %v8242 = vpack.c.b16 %v8229, %v8228
        %v8243 = vpack.c.b16 %v8231, %v8230
        %v8244 = vpack.c.b16 %v8233, %v8232
        %v8245 = vpack.c.b16 %v8235, %v8234
        %v8246 = vpack.c.b16 %v8237, %v8236
        %v8247 = vpack.c.b16 %v8239, %v8238
        %8256 = vmatprep.subr.bf16.mxu0 0
        %8257 = vmatpush1.bf16.msra.mxu0 %v8240
        %8258 = vmatprep.subr.bf16.mxu0 0
        %8259 = vmatpush1.bf16.msra.mxu0 %v8241
        %8260 = vmatprep.subr.bf16.mxu0 0
        %8261 = vmatpush1.bf16.msra.mxu0 %v8242
        %8262 = vmatprep.subr.bf16.mxu0 0
        %8263 = vmatpush1.bf16.msra.mxu0 %v8243
        %8264 = vmatprep.subr.bf16.mxu0 0
        %8265 = vmatpush1.bf16.msra.mxu0 %v8244
        %8266 = vmatprep.subr.bf16.mxu0 0
        %8267 = vmatpush1.bf16.msra.mxu0 %v8245
        %8268 = vmatprep.subr.bf16.mxu0 0
        %8269 = vmatpush1.bf16.msra.mxu0 %v8246
        %8270 = vmatprep.subr.bf16.mxu0 0
        %8271 = vmatpush1.bf16.msra.mxu0 %v8247
        %8272 = vmatprep.subr.bf16.mxu0 0
        %8273 = vmatpush1.bf16.msra.mxu0 0
        %8274 = vmatprep.subr.bf16.mxu0 0
        %8275 = vmatpush1.bf16.msra.mxu0 0
        %8276 = vmatprep.subr.bf16.mxu0 0
        %8277 = vmatpush1.bf16.msra.mxu0 0
        %8278 = vmatprep.subr.bf16.mxu0 0
        %8279 = vmatpush1.bf16.msra.mxu0 0
        %8280 = vmatprep.subr.bf16.mxu0 0
        %8281 = vmatpush1.bf16.msra.mxu0 0
        %8282 = vmatprep.subr.bf16.mxu0 0
        %8283 = vmatpush1.bf16.msra.mxu0 0
        %8284 = vmatprep.subr.bf16.mxu0 0
        %8285 = vmatpush1.bf16.msra.mxu0 0
        %8286 = vmatprep.subr.bf16.mxu0 0
        %8287 = vmatpush1.bf16.msra.mxu0 0
        %8288 = vmatprep.mubr.bf16.mxu0 0
        %8289 = vmatmul.mubr.bf16.gmra.mrb[0].mxu0 %v8176
        %v8290 = vpop.f32.mrb[0].mxu0
        %v8291 = vadd.f32 0.0, %v8290
        %v8292 = vpop.f32.mrb[0].mxu0
        %v8293 = vpop.f32.mrb[0].mxu0
        %v8294 = vadd.f32 0.0, %v8293
        %v8295 = vpop.f32.mrb[0].mxu0
        %8296 = vmatprep.mubr.bf16.mxu0 0
        %8297 = vmatmul.mubr.bf16.gmra.mrb[0].mxu0 %v8177
        %v8298 = vpop.f32.mrb[0].mxu0
        %v8299 = vadd.f32 0.0, %v8298
        %v8300 = vpop.f32.mrb[0].mxu0
        %v8301 = vpop.f32.mrb[0].mxu0
        %v8302 = vadd.f32 0.0, %v8301
        %v8303 = vpop.f32.mrb[0].mxu0
        %8304 = vmatprep.mubr.bf16.mxu0 0
        %8305 = vmatmul.mubr.bf16.gmra.mrb[0].mxu0 %v8178
        %v8306 = vpop.f32.mrb[0].mxu0
        %v8307 = vadd.f32 0.0, %v8306
        %v8308 = vpop.f32.mrb[0].mxu0
        %v8309 = vpop.f32.mrb[0].mxu0
        %v8310 = vadd.f32 0.0, %v8309
        %v8311 = vpop.f32.mrb[0].mxu0
        %8312 = vmatprep.mubr.bf16.mxu0 0
        %8313 = vmatmul.mubr.bf16.gmra.mrb[0].mxu0 %v8179
        %v8314 = vpop.f32.mrb[0].mxu0
        %v8315 = vadd.f32 0.0, %v8314
        %v8316 = vpop.f32.mrb[0].mxu0
        %v8317 = vpop.f32.mrb[0].mxu0
        %v8318 = vadd.f32 0.0, %v8317
        %v8319 = vpop.f32.mrb[0].mxu0
        %8320 = vmatprep.mubr.bf16.mxu0 0
        %8321 = vmatmul.mubr.bf16.gmra.mrb[0].mxu0 %v8180
        %v8322 = vpop.f32.mrb[0].mxu0
        %v8323 = vadd.f32 0.0, %v8322
        %v8324 = vpop.f32.mrb[0].mxu0
        %v8325 = vpop.f32.mrb[0].mxu0
        %v8326 = vadd.f32 0.0, %v8325
        %v8327 = vpop.f32.mrb[0].mxu0
        %8328 = vmatprep.mubr.bf16.mxu0 0
        %8329 = vmatmul.mubr.bf16.gmra.mrb[0].mxu0 %v8181
        %v8330 = vpop.f32.mrb[0].mxu0
        %v8331 = vadd.f32 0.0, %v8330
        %v8332 = vpop.f32.mrb[0].mxu0
        %v8333 = vpop.f32.mrb[0].mxu0
        %v8334 = vadd.f32 0.0, %v8333
        %v8335 = vpop.f32.mrb[0].mxu0
        %8336 = vmatprep.mubr.bf16.mxu0 0
        %8337 = vmatmul.mubr.bf16.gmra.mrb[0].mxu0 %v8182
        %v8338 = vpop.f32.mrb[0].mxu0
        %v8339 = vadd.f32 0.0, %v8338
        %v8340 = vpop.f32.mrb[0].mxu0
        %v8341 = vpop.f32.mrb[0].mxu0
        %v8342 = vadd.f32 0.0, %v8341
        %v8343 = vpop.f32.mrb[0].mxu0
        %8344 = vmatprep.mubr.bf16.mxu0 0
        %8345 = vmatmul.mubr.bf16.gmra.mrb[0].mxu0 %v8183
        %v8346 = vpop.f32.mrb[0].mxu0
        %v8347 = vadd.f32 0.0, %v8346
        %v8348 = vpop.f32.mrb[0].mxu0
        %v8349 = vpop.f32.mrb[0].mxu0
        %v8350 = vadd.f32 0.0, %v8349
        %v8351 = vpop.f32.mrb[0].mxu0
        %8352 = vmatprep.mubr.bf16.mxu0 0
        %8353 = vmatmul.mubr.bf16.gmra.mrb[0].mxu0 %v8184
        %v8354 = vpop.f32.mrb[0].mxu0
        %v8355 = vadd.f32 0.0, %v8354
        %v8356 = vpop.f32.mrb[0].mxu0
        %v8357 = vpop.f32.mrb[0].mxu0
        %v8358 = vadd.f32 0.0, %v8357
        %v8359 = vpop.f32.mrb[0].mxu0
        %8360 = vmatprep.mubr.bf16.mxu0 0
        %8361 = vmatmul.mubr.bf16.gmra.mrb[0].mxu0 %v8185
        %v8362 = vpop.f32.mrb[0].mxu0
        %v8363 = vadd.f32 0.0, %v8362
        %v8364 = vpop.f32.mrb[0].mxu0
        %v8365 = vpop.f32.mrb[0].mxu0
        %v8366 = vadd.f32 0.0, %v8365
        %v8367 = vpop.f32.mrb[0].mxu0
        %8368 = vmatprep.mubr.bf16.mxu0 0
        %8369 = vmatmul.mubr.bf16.gmra.mrb[0].mxu0 %v8186
        %v8370 = vpop.f32.mrb[0].mxu0
        %v8371 = vadd.f32 0.0, %v8370
        %v8372 = vpop.f32.mrb[0].mxu0
        %v8373 = vpop.f32.mrb[0].mxu0
        %v8374 = vadd.f32 0.0, %v8373
        %v8375 = vpop.f32.mrb[0].mxu0
        %8376 = vmatprep.mubr.bf16.mxu0 0
        %8377 = vmatmul.mubr.bf16.gmra.mrb[0].mxu0 %v8187
        %v8378 = vpop.f32.mrb[0].mxu0
        %v8379 = vadd.f32 0.0, %v8378
        %v8380 = vpop.f32.mrb[0].mxu0
        %v8381 = vpop.f32.mrb[0].mxu0
        %v8382 = vadd.f32 0.0, %v8381
        %v8383 = vpop.f32.mrb[0].mxu0
        %8384 = vmatprep.mubr.bf16.mxu0 0
        %8385 = vmatmul.mubr.bf16.gmra.mrb[0].mxu0 %v8188
        %v8386 = vpop.f32.mrb[0].mxu0
        %v8387 = vadd.f32 0.0, %v8386
        %v8388 = vpop.f32.mrb[0].mxu0
        %v8389 = vpop.f32.mrb[0].mxu0
        %v8390 = vadd.f32 0.0, %v8389
        %v8391 = vpop.f32.mrb[0].mxu0
        %8392 = vmatprep.mubr.bf16.mxu0 0
        %8393 = vmatmul.mubr.bf16.gmra.mrb[0].mxu0 %v8189
        %v8394 = vpop.f32.mrb[0].mxu0
        %v8395 = vadd.f32 0.0, %v8394
        %v8396 = vpop.f32.mrb[0].mxu0
        %v8397 = vpop.f32.mrb[0].mxu0
        %v8398 = vadd.f32 0.0, %v8397
        %v8399 = vpop.f32.mrb[0].mxu0
        %8400 = vmatprep.mubr.bf16.mxu0 0
        %8401 = vmatmul.mubr.bf16.gmra.mrb[0].mxu0 %v8190
        %v8402 = vpop.f32.mrb[0].mxu0
        %v8403 = vadd.f32 0.0, %v8402
        %v8404 = vpop.f32.mrb[0].mxu0
        %v8405 = vpop.f32.mrb[0].mxu0
        %v8406 = vadd.f32 0.0, %v8405
        %v8407 = vpop.f32.mrb[0].mxu0
        %8408 = vmatprep.mubr.bf16.mxu0 0
        %8409 = vmatmul.mubr.bf16.gmra.mrb[0].mxu0 %v8191
        %v8410 = vpop.f32.mrb[0].mxu0
        %v8411 = vadd.f32 0.0, %v8410
        %v8412 = vpop.f32.mrb[0].mxu0
        %v8413 = vpop.f32.mrb[0].mxu0
        %v8414 = vadd.f32 0.0, %v8413
        %v8415 = vpop.f32.mrb[0].mxu0
        %8416 = vdwg.mxu0
        %v8417 = vadd.f32 %v8110, %v8291
        %v8418 = vadd.f32 %v8110, %v8294
        %v8419 = vadd.f32 %v8110, %v8299
        %v8420 = vadd.f32 %v8110, %v8302
        %v8421 = vadd.f32 %v8110, %v8307
        %v8422 = vadd.f32 %v8110, %v8310
        %v8423 = vadd.f32 %v8110, %v8315
        %v8424 = vadd.f32 %v8110, %v8318
        %v8425 = vadd.f32 %v8110, %v8323
        %v8426 = vadd.f32 %v8110, %v8326
        %v8427 = vadd.f32 %v8110, %v8331
        %v8428 = vadd.f32 %v8110, %v8334
        %v8429 = vadd.f32 %v8110, %v8339
        %v8430 = vadd.f32 %v8110, %v8342
        %v8431 = vadd.f32 %v8110, %v8347
        %v8432 = vadd.f32 %v8110, %v8350
        %v8433 = vadd.f32 %v8110, %v8355
        %v8434 = vadd.f32 %v8110, %v8358
        %v8435 = vadd.f32 %v8110, %v8363
        %v8436 = vadd.f32 %v8110, %v8366
        %v8437 = vadd.f32 %v8110, %v8371
        %v8438 = vadd.f32 %v8110, %v8374
        %v8439 = vadd.f32 %v8110, %v8379
        %v8440 = vadd.f32 %v8110, %v8382
        %v8441 = vadd.f32 %v8110, %v8387
        %v8442 = vadd.f32 %v8110, %v8390
        %v8443 = vadd.f32 %v8110, %v8395
        %v8444 = vadd.f32 %v8110, %v8398
        %v8445 = vadd.f32 %v8110, %v8403
        %v8446 = vadd.f32 %v8110, %v8406
        %v8447 = vadd.f32 %v8110, %v8411
        %v8448 = vadd.f32 %v8110, %v8414
        %v8449 = vld [vmem:[#allocation3 + $0x8] sm:$0xff]
        %v8450 = vld [vmem:[#allocation3 + $0x10] sm:$0xff]
        %v8451 = vld [vmem:[#allocation3 + $0x18] sm:$0xff]
        %v8452 = vld [vmem:[#allocation3 + $0x20] sm:$0xff]
        %v8453 = vld [vmem:[#allocation3 + $0x28] sm:$0xff]
        %v8454 = vld [vmem:[#allocation3 + $0x30] sm:$0xff]
        %v8455 = vld [vmem:[#allocation3 + $0x38] sm:$0xff]
        %v8456 = vld [vmem:[#allocation3 + $0x40] sm:$0xff]
        %v8457 = vld [vmem:[#allocation3 + $0x48] sm:$0xff]
        %v8458 = vld [vmem:[#allocation3 + $0x50] sm:$0xff]
        %v8459 = vld [vmem:[#allocation3 + $0x58] sm:$0xff]
        %v8460 = vld [vmem:[#allocation3 + $0x60] sm:$0xff]
        %v8461 = vld [vmem:[#allocation3 + $0x68] sm:$0xff]
        %v8462 = vld [vmem:[#allocation3 + $0x70] sm:$0xff]
        %v8463 = vld [vmem:[#allocation3 + $0x78] sm:$0xff]
        %v8464 = vld [vmem:[#allocation3 + $0x80] sm:$0xff]
        %v8465 = vld [vmem:[#allocation3 + $0x88] sm:$0xff]
        %v8466 = vld [vmem:[#allocation3 + $0x90] sm:$0xff]
        %v8467 = vld [vmem:[#allocation3 + $0x98] sm:$0xff]
        %v8468 = vld [vmem:[#allocation3 + $0xa0] sm:$0xff]
        %v8469 = vld [vmem:[#allocation3 + $0xa8] sm:$0xff]
        %v8470 = vld [vmem:[#allocation3 + $0xb0] sm:$0xff]
        %v8471 = vld [vmem:[#allocation3 + $0xb8] sm:$0xff]
        %v8472 = vld [vmem:[#allocation3 + $0xc0] sm:$0xff]
        %v8473 = vld [vmem:[#allocation3 + $0xc8] sm:$0xff]
        %v8474 = vld [vmem:[#allocation3 + $0xd0] sm:$0xff]
        %v8475 = vld [vmem:[#allocation3 + $0xd8] sm:$0xff]
        %v8476 = vld [vmem:[#allocation3 + $0xe0] sm:$0xff]
        %v8477 = vld [vmem:[#allocation3 + $0xe8] sm:$0xff]
        %v8478 = vld [vmem:[#allocation3 + $0xf0] sm:$0xff]
        %v8479 = vld [vmem:[#allocation3 + $0xf8] sm:$0xff]
        %v8480 = vld [vmem:[#allocation3 + $0x100] sm:$0xff]
        %v8481 = vpack.c.bf16 %v8450, %v8449
        %v8482 = vpack.c.bf16 %v8452, %v8451
        %v8483 = vpack.c.bf16 %v8454, %v8453
        %v8484 = vpack.c.bf16 %v8456, %v8455
        %v8485 = vpack.c.bf16 %v8458, %v8457
        %v8486 = vpack.c.bf16 %v8460, %v8459
        %v8487 = vpack.c.bf16 %v8462, %v8461
        %v8488 = vpack.c.bf16 %v8464, %v8463
        %v8489 = vpack.c.bf16 %v8466, %v8465
        %v8490 = vpack.c.bf16 %v8468, %v8467
        %v8491 = vpack.c.bf16 %v8470, %v8469
        %v8492 = vpack.c.bf16 %v8472, %v8471
        %v8493 = vpack.c.bf16 %v8474, %v8473
        %v8494 = vpack.c.bf16 %v8476, %v8475
        %v8495 = vpack.c.bf16 %v8478, %v8477
        %v8496 = vpack.c.bf16 %v8480, %v8479
        %s8497 = scalar_lea.vmem %s6, 64
        %v8498 = vld [vmem:[%s8497] sm:$0xf]
        %v8499 = vld [vmem:[%s8497 + $0x4] sm:$0xf]
        %v8500 = vld [vmem:[%s8497 + $0x8] sm:$0xf]
        %v8501 = vld [vmem:[%s8497 + $0xc] sm:$0xf]
        %v8502 = vld [vmem:[%s8497 + $0x10] sm:$0xf]
        %v8503 = vld [vmem:[%s8497 + $0x14] sm:$0xf]
        %v8504 = vld [vmem:[%s8497 + $0x18] sm:$0xf]
        %v8505 = vld [vmem:[%s8497 + $0x1c] sm:$0xf]
        %v8506 = vld [vmem:[%s8497 + $0x20] sm:$0xf]
        %v8507 = vld [vmem:[%s8497 + $0x24] sm:$0xf]
        %v8508 = vld [vmem:[%s8497 + $0x28] sm:$0xf]
        %v8509 = vld [vmem:[%s8497 + $0x2c] sm:$0xf]
        %v8510 = vld [vmem:[%s8497 + $0x30] sm:$0xf]
        %v8511 = vld [vmem:[%s8497 + $0x34] sm:$0xf]
        %v8512 = vld [vmem:[%s8497 + $0x38] sm:$0xf]
        %v8513 = vld [vmem:[%s8497 + $0x3c] sm:$0xf]
        %v8530 = vunpack.c.l.b16 %v8498
        %v8531 = vunpack.c.l.b16 %v8499
        %v8532 = vunpack.c.l.b16 %v8500
        %v8533 = vunpack.c.l.b16 %v8501
        %v8534 = vunpack.c.l.b16 %v8502
        %v8535 = vunpack.c.l.b16 %v8503
        %v8536 = vunpack.c.l.b16 %v8504
        %v8537 = vunpack.c.l.b16 %v8505
        %v8538 = vunpack.c.l.b16 %v8506
        %v8539 = vunpack.c.l.b16 %v8507
        %v8540 = vunpack.c.l.b16 %v8508
        %v8541 = vunpack.c.l.b16 %v8509
        %v8542 = vunpack.c.l.b16 %v8510
        %v8543 = vunpack.c.l.b16 %v8511
        %v8544 = vunpack.c.l.b16 %v8512
        %v8545 = vunpack.c.l.b16 %v8513
        %v8546 = vpack.c.b16 %v8531, %v8530
        %v8547 = vpack.c.b16 %v8533, %v8532
        %v8548 = vpack.c.b16 %v8535, %v8534
        %v8549 = vpack.c.b16 %v8537, %v8536
        %v8550 = vpack.c.b16 %v8539, %v8538
        %v8551 = vpack.c.b16 %v8541, %v8540
        %v8552 = vpack.c.b16 %v8543, %v8542
        %v8553 = vpack.c.b16 %v8545, %v8544
        %8562 = vmatprep.subr.bf16.mxu0 0
        %8563 = vmatpush1.bf16.msra.mxu0 %v8546
        %8564 = vmatprep.subr.bf16.mxu0 0
        %8565 = vmatpush1.bf16.msra.mxu0 %v8547
        %8566 = vmatprep.subr.bf16.mxu0 0
        %8567 = vmatpush1.bf16.msra.mxu0 %v8548
        %8568 = vmatprep.subr.bf16.mxu0 0
        %8569 = vmatpush1.bf16.msra.mxu0 %v8549
        %8570 = vmatprep.subr.bf16.mxu0 0
        %8571 = vmatpush1.bf16.msra.mxu0 %v8550
        %8572 = vmatprep.subr.bf16.mxu0 0
        %8573 = vmatpush1.bf16.msra.mxu0 %v8551
        %8574 = vmatprep.subr.bf16.mxu0 0
        %8575 = vmatpush1.bf16.msra.mxu0 %v8552
        %8576 = vmatprep.subr.bf16.mxu0 0
        %8577 = vmatpush1.bf16.msra.mxu0 %v8553
        %8578 = vmatprep.subr.bf16.mxu0 0
        %8579 = vmatpush1.bf16.msra.mxu0 0
        %8580 = vmatprep.subr.bf16.mxu0 0
        %8581 = vmatpush1.bf16.msra.mxu0 0
        %8582 = vmatprep.subr.bf16.mxu0 0
        %8583 = vmatpush1.bf16.msra.mxu0 0
        %8584 = vmatprep.subr.bf16.mxu0 0
        %8585 = vmatpush1.bf16.msra.mxu0 0
        %8586 = vmatprep.subr.bf16.mxu0 0
        %8587 = vmatpush1.bf16.msra.mxu0 0
        %8588 = vmatprep.subr.bf16.mxu0 0
        %8589 = vmatpush1.bf16.msra.mxu0 0
        %8590 = vmatprep.subr.bf16.mxu0 0
        %8591 = vmatpush1.bf16.msra.mxu0 0
        %8592 = vmatprep.subr.bf16.mxu0 0
        %8593 = vmatpush1.bf16.msra.mxu0 0
        %8594 = vmatprep.mubr.bf16.mxu0 0
        %8595 = vmatmul.mubr.bf16.gmra.mrb[0].mxu0 %v8481
        %v8596 = vpop.f32.mrb[0].mxu0
        %v8597 = vadd.f32 0.0, %v8596
        %v8598 = vpop.f32.mrb[0].mxu0
        %v8599 = vpop.f32.mrb[0].mxu0
        %v8600 = vadd.f32 0.0, %v8599
        %v8601 = vpop.f32.mrb[0].mxu0
        %8602 = vmatprep.mubr.bf16.mxu0 0
        %8603 = vmatmul.mubr.bf16.gmra.mrb[0].mxu0 %v8482
        %v8604 = vpop.f32.mrb[0].mxu0
        %v8605 = vadd.f32 0.0, %v8604
        %v8606 = vpop.f32.mrb[0].mxu0
        %v8607 = vpop.f32.mrb[0].mxu0
        %v8608 = vadd.f32 0.0, %v8607
        %v8609 = vpop.f32.mrb[0].mxu0
        %8610 = vmatprep.mubr.bf16.mxu0 0
        %8611 = vmatmul.mubr.bf16.gmra.mrb[0].mxu0 %v8483
        %v8612 = vpop.f32.mrb[0].mxu0
        %v8613 = vadd.f32 0.0, %v8612
        %v8614 = vpop.f32.mrb[0].mxu0
        %v8615 = vpop.f32.mrb[0].mxu0
        %v8616 = vadd.f32 0.0, %v8615
        %v8617 = vpop.f32.mrb[0].mxu0
        %8618 = vmatprep.mubr.bf16.mxu0 0
        %8619 = vmatmul.mubr.bf16.gmra.mrb[0].mxu0 %v8484
        %v8620 = vpop.f32.mrb[0].mxu0
        %v8621 = vadd.f32 0.0, %v8620
        %v8622 = vpop.f32.mrb[0].mxu0
        %v8623 = vpop.f32.mrb[0].mxu0
        %v8624 = vadd.f32 0.0, %v8623
        %v8625 = vpop.f32.mrb[0].mxu0
        %8626 = vmatprep.mubr.bf16.mxu0 0
        %8627 = vmatmul.mubr.bf16.gmra.mrb[0].mxu0 %v8485
        %v8628 = vpop.f32.mrb[0].mxu0
        %v8629 = vadd.f32 0.0, %v8628
        %v8630 = vpop.f32.mrb[0].mxu0
        %v8631 = vpop.f32.mrb[0].mxu0
        %v8632 = vadd.f32 0.0, %v8631
        %v8633 = vpop.f32.mrb[0].mxu0
        %8634 = vmatprep.mubr.bf16.mxu0 0
        %8635 = vmatmul.mubr.bf16.gmra.mrb[0].mxu0 %v8486
        %v8636 = vpop.f32.mrb[0].mxu0
        %v8637 = vadd.f32 0.0, %v8636
        %v8638 = vpop.f32.mrb[0].mxu0
        %v8639 = vpop.f32.mrb[0].mxu0
        %v8640 = vadd.f32 0.0, %v8639
        %v8641 = vpop.f32.mrb[0].mxu0
        %8642 = vmatprep.mubr.bf16.mxu0 0
        %8643 = vmatmul.mubr.bf16.gmra.mrb[0].mxu0 %v8487
        %v8644 = vpop.f32.mrb[0].mxu0
        %v8645 = vadd.f32 0.0, %v8644
        %v8646 = vpop.f32.mrb[0].mxu0
        %v8647 = vpop.f32.mrb[0].mxu0
        %v8648 = vadd.f32 0.0, %v8647
        %v8649 = vpop.f32.mrb[0].mxu0
        %8650 = vmatprep.mubr.bf16.mxu0 0
        %8651 = vmatmul.mubr.bf16.gmra.mrb[0].mxu0 %v8488
        %v8652 = vpop.f32.mrb[0].mxu0
        %v8653 = vadd.f32 0.0, %v8652
        %v8654 = vpop.f32.mrb[0].mxu0
        %v8655 = vpop.f32.mrb[0].mxu0
        %v8656 = vadd.f32 0.0, %v8655
        %v8657 = vpop.f32.mrb[0].mxu0
        %8658 = vmatprep.mubr.bf16.mxu0 0
        %8659 = vmatmul.mubr.bf16.gmra.mrb[0].mxu0 %v8489
        %v8660 = vpop.f32.mrb[0].mxu0
        %v8661 = vadd.f32 0.0, %v8660
        %v8662 = vpop.f32.mrb[0].mxu0
        %v8663 = vpop.f32.mrb[0].mxu0
        %v8664 = vadd.f32 0.0, %v8663
        %v8665 = vpop.f32.mrb[0].mxu0
        %8666 = vmatprep.mubr.bf16.mxu0 0
        %8667 = vmatmul.mubr.bf16.gmra.mrb[0].mxu0 %v8490
        %v8668 = vpop.f32.mrb[0].mxu0
        %v8669 = vadd.f32 0.0, %v8668
        %v8670 = vpop.f32.mrb[0].mxu0
        %v8671 = vpop.f32.mrb[0].mxu0
        %v8672 = vadd.f32 0.0, %v8671
        %v8673 = vpop.f32.mrb[0].mxu0
        %8674 = vmatprep.mubr.bf16.mxu0 0
        %8675 = vmatmul.mubr.bf16.gmra.mrb[0].mxu0 %v8491
        %v8676 = vpop.f32.mrb[0].mxu0
        %v8677 = vadd.f32 0.0, %v8676
        %v8678 = vpop.f32.mrb[0].mxu0
        %v8679 = vpop.f32.mrb[0].mxu0
        %v8680 = vadd.f32 0.0, %v8679
        %v8681 = vpop.f32.mrb[0].mxu0
        %8682 = vmatprep.mubr.bf16.mxu0 0
        %8683 = vmatmul.mubr.bf16.gmra.mrb[0].mxu0 %v8492
        %v8684 = vpop.f32.mrb[0].mxu0
        %v8685 = vadd.f32 0.0, %v8684
        %v8686 = vpop.f32.mrb[0].mxu0
        %v8687 = vpop.f32.mrb[0].mxu0
        %v8688 = vadd.f32 0.0, %v8687
        %v8689 = vpop.f32.mrb[0].mxu0
        %8690 = vmatprep.mubr.bf16.mxu0 0
        %8691 = vmatmul.mubr.bf16.gmra.mrb[0].mxu0 %v8493
        %v8692 = vpop.f32.mrb[0].mxu0
        %v8693 = vadd.f32 0.0, %v8692
        %v8694 = vpop.f32.mrb[0].mxu0
        %v8695 = vpop.f32.mrb[0].mxu0
        %v8696 = vadd.f32 0.0, %v8695
        %v8697 = vpop.f32.mrb[0].mxu0
        %8698 = vmatprep.mubr.bf16.mxu0 0
        %8699 = vmatmul.mubr.bf16.gmra.mrb[0].mxu0 %v8494
        %v8700 = vpop.f32.mrb[0].mxu0
        %v8701 = vadd.f32 0.0, %v8700
        %v8702 = vpop.f32.mrb[0].mxu0
        %v8703 = vpop.f32.mrb[0].mxu0
        %v8704 = vadd.f32 0.0, %v8703
        %v8705 = vpop.f32.mrb[0].mxu0
        %8706 = vmatprep.mubr.bf16.mxu0 0
        %8707 = vmatmul.mubr.bf16.gmra.mrb[0].mxu0 %v8495
        %v8708 = vpop.f32.mrb[0].mxu0
        %v8709 = vadd.f32 0.0, %v8708
        %v8710 = vpop.f32.mrb[0].mxu0
        %v8711 = vpop.f32.mrb[0].mxu0
        %v8712 = vadd.f32 0.0, %v8711
        %v8713 = vpop.f32.mrb[0].mxu0
        %8714 = vmatprep.mubr.bf16.mxu0 0
        %8715 = vmatmul.mubr.bf16.gmra.mrb[0].mxu0 %v8496
        %v8716 = vpop.f32.mrb[0].mxu0
        %v8717 = vadd.f32 0.0, %v8716
        %v8718 = vpop.f32.mrb[0].mxu0
        %v8719 = vpop.f32.mrb[0].mxu0
        %v8720 = vadd.f32 0.0, %v8719
        %v8721 = vpop.f32.mrb[0].mxu0
        %8722 = vdwg.mxu0
        %v8723 = vadd.f32 %v8417, %v8597
        %v8724 = vadd.f32 %v8418, %v8600
        %v8725 = vadd.f32 %v8419, %v8605
        %v8726 = vadd.f32 %v8420, %v8608
        %v8727 = vadd.f32 %v8421, %v8613
        %v8728 = vadd.f32 %v8422, %v8616
        %v8729 = vadd.f32 %v8423, %v8621
        %v8730 = vadd.f32 %v8424, %v8624
        %v8731 = vadd.f32 %v8425, %v8629
        %v8732 = vadd.f32 %v8426, %v8632
        %v8733 = vadd.f32 %v8427, %v8637
        %v8734 = vadd.f32 %v8428, %v8640
        %v8735 = vadd.f32 %v8429, %v8645
        %v8736 = vadd.f32 %v8430, %v8648
        %v8737 = vadd.f32 %v8431, %v8653
        %v8738 = vadd.f32 %v8432, %v8656
        %v8739 = vadd.f32 %v8433, %v8661
        %v8740 = vadd.f32 %v8434, %v8664
        %v8741 = vadd.f32 %v8435, %v8669
        %v8742 = vadd.f32 %v8436, %v8672
        %v8743 = vadd.f32 %v8437, %v8677
        %v8744 = vadd.f32 %v8438, %v8680
        %v8745 = vadd.f32 %v8439, %v8685
        %v8746 = vadd.f32 %v8440, %v8688
        %v8747 = vadd.f32 %v8441, %v8693
        %v8748 = vadd.f32 %v8442, %v8696
        %v8749 = vadd.f32 %v8443, %v8701
        %v8750 = vadd.f32 %v8444, %v8704
        %v8751 = vadd.f32 %v8445, %v8709
        %v8752 = vadd.f32 %v8446, %v8712
        %v8753 = vadd.f32 %v8447, %v8717
        %v8754 = vadd.f32 %v8448, %v8720
        %v8755 = vld [vmem:[#allocation3 + $0x9] sm:$0xff]
        %v8756 = vld [vmem:[#allocation3 + $0x11] sm:$0xff]
        %v8757 = vld [vmem:[#allocation3 + $0x19] sm:$0xff]
        %v8758 = vld [vmem:[#allocation3 + $0x21] sm:$0xff]
        %v8759 = vld [vmem:[#allocation3 + $0x29] sm:$0xff]
        %v8760 = vld [vmem:[#allocation3 + $0x31] sm:$0xff]
        %v8761 = vld [vmem:[#allocation3 + $0x39] sm:$0xff]
        %v8762 = vld [vmem:[#allocation3 + $0x41] sm:$0xff]
        %v8763 = vld [vmem:[#allocation3 + $0x49] sm:$0xff]
        %v8764 = vld [vmem:[#allocation3 + $0x51] sm:$0xff]
        %v8765 = vld [vmem:[#allocation3 + $0x59] sm:$0xff]
        %v8766 = vld [vmem:[#allocation3 + $0x61] sm:$0xff]
        %v8767 = vld [vmem:[#allocation3 + $0x69] sm:$0xff]
        %v8768 = vld [vmem:[#allocation3 + $0x71] sm:$0xff]
        %v8769 = vld [vmem:[#allocation3 + $0x79] sm:$0xff]
        %v8770 = vld [vmem:[#allocation3 + $0x81] sm:$0xff]
        %v8771 = vld [vmem:[#allocation3 + $0x89] sm:$0xff]
        %v8772 = vld [vmem:[#allocation3 + $0x91] sm:$0xff]
        %v8773 = vld [vmem:[#allocation3 + $0x99] sm:$0xff]
        %v8774 = vld [vmem:[#allocation3 + $0xa1] sm:$0xff]
        %v8775 = vld [vmem:[#allocation3 + $0xa9] sm:$0xff]
        %v8776 = vld [vmem:[#allocation3 + $0xb1] sm:$0xff]
        %v8777 = vld [vmem:[#allocation3 + $0xb9] sm:$0xff]
        %v8778 = vld [vmem:[#allocation3 + $0xc1] sm:$0xff]
        %v8779 = vld [vmem:[#allocation3 + $0xc9] sm:$0xff]
        %v8780 = vld [vmem:[#allocation3 + $0xd1] sm:$0xff]
        %v8781 = vld [vmem:[#allocation3 + $0xd9] sm:$0xff]
        %v8782 = vld [vmem:[#allocation3 + $0xe1] sm:$0xff]
        %v8783 = vld [vmem:[#allocation3 + $0xe9] sm:$0xff]
        %v8784 = vld [vmem:[#allocation3 + $0xf1] sm:$0xff]
        %v8785 = vld [vmem:[#allocation3 + $0xf9] sm:$0xff]
        %v8786 = vld [vmem:[#allocation3 + $0x101] sm:$0xff]
        %v8787 = vmul.f32 %v8755, %v1566
        %v8788 = vmul.f32 %v8756, %v1570
        %v8789 = vmul.f32 %v8757, %v1574
        %v8790 = vmul.f32 %v8758, %v1578
        %v8791 = vmul.f32 %v8759, %v1582
        %v8792 = vmul.f32 %v8760, %v1586
        %v8793 = vmul.f32 %v8761, %v1590
        %v8794 = vmul.f32 %v8762, %v1594
        %v8795 = vmul.f32 %v8763, %v1598
        %v8796 = vmul.f32 %v8764, %v1602
        %v8797 = vmul.f32 %v8765, %v1606
        %v8798 = vmul.f32 %v8766, %v1610
        %v8799 = vmul.f32 %v8767, %v1614
        %v8800 = vmul.f32 %v8768, %v1618
        %v8801 = vmul.f32 %v8769, %v1622
        %v8802 = vmul.f32 %v8770, %v1626
        %v8803 = vmul.f32 %v8771, %v1630
        %v8804 = vmul.f32 %v8772, %v1634
        %v8805 = vmul.f32 %v8773, %v1638
        %v8806 = vmul.f32 %v8774, %v1642
        %v8807 = vmul.f32 %v8775, %v1646
        %v8808 = vmul.f32 %v8776, %v1650
        %v8809 = vmul.f32 %v8777, %v1654
        %v8810 = vmul.f32 %v8778, %v1658
        %v8811 = vmul.f32 %v8779, %v1662
        %v8812 = vmul.f32 %v8780, %v1666
        %v8813 = vmul.f32 %v8781, %v1670
        %v8814 = vmul.f32 %v8782, %v1674
        %v8815 = vmul.f32 %v8783, %v1678
        %v8816 = vmul.f32 %v8784, %v1682
        %v8817 = vmul.f32 %v8785, %v1686
        %v8818 = vmul.f32 %v8786, %v1690
        %v8819 = vpack.c.bf16 %v8788, %v8787
        %v8820 = vpack.c.bf16 %v8790, %v8789
        %v8821 = vpack.c.bf16 %v8792, %v8791
        %v8822 = vpack.c.bf16 %v8794, %v8793
        %v8823 = vpack.c.bf16 %v8796, %v8795
        %v8824 = vpack.c.bf16 %v8798, %v8797
        %v8825 = vpack.c.bf16 %v8800, %v8799
        %v8826 = vpack.c.bf16 %v8802, %v8801
        %v8827 = vpack.c.bf16 %v8804, %v8803
        %v8828 = vpack.c.bf16 %v8806, %v8805
        %v8829 = vpack.c.bf16 %v8808, %v8807
        %v8830 = vpack.c.bf16 %v8810, %v8809
        %v8831 = vpack.c.bf16 %v8812, %v8811
        %v8832 = vpack.c.bf16 %v8814, %v8813
        %v8833 = vpack.c.bf16 %v8816, %v8815
        %v8834 = vpack.c.bf16 %v8818, %v8817
        %s8835 = scalar_lea.vmem %s6, 128
        %v8836 = vld [vmem:[%s8835] sm:$0xf]
        %v8837 = vld [vmem:[%s8835 + $0x4] sm:$0xf]
        %v8838 = vld [vmem:[%s8835 + $0x8] sm:$0xf]
        %v8839 = vld [vmem:[%s8835 + $0xc] sm:$0xf]
        %v8840 = vld [vmem:[%s8835 + $0x10] sm:$0xf]
        %v8841 = vld [vmem:[%s8835 + $0x14] sm:$0xf]
        %v8842 = vld [vmem:[%s8835 + $0x18] sm:$0xf]
        %v8843 = vld [vmem:[%s8835 + $0x1c] sm:$0xf]
        %v8844 = vld [vmem:[%s8835 + $0x20] sm:$0xf]
        %v8845 = vld [vmem:[%s8835 + $0x24] sm:$0xf]
        %v8846 = vld [vmem:[%s8835 + $0x28] sm:$0xf]
        %v8847 = vld [vmem:[%s8835 + $0x2c] sm:$0xf]
        %v8848 = vld [vmem:[%s8835 + $0x30] sm:$0xf]
        %v8849 = vld [vmem:[%s8835 + $0x34] sm:$0xf]
        %v8850 = vld [vmem:[%s8835 + $0x38] sm:$0xf]
        %v8851 = vld [vmem:[%s8835 + $0x3c] sm:$0xf]
        %v8868 = vunpack.c.l.b16 %v8836
        %v8869 = vunpack.c.l.b16 %v8837
        %v8870 = vunpack.c.l.b16 %v8838
        %v8871 = vunpack.c.l.b16 %v8839
        %v8872 = vunpack.c.l.b16 %v8840
        %v8873 = vunpack.c.l.b16 %v8841
        %v8874 = vunpack.c.l.b16 %v8842
        %v8875 = vunpack.c.l.b16 %v8843
        %v8876 = vunpack.c.l.b16 %v8844
        %v8877 = vunpack.c.l.b16 %v8845
        %v8878 = vunpack.c.l.b16 %v8846
        %v8879 = vunpack.c.l.b16 %v8847
        %v8880 = vunpack.c.l.b16 %v8848
        %v8881 = vunpack.c.l.b16 %v8849
        %v8882 = vunpack.c.l.b16 %v8850
        %v8883 = vunpack.c.l.b16 %v8851
        %v8884 = vpack.c.b16 %v8869, %v8868
        %v8885 = vpack.c.b16 %v8871, %v8870
        %v8886 = vpack.c.b16 %v8873, %v8872
        %v8887 = vpack.c.b16 %v8875, %v8874
        %v8888 = vpack.c.b16 %v8877, %v8876
        %v8889 = vpack.c.b16 %v8879, %v8878
        %v8890 = vpack.c.b16 %v8881, %v8880
        %v8891 = vpack.c.b16 %v8883, %v8882
        %8900 = vmatprep.subr.bf16.mxu0 0
        %8901 = vmatpush1.bf16.msra.mxu0 %v8884
        %8902 = vmatprep.subr.bf16.mxu0 0
        %8903 = vmatpush1.bf16.msra.mxu0 %v8885
        %8904 = vmatprep.subr.bf16.mxu0 0
        %8905 = vmatpush1.bf16.msra.mxu0 %v8886
        %8906 = vmatprep.subr.bf16.mxu0 0
        %8907 = vmatpush1.bf16.msra.mxu0 %v8887
        %8908 = vmatprep.subr.bf16.mxu0 0
        %8909 = vmatpush1.bf16.msra.mxu0 %v8888
        %8910 = vmatprep.subr.bf16.mxu0 0
        %8911 = vmatpush1.bf16.msra.mxu0 %v8889
        %8912 = vmatprep.subr.bf16.mxu0 0
        %8913 = vmatpush1.bf16.msra.mxu0 %v8890
        %8914 = vmatprep.subr.bf16.mxu0 0
        %8915 = vmatpush1.bf16.msra.mxu0 %v8891
        %8916 = vmatprep.subr.bf16.mxu0 0
        %8917 = vmatpush1.bf16.msra.mxu0 0
        %8918 = vmatprep.subr.bf16.mxu0 0
        %8919 = vmatpush1.bf16.msra.mxu0 0
        %8920 = vmatprep.subr.bf16.mxu0 0
        %8921 = vmatpush1.bf16.msra.mxu0 0
        %8922 = vmatprep.subr.bf16.mxu0 0
        %8923 = vmatpush1.bf16.msra.mxu0 0
        %8924 = vmatprep.subr.bf16.mxu0 0
        %8925 = vmatpush1.bf16.msra.mxu0 0
        %8926 = vmatprep.subr.bf16.mxu0 0
        %8927 = vmatpush1.bf16.msra.mxu0 0
        %8928 = vmatprep.subr.bf16.mxu0 0
        %8929 = vmatpush1.bf16.msra.mxu0 0
        %8930 = vmatprep.subr.bf16.mxu0 0
        %8931 = vmatpush1.bf16.msra.mxu0 0
        %8932 = vmatprep.mubr.bf16.mxu0 0
        %8933 = vmatmul.mubr.bf16.gmra.mrb[0].mxu0 %v8819
        %v8934 = vpop.f32.mrb[0].mxu0
        %v8935 = vadd.f32 0.0, %v8934
        %v8936 = vpop.f32.mrb[0].mxu0
        %v8937 = vpop.f32.mrb[0].mxu0
        %v8938 = vadd.f32 0.0, %v8937
        %v8939 = vpop.f32.mrb[0].mxu0
        %8940 = vmatprep.mubr.bf16.mxu0 0
        %8941 = vmatmul.mubr.bf16.gmra.mrb[0].mxu0 %v8820
        %v8942 = vpop.f32.mrb[0].mxu0
        %v8943 = vadd.f32 0.0, %v8942
        %v8944 = vpop.f32.mrb[0].mxu0
        %v8945 = vpop.f32.mrb[0].mxu0
        %v8946 = vadd.f32 0.0, %v8945
        %v8947 = vpop.f32.mrb[0].mxu0
        %8948 = vmatprep.mubr.bf16.mxu0 0
        %8949 = vmatmul.mubr.bf16.gmra.mrb[0].mxu0 %v8821
        %v8950 = vpop.f32.mrb[0].mxu0
        %v8951 = vadd.f32 0.0, %v8950
        %v8952 = vpop.f32.mrb[0].mxu0
        %v8953 = vpop.f32.mrb[0].mxu0
        %v8954 = vadd.f32 0.0, %v8953
        %v8955 = vpop.f32.mrb[0].mxu0
        %8956 = vmatprep.mubr.bf16.mxu0 0
        %8957 = vmatmul.mubr.bf16.gmra.mrb[0].mxu0 %v8822
        %v8958 = vpop.f32.mrb[0].mxu0
        %v8959 = vadd.f32 0.0, %v8958
        %v8960 = vpop.f32.mrb[0].mxu0
        %v8961 = vpop.f32.mrb[0].mxu0
        %v8962 = vadd.f32 0.0, %v8961
        %v8963 = vpop.f32.mrb[0].mxu0
        %8964 = vmatprep.mubr.bf16.mxu0 0
        %8965 = vmatmul.mubr.bf16.gmra.mrb[0].mxu0 %v8823
        %v8966 = vpop.f32.mrb[0].mxu0
        %v8967 = vadd.f32 0.0, %v8966
        %v8968 = vpop.f32.mrb[0].mxu0
        %v8969 = vpop.f32.mrb[0].mxu0
        %v8970 = vadd.f32 0.0, %v8969
        %v8971 = vpop.f32.mrb[0].mxu0
        %8972 = vmatprep.mubr.bf16.mxu0 0
        %8973 = vmatmul.mubr.bf16.gmra.mrb[0].mxu0 %v8824
        %v8974 = vpop.f32.mrb[0].mxu0
        %v8975 = vadd.f32 0.0, %v8974
        %v8976 = vpop.f32.mrb[0].mxu0
        %v8977 = vpop.f32.mrb[0].mxu0
        %v8978 = vadd.f32 0.0, %v8977
        %v8979 = vpop.f32.mrb[0].mxu0
        %8980 = vmatprep.mubr.bf16.mxu0 0
        %8981 = vmatmul.mubr.bf16.gmra.mrb[0].mxu0 %v8825
        %v8982 = vpop.f32.mrb[0].mxu0
        %v8983 = vadd.f32 0.0, %v8982
        %v8984 = vpop.f32.mrb[0].mxu0
        %v8985 = vpop.f32.mrb[0].mxu0
        %v8986 = vadd.f32 0.0, %v8985
        %v8987 = vpop.f32.mrb[0].mxu0
        %8988 = vmatprep.mubr.bf16.mxu0 0
        %8989 = vmatmul.mubr.bf16.gmra.mrb[0].mxu0 %v8826
        %v8990 = vpop.f32.mrb[0].mxu0
        %v8991 = vadd.f32 0.0, %v8990
        %v8992 = vpop.f32.mrb[0].mxu0
        %v8993 = vpop.f32.mrb[0].mxu0
        %v8994 = vadd.f32 0.0, %v8993
        %v8995 = vpop.f32.mrb[0].mxu0
        %8996 = vmatprep.mubr.bf16.mxu0 0
        %8997 = vmatmul.mubr.bf16.gmra.mrb[0].mxu0 %v8827
        %v8998 = vpop.f32.mrb[0].mxu0
        %v8999 = vadd.f32 0.0, %v8998
        %v9000 = vpop.f32.mrb[0].mxu0
        %v9001 = vpop.f32.mrb[0].mxu0
        %v9002 = vadd.f32 0.0, %v9001
        %v9003 = vpop.f32.mrb[0].mxu0
        %9004 = vmatprep.mubr.bf16.mxu0 0
        %9005 = vmatmul.mubr.bf16.gmra.mrb[0].mxu0 %v8828
        %v9006 = vpop.f32.mrb[0].mxu0
        %v9007 = vadd.f32 0.0, %v9006
        %v9008 = vpop.f32.mrb[0].mxu0
        %v9009 = vpop.f32.mrb[0].mxu0
        %v9010 = vadd.f32 0.0, %v9009
        %v9011 = vpop.f32.mrb[0].mxu0
        %9012 = vmatprep.mubr.bf16.mxu0 0
        %9013 = vmatmul.mubr.bf16.gmra.mrb[0].mxu0 %v8829
        %v9014 = vpop.f32.mrb[0].mxu0
        %v9015 = vadd.f32 0.0, %v9014
        %v9016 = vpop.f32.mrb[0].mxu0
        %v9017 = vpop.f32.mrb[0].mxu0
        %v9018 = vadd.f32 0.0, %v9017
        %v9019 = vpop.f32.mrb[0].mxu0
        %9020 = vmatprep.mubr.bf16.mxu0 0
        %9021 = vmatmul.mubr.bf16.gmra.mrb[0].mxu0 %v8830
        %v9022 = vpop.f32.mrb[0].mxu0
        %v9023 = vadd.f32 0.0, %v9022
        %v9024 = vpop.f32.mrb[0].mxu0
        %v9025 = vpop.f32.mrb[0].mxu0
        %v9026 = vadd.f32 0.0, %v9025
        %v9027 = vpop.f32.mrb[0].mxu0
        %9028 = vmatprep.mubr.bf16.mxu0 0
        %9029 = vmatmul.mubr.bf16.gmra.mrb[0].mxu0 %v8831
        %v9030 = vpop.f32.mrb[0].mxu0
        %v9031 = vadd.f32 0.0, %v9030
        %v9032 = vpop.f32.mrb[0].mxu0
        %v9033 = vpop.f32.mrb[0].mxu0
        %v9034 = vadd.f32 0.0, %v9033
        %v9035 = vpop.f32.mrb[0].mxu0
        %9036 = vmatprep.mubr.bf16.mxu0 0
        %9037 = vmatmul.mubr.bf16.gmra.mrb[0].mxu0 %v8832
        %v9038 = vpop.f32.mrb[0].mxu0
        %v9039 = vadd.f32 0.0, %v9038
        %v9040 = vpop.f32.mrb[0].mxu0
        %v9041 = vpop.f32.mrb[0].mxu0
        %v9042 = vadd.f32 0.0, %v9041
        %v9043 = vpop.f32.mrb[0].mxu0
        %9044 = vmatprep.mubr.bf16.mxu0 0
        %9045 = vmatmul.mubr.bf16.gmra.mrb[0].mxu0 %v8833
        %v9046 = vpop.f32.mrb[0].mxu0
        %v9047 = vadd.f32 0.0, %v9046
        %v9048 = vpop.f32.mrb[0].mxu0
        %v9049 = vpop.f32.mrb[0].mxu0
        %v9050 = vadd.f32 0.0, %v9049
        %v9051 = vpop.f32.mrb[0].mxu0
        %9052 = vmatprep.mubr.bf16.mxu0 0
        %9053 = vmatmul.mubr.bf16.gmra.mrb[0].mxu0 %v8834
        %v9054 = vpop.f32.mrb[0].mxu0
        %v9055 = vadd.f32 0.0, %v9054
        %v9056 = vpop.f32.mrb[0].mxu0
        %v9057 = vpop.f32.mrb[0].mxu0
        %v9058 = vadd.f32 0.0, %v9057
        %v9059 = vpop.f32.mrb[0].mxu0
        %9060 = vdwg.mxu0
        %v9061 = vadd.f32 %v8723, %v8935
        %v9062 = vadd.f32 %v8724, %v8938
        %v9063 = vadd.f32 %v8725, %v8943
        %v9064 = vadd.f32 %v8726, %v8946
        %v9065 = vadd.f32 %v8727, %v8951
        %v9066 = vadd.f32 %v8728, %v8954
        %v9067 = vadd.f32 %v8729, %v8959
        %v9068 = vadd.f32 %v8730, %v8962
        %v9069 = vadd.f32 %v8731, %v8967
        %v9070 = vadd.f32 %v8732, %v8970
        %v9071 = vadd.f32 %v8733, %v8975
        %v9072 = vadd.f32 %v8734, %v8978
        %v9073 = vadd.f32 %v8735, %v8983
        %v9074 = vadd.f32 %v8736, %v8986
        %v9075 = vadd.f32 %v8737, %v8991
        %v9076 = vadd.f32 %v8738, %v8994
        %v9077 = vadd.f32 %v8739, %v8999
        %v9078 = vadd.f32 %v8740, %v9002
        %v9079 = vadd.f32 %v8741, %v9007
        %v9080 = vadd.f32 %v8742, %v9010
        %v9081 = vadd.f32 %v8743, %v9015
        %v9082 = vadd.f32 %v8744, %v9018
        %v9083 = vadd.f32 %v8745, %v9023
        %v9084 = vadd.f32 %v8746, %v9026
        %v9085 = vadd.f32 %v8747, %v9031
        %v9086 = vadd.f32 %v8748, %v9034
        %v9087 = vadd.f32 %v8749, %v9039
        %v9088 = vadd.f32 %v8750, %v9042
        %v9089 = vadd.f32 %v8751, %v9047
        %v9090 = vadd.f32 %v8752, %v9050
        %v9091 = vadd.f32 %v8753, %v9055
        %v9092 = vadd.f32 %v8754, %v9058
        %v9093 = vld [vmem:[#allocation3 + $0x17] sm:$0xff]
        %v9094 = vld [vmem:[#allocation3 + $0x1f] sm:$0xff]
        %v9095 = vld [vmem:[#allocation3 + $0x27] sm:$0xff]
        %v9096 = vld [vmem:[#allocation3 + $0x2f] sm:$0xff]
        %v9097 = vld [vmem:[#allocation3 + $0x37] sm:$0xff]
        %v9098 = vld [vmem:[#allocation3 + $0x3f] sm:$0xff]
        %v9099 = vld [vmem:[#allocation3 + $0x47] sm:$0xff]
        %v9100 = vld [vmem:[#allocation3 + $0x4f] sm:$0xff]
        %v9101 = vld [vmem:[#allocation3 + $0x57] sm:$0xff]
        %v9102 = vld [vmem:[#allocation3 + $0x5f] sm:$0xff]
        %v9103 = vld [vmem:[#allocation3 + $0x67] sm:$0xff]
        %v9104 = vld [vmem:[#allocation3 + $0x6f] sm:$0xff]
        %v9105 = vld [vmem:[#allocation3 + $0x77] sm:$0xff]
        %v9106 = vld [vmem:[#allocation3 + $0x7f] sm:$0xff]
        %v9107 = vld [vmem:[#allocation3 + $0x87] sm:$0xff]
        %v9108 = vld [vmem:[#allocation3 + $0x8f] sm:$0xff]
        %v9109 = vld [vmem:[#allocation3 + $0x97] sm:$0xff]
        %v9110 = vld [vmem:[#allocation3 + $0x9f] sm:$0xff]
        %v9111 = vld [vmem:[#allocation3 + $0xa7] sm:$0xff]
        %v9112 = vld [vmem:[#allocation3 + $0xaf] sm:$0xff]
        %v9113 = vld [vmem:[#allocation3 + $0xb7] sm:$0xff]
        %v9114 = vld [vmem:[#allocation3 + $0xbf] sm:$0xff]
        %v9115 = vld [vmem:[#allocation3 + $0xc7] sm:$0xff]
        %v9116 = vld [vmem:[#allocation3 + $0xcf] sm:$0xff]
        %v9117 = vld [vmem:[#allocation3 + $0xd7] sm:$0xff]
        %v9118 = vld [vmem:[#allocation3 + $0xdf] sm:$0xff]
        %v9119 = vld [vmem:[#allocation3 + $0xe7] sm:$0xff]
        %v9120 = vld [vmem:[#allocation3 + $0xef] sm:$0xff]
        %v9121 = vld [vmem:[#allocation3 + $0xf7] sm:$0xff]
        %v9122 = vld [vmem:[#allocation3 + $0xff] sm:$0xff]
        %v9123 = vld [vmem:[#allocation3 + $0x107] sm:$0xff]
        %v9124 = vld [vmem:[#allocation3 + $0x10f] sm:$0xff]
        %v9125 = vmul.f32 %v9093, %v499
        %v9126 = vmul.f32 %v9094, %v503
        %v9127 = vmul.f32 %v9095, %v507
        %v9128 = vmul.f32 %v9096, %v511
        %v9129 = vmul.f32 %v9097, %v515
        %v9130 = vmul.f32 %v9098, %v519
        %v9131 = vmul.f32 %v9099, %v523
        %v9132 = vmul.f32 %v9100, %v527
        %v9133 = vmul.f32 %v9101, %v531
        %v9134 = vmul.f32 %v9102, %v535
        %v9135 = vmul.f32 %v9103, %v539
        %v9136 = vmul.f32 %v9104, %v543
        %v9137 = vmul.f32 %v9105, %v547
        %v9138 = vmul.f32 %v9106, %v551
        %v9139 = vmul.f32 %v9107, %v555
        %v9140 = vmul.f32 %v9108, %v559
        %v9141 = vmul.f32 %v9109, %v563
        %v9142 = vmul.f32 %v9110, %v567
        %v9143 = vmul.f32 %v9111, %v571
        %v9144 = vmul.f32 %v9112, %v575
        %v9145 = vmul.f32 %v9113, %v579
        %v9146 = vmul.f32 %v9114, %v583
        %v9147 = vmul.f32 %v9115, %v587
        %v9148 = vmul.f32 %v9116, %v591
        %v9149 = vmul.f32 %v9117, %v595
        %v9150 = vmul.f32 %v9118, %v599
        %v9151 = vmul.f32 %v9119, %v603
        %v9152 = vmul.f32 %v9120, %v607
        %v9153 = vmul.f32 %v9121, %v611
        %v9154 = vmul.f32 %v9122, %v615
        %v9155 = vmul.f32 %v9123, %v619
        %v9156 = vmul.f32 %v9124, %v623
        %v9157 = vpack.c.bf16 %v9126, %v9125
        %v9158 = vpack.c.bf16 %v9128, %v9127
        %v9159 = vpack.c.bf16 %v9130, %v9129
        %v9160 = vpack.c.bf16 %v9132, %v9131
        %v9161 = vpack.c.bf16 %v9134, %v9133
        %v9162 = vpack.c.bf16 %v9136, %v9135
        %v9163 = vpack.c.bf16 %v9138, %v9137
        %v9164 = vpack.c.bf16 %v9140, %v9139
        %v9165 = vpack.c.bf16 %v9142, %v9141
        %v9166 = vpack.c.bf16 %v9144, %v9143
        %v9167 = vpack.c.bf16 %v9146, %v9145
        %v9168 = vpack.c.bf16 %v9148, %v9147
        %v9169 = vpack.c.bf16 %v9150, %v9149
        %v9170 = vpack.c.bf16 %v9152, %v9151
        %v9171 = vpack.c.bf16 %v9154, %v9153
        %v9172 = vpack.c.bf16 %v9156, %v9155
        %s9173 = scalar_lea.vmem %s6, 192
        %v9174 = vld [vmem:[%s9173] sm:$0xf]
        %v9175 = vld [vmem:[%s9173 + $0x4] sm:$0xf]
        %v9176 = vld [vmem:[%s9173 + $0x8] sm:$0xf]
        %v9177 = vld [vmem:[%s9173 + $0xc] sm:$0xf]
        %v9178 = vld [vmem:[%s9173 + $0x10] sm:$0xf]
        %v9179 = vld [vmem:[%s9173 + $0x14] sm:$0xf]
        %v9180 = vld [vmem:[%s9173 + $0x18] sm:$0xf]
        %v9181 = vld [vmem:[%s9173 + $0x1c] sm:$0xf]
        %v9182 = vld [vmem:[%s9173 + $0x20] sm:$0xf]
        %v9183 = vld [vmem:[%s9173 + $0x24] sm:$0xf]
        %v9184 = vld [vmem:[%s9173 + $0x28] sm:$0xf]
        %v9185 = vld [vmem:[%s9173 + $0x2c] sm:$0xf]
        %v9186 = vld [vmem:[%s9173 + $0x30] sm:$0xf]
        %v9187 = vld [vmem:[%s9173 + $0x34] sm:$0xf]
        %v9188 = vld [vmem:[%s9173 + $0x38] sm:$0xf]
        %v9189 = vld [vmem:[%s9173 + $0x3c] sm:$0xf]
        %v9206 = vunpack.c.l.b16 %v9174
        %v9207 = vunpack.c.l.b16 %v9175
        %v9208 = vunpack.c.l.b16 %v9176
        %v9209 = vunpack.c.l.b16 %v9177
        %v9210 = vunpack.c.l.b16 %v9178
        %v9211 = vunpack.c.l.b16 %v9179
        %v9212 = vunpack.c.l.b16 %v9180
        %v9213 = vunpack.c.l.b16 %v9181
        %v9214 = vunpack.c.l.b16 %v9182
        %v9215 = vunpack.c.l.b16 %v9183
        %v9216 = vunpack.c.l.b16 %v9184
        %v9217 = vunpack.c.l.b16 %v9185
        %v9218 = vunpack.c.l.b16 %v9186
        %v9219 = vunpack.c.l.b16 %v9187
        %v9220 = vunpack.c.l.b16 %v9188
        %v9221 = vunpack.c.l.b16 %v9189
        %v9222 = vpack.c.b16 %v9207, %v9206
        %v9223 = vpack.c.b16 %v9209, %v9208
        %v9224 = vpack.c.b16 %v9211, %v9210
        %v9225 = vpack.c.b16 %v9213, %v9212
        %v9226 = vpack.c.b16 %v9215, %v9214
        %v9227 = vpack.c.b16 %v9217, %v9216
        %v9228 = vpack.c.b16 %v9219, %v9218
        %v9229 = vpack.c.b16 %v9221, %v9220
        %9238 = vmatprep.subr.bf16.mxu0 0
        %9239 = vmatpush1.bf16.msra.mxu0 %v9222
        %9240 = vmatprep.subr.bf16.mxu0 0
        %9241 = vmatpush1.bf16.msra.mxu0 %v9223
        %9242 = vmatprep.subr.bf16.mxu0 0
        %9243 = vmatpush1.bf16.msra.mxu0 %v9224
        %9244 = vmatprep.subr.bf16.mxu0 0
        %9245 = vmatpush1.bf16.msra.mxu0 %v9225
        %9246 = vmatprep.subr.bf16.mxu0 0
        %9247 = vmatpush1.bf16.msra.mxu0 %v9226
        %9248 = vmatprep.subr.bf16.mxu0 0
        %9249 = vmatpush1.bf16.msra.mxu0 %v9227
        %9250 = vmatprep.subr.bf16.mxu0 0
        %9251 = vmatpush1.bf16.msra.mxu0 %v9228
        %9252 = vmatprep.subr.bf16.mxu0 0
        %9253 = vmatpush1.bf16.msra.mxu0 %v9229
        %9254 = vmatprep.subr.bf16.mxu0 0
        %9255 = vmatpush1.bf16.msra.mxu0 0
        %9256 = vmatprep.subr.bf16.mxu0 0
        %9257 = vmatpush1.bf16.msra.mxu0 0
        %9258 = vmatprep.subr.bf16.mxu0 0
        %9259 = vmatpush1.bf16.msra.mxu0 0
        %9260 = vmatprep.subr.bf16.mxu0 0
        %9261 = vmatpush1.bf16.msra.mxu0 0
        %9262 = vmatprep.subr.bf16.mxu0 0
        %9263 = vmatpush1.bf16.msra.mxu0 0
        %9264 = vmatprep.subr.bf16.mxu0 0
        %9265 = vmatpush1.bf16.msra.mxu0 0
        %9266 = vmatprep.subr.bf16.mxu0 0
        %9267 = vmatpush1.bf16.msra.mxu0 0
        %9268 = vmatprep.subr.bf16.mxu0 0
        %9269 = vmatpush1.bf16.msra.mxu0 0
        %9270 = vmatprep.mubr.bf16.mxu0 0
        %9271 = vmatmul.mubr.bf16.gmra.mrb[0].mxu0 %v9157
        %v9272 = vpop.f32.mrb[0].mxu0
        %v9273 = vadd.f32 0.0, %v9272
        %v9274 = vpop.f32.mrb[0].mxu0
        %v9275 = vpop.f32.mrb[0].mxu0
        %v9276 = vadd.f32 0.0, %v9275
        %v9277 = vpop.f32.mrb[0].mxu0
        %9278 = vmatprep.mubr.bf16.mxu0 0
        %9279 = vmatmul.mubr.bf16.gmra.mrb[0].mxu0 %v9158
        %v9280 = vpop.f32.mrb[0].mxu0
        %v9281 = vadd.f32 0.0, %v9280
        %v9282 = vpop.f32.mrb[0].mxu0
        %v9283 = vpop.f32.mrb[0].mxu0
        %v9284 = vadd.f32 0.0, %v9283
        %v9285 = vpop.f32.mrb[0].mxu0
        %9286 = vmatprep.mubr.bf16.mxu0 0
        %9287 = vmatmul.mubr.bf16.gmra.mrb[0].mxu0 %v9159
        %v9288 = vpop.f32.mrb[0].mxu0
        %v9289 = vadd.f32 0.0, %v9288
        %v9290 = vpop.f32.mrb[0].mxu0
        %v9291 = vpop.f32.mrb[0].mxu0
        %v9292 = vadd.f32 0.0, %v9291
        %v9293 = vpop.f32.mrb[0].mxu0
        %9294 = vmatprep.mubr.bf16.mxu0 0
        %9295 = vmatmul.mubr.bf16.gmra.mrb[0].mxu0 %v9160
        %v9296 = vpop.f32.mrb[0].mxu0
        %v9297 = vadd.f32 0.0, %v9296
        %v9298 = vpop.f32.mrb[0].mxu0
        %v9299 = vpop.f32.mrb[0].mxu0
        %v9300 = vadd.f32 0.0, %v9299
        %v9301 = vpop.f32.mrb[0].mxu0
        %9302 = vmatprep.mubr.bf16.mxu0 0
        %9303 = vmatmul.mubr.bf16.gmra.mrb[0].mxu0 %v9161
        %v9304 = vpop.f32.mrb[0].mxu0
        %v9305 = vadd.f32 0.0, %v9304
        %v9306 = vpop.f32.mrb[0].mxu0
        %v9307 = vpop.f32.mrb[0].mxu0
        %v9308 = vadd.f32 0.0, %v9307
        %v9309 = vpop.f32.mrb[0].mxu0
        %9310 = vmatprep.mubr.bf16.mxu0 0
        %9311 = vmatmul.mubr.bf16.gmra.mrb[0].mxu0 %v9162
        %v9312 = vpop.f32.mrb[0].mxu0
        %v9313 = vadd.f32 0.0, %v9312
        %v9314 = vpop.f32.mrb[0].mxu0
        %v9315 = vpop.f32.mrb[0].mxu0
        %v9316 = vadd.f32 0.0, %v9315
        %v9317 = vpop.f32.mrb[0].mxu0
        %9318 = vmatprep.mubr.bf16.mxu0 0
        %9319 = vmatmul.mubr.bf16.gmra.mrb[0].mxu0 %v9163
        %v9320 = vpop.f32.mrb[0].mxu0
        %v9321 = vadd.f32 0.0, %v9320
        %v9322 = vpop.f32.mrb[0].mxu0
        %v9323 = vpop.f32.mrb[0].mxu0
        %v9324 = vadd.f32 0.0, %v9323
        %v9325 = vpop.f32.mrb[0].mxu0
        %9326 = vmatprep.mubr.bf16.mxu0 0
        %9327 = vmatmul.mubr.bf16.gmra.mrb[0].mxu0 %v9164
        %v9328 = vpop.f32.mrb[0].mxu0
        %v9329 = vadd.f32 0.0, %v9328
        %v9330 = vpop.f32.mrb[0].mxu0
        %v9331 = vpop.f32.mrb[0].mxu0
        %v9332 = vadd.f32 0.0, %v9331
        %v9333 = vpop.f32.mrb[0].mxu0
        %9334 = vmatprep.mubr.bf16.mxu0 0
        %9335 = vmatmul.mubr.bf16.gmra.mrb[0].mxu0 %v9165
        %v9336 = vpop.f32.mrb[0].mxu0
        %v9337 = vadd.f32 0.0, %v9336
        %v9338 = vpop.f32.mrb[0].mxu0
        %v9339 = vpop.f32.mrb[0].mxu0
        %v9340 = vadd.f32 0.0, %v9339
        %v9341 = vpop.f32.mrb[0].mxu0
        %9342 = vmatprep.mubr.bf16.mxu0 0
        %9343 = vmatmul.mubr.bf16.gmra.mrb[0].mxu0 %v9166
        %v9344 = vpop.f32.mrb[0].mxu0
        %v9345 = vadd.f32 0.0, %v9344
        %v9346 = vpop.f32.mrb[0].mxu0
        %v9347 = vpop.f32.mrb[0].mxu0
        %v9348 = vadd.f32 0.0, %v9347
        %v9349 = vpop.f32.mrb[0].mxu0
        %9350 = vmatprep.mubr.bf16.mxu0 0
        %9351 = vmatmul.mubr.bf16.gmra.mrb[0].mxu0 %v9167
        %v9352 = vpop.f32.mrb[0].mxu0
        %v9353 = vadd.f32 0.0, %v9352
        %v9354 = vpop.f32.mrb[0].mxu0
        %v9355 = vpop.f32.mrb[0].mxu0
        %v9356 = vadd.f32 0.0, %v9355
        %v9357 = vpop.f32.mrb[0].mxu0
        %9358 = vmatprep.mubr.bf16.mxu0 0
        %9359 = vmatmul.mubr.bf16.gmra.mrb[0].mxu0 %v9168
        %v9360 = vpop.f32.mrb[0].mxu0
        %v9361 = vadd.f32 0.0, %v9360
        %v9362 = vpop.f32.mrb[0].mxu0
        %v9363 = vpop.f32.mrb[0].mxu0
        %v9364 = vadd.f32 0.0, %v9363
        %v9365 = vpop.f32.mrb[0].mxu0
        %9366 = vmatprep.mubr.bf16.mxu0 0
        %9367 = vmatmul.mubr.bf16.gmra.mrb[0].mxu0 %v9169
        %v9368 = vpop.f32.mrb[0].mxu0
        %v9369 = vadd.f32 0.0, %v9368
        %v9370 = vpop.f32.mrb[0].mxu0
        %v9371 = vpop.f32.mrb[0].mxu0
        %v9372 = vadd.f32 0.0, %v9371
        %v9373 = vpop.f32.mrb[0].mxu0
        %9374 = vmatprep.mubr.bf16.mxu0 0
        %9375 = vmatmul.mubr.bf16.gmra.mrb[0].mxu0 %v9170
        %v9376 = vpop.f32.mrb[0].mxu0
        %v9377 = vadd.f32 0.0, %v9376
        %v9378 = vpop.f32.mrb[0].mxu0
        %v9379 = vpop.f32.mrb[0].mxu0
        %v9380 = vadd.f32 0.0, %v9379
        %v9381 = vpop.f32.mrb[0].mxu0
        %9382 = vmatprep.mubr.bf16.mxu0 0
        %9383 = vmatmul.mubr.bf16.gmra.mrb[0].mxu0 %v9171
        %v9384 = vpop.f32.mrb[0].mxu0
        %v9385 = vadd.f32 0.0, %v9384
        %v9386 = vpop.f32.mrb[0].mxu0
        %v9387 = vpop.f32.mrb[0].mxu0
        %v9388 = vadd.f32 0.0, %v9387
        %v9389 = vpop.f32.mrb[0].mxu0
        %9390 = vmatprep.mubr.bf16.mxu0 0
        %9391 = vmatmul.mubr.bf16.gmra.mrb[0].mxu0 %v9172
        %v9392 = vpop.f32.mrb[0].mxu0
        %v9393 = vadd.f32 0.0, %v9392
        %v9394 = vpop.f32.mrb[0].mxu0
        %v9395 = vpop.f32.mrb[0].mxu0
        %v9396 = vadd.f32 0.0, %v9395
        %v9397 = vpop.f32.mrb[0].mxu0
        %9398 = vdwg.mxu0
        %v9399 = vadd.f32 %v9061, %v9273
        %v9400 = vadd.f32 %v9062, %v9276
        %v9401 = vadd.f32 %v9063, %v9281
        %v9402 = vadd.f32 %v9064, %v9284
        %v9403 = vadd.f32 %v9065, %v9289
        %v9404 = vadd.f32 %v9066, %v9292
        %v9405 = vadd.f32 %v9067, %v9297
        %v9406 = vadd.f32 %v9068, %v9300
        %v9407 = vadd.f32 %v9069, %v9305
        %v9408 = vadd.f32 %v9070, %v9308
        %v9409 = vadd.f32 %v9071, %v9313
        %v9410 = vadd.f32 %v9072, %v9316
        %v9411 = vadd.f32 %v9073, %v9321
        %v9412 = vadd.f32 %v9074, %v9324
        %v9413 = vadd.f32 %v9075, %v9329
        %v9414 = vadd.f32 %v9076, %v9332
        %v9415 = vadd.f32 %v9077, %v9337
        %v9416 = vadd.f32 %v9078, %v9340
        %v9417 = vadd.f32 %v9079, %v9345
        %v9418 = vadd.f32 %v9080, %v9348
        %v9419 = vadd.f32 %v9081, %v9353
        %v9420 = vadd.f32 %v9082, %v9356
        %v9421 = vadd.f32 %v9083, %v9361
        %v9422 = vadd.f32 %v9084, %v9364
        %v9423 = vadd.f32 %v9085, %v9369
        %v9424 = vadd.f32 %v9086, %v9372
        %v9425 = vadd.f32 %v9087, %v9377
        %v9426 = vadd.f32 %v9088, %v9380
        %v9427 = vadd.f32 %v9089, %v9385
        %v9428 = vadd.f32 %v9090, %v9388
        %v9429 = vadd.f32 %v9091, %v9393
        %v9430 = vadd.f32 %v9092, %v9396
        %v9431 = vld [vmem:[#allocation3 + $0x18] sm:$0xff]
        %v9432 = vld [vmem:[#allocation3 + $0x20] sm:$0xff]
        %v9433 = vld [vmem:[#allocation3 + $0x28] sm:$0xff]
        %v9434 = vld [vmem:[#allocation3 + $0x30] sm:$0xff]
        %v9435 = vld [vmem:[#allocation3 + $0x38] sm:$0xff]
        %v9436 = vld [vmem:[#allocation3 + $0x40] sm:$0xff]
        %v9437 = vld [vmem:[#allocation3 + $0x48] sm:$0xff]
        %v9438 = vld [vmem:[#allocation3 + $0x50] sm:$0xff]
        %v9439 = vld [vmem:[#allocation3 + $0x58] sm:$0xff]
        %v9440 = vld [vmem:[#allocation3 + $0x60] sm:$0xff]
        %v9441 = vld [vmem:[#allocation3 + $0x68] sm:$0xff]
        %v9442 = vld [vmem:[#allocation3 + $0x70] sm:$0xff]
        %v9443 = vld [vmem:[#allocation3 + $0x78] sm:$0xff]
        %v9444 = vld [vmem:[#allocation3 + $0x80] sm:$0xff]
        %v9445 = vld [vmem:[#allocation3 + $0x88] sm:$0xff]
        %v9446 = vld [vmem:[#allocation3 + $0x90] sm:$0xff]
        %v9447 = vld [vmem:[#allocation3 + $0x98] sm:$0xff]
        %v9448 = vld [vmem:[#allocation3 + $0xa0] sm:$0xff]
        %v9449 = vld [vmem:[#allocation3 + $0xa8] sm:$0xff]
        %v9450 = vld [vmem:[#allocation3 + $0xb0] sm:$0xff]
        %v9451 = vld [vmem:[#allocation3 + $0xb8] sm:$0xff]
        %v9452 = vld [vmem:[#allocation3 + $0xc0] sm:$0xff]
        %v9453 = vld [vmem:[#allocation3 + $0xc8] sm:$0xff]
        %v9454 = vld [vmem:[#allocation3 + $0xd0] sm:$0xff]
        %v9455 = vld [vmem:[#allocation3 + $0xd8] sm:$0xff]
        %v9456 = vld [vmem:[#allocation3 + $0xe0] sm:$0xff]
        %v9457 = vld [vmem:[#allocation3 + $0xe8] sm:$0xff]
        %v9458 = vld [vmem:[#allocation3 + $0xf0] sm:$0xff]
        %v9459 = vld [vmem:[#allocation3 + $0xf8] sm:$0xff]
        %v9460 = vld [vmem:[#allocation3 + $0x100] sm:$0xff]
        %v9461 = vld [vmem:[#allocation3 + $0x108] sm:$0xff]
        %v9462 = vld [vmem:[#allocation3 + $0x110] sm:$0xff]
        %v9463 = vpack.c.bf16 %v9432, %v9431
        %v9464 = vpack.c.bf16 %v9434, %v9433
        %v9465 = vpack.c.bf16 %v9436, %v9435
        %v9466 = vpack.c.bf16 %v9438, %v9437
        %v9467 = vpack.c.bf16 %v9440, %v9439
        %v9468 = vpack.c.bf16 %v9442, %v9441
        %v9469 = vpack.c.bf16 %v9444, %v9443
        %v9470 = vpack.c.bf16 %v9446, %v9445
        %v9471 = vpack.c.bf16 %v9448, %v9447
        %v9472 = vpack.c.bf16 %v9450, %v9449
        %v9473 = vpack.c.bf16 %v9452, %v9451
        %v9474 = vpack.c.bf16 %v9454, %v9453
        %v9475 = vpack.c.bf16 %v9456, %v9455
        %v9476 = vpack.c.bf16 %v9458, %v9457
        %v9477 = vpack.c.bf16 %v9460, %v9459
        %v9478 = vpack.c.bf16 %v9462, %v9461
        %s9479 = scalar_lea.vmem %s6, 256
        %v9480 = vld [vmem:[%s9479] sm:$0xf]
        %v9481 = vld [vmem:[%s9479 + $0x4] sm:$0xf]
        %v9482 = vld [vmem:[%s9479 + $0x8] sm:$0xf]
        %v9483 = vld [vmem:[%s9479 + $0xc] sm:$0xf]
        %v9484 = vld [vmem:[%s9479 + $0x10] sm:$0xf]
        %v9485 = vld [vmem:[%s9479 + $0x14] sm:$0xf]
        %v9486 = vld [vmem:[%s9479 + $0x18] sm:$0xf]
        %v9487 = vld [vmem:[%s9479 + $0x1c] sm:$0xf]
        %v9488 = vld [vmem:[%s9479 + $0x20] sm:$0xf]
        %v9489 = vld [vmem:[%s9479 + $0x24] sm:$0xf]
        %v9490 = vld [vmem:[%s9479 + $0x28] sm:$0xf]
        %v9491 = vld [vmem:[%s9479 + $0x2c] sm:$0xf]
        %v9492 = vld [vmem:[%s9479 + $0x30] sm:$0xf]
        %v9493 = vld [vmem:[%s9479 + $0x34] sm:$0xf]
        %v9494 = vld [vmem:[%s9479 + $0x38] sm:$0xf]
        %v9495 = vld [vmem:[%s9479 + $0x3c] sm:$0xf]
        %v9512 = vunpack.c.l.b16 %v9480
        %v9513 = vunpack.c.l.b16 %v9481
        %v9514 = vunpack.c.l.b16 %v9482
        %v9515 = vunpack.c.l.b16 %v9483
        %v9516 = vunpack.c.l.b16 %v9484
        %v9517 = vunpack.c.l.b16 %v9485
        %v9518 = vunpack.c.l.b16 %v9486
        %v9519 = vunpack.c.l.b16 %v9487
        %v9520 = vunpack.c.l.b16 %v9488
        %v9521 = vunpack.c.l.b16 %v9489
        %v9522 = vunpack.c.l.b16 %v9490
        %v9523 = vunpack.c.l.b16 %v9491
        %v9524 = vunpack.c.l.b16 %v9492
        %v9525 = vunpack.c.l.b16 %v9493
        %v9526 = vunpack.c.l.b16 %v9494
        %v9527 = vunpack.c.l.b16 %v9495
        %v9528 = vpack.c.b16 %v9513, %v9512
        %v9529 = vpack.c.b16 %v9515, %v9514
        %v9530 = vpack.c.b16 %v9517, %v9516
        %v9531 = vpack.c.b16 %v9519, %v9518
        %v9532 = vpack.c.b16 %v9521, %v9520
        %v9533 = vpack.c.b16 %v9523, %v9522
        %v9534 = vpack.c.b16 %v9525, %v9524
        %v9535 = vpack.c.b16 %v9527, %v9526
        %9544 = vmatprep.subr.bf16.mxu0 0
        %9545 = vmatpush1.bf16.msra.mxu0 %v9528
        %9546 = vmatprep.subr.bf16.mxu0 0
        %9547 = vmatpush1.bf16.msra.mxu0 %v9529
        %9548 = vmatprep.subr.bf16.mxu0 0
        %9549 = vmatpush1.bf16.msra.mxu0 %v9530
        %9550 = vmatprep.subr.bf16.mxu0 0
        %9551 = vmatpush1.bf16.msra.mxu0 %v9531
        %9552 = vmatprep.subr.bf16.mxu0 0
        %9553 = vmatpush1.bf16.msra.mxu0 %v9532
        %9554 = vmatprep.subr.bf16.mxu0 0
        %9555 = vmatpush1.bf16.msra.mxu0 %v9533
        %9556 = vmatprep.subr.bf16.mxu0 0
        %9557 = vmatpush1.bf16.msra.mxu0 %v9534
        %9558 = vmatprep.subr.bf16.mxu0 0
        %9559 = vmatpush1.bf16.msra.mxu0 %v9535
        %9560 = vmatprep.subr.bf16.mxu0 0
        %9561 = vmatpush1.bf16.msra.mxu0 0
        %9562 = vmatprep.subr.bf16.mxu0 0
        %9563 = vmatpush1.bf16.msra.mxu0 0
        %9564 = vmatprep.subr.bf16.mxu0 0
        %9565 = vmatpush1.bf16.msra.mxu0 0
        %9566 = vmatprep.subr.bf16.mxu0 0
        %9567 = vmatpush1.bf16.msra.mxu0 0
        %9568 = vmatprep.subr.bf16.mxu0 0
        %9569 = vmatpush1.bf16.msra.mxu0 0
        %9570 = vmatprep.subr.bf16.mxu0 0
        %9571 = vmatpush1.bf16.msra.mxu0 0
        %9572 = vmatprep.subr.bf16.mxu0 0
        %9573 = vmatpush1.bf16.msra.mxu0 0
        %9574 = vmatprep.subr.bf16.mxu0 0
        %9575 = vmatpush1.bf16.msra.mxu0 0
        %9576 = vmatprep.mubr.bf16.mxu0 0
        %9577 = vmatmul.mubr.bf16.gmra.mrb[0].mxu0 %v9463
        %v9578 = vpop.f32.mrb[0].mxu0
        %v9579 = vadd.f32 0.0, %v9578
        %v9580 = vpop.f32.mrb[0].mxu0
        %v9581 = vpop.f32.mrb[0].mxu0
        %v9582 = vadd.f32 0.0, %v9581
        %v9583 = vpop.f32.mrb[0].mxu0
        %9584 = vmatprep.mubr.bf16.mxu0 0
        %9585 = vmatmul.mubr.bf16.gmra.mrb[0].mxu0 %v9464
        %v9586 = vpop.f32.mrb[0].mxu0
        %v9587 = vadd.f32 0.0, %v9586
        %v9588 = vpop.f32.mrb[0].mxu0
        %v9589 = vpop.f32.mrb[0].mxu0
        %v9590 = vadd.f32 0.0, %v9589
        %v9591 = vpop.f32.mrb[0].mxu0
        %9592 = vmatprep.mubr.bf16.mxu0 0
        %9593 = vmatmul.mubr.bf16.gmra.mrb[0].mxu0 %v9465
        %v9594 = vpop.f32.mrb[0].mxu0
        %v9595 = vadd.f32 0.0, %v9594
        %v9596 = vpop.f32.mrb[0].mxu0
        %v9597 = vpop.f32.mrb[0].mxu0
        %v9598 = vadd.f32 0.0, %v9597
        %v9599 = vpop.f32.mrb[0].mxu0
        %9600 = vmatprep.mubr.bf16.mxu0 0
        %9601 = vmatmul.mubr.bf16.gmra.mrb[0].mxu0 %v9466
        %v9602 = vpop.f32.mrb[0].mxu0
        %v9603 = vadd.f32 0.0, %v9602
        %v9604 = vpop.f32.mrb[0].mxu0
        %v9605 = vpop.f32.mrb[0].mxu0
        %v9606 = vadd.f32 0.0, %v9605
        %v9607 = vpop.f32.mrb[0].mxu0
        %9608 = vmatprep.mubr.bf16.mxu0 0
        %9609 = vmatmul.mubr.bf16.gmra.mrb[0].mxu0 %v9467
        %v9610 = vpop.f32.mrb[0].mxu0
        %v9611 = vadd.f32 0.0, %v9610
        %v9612 = vpop.f32.mrb[0].mxu0
        %v9613 = vpop.f32.mrb[0].mxu0
        %v9614 = vadd.f32 0.0, %v9613
        %v9615 = vpop.f32.mrb[0].mxu0
        %9616 = vmatprep.mubr.bf16.mxu0 0
        %9617 = vmatmul.mubr.bf16.gmra.mrb[0].mxu0 %v9468
        %v9618 = vpop.f32.mrb[0].mxu0
        %v9619 = vadd.f32 0.0, %v9618
        %v9620 = vpop.f32.mrb[0].mxu0
        %v9621 = vpop.f32.mrb[0].mxu0
        %v9622 = vadd.f32 0.0, %v9621
        %v9623 = vpop.f32.mrb[0].mxu0
        %9624 = vmatprep.mubr.bf16.mxu0 0
        %9625 = vmatmul.mubr.bf16.gmra.mrb[0].mxu0 %v9469
        %v9626 = vpop.f32.mrb[0].mxu0
        %v9627 = vadd.f32 0.0, %v9626
        %v9628 = vpop.f32.mrb[0].mxu0
        %v9629 = vpop.f32.mrb[0].mxu0
        %v9630 = vadd.f32 0.0, %v9629
        %v9631 = vpop.f32.mrb[0].mxu0
        %9632 = vmatprep.mubr.bf16.mxu0 0
        %9633 = vmatmul.mubr.bf16.gmra.mrb[0].mxu0 %v9470
        %v9634 = vpop.f32.mrb[0].mxu0
        %v9635 = vadd.f32 0.0, %v9634
        %v9636 = vpop.f32.mrb[0].mxu0
        %v9637 = vpop.f32.mrb[0].mxu0
        %v9638 = vadd.f32 0.0, %v9637
        %v9639 = vpop.f32.mrb[0].mxu0
        %9640 = vmatprep.mubr.bf16.mxu0 0
        %9641 = vmatmul.mubr.bf16.gmra.mrb[0].mxu0 %v9471
        %v9642 = vpop.f32.mrb[0].mxu0
        %v9643 = vadd.f32 0.0, %v9642
        %v9644 = vpop.f32.mrb[0].mxu0
        %v9645 = vpop.f32.mrb[0].mxu0
        %v9646 = vadd.f32 0.0, %v9645
        %v9647 = vpop.f32.mrb[0].mxu0
        %9648 = vmatprep.mubr.bf16.mxu0 0
        %9649 = vmatmul.mubr.bf16.gmra.mrb[0].mxu0 %v9472
        %v9650 = vpop.f32.mrb[0].mxu0
        %v9651 = vadd.f32 0.0, %v9650
        %v9652 = vpop.f32.mrb[0].mxu0
        %v9653 = vpop.f32.mrb[0].mxu0
        %v9654 = vadd.f32 0.0, %v9653
        %v9655 = vpop.f32.mrb[0].mxu0
        %9656 = vmatprep.mubr.bf16.mxu0 0
        %9657 = vmatmul.mubr.bf16.gmra.mrb[0].mxu0 %v9473
        %v9658 = vpop.f32.mrb[0].mxu0
        %v9659 = vadd.f32 0.0, %v9658
        %v9660 = vpop.f32.mrb[0].mxu0
        %v9661 = vpop.f32.mrb[0].mxu0
        %v9662 = vadd.f32 0.0, %v9661
        %v9663 = vpop.f32.mrb[0].mxu0
        %9664 = vmatprep.mubr.bf16.mxu0 0
        %9665 = vmatmul.mubr.bf16.gmra.mrb[0].mxu0 %v9474
        %v9666 = vpop.f32.mrb[0].mxu0
        %v9667 = vadd.f32 0.0, %v9666
        %v9668 = vpop.f32.mrb[0].mxu0
        %v9669 = vpop.f32.mrb[0].mxu0
        %v9670 = vadd.f32 0.0, %v9669
        %v9671 = vpop.f32.mrb[0].mxu0
        %9672 = vmatprep.mubr.bf16.mxu0 0
        %9673 = vmatmul.mubr.bf16.gmra.mrb[0].mxu0 %v9475
        %v9674 = vpop.f32.mrb[0].mxu0
        %v9675 = vadd.f32 0.0, %v9674
        %v9676 = vpop.f32.mrb[0].mxu0
        %v9677 = vpop.f32.mrb[0].mxu0
        %v9678 = vadd.f32 0.0, %v9677
        %v9679 = vpop.f32.mrb[0].mxu0
        %9680 = vmatprep.mubr.bf16.mxu0 0
        %9681 = vmatmul.mubr.bf16.gmra.mrb[0].mxu0 %v9476
        %v9682 = vpop.f32.mrb[0].mxu0
        %v9683 = vadd.f32 0.0, %v9682
        %v9684 = vpop.f32.mrb[0].mxu0
        %v9685 = vpop.f32.mrb[0].mxu0
        %v9686 = vadd.f32 0.0, %v9685
        %v9687 = vpop.f32.mrb[0].mxu0
        %9688 = vmatprep.mubr.bf16.mxu0 0
        %9689 = vmatmul.mubr.bf16.gmra.mrb[0].mxu0 %v9477
        %v9690 = vpop.f32.mrb[0].mxu0
        %v9691 = vadd.f32 0.0, %v9690
        %v9692 = vpop.f32.mrb[0].mxu0
        %v9693 = vpop.f32.mrb[0].mxu0
        %v9694 = vadd.f32 0.0, %v9693
        %v9695 = vpop.f32.mrb[0].mxu0
        %9696 = vmatprep.mubr.bf16.mxu0 0
        %9697 = vmatmul.mubr.bf16.gmra.mrb[0].mxu0 %v9478
        %v9698 = vpop.f32.mrb[0].mxu0
        %v9699 = vadd.f32 0.0, %v9698
        %v9700 = vpop.f32.mrb[0].mxu0
        %v9701 = vpop.f32.mrb[0].mxu0
        %v9702 = vadd.f32 0.0, %v9701
        %v9703 = vpop.f32.mrb[0].mxu0
        %9704 = vdwg.mxu0
        %v9705 = vadd.f32 %v9399, %v9579
        %v9706 = vadd.f32 %v9400, %v9582
        %v9707 = vadd.f32 %v9401, %v9587
        %v9708 = vadd.f32 %v9402, %v9590
        %v9709 = vadd.f32 %v9403, %v9595
        %v9710 = vadd.f32 %v9404, %v9598
        %v9711 = vadd.f32 %v9405, %v9603
        %v9712 = vadd.f32 %v9406, %v9606
        %v9713 = vadd.f32 %v9407, %v9611
        %v9714 = vadd.f32 %v9408, %v9614
        %v9715 = vadd.f32 %v9409, %v9619
        %v9716 = vadd.f32 %v9410, %v9622
        %v9717 = vadd.f32 %v9411, %v9627
        %v9718 = vadd.f32 %v9412, %v9630
        %v9719 = vadd.f32 %v9413, %v9635
        %v9720 = vadd.f32 %v9414, %v9638
        %v9721 = vadd.f32 %v9415, %v9643
        %v9722 = vadd.f32 %v9416, %v9646
        %v9723 = vadd.f32 %v9417, %v9651
        %v9724 = vadd.f32 %v9418, %v9654
        %v9725 = vadd.f32 %v9419, %v9659
        %v9726 = vadd.f32 %v9420, %v9662
        %v9727 = vadd.f32 %v9421, %v9667
        %v9728 = vadd.f32 %v9422, %v9670
        %v9729 = vadd.f32 %v9423, %v9675
        %v9730 = vadd.f32 %v9424, %v9678
        %v9731 = vadd.f32 %v9425, %v9683
        %v9732 = vadd.f32 %v9426, %v9686
        %v9733 = vadd.f32 %v9427, %v9691
        %v9734 = vadd.f32 %v9428, %v9694
        %v9735 = vadd.f32 %v9429, %v9699
        %v9736 = vadd.f32 %v9430, %v9702
        %v9737 = vld [vmem:[#allocation3 + $0x19] sm:$0xff]
        %v9738 = vld [vmem:[#allocation3 + $0x21] sm:$0xff]
        %v9739 = vld [vmem:[#allocation3 + $0x29] sm:$0xff]
        %v9740 = vld [vmem:[#allocation3 + $0x31] sm:$0xff]
        %v9741 = vld [vmem:[#allocation3 + $0x39] sm:$0xff]
        %v9742 = vld [vmem:[#allocation3 + $0x41] sm:$0xff]
        %v9743 = vld [vmem:[#allocation3 + $0x49] sm:$0xff]
        %v9744 = vld [vmem:[#allocation3 + $0x51] sm:$0xff]
        %v9745 = vld [vmem:[#allocation3 + $0x59] sm:$0xff]
        %v9746 = vld [vmem:[#allocation3 + $0x61] sm:$0xff]
        %v9747 = vld [vmem:[#allocation3 + $0x69] sm:$0xff]
        %v9748 = vld [vmem:[#allocation3 + $0x71] sm:$0xff]
        %v9749 = vld [vmem:[#allocation3 + $0x79] sm:$0xff]
        %v9750 = vld [vmem:[#allocation3 + $0x81] sm:$0xff]
        %v9751 = vld [vmem:[#allocation3 + $0x89] sm:$0xff]
        %v9752 = vld [vmem:[#allocation3 + $0x91] sm:$0xff]
        %v9753 = vld [vmem:[#allocation3 + $0x99] sm:$0xff]
        %v9754 = vld [vmem:[#allocation3 + $0xa1] sm:$0xff]
        %v9755 = vld [vmem:[#allocation3 + $0xa9] sm:$0xff]
        %v9756 = vld [vmem:[#allocation3 + $0xb1] sm:$0xff]
        %v9757 = vld [vmem:[#allocation3 + $0xb9] sm:$0xff]
        %v9758 = vld [vmem:[#allocation3 + $0xc1] sm:$0xff]
        %v9759 = vld [vmem:[#allocation3 + $0xc9] sm:$0xff]
        %v9760 = vld [vmem:[#allocation3 + $0xd1] sm:$0xff]
        %v9761 = vld [vmem:[#allocation3 + $0xd9] sm:$0xff]
        %v9762 = vld [vmem:[#allocation3 + $0xe1] sm:$0xff]
        %v9763 = vld [vmem:[#allocation3 + $0xe9] sm:$0xff]
        %v9764 = vld [vmem:[#allocation3 + $0xf1] sm:$0xff]
        %v9765 = vld [vmem:[#allocation3 + $0xf9] sm:$0xff]
        %v9766 = vld [vmem:[#allocation3 + $0x101] sm:$0xff]
        %v9767 = vld [vmem:[#allocation3 + $0x109] sm:$0xff]
        %v9768 = vld [vmem:[#allocation3 + $0x111] sm:$0xff]
        %v9769 = vmul.f32 %v9737, %v1566
        %v9770 = vmul.f32 %v9738, %v1570
        %v9771 = vmul.f32 %v9739, %v1574
        %v9772 = vmul.f32 %v9740, %v1578
        %v9773 = vmul.f32 %v9741, %v1582
        %v9774 = vmul.f32 %v9742, %v1586
        %v9775 = vmul.f32 %v9743, %v1590
        %v9776 = vmul.f32 %v9744, %v1594
        %v9777 = vmul.f32 %v9745, %v1598
        %v9778 = vmul.f32 %v9746, %v1602
        %v9779 = vmul.f32 %v9747, %v1606
        %v9780 = vmul.f32 %v9748, %v1610
        %v9781 = vmul.f32 %v9749, %v1614
        %v9782 = vmul.f32 %v9750, %v1618
        %v9783 = vmul.f32 %v9751, %v1622
        %v9784 = vmul.f32 %v9752, %v1626
        %v9785 = vmul.f32 %v9753, %v1630
        %v9786 = vmul.f32 %v9754, %v1634
        %v9787 = vmul.f32 %v9755, %v1638
        %v9788 = vmul.f32 %v9756, %v1642
        %v9789 = vmul.f32 %v9757, %v1646
        %v9790 = vmul.f32 %v9758, %v1650
        %v9791 = vmul.f32 %v9759, %v1654
        %v9792 = vmul.f32 %v9760, %v1658
        %v9793 = vmul.f32 %v9761, %v1662
        %v9794 = vmul.f32 %v9762, %v1666
        %v9795 = vmul.f32 %v9763, %v1670
        %v9796 = vmul.f32 %v9764, %v1674
        %v9797 = vmul.f32 %v9765, %v1678
        %v9798 = vmul.f32 %v9766, %v1682
        %v9799 = vmul.f32 %v9767, %v1686
        %v9800 = vmul.f32 %v9768, %v1690
        %v9801 = vpack.c.bf16 %v9770, %v9769
        %v9802 = vpack.c.bf16 %v9772, %v9771
        %v9803 = vpack.c.bf16 %v9774, %v9773
        %v9804 = vpack.c.bf16 %v9776, %v9775
        %v9805 = vpack.c.bf16 %v9778, %v9777
        %v9806 = vpack.c.bf16 %v9780, %v9779
        %v9807 = vpack.c.bf16 %v9782, %v9781
        %v9808 = vpack.c.bf16 %v9784, %v9783
        %v9809 = vpack.c.bf16 %v9786, %v9785
        %v9810 = vpack.c.bf16 %v9788, %v9787
        %v9811 = vpack.c.bf16 %v9790, %v9789
        %v9812 = vpack.c.bf16 %v9792, %v9791
        %v9813 = vpack.c.bf16 %v9794, %v9793
        %v9814 = vpack.c.bf16 %v9796, %v9795
        %v9815 = vpack.c.bf16 %v9798, %v9797
        %v9816 = vpack.c.bf16 %v9800, %v9799
        %s9817 = scalar_lea.vmem %s6, 320
        %v9818 = vld [vmem:[%s9817] sm:$0xf]
        %v9819 = vld [vmem:[%s9817 + $0x4] sm:$0xf]
        %v9820 = vld [vmem:[%s9817 + $0x8] sm:$0xf]
        %v9821 = vld [vmem:[%s9817 + $0xc] sm:$0xf]
        %v9822 = vld [vmem:[%s9817 + $0x10] sm:$0xf]
        %v9823 = vld [vmem:[%s9817 + $0x14] sm:$0xf]
        %v9824 = vld [vmem:[%s9817 + $0x18] sm:$0xf]
        %v9825 = vld [vmem:[%s9817 + $0x1c] sm:$0xf]
        %v9826 = vld [vmem:[%s9817 + $0x20] sm:$0xf]
        %v9827 = vld [vmem:[%s9817 + $0x24] sm:$0xf]
        %v9828 = vld [vmem:[%s9817 + $0x28] sm:$0xf]
        %v9829 = vld [vmem:[%s9817 + $0x2c] sm:$0xf]
        %v9830 = vld [vmem:[%s9817 + $0x30] sm:$0xf]
        %v9831 = vld [vmem:[%s9817 + $0x34] sm:$0xf]
        %v9832 = vld [vmem:[%s9817 + $0x38] sm:$0xf]
        %v9833 = vld [vmem:[%s9817 + $0x3c] sm:$0xf]
        %v9850 = vunpack.c.l.b16 %v9818
        %v9851 = vunpack.c.l.b16 %v9819
        %v9852 = vunpack.c.l.b16 %v9820
        %v9853 = vunpack.c.l.b16 %v9821
        %v9854 = vunpack.c.l.b16 %v9822
        %v9855 = vunpack.c.l.b16 %v9823
        %v9856 = vunpack.c.l.b16 %v9824
        %v9857 = vunpack.c.l.b16 %v9825
        %v9858 = vunpack.c.l.b16 %v9826
        %v9859 = vunpack.c.l.b16 %v9827
        %v9860 = vunpack.c.l.b16 %v9828
        %v9861 = vunpack.c.l.b16 %v9829
        %v9862 = vunpack.c.l.b16 %v9830
        %v9863 = vunpack.c.l.b16 %v9831
        %v9864 = vunpack.c.l.b16 %v9832
        %v9865 = vunpack.c.l.b16 %v9833
        %v9866 = vpack.c.b16 %v9851, %v9850
        %v9867 = vpack.c.b16 %v9853, %v9852
        %v9868 = vpack.c.b16 %v9855, %v9854
        %v9869 = vpack.c.b16 %v9857, %v9856
        %v9870 = vpack.c.b16 %v9859, %v9858
        %v9871 = vpack.c.b16 %v9861, %v9860
        %v9872 = vpack.c.b16 %v9863, %v9862
        %v9873 = vpack.c.b16 %v9865, %v9864
        %9882 = vmatprep.subr.bf16.mxu0 0
        %9883 = vmatpush1.bf16.msra.mxu0 %v9866
        %9884 = vmatprep.subr.bf16.mxu0 0
        %9885 = vmatpush1.bf16.msra.mxu0 %v9867
        %9886 = vmatprep.subr.bf16.mxu0 0
        %9887 = vmatpush1.bf16.msra.mxu0 %v9868
        %9888 = vmatprep.subr.bf16.mxu0 0
        %9889 = vmatpush1.bf16.msra.mxu0 %v9869
        %9890 = vmatprep.subr.bf16.mxu0 0
        %9891 = vmatpush1.bf16.msra.mxu0 %v9870
        %9892 = vmatprep.subr.bf16.mxu0 0
        %9893 = vmatpush1.bf16.msra.mxu0 %v9871
        %9894 = vmatprep.subr.bf16.mxu0 0
        %9895 = vmatpush1.bf16.msra.mxu0 %v9872
        %9896 = vmatprep.subr.bf16.mxu0 0
        %9897 = vmatpush1.bf16.msra.mxu0 %v9873
        %9898 = vmatprep.subr.bf16.mxu0 0
        %9899 = vmatpush1.bf16.msra.mxu0 0
        %9900 = vmatprep.subr.bf16.mxu0 0
        %9901 = vmatpush1.bf16.msra.mxu0 0
        %9902 = vmatprep.subr.bf16.mxu0 0
        %9903 = vmatpush1.bf16.msra.mxu0 0
        %9904 = vmatprep.subr.bf16.mxu0 0
        %9905 = vmatpush1.bf16.msra.mxu0 0
        %9906 = vmatprep.subr.bf16.mxu0 0
        %9907 = vmatpush1.bf16.msra.mxu0 0
        %9908 = vmatprep.subr.bf16.mxu0 0
        %9909 = vmatpush1.bf16.msra.mxu0 0
        %9910 = vmatprep.subr.bf16.mxu0 0
        %9911 = vmatpush1.bf16.msra.mxu0 0
        %9912 = vmatprep.subr.bf16.mxu0 0
        %9913 = vmatpush1.bf16.msra.mxu0 0
        %9914 = vmatprep.mubr.bf16.mxu0 0
        %9915 = vmatmul.mubr.bf16.gmra.mrb[0].mxu0 %v9801
        %v9916 = vpop.f32.mrb[0].mxu0
        %v9917 = vadd.f32 0.0, %v9916
        %v9918 = vpop.f32.mrb[0].mxu0
        %v9919 = vpop.f32.mrb[0].mxu0
        %v9920 = vadd.f32 0.0, %v9919
        %v9921 = vpop.f32.mrb[0].mxu0
        %9922 = vmatprep.mubr.bf16.mxu0 0
        %9923 = vmatmul.mubr.bf16.gmra.mrb[0].mxu0 %v9802
        %v9924 = vpop.f32.mrb[0].mxu0
        %v9925 = vadd.f32 0.0, %v9924
        %v9926 = vpop.f32.mrb[0].mxu0
        %v9927 = vpop.f32.mrb[0].mxu0
        %v9928 = vadd.f32 0.0, %v9927
        %v9929 = vpop.f32.mrb[0].mxu0
        %9930 = vmatprep.mubr.bf16.mxu0 0
        %9931 = vmatmul.mubr.bf16.gmra.mrb[0].mxu0 %v9803
        %v9932 = vpop.f32.mrb[0].mxu0
        %v9933 = vadd.f32 0.0, %v9932
        %v9934 = vpop.f32.mrb[0].mxu0
        %v9935 = vpop.f32.mrb[0].mxu0
        %v9936 = vadd.f32 0.0, %v9935
        %v9937 = vpop.f32.mrb[0].mxu0
        %9938 = vmatprep.mubr.bf16.mxu0 0
        %9939 = vmatmul.mubr.bf16.gmra.mrb[0].mxu0 %v9804
        %v9940 = vpop.f32.mrb[0].mxu0
        %v9941 = vadd.f32 0.0, %v9940
        %v9942 = vpop.f32.mrb[0].mxu0
        %v9943 = vpop.f32.mrb[0].mxu0
        %v9944 = vadd.f32 0.0, %v9943
        %v9945 = vpop.f32.mrb[0].mxu0
        %9946 = vmatprep.mubr.bf16.mxu0 0
        %9947 = vmatmul.mubr.bf16.gmra.mrb[0].mxu0 %v9805
        %v9948 = vpop.f32.mrb[0].mxu0
        %v9949 = vadd.f32 0.0, %v9948
        %v9950 = vpop.f32.mrb[0].mxu0
        %v9951 = vpop.f32.mrb[0].mxu0
        %v9952 = vadd.f32 0.0, %v9951
        %v9953 = vpop.f32.mrb[0].mxu0
        %9954 = vmatprep.mubr.bf16.mxu0 0
        %9955 = vmatmul.mubr.bf16.gmra.mrb[0].mxu0 %v9806
        %v9956 = vpop.f32.mrb[0].mxu0
        %v9957 = vadd.f32 0.0, %v9956
        %v9958 = vpop.f32.mrb[0].mxu0
        %v9959 = vpop.f32.mrb[0].mxu0
        %v9960 = vadd.f32 0.0, %v9959
        %v9961 = vpop.f32.mrb[0].mxu0
        %9962 = vmatprep.mubr.bf16.mxu0 0
        %9963 = vmatmul.mubr.bf16.gmra.mrb[0].mxu0 %v9807
        %v9964 = vpop.f32.mrb[0].mxu0
        %v9965 = vadd.f32 0.0, %v9964
        %v9966 = vpop.f32.mrb[0].mxu0
        %v9967 = vpop.f32.mrb[0].mxu0
        %v9968 = vadd.f32 0.0, %v9967
        %v9969 = vpop.f32.mrb[0].mxu0
        %9970 = vmatprep.mubr.bf16.mxu0 0
        %9971 = vmatmul.mubr.bf16.gmra.mrb[0].mxu0 %v9808
        %v9972 = vpop.f32.mrb[0].mxu0
        %v9973 = vadd.f32 0.0, %v9972
        %v9974 = vpop.f32.mrb[0].mxu0
        %v9975 = vpop.f32.mrb[0].mxu0
        %v9976 = vadd.f32 0.0, %v9975
        %v9977 = vpop.f32.mrb[0].mxu0
        %9978 = vmatprep.mubr.bf16.mxu0 0
        %9979 = vmatmul.mubr.bf16.gmra.mrb[0].mxu0 %v9809
        %v9980 = vpop.f32.mrb[0].mxu0
        %v9981 = vadd.f32 0.0, %v9980
        %v9982 = vpop.f32.mrb[0].mxu0
        %v9983 = vpop.f32.mrb[0].mxu0
        %v9984 = vadd.f32 0.0, %v9983
        %v9985 = vpop.f32.mrb[0].mxu0
        %9986 = vmatprep.mubr.bf16.mxu0 0
        %9987 = vmatmul.mubr.bf16.gmra.mrb[0].mxu0 %v9810
        %v9988 = vpop.f32.mrb[0].mxu0
        %v9989 = vadd.f32 0.0, %v9988
        %v9990 = vpop.f32.mrb[0].mxu0
        %v9991 = vpop.f32.mrb[0].mxu0
        %v9992 = vadd.f32 0.0, %v9991
        %v9993 = vpop.f32.mrb[0].mxu0
        %9994 = vmatprep.mubr.bf16.mxu0 0
        %9995 = vmatmul.mubr.bf16.gmra.mrb[0].mxu0 %v9811
        %v9996 = vpop.f32.mrb[0].mxu0
        %v9997 = vadd.f32 0.0, %v9996
        %v9998 = vpop.f32.mrb[0].mxu0
        %v9999 = vpop.f32.mrb[0].mxu0
        %v10000 = vadd.f32 0.0, %v9999
        %v10001 = vpop.f32.mrb[0].mxu0
        %10002 = vmatprep.mubr.bf16.mxu0 0
        %10003 = vmatmul.mubr.bf16.gmra.mrb[0].mxu0 %v9812
        %v10004 = vpop.f32.mrb[0].mxu0
        %v10005 = vadd.f32 0.0, %v10004
        %v10006 = vpop.f32.mrb[0].mxu0
        %v10007 = vpop.f32.mrb[0].mxu0
        %v10008 = vadd.f32 0.0, %v10007
        %v10009 = vpop.f32.mrb[0].mxu0
        %10010 = vmatprep.mubr.bf16.mxu0 0
        %10011 = vmatmul.mubr.bf16.gmra.mrb[0].mxu0 %v9813
        %v10012 = vpop.f32.mrb[0].mxu0
        %v10013 = vadd.f32 0.0, %v10012
        %v10014 = vpop.f32.mrb[0].mxu0
        %v10015 = vpop.f32.mrb[0].mxu0
        %v10016 = vadd.f32 0.0, %v10015
        %v10017 = vpop.f32.mrb[0].mxu0
        %10018 = vmatprep.mubr.bf16.mxu0 0
        %10019 = vmatmul.mubr.bf16.gmra.mrb[0].mxu0 %v9814
        %v10020 = vpop.f32.mrb[0].mxu0
        %v10021 = vadd.f32 0.0, %v10020
        %v10022 = vpop.f32.mrb[0].mxu0
        %v10023 = vpop.f32.mrb[0].mxu0
        %v10024 = vadd.f32 0.0, %v10023
        %v10025 = vpop.f32.mrb[0].mxu0
        %10026 = vmatprep.mubr.bf16.mxu0 0
        %10027 = vmatmul.mubr.bf16.gmra.mrb[0].mxu0 %v9815
        %v10028 = vpop.f32.mrb[0].mxu0
        %v10029 = vadd.f32 0.0, %v10028
        %v10030 = vpop.f32.mrb[0].mxu0
        %v10031 = vpop.f32.mrb[0].mxu0
        %v10032 = vadd.f32 0.0, %v10031
        %v10033 = vpop.f32.mrb[0].mxu0
        %10034 = vmatprep.mubr.bf16.mxu0 0
        %10035 = vmatmul.mubr.bf16.gmra.mrb[0].mxu0 %v9816
        %v10036 = vpop.f32.mrb[0].mxu0
        %v10037 = vadd.f32 0.0, %v10036
        %v10038 = vpop.f32.mrb[0].mxu0
        %v10039 = vpop.f32.mrb[0].mxu0
        %v10040 = vadd.f32 0.0, %v10039
        %v10041 = vpop.f32.mrb[0].mxu0
        %10042 = vdwg.mxu0
        %v10043 = vadd.f32 %v9705, %v9917
        %v10044 = vadd.f32 %v9706, %v9920
        %v10045 = vadd.f32 %v9707, %v9925
        %v10046 = vadd.f32 %v9708, %v9928
        %v10047 = vadd.f32 %v9709, %v9933
        %v10048 = vadd.f32 %v9710, %v9936
        %v10049 = vadd.f32 %v9711, %v9941
        %v10050 = vadd.f32 %v9712, %v9944
        %v10051 = vadd.f32 %v9713, %v9949
        %v10052 = vadd.f32 %v9714, %v9952
        %v10053 = vadd.f32 %v9715, %v9957
        %v10054 = vadd.f32 %v9716, %v9960
        %v10055 = vadd.f32 %v9717, %v9965
        %v10056 = vadd.f32 %v9718, %v9968
        %v10057 = vadd.f32 %v9719, %v9973
        %v10058 = vadd.f32 %v9720, %v9976
        %v10059 = vadd.f32 %v9721, %v9981
        %v10060 = vadd.f32 %v9722, %v9984
        %v10061 = vadd.f32 %v9723, %v9989
        %v10062 = vadd.f32 %v9724, %v9992
        %v10063 = vadd.f32 %v9725, %v9997
        %v10064 = vadd.f32 %v9726, %v10000
        %v10065 = vadd.f32 %v9727, %v10005
        %v10066 = vadd.f32 %v9728, %v10008
        %v10067 = vadd.f32 %v9729, %v10013
        %v10068 = vadd.f32 %v9730, %v10016
        %v10069 = vadd.f32 %v9731, %v10021
        %v10070 = vadd.f32 %v9732, %v10024
        %v10071 = vadd.f32 %v9733, %v10029
        %v10072 = vadd.f32 %v9734, %v10032
        %v10073 = vadd.f32 %v9735, %v10037
        %v10074 = vadd.f32 %v9736, %v10040
        %v10075 = vld [vmem:[#allocation3 + $0x27] sm:$0xff]
        %v10076 = vld [vmem:[#allocation3 + $0x2f] sm:$0xff]
        %v10077 = vld [vmem:[#allocation3 + $0x37] sm:$0xff]
        %v10078 = vld [vmem:[#allocation3 + $0x3f] sm:$0xff]
        %v10079 = vld [vmem:[#allocation3 + $0x47] sm:$0xff]
        %v10080 = vld [vmem:[#allocation3 + $0x4f] sm:$0xff]
        %v10081 = vld [vmem:[#allocation3 + $0x57] sm:$0xff]
        %v10082 = vld [vmem:[#allocation3 + $0x5f] sm:$0xff]
        %v10083 = vld [vmem:[#allocation3 + $0x67] sm:$0xff]
        %v10084 = vld [vmem:[#allocation3 + $0x6f] sm:$0xff]
        %v10085 = vld [vmem:[#allocation3 + $0x77] sm:$0xff]
        %v10086 = vld [vmem:[#allocation3 + $0x7f] sm:$0xff]
        %v10087 = vld [vmem:[#allocation3 + $0x87] sm:$0xff]
        %v10088 = vld [vmem:[#allocation3 + $0x8f] sm:$0xff]
        %v10089 = vld [vmem:[#allocation3 + $0x97] sm:$0xff]
        %v10090 = vld [vmem:[#allocation3 + $0x9f] sm:$0xff]
        %v10091 = vld [vmem:[#allocation3 + $0xa7] sm:$0xff]
        %v10092 = vld [vmem:[#allocation3 + $0xaf] sm:$0xff]
        %v10093 = vld [vmem:[#allocation3 + $0xb7] sm:$0xff]
        %v10094 = vld [vmem:[#allocation3 + $0xbf] sm:$0xff]
        %v10095 = vld [vmem:[#allocation3 + $0xc7] sm:$0xff]
        %v10096 = vld [vmem:[#allocation3 + $0xcf] sm:$0xff]
        %v10097 = vld [vmem:[#allocation3 + $0xd7] sm:$0xff]
        %v10098 = vld [vmem:[#allocation3 + $0xdf] sm:$0xff]
        %v10099 = vld [vmem:[#allocation3 + $0xe7] sm:$0xff]
        %v10100 = vld [vmem:[#allocation3 + $0xef] sm:$0xff]
        %v10101 = vld [vmem:[#allocation3 + $0xf7] sm:$0xff]
        %v10102 = vld [vmem:[#allocation3 + $0xff] sm:$0xff]
        %v10103 = vld [vmem:[#allocation3 + $0x107] sm:$0xff]
        %v10104 = vld [vmem:[#allocation3 + $0x10f] sm:$0xff]
        %v10105 = vld [vmem:[#allocation3 + $0x117] sm:$0xff]
        %v10106 = vld [vmem:[#allocation3 + $0x11f] sm:$0xff]
        %v10107 = vmul.f32 %v10075, %v499
        %v10108 = vmul.f32 %v10076, %v503
        %v10109 = vmul.f32 %v10077, %v507
        %v10110 = vmul.f32 %v10078, %v511
        %v10111 = vmul.f32 %v10079, %v515
        %v10112 = vmul.f32 %v10080, %v519
        %v10113 = vmul.f32 %v10081, %v523
        %v10114 = vmul.f32 %v10082, %v527
        %v10115 = vmul.f32 %v10083, %v531
        %v10116 = vmul.f32 %v10084, %v535
        %v10117 = vmul.f32 %v10085, %v539
        %v10118 = vmul.f32 %v10086, %v543
        %v10119 = vmul.f32 %v10087, %v547
        %v10120 = vmul.f32 %v10088, %v551
        %v10121 = vmul.f32 %v10089, %v555
        %v10122 = vmul.f32 %v10090, %v559
        %v10123 = vmul.f32 %v10091, %v563
        %v10124 = vmul.f32 %v10092, %v567
        %v10125 = vmul.f32 %v10093, %v571
        %v10126 = vmul.f32 %v10094, %v575
        %v10127 = vmul.f32 %v10095, %v579
        %v10128 = vmul.f32 %v10096, %v583
        %v10129 = vmul.f32 %v10097, %v587
        %v10130 = vmul.f32 %v10098, %v591
        %v10131 = vmul.f32 %v10099, %v595
        %v10132 = vmul.f32 %v10100, %v599
        %v10133 = vmul.f32 %v10101, %v603
        %v10134 = vmul.f32 %v10102, %v607
        %v10135 = vmul.f32 %v10103, %v611
        %v10136 = vmul.f32 %v10104, %v615
        %v10137 = vmul.f32 %v10105, %v619
        %v10138 = vmul.f32 %v10106, %v623
        %v10139 = vpack.c.bf16 %v10108, %v10107
        %v10140 = vpack.c.bf16 %v10110, %v10109
        %v10141 = vpack.c.bf16 %v10112, %v10111
        %v10142 = vpack.c.bf16 %v10114, %v10113
        %v10143 = vpack.c.bf16 %v10116, %v10115
        %v10144 = vpack.c.bf16 %v10118, %v10117
        %v10145 = vpack.c.bf16 %v10120, %v10119
        %v10146 = vpack.c.bf16 %v10122, %v10121
        %v10147 = vpack.c.bf16 %v10124, %v10123
        %v10148 = vpack.c.bf16 %v10126, %v10125
        %v10149 = vpack.c.bf16 %v10128, %v10127
        %v10150 = vpack.c.bf16 %v10130, %v10129
        %v10151 = vpack.c.bf16 %v10132, %v10131
        %v10152 = vpack.c.bf16 %v10134, %v10133
        %v10153 = vpack.c.bf16 %v10136, %v10135
        %v10154 = vpack.c.bf16 %v10138, %v10137
        %s10155 = scalar_lea.vmem %s6, 384
        %v10156 = vld [vmem:[%s10155] sm:$0xf]
        %v10157 = vld [vmem:[%s10155 + $0x4] sm:$0xf]
        %v10158 = vld [vmem:[%s10155 + $0x8] sm:$0xf]
        %v10159 = vld [vmem:[%s10155 + $0xc] sm:$0xf]
        %v10160 = vld [vmem:[%s10155 + $0x10] sm:$0xf]
        %v10161 = vld [vmem:[%s10155 + $0x14] sm:$0xf]
        %v10162 = vld [vmem:[%s10155 + $0x18] sm:$0xf]
        %v10163 = vld [vmem:[%s10155 + $0x1c] sm:$0xf]
        %v10164 = vld [vmem:[%s10155 + $0x20] sm:$0xf]
        %v10165 = vld [vmem:[%s10155 + $0x24] sm:$0xf]
        %v10166 = vld [vmem:[%s10155 + $0x28] sm:$0xf]
        %v10167 = vld [vmem:[%s10155 + $0x2c] sm:$0xf]
        %v10168 = vld [vmem:[%s10155 + $0x30] sm:$0xf]
        %v10169 = vld [vmem:[%s10155 + $0x34] sm:$0xf]
        %v10170 = vld [vmem:[%s10155 + $0x38] sm:$0xf]
        %v10171 = vld [vmem:[%s10155 + $0x3c] sm:$0xf]
        %v10188 = vunpack.c.l.b16 %v10156
        %v10189 = vunpack.c.l.b16 %v10157
        %v10190 = vunpack.c.l.b16 %v10158
        %v10191 = vunpack.c.l.b16 %v10159
        %v10192 = vunpack.c.l.b16 %v10160
        %v10193 = vunpack.c.l.b16 %v10161
        %v10194 = vunpack.c.l.b16 %v10162
        %v10195 = vunpack.c.l.b16 %v10163
        %v10196 = vunpack.c.l.b16 %v10164
        %v10197 = vunpack.c.l.b16 %v10165
        %v10198 = vunpack.c.l.b16 %v10166
        %v10199 = vunpack.c.l.b16 %v10167
        %v10200 = vunpack.c.l.b16 %v10168
        %v10201 = vunpack.c.l.b16 %v10169
        %v10202 = vunpack.c.l.b16 %v10170
        %v10203 = vunpack.c.l.b16 %v10171
        %v10204 = vpack.c.b16 %v10189, %v10188
        %v10205 = vpack.c.b16 %v10191, %v10190
        %v10206 = vpack.c.b16 %v10193, %v10192
        %v10207 = vpack.c.b16 %v10195, %v10194
        %v10208 = vpack.c.b16 %v10197, %v10196
        %v10209 = vpack.c.b16 %v10199, %v10198
        %v10210 = vpack.c.b16 %v10201, %v10200
        %v10211 = vpack.c.b16 %v10203, %v10202
        %10220 = vmatprep.subr.bf16.mxu0 0
        %10221 = vmatpush1.bf16.msra.mxu0 %v10204
        %10222 = vmatprep.subr.bf16.mxu0 0
        %10223 = vmatpush1.bf16.msra.mxu0 %v10205
        %10224 = vmatprep.subr.bf16.mxu0 0
        %10225 = vmatpush1.bf16.msra.mxu0 %v10206
        %10226 = vmatprep.subr.bf16.mxu0 0
        %10227 = vmatpush1.bf16.msra.mxu0 %v10207
        %10228 = vmatprep.subr.bf16.mxu0 0
        %10229 = vmatpush1.bf16.msra.mxu0 %v10208
        %10230 = vmatprep.subr.bf16.mxu0 0
        %10231 = vmatpush1.bf16.msra.mxu0 %v10209
        %10232 = vmatprep.subr.bf16.mxu0 0
        %10233 = vmatpush1.bf16.msra.mxu0 %v10210
        %10234 = vmatprep.subr.bf16.mxu0 0
        %10235 = vmatpush1.bf16.msra.mxu0 %v10211
        %10236 = vmatprep.subr.bf16.mxu0 0
        %10237 = vmatpush1.bf16.msra.mxu0 0
        %10238 = vmatprep.subr.bf16.mxu0 0
        %10239 = vmatpush1.bf16.msra.mxu0 0
        %10240 = vmatprep.subr.bf16.mxu0 0
        %10241 = vmatpush1.bf16.msra.mxu0 0
        %10242 = vmatprep.subr.bf16.mxu0 0
        %10243 = vmatpush1.bf16.msra.mxu0 0
        %10244 = vmatprep.subr.bf16.mxu0 0
        %10245 = vmatpush1.bf16.msra.mxu0 0
        %10246 = vmatprep.subr.bf16.mxu0 0
        %10247 = vmatpush1.bf16.msra.mxu0 0
        %10248 = vmatprep.subr.bf16.mxu0 0
        %10249 = vmatpush1.bf16.msra.mxu0 0
        %10250 = vmatprep.subr.bf16.mxu0 0
        %10251 = vmatpush1.bf16.msra.mxu0 0
        %10252 = vmatprep.mubr.bf16.mxu0 0
        %10253 = vmatmul.mubr.bf16.gmra.mrb[0].mxu0 %v10139
        %v10254 = vpop.f32.mrb[0].mxu0
        %v10255 = vadd.f32 0.0, %v10254
        %v10256 = vpop.f32.mrb[0].mxu0
        %v10257 = vpop.f32.mrb[0].mxu0
        %v10258 = vadd.f32 0.0, %v10257
        %v10259 = vpop.f32.mrb[0].mxu0
        %10260 = vmatprep.mubr.bf16.mxu0 0
        %10261 = vmatmul.mubr.bf16.gmra.mrb[0].mxu0 %v10140
        %v10262 = vpop.f32.mrb[0].mxu0
        %v10263 = vadd.f32 0.0, %v10262
        %v10264 = vpop.f32.mrb[0].mxu0
        %v10265 = vpop.f32.mrb[0].mxu0
        %v10266 = vadd.f32 0.0, %v10265
        %v10267 = vpop.f32.mrb[0].mxu0
        %10268 = vmatprep.mubr.bf16.mxu0 0
        %10269 = vmatmul.mubr.bf16.gmra.mrb[0].mxu0 %v10141
        %v10270 = vpop.f32.mrb[0].mxu0
        %v10271 = vadd.f32 0.0, %v10270
        %v10272 = vpop.f32.mrb[0].mxu0
        %v10273 = vpop.f32.mrb[0].mxu0
        %v10274 = vadd.f32 0.0, %v10273
        %v10275 = vpop.f32.mrb[0].mxu0
        %10276 = vmatprep.mubr.bf16.mxu0 0
        %10277 = vmatmul.mubr.bf16.gmra.mrb[0].mxu0 %v10142
        %v10278 = vpop.f32.mrb[0].mxu0
        %v10279 = vadd.f32 0.0, %v10278
        %v10280 = vpop.f32.mrb[0].mxu0
        %v10281 = vpop.f32.mrb[0].mxu0
        %v10282 = vadd.f32 0.0, %v10281
        %v10283 = vpop.f32.mrb[0].mxu0
        %10284 = vmatprep.mubr.bf16.mxu0 0
        %10285 = vmatmul.mubr.bf16.gmra.mrb[0].mxu0 %v10143
        %v10286 = vpop.f32.mrb[0].mxu0
        %v10287 = vadd.f32 0.0, %v10286
        %v10288 = vpop.f32.mrb[0].mxu0
        %v10289 = vpop.f32.mrb[0].mxu0
        %v10290 = vadd.f32 0.0, %v10289
        %v10291 = vpop.f32.mrb[0].mxu0
        %10292 = vmatprep.mubr.bf16.mxu0 0
        %10293 = vmatmul.mubr.bf16.gmra.mrb[0].mxu0 %v10144
        %v10294 = vpop.f32.mrb[0].mxu0
        %v10295 = vadd.f32 0.0, %v10294
        %v10296 = vpop.f32.mrb[0].mxu0
        %v10297 = vpop.f32.mrb[0].mxu0
        %v10298 = vadd.f32 0.0, %v10297
        %v10299 = vpop.f32.mrb[0].mxu0
        %10300 = vmatprep.mubr.bf16.mxu0 0
        %10301 = vmatmul.mubr.bf16.gmra.mrb[0].mxu0 %v10145
        %v10302 = vpop.f32.mrb[0].mxu0
        %v10303 = vadd.f32 0.0, %v10302
        %v10304 = vpop.f32.mrb[0].mxu0
        %v10305 = vpop.f32.mrb[0].mxu0
        %v10306 = vadd.f32 0.0, %v10305
        %v10307 = vpop.f32.mrb[0].mxu0
        %10308 = vmatprep.mubr.bf16.mxu0 0
        %10309 = vmatmul.mubr.bf16.gmra.mrb[0].mxu0 %v10146
        %v10310 = vpop.f32.mrb[0].mxu0
        %v10311 = vadd.f32 0.0, %v10310
        %v10312 = vpop.f32.mrb[0].mxu0
        %v10313 = vpop.f32.mrb[0].mxu0
        %v10314 = vadd.f32 0.0, %v10313
        %v10315 = vpop.f32.mrb[0].mxu0
        %10316 = vmatprep.mubr.bf16.mxu0 0
        %10317 = vmatmul.mubr.bf16.gmra.mrb[0].mxu0 %v10147
        %v10318 = vpop.f32.mrb[0].mxu0
        %v10319 = vadd.f32 0.0, %v10318
        %v10320 = vpop.f32.mrb[0].mxu0
        %v10321 = vpop.f32.mrb[0].mxu0
        %v10322 = vadd.f32 0.0, %v10321
        %v10323 = vpop.f32.mrb[0].mxu0
        %10324 = vmatprep.mubr.bf16.mxu0 0
        %10325 = vmatmul.mubr.bf16.gmra.mrb[0].mxu0 %v10148
        %v10326 = vpop.f32.mrb[0].mxu0
        %v10327 = vadd.f32 0.0, %v10326
        %v10328 = vpop.f32.mrb[0].mxu0
        %v10329 = vpop.f32.mrb[0].mxu0
        %v10330 = vadd.f32 0.0, %v10329
        %v10331 = vpop.f32.mrb[0].mxu0
        %10332 = vmatprep.mubr.bf16.mxu0 0
        %10333 = vmatmul.mubr.bf16.gmra.mrb[0].mxu0 %v10149
        %v10334 = vpop.f32.mrb[0].mxu0
        %v10335 = vadd.f32 0.0, %v10334
        %v10336 = vpop.f32.mrb[0].mxu0
        %v10337 = vpop.f32.mrb[0].mxu0
        %v10338 = vadd.f32 0.0, %v10337
        %v10339 = vpop.f32.mrb[0].mxu0
        %10340 = vmatprep.mubr.bf16.mxu0 0
        %10341 = vmatmul.mubr.bf16.gmra.mrb[0].mxu0 %v10150
        %v10342 = vpop.f32.mrb[0].mxu0
        %v10343 = vadd.f32 0.0, %v10342
        %v10344 = vpop.f32.mrb[0].mxu0
        %v10345 = vpop.f32.mrb[0].mxu0
        %v10346 = vadd.f32 0.0, %v10345
        %v10347 = vpop.f32.mrb[0].mxu0
        %10348 = vmatprep.mubr.bf16.mxu0 0
        %10349 = vmatmul.mubr.bf16.gmra.mrb[0].mxu0 %v10151
        %v10350 = vpop.f32.mrb[0].mxu0
        %v10351 = vadd.f32 0.0, %v10350
        %v10352 = vpop.f32.mrb[0].mxu0
        %v10353 = vpop.f32.mrb[0].mxu0
        %v10354 = vadd.f32 0.0, %v10353
        %v10355 = vpop.f32.mrb[0].mxu0
        %10356 = vmatprep.mubr.bf16.mxu0 0
        %10357 = vmatmul.mubr.bf16.gmra.mrb[0].mxu0 %v10152
        %v10358 = vpop.f32.mrb[0].mxu0
        %v10359 = vadd.f32 0.0, %v10358
        %v10360 = vpop.f32.mrb[0].mxu0
        %v10361 = vpop.f32.mrb[0].mxu0
        %v10362 = vadd.f32 0.0, %v10361
        %v10363 = vpop.f32.mrb[0].mxu0
        %10364 = vmatprep.mubr.bf16.mxu0 0
        %10365 = vmatmul.mubr.bf16.gmra.mrb[0].mxu0 %v10153
        %v10366 = vpop.f32.mrb[0].mxu0
        %v10367 = vadd.f32 0.0, %v10366
        %v10368 = vpop.f32.mrb[0].mxu0
        %v10369 = vpop.f32.mrb[0].mxu0
        %v10370 = vadd.f32 0.0, %v10369
        %v10371 = vpop.f32.mrb[0].mxu0
        %10372 = vmatprep.mubr.bf16.mxu0 0
        %10373 = vmatmul.mubr.bf16.gmra.mrb[0].mxu0 %v10154
        %v10374 = vpop.f32.mrb[0].mxu0
        %v10375 = vadd.f32 0.0, %v10374
        %v10376 = vpop.f32.mrb[0].mxu0
        %v10377 = vpop.f32.mrb[0].mxu0
        %v10378 = vadd.f32 0.0, %v10377
        %v10379 = vpop.f32.mrb[0].mxu0
        %10380 = vdwg.mxu0
        %v10381 = vadd.f32 %v10043, %v10255
        %v10382 = vadd.f32 %v10044, %v10258
        %v10383 = vadd.f32 %v10045, %v10263
        %v10384 = vadd.f32 %v10046, %v10266
        %v10385 = vadd.f32 %v10047, %v10271
        %v10386 = vadd.f32 %v10048, %v10274
        %v10387 = vadd.f32 %v10049, %v10279
        %v10388 = vadd.f32 %v10050, %v10282
        %v10389 = vadd.f32 %v10051, %v10287
        %v10390 = vadd.f32 %v10052, %v10290
        %v10391 = vadd.f32 %v10053, %v10295
        %v10392 = vadd.f32 %v10054, %v10298
        %v10393 = vadd.f32 %v10055, %v10303
        %v10394 = vadd.f32 %v10056, %v10306
        %v10395 = vadd.f32 %v10057, %v10311
        %v10396 = vadd.f32 %v10058, %v10314
        %v10397 = vadd.f32 %v10059, %v10319
        %v10398 = vadd.f32 %v10060, %v10322
        %v10399 = vadd.f32 %v10061, %v10327
        %v10400 = vadd.f32 %v10062, %v10330
        %v10401 = vadd.f32 %v10063, %v10335
        %v10402 = vadd.f32 %v10064, %v10338
        %v10403 = vadd.f32 %v10065, %v10343
        %v10404 = vadd.f32 %v10066, %v10346
        %v10405 = vadd.f32 %v10067, %v10351
        %v10406 = vadd.f32 %v10068, %v10354
        %v10407 = vadd.f32 %v10069, %v10359
        %v10408 = vadd.f32 %v10070, %v10362
        %v10409 = vadd.f32 %v10071, %v10367
        %v10410 = vadd.f32 %v10072, %v10370
        %v10411 = vadd.f32 %v10073, %v10375
        %v10412 = vadd.f32 %v10074, %v10378
        %v10413 = vld [vmem:[#allocation3 + $0x28] sm:$0xff]
        %v10414 = vld [vmem:[#allocation3 + $0x30] sm:$0xff]
        %v10415 = vld [vmem:[#allocation3 + $0x38] sm:$0xff]
        %v10416 = vld [vmem:[#allocation3 + $0x40] sm:$0xff]
        %v10417 = vld [vmem:[#allocation3 + $0x48] sm:$0xff]
        %v10418 = vld [vmem:[#allocation3 + $0x50] sm:$0xff]
        %v10419 = vld [vmem:[#allocation3 + $0x58] sm:$0xff]
        %v10420 = vld [vmem:[#allocation3 + $0x60] sm:$0xff]
        %v10421 = vld [vmem:[#allocation3 + $0x68] sm:$0xff]
        %v10422 = vld [vmem:[#allocation3 + $0x70] sm:$0xff]
        %v10423 = vld [vmem:[#allocation3 + $0x78] sm:$0xff]
        %v10424 = vld [vmem:[#allocation3 + $0x80] sm:$0xff]
        %v10425 = vld [vmem:[#allocation3 + $0x88] sm:$0xff]
        %v10426 = vld [vmem:[#allocation3 + $0x90] sm:$0xff]
        %v10427 = vld [vmem:[#allocation3 + $0x98] sm:$0xff]
        %v10428 = vld [vmem:[#allocation3 + $0xa0] sm:$0xff]
        %v10429 = vld [vmem:[#allocation3 + $0xa8] sm:$0xff]
        %v10430 = vld [vmem:[#allocation3 + $0xb0] sm:$0xff]
        %v10431 = vld [vmem:[#allocation3 + $0xb8] sm:$0xff]
        %v10432 = vld [vmem:[#allocation3 + $0xc0] sm:$0xff]
        %v10433 = vld [vmem:[#allocation3 + $0xc8] sm:$0xff]
        %v10434 = vld [vmem:[#allocation3 + $0xd0] sm:$0xff]
        %v10435 = vld [vmem:[#allocation3 + $0xd8] sm:$0xff]
        %v10436 = vld [vmem:[#allocation3 + $0xe0] sm:$0xff]
        %v10437 = vld [vmem:[#allocation3 + $0xe8] sm:$0xff]
        %v10438 = vld [vmem:[#allocation3 + $0xf0] sm:$0xff]
        %v10439 = vld [vmem:[#allocation3 + $0xf8] sm:$0xff]
        %v10440 = vld [vmem:[#allocation3 + $0x100] sm:$0xff]
        %v10441 = vld [vmem:[#allocation3 + $0x108] sm:$0xff]
        %v10442 = vld [vmem:[#allocation3 + $0x110] sm:$0xff]
        %v10443 = vld [vmem:[#allocation3 + $0x118] sm:$0xff]
        %v10444 = vld [vmem:[#allocation3 + $0x120] sm:$0xff]
        %v10445 = vpack.c.bf16 %v10414, %v10413
        %v10446 = vpack.c.bf16 %v10416, %v10415
        %v10447 = vpack.c.bf16 %v10418, %v10417
        %v10448 = vpack.c.bf16 %v10420, %v10419
        %v10449 = vpack.c.bf16 %v10422, %v10421
        %v10450 = vpack.c.bf16 %v10424, %v10423
        %v10451 = vpack.c.bf16 %v10426, %v10425
        %v10452 = vpack.c.bf16 %v10428, %v10427
        %v10453 = vpack.c.bf16 %v10430, %v10429
        %v10454 = vpack.c.bf16 %v10432, %v10431
        %v10455 = vpack.c.bf16 %v10434, %v10433
        %v10456 = vpack.c.bf16 %v10436, %v10435
        %v10457 = vpack.c.bf16 %v10438, %v10437
        %v10458 = vpack.c.bf16 %v10440, %v10439
        %v10459 = vpack.c.bf16 %v10442, %v10441
        %v10460 = vpack.c.bf16 %v10444, %v10443
        %s10461 = scalar_lea.vmem %s6, 448
        %v10462 = vld [vmem:[%s10461] sm:$0xf]
        %v10463 = vld [vmem:[%s10461 + $0x4] sm:$0xf]
        %v10464 = vld [vmem:[%s10461 + $0x8] sm:$0xf]
        %v10465 = vld [vmem:[%s10461 + $0xc] sm:$0xf]
        %v10466 = vld [vmem:[%s10461 + $0x10] sm:$0xf]
        %v10467 = vld [vmem:[%s10461 + $0x14] sm:$0xf]
        %v10468 = vld [vmem:[%s10461 + $0x18] sm:$0xf]
        %v10469 = vld [vmem:[%s10461 + $0x1c] sm:$0xf]
        %v10470 = vld [vmem:[%s10461 + $0x20] sm:$0xf]
        %v10471 = vld [vmem:[%s10461 + $0x24] sm:$0xf]
        %v10472 = vld [vmem:[%s10461 + $0x28] sm:$0xf]
        %v10473 = vld [vmem:[%s10461 + $0x2c] sm:$0xf]
        %v10474 = vld [vmem:[%s10461 + $0x30] sm:$0xf]
        %v10475 = vld [vmem:[%s10461 + $0x34] sm:$0xf]
        %v10476 = vld [vmem:[%s10461 + $0x38] sm:$0xf]
        %v10477 = vld [vmem:[%s10461 + $0x3c] sm:$0xf]
        %v10494 = vunpack.c.l.b16 %v10462
        %v10495 = vunpack.c.l.b16 %v10463
        %v10496 = vunpack.c.l.b16 %v10464
        %v10497 = vunpack.c.l.b16 %v10465
        %v10498 = vunpack.c.l.b16 %v10466
        %v10499 = vunpack.c.l.b16 %v10467
        %v10500 = vunpack.c.l.b16 %v10468
        %v10501 = vunpack.c.l.b16 %v10469
        %v10502 = vunpack.c.l.b16 %v10470
        %v10503 = vunpack.c.l.b16 %v10471
        %v10504 = vunpack.c.l.b16 %v10472
        %v10505 = vunpack.c.l.b16 %v10473
        %v10506 = vunpack.c.l.b16 %v10474
        %v10507 = vunpack.c.l.b16 %v10475
        %v10508 = vunpack.c.l.b16 %v10476
        %v10509 = vunpack.c.l.b16 %v10477
        %v10510 = vpack.c.b16 %v10495, %v10494
        %v10511 = vpack.c.b16 %v10497, %v10496
        %v10512 = vpack.c.b16 %v10499, %v10498
        %v10513 = vpack.c.b16 %v10501, %v10500
        %v10514 = vpack.c.b16 %v10503, %v10502
        %v10515 = vpack.c.b16 %v10505, %v10504
        %v10516 = vpack.c.b16 %v10507, %v10506
        %v10517 = vpack.c.b16 %v10509, %v10508
        %10526 = vmatprep.subr.bf16.mxu0 0
        %10527 = vmatpush1.bf16.msra.mxu0 %v10510
        %10528 = vmatprep.subr.bf16.mxu0 0
        %10529 = vmatpush1.bf16.msra.mxu0 %v10511
        %10530 = vmatprep.subr.bf16.mxu0 0
        %10531 = vmatpush1.bf16.msra.mxu0 %v10512
        %10532 = vmatprep.subr.bf16.mxu0 0
        %10533 = vmatpush1.bf16.msra.mxu0 %v10513
        %10534 = vmatprep.subr.bf16.mxu0 0
        %10535 = vmatpush1.bf16.msra.mxu0 %v10514
        %10536 = vmatprep.subr.bf16.mxu0 0
        %10537 = vmatpush1.bf16.msra.mxu0 %v10515
        %10538 = vmatprep.subr.bf16.mxu0 0
        %10539 = vmatpush1.bf16.msra.mxu0 %v10516
        %10540 = vmatprep.subr.bf16.mxu0 0
        %10541 = vmatpush1.bf16.msra.mxu0 %v10517
        %10542 = vmatprep.subr.bf16.mxu0 0
        %10543 = vmatpush1.bf16.msra.mxu0 0
        %10544 = vmatprep.subr.bf16.mxu0 0
        %10545 = vmatpush1.bf16.msra.mxu0 0
        %10546 = vmatprep.subr.bf16.mxu0 0
        %10547 = vmatpush1.bf16.msra.mxu0 0
        %10548 = vmatprep.subr.bf16.mxu0 0
        %10549 = vmatpush1.bf16.msra.mxu0 0
        %10550 = vmatprep.subr.bf16.mxu0 0
        %10551 = vmatpush1.bf16.msra.mxu0 0
        %10552 = vmatprep.subr.bf16.mxu0 0
        %10553 = vmatpush1.bf16.msra.mxu0 0
        %10554 = vmatprep.subr.bf16.mxu0 0
        %10555 = vmatpush1.bf16.msra.mxu0 0
        %10556 = vmatprep.subr.bf16.mxu0 0
        %10557 = vmatpush1.bf16.msra.mxu0 0
        %10558 = vmatprep.mubr.bf16.mxu0 0
        %10559 = vmatmul.mubr.bf16.gmra.mrb[0].mxu0 %v10445
        %v10560 = vpop.f32.mrb[0].mxu0
        %v10561 = vadd.f32 0.0, %v10560
        %v10562 = vpop.f32.mrb[0].mxu0
        %v10563 = vpop.f32.mrb[0].mxu0
        %v10564 = vadd.f32 0.0, %v10563
        %v10565 = vpop.f32.mrb[0].mxu0
        %10566 = vmatprep.mubr.bf16.mxu0 0
        %10567 = vmatmul.mubr.bf16.gmra.mrb[0].mxu0 %v10446
        %v10568 = vpop.f32.mrb[0].mxu0
        %v10569 = vadd.f32 0.0, %v10568
        %v10570 = vpop.f32.mrb[0].mxu0
        %v10571 = vpop.f32.mrb[0].mxu0
        %v10572 = vadd.f32 0.0, %v10571
        %v10573 = vpop.f32.mrb[0].mxu0
        %10574 = vmatprep.mubr.bf16.mxu0 0
        %10575 = vmatmul.mubr.bf16.gmra.mrb[0].mxu0 %v10447
        %v10576 = vpop.f32.mrb[0].mxu0
        %v10577 = vadd.f32 0.0, %v10576
        %v10578 = vpop.f32.mrb[0].mxu0
        %v10579 = vpop.f32.mrb[0].mxu0
        %v10580 = vadd.f32 0.0, %v10579
        %v10581 = vpop.f32.mrb[0].mxu0
        %10582 = vmatprep.mubr.bf16.mxu0 0
        %10583 = vmatmul.mubr.bf16.gmra.mrb[0].mxu0 %v10448
        %v10584 = vpop.f32.mrb[0].mxu0
        %v10585 = vadd.f32 0.0, %v10584
        %v10586 = vpop.f32.mrb[0].mxu0
        %v10587 = vpop.f32.mrb[0].mxu0
        %v10588 = vadd.f32 0.0, %v10587
        %v10589 = vpop.f32.mrb[0].mxu0
        %10590 = vmatprep.mubr.bf16.mxu0 0
        %10591 = vmatmul.mubr.bf16.gmra.mrb[0].mxu0 %v10449
        %v10592 = vpop.f32.mrb[0].mxu0
        %v10593 = vadd.f32 0.0, %v10592
        %v10594 = vpop.f32.mrb[0].mxu0
        %v10595 = vpop.f32.mrb[0].mxu0
        %v10596 = vadd.f32 0.0, %v10595
        %v10597 = vpop.f32.mrb[0].mxu0
        %10598 = vmatprep.mubr.bf16.mxu0 0
        %10599 = vmatmul.mubr.bf16.gmra.mrb[0].mxu0 %v10450
        %v10600 = vpop.f32.mrb[0].mxu0
        %v10601 = vadd.f32 0.0, %v10600
        %v10602 = vpop.f32.mrb[0].mxu0
        %v10603 = vpop.f32.mrb[0].mxu0
        %v10604 = vadd.f32 0.0, %v10603
        %v10605 = vpop.f32.mrb[0].mxu0
        %10606 = vmatprep.mubr.bf16.mxu0 0
        %10607 = vmatmul.mubr.bf16.gmra.mrb[0].mxu0 %v10451
        %v10608 = vpop.f32.mrb[0].mxu0
        %v10609 = vadd.f32 0.0, %v10608
        %v10610 = vpop.f32.mrb[0].mxu0
        %v10611 = vpop.f32.mrb[0].mxu0
        %v10612 = vadd.f32 0.0, %v10611
        %v10613 = vpop.f32.mrb[0].mxu0
        %10614 = vmatprep.mubr.bf16.mxu0 0
        %10615 = vmatmul.mubr.bf16.gmra.mrb[0].mxu0 %v10452
        %v10616 = vpop.f32.mrb[0].mxu0
        %v10617 = vadd.f32 0.0, %v10616
        %v10618 = vpop.f32.mrb[0].mxu0
        %v10619 = vpop.f32.mrb[0].mxu0
        %v10620 = vadd.f32 0.0, %v10619
        %v10621 = vpop.f32.mrb[0].mxu0
        %10622 = vmatprep.mubr.bf16.mxu0 0
        %10623 = vmatmul.mubr.bf16.gmra.mrb[0].mxu0 %v10453
        %v10624 = vpop.f32.mrb[0].mxu0
        %v10625 = vadd.f32 0.0, %v10624
        %v10626 = vpop.f32.mrb[0].mxu0
        %v10627 = vpop.f32.mrb[0].mxu0
        %v10628 = vadd.f32 0.0, %v10627
        %v10629 = vpop.f32.mrb[0].mxu0
        %10630 = vmatprep.mubr.bf16.mxu0 0
        %10631 = vmatmul.mubr.bf16.gmra.mrb[0].mxu0 %v10454
        %v10632 = vpop.f32.mrb[0].mxu0
        %v10633 = vadd.f32 0.0, %v10632
        %v10634 = vpop.f32.mrb[0].mxu0
        %v10635 = vpop.f32.mrb[0].mxu0
        %v10636 = vadd.f32 0.0, %v10635
        %v10637 = vpop.f32.mrb[0].mxu0
        %10638 = vmatprep.mubr.bf16.mxu0 0
        %10639 = vmatmul.mubr.bf16.gmra.mrb[0].mxu0 %v10455
        %v10640 = vpop.f32.mrb[0].mxu0
        %v10641 = vadd.f32 0.0, %v10640
        %v10642 = vpop.f32.mrb[0].mxu0
        %v10643 = vpop.f32.mrb[0].mxu0
        %v10644 = vadd.f32 0.0, %v10643
        %v10645 = vpop.f32.mrb[0].mxu0
        %10646 = vmatprep.mubr.bf16.mxu0 0
        %10647 = vmatmul.mubr.bf16.gmra.mrb[0].mxu0 %v10456
        %v10648 = vpop.f32.mrb[0].mxu0
        %v10649 = vadd.f32 0.0, %v10648
        %v10650 = vpop.f32.mrb[0].mxu0
        %v10651 = vpop.f32.mrb[0].mxu0
        %v10652 = vadd.f32 0.0, %v10651
        %v10653 = vpop.f32.mrb[0].mxu0
        %10654 = vmatprep.mubr.bf16.mxu0 0
        %10655 = vmatmul.mubr.bf16.gmra.mrb[0].mxu0 %v10457
        %v10656 = vpop.f32.mrb[0].mxu0
        %v10657 = vadd.f32 0.0, %v10656
        %v10658 = vpop.f32.mrb[0].mxu0
        %v10659 = vpop.f32.mrb[0].mxu0
        %v10660 = vadd.f32 0.0, %v10659
        %v10661 = vpop.f32.mrb[0].mxu0
        %10662 = vmatprep.mubr.bf16.mxu0 0
        %10663 = vmatmul.mubr.bf16.gmra.mrb[0].mxu0 %v10458
        %v10664 = vpop.f32.mrb[0].mxu0
        %v10665 = vadd.f32 0.0, %v10664
        %v10666 = vpop.f32.mrb[0].mxu0
        %v10667 = vpop.f32.mrb[0].mxu0
        %v10668 = vadd.f32 0.0, %v10667
        %v10669 = vpop.f32.mrb[0].mxu0
        %10670 = vmatprep.mubr.bf16.mxu0 0
        %10671 = vmatmul.mubr.bf16.gmra.mrb[0].mxu0 %v10459
        %v10672 = vpop.f32.mrb[0].mxu0
        %v10673 = vadd.f32 0.0, %v10672
        %v10674 = vpop.f32.mrb[0].mxu0
        %v10675 = vpop.f32.mrb[0].mxu0
        %v10676 = vadd.f32 0.0, %v10675
        %v10677 = vpop.f32.mrb[0].mxu0
        %10678 = vmatprep.mubr.bf16.mxu0 0
        %10679 = vmatmul.mubr.bf16.gmra.mrb[0].mxu0 %v10460
        %v10680 = vpop.f32.mrb[0].mxu0
        %v10681 = vadd.f32 0.0, %v10680
        %v10682 = vpop.f32.mrb[0].mxu0
        %v10683 = vpop.f32.mrb[0].mxu0
        %v10684 = vadd.f32 0.0, %v10683
        %v10685 = vpop.f32.mrb[0].mxu0
        %10686 = vdwg.mxu0
        %v10687 = vadd.f32 %v10381, %v10561
        %v10688 = vadd.f32 %v10382, %v10564
        %v10689 = vadd.f32 %v10383, %v10569
        %v10690 = vadd.f32 %v10384, %v10572
        %v10691 = vadd.f32 %v10385, %v10577
        %v10692 = vadd.f32 %v10386, %v10580
        %v10693 = vadd.f32 %v10387, %v10585
        %v10694 = vadd.f32 %v10388, %v10588
        %v10695 = vadd.f32 %v10389, %v10593
        %v10696 = vadd.f32 %v10390, %v10596
        %v10697 = vadd.f32 %v10391, %v10601
        %v10698 = vadd.f32 %v10392, %v10604
        %v10699 = vadd.f32 %v10393, %v10609
        %v10700 = vadd.f32 %v10394, %v10612
        %v10701 = vadd.f32 %v10395, %v10617
        %v10702 = vadd.f32 %v10396, %v10620
        %v10703 = vadd.f32 %v10397, %v10625
        %v10704 = vadd.f32 %v10398, %v10628
        %v10705 = vadd.f32 %v10399, %v10633
        %v10706 = vadd.f32 %v10400, %v10636
        %v10707 = vadd.f32 %v10401, %v10641
        %v10708 = vadd.f32 %v10402, %v10644
        %v10709 = vadd.f32 %v10403, %v10649
        %v10710 = vadd.f32 %v10404, %v10652
        %v10711 = vadd.f32 %v10405, %v10657
        %v10712 = vadd.f32 %v10406, %v10660
        %v10713 = vadd.f32 %v10407, %v10665
        %v10714 = vadd.f32 %v10408, %v10668
        %v10715 = vadd.f32 %v10409, %v10673
        %v10716 = vadd.f32 %v10410, %v10676
        %v10717 = vadd.f32 %v10411, %v10681
        %v10718 = vadd.f32 %v10412, %v10684
        %v10719 = vld [vmem:[#allocation3 + $0x29] sm:$0xff]
        %v10720 = vld [vmem:[#allocation3 + $0x31] sm:$0xff]
        %v10721 = vld [vmem:[#allocation3 + $0x39] sm:$0xff]
        %v10722 = vld [vmem:[#allocation3 + $0x41] sm:$0xff]
        %v10723 = vld [vmem:[#allocation3 + $0x49] sm:$0xff]
        %v10724 = vld [vmem:[#allocation3 + $0x51] sm:$0xff]
        %v10725 = vld [vmem:[#allocation3 + $0x59] sm:$0xff]
        %v10726 = vld [vmem:[#allocation3 + $0x61] sm:$0xff]
        %v10727 = vld [vmem:[#allocation3 + $0x69] sm:$0xff]
        %v10728 = vld [vmem:[#allocation3 + $0x71] sm:$0xff]
        %v10729 = vld [vmem:[#allocation3 + $0x79] sm:$0xff]
        %v10730 = vld [vmem:[#allocation3 + $0x81] sm:$0xff]
        %v10731 = vld [vmem:[#allocation3 + $0x89] sm:$0xff]
        %v10732 = vld [vmem:[#allocation3 + $0x91] sm:$0xff]
        %v10733 = vld [vmem:[#allocation3 + $0x99] sm:$0xff]
        %v10734 = vld [vmem:[#allocation3 + $0xa1] sm:$0xff]
        %v10735 = vld [vmem:[#allocation3 + $0xa9] sm:$0xff]
        %v10736 = vld [vmem:[#allocation3 + $0xb1] sm:$0xff]
        %v10737 = vld [vmem:[#allocation3 + $0xb9] sm:$0xff]
        %v10738 = vld [vmem:[#allocation3 + $0xc1] sm:$0xff]
        %v10739 = vld [vmem:[#allocation3 + $0xc9] sm:$0xff]
        %v10740 = vld [vmem:[#allocation3 + $0xd1] sm:$0xff]
        %v10741 = vld [vmem:[#allocation3 + $0xd9] sm:$0xff]
        %v10742 = vld [vmem:[#allocation3 + $0xe1] sm:$0xff]
        %v10743 = vld [vmem:[#allocation3 + $0xe9] sm:$0xff]
        %v10744 = vld [vmem:[#allocation3 + $0xf1] sm:$0xff]
        %v10745 = vld [vmem:[#allocation3 + $0xf9] sm:$0xff]
        %v10746 = vld [vmem:[#allocation3 + $0x101] sm:$0xff]
        %v10747 = vld [vmem:[#allocation3 + $0x109] sm:$0xff]
        %v10748 = vld [vmem:[#allocation3 + $0x111] sm:$0xff]
        %v10749 = vld [vmem:[#allocation3 + $0x119] sm:$0xff]
        %v10750 = vld [vmem:[#allocation3 + $0x121] sm:$0xff]
        %v10751 = vmul.f32 %v10719, %v1566
        %v10752 = vmul.f32 %v10720, %v1570
        %v10753 = vmul.f32 %v10721, %v1574
        %v10754 = vmul.f32 %v10722, %v1578
        %v10755 = vmul.f32 %v10723, %v1582
        %v10756 = vmul.f32 %v10724, %v1586
        %v10757 = vmul.f32 %v10725, %v1590
        %v10758 = vmul.f32 %v10726, %v1594
        %v10759 = vmul.f32 %v10727, %v1598
        %v10760 = vmul.f32 %v10728, %v1602
        %v10761 = vmul.f32 %v10729, %v1606
        %v10762 = vmul.f32 %v10730, %v1610
        %v10763 = vmul.f32 %v10731, %v1614
        %v10764 = vmul.f32 %v10732, %v1618
        %v10765 = vmul.f32 %v10733, %v1622
        %v10766 = vmul.f32 %v10734, %v1626
        %v10767 = vmul.f32 %v10735, %v1630
        %v10768 = vmul.f32 %v10736, %v1634
        %v10769 = vmul.f32 %v10737, %v1638
        %v10770 = vmul.f32 %v10738, %v1642
        %v10771 = vmul.f32 %v10739, %v1646
        %v10772 = vmul.f32 %v10740, %v1650
        %v10773 = vmul.f32 %v10741, %v1654
        %v10774 = vmul.f32 %v10742, %v1658
        %v10775 = vmul.f32 %v10743, %v1662
        %v10776 = vmul.f32 %v10744, %v1666
        %v10777 = vmul.f32 %v10745, %v1670
        %v10778 = vmul.f32 %v10746, %v1674
        %v10779 = vmul.f32 %v10747, %v1678
        %v10780 = vmul.f32 %v10748, %v1682
        %v10781 = vmul.f32 %v10749, %v1686
        %v10782 = vmul.f32 %v10750, %v1690
        %v10783 = vpack.c.bf16 %v10752, %v10751
        %v10784 = vpack.c.bf16 %v10754, %v10753
        %v10785 = vpack.c.bf16 %v10756, %v10755
        %v10786 = vpack.c.bf16 %v10758, %v10757
        %v10787 = vpack.c.bf16 %v10760, %v10759
        %v10788 = vpack.c.bf16 %v10762, %v10761
        %v10789 = vpack.c.bf16 %v10764, %v10763
        %v10790 = vpack.c.bf16 %v10766, %v10765
        %v10791 = vpack.c.bf16 %v10768, %v10767
        %v10792 = vpack.c.bf16 %v10770, %v10769
        %v10793 = vpack.c.bf16 %v10772, %v10771
        %v10794 = vpack.c.bf16 %v10774, %v10773
        %v10795 = vpack.c.bf16 %v10776, %v10775
        %v10796 = vpack.c.bf16 %v10778, %v10777
        %v10797 = vpack.c.bf16 %v10780, %v10779
        %v10798 = vpack.c.bf16 %v10782, %v10781
        %s10799 = scalar_lea.vmem %s6, 512
        %v10800 = vld [vmem:[%s10799] sm:$0xf]
        %v10801 = vld [vmem:[%s10799 + $0x4] sm:$0xf]
        %v10802 = vld [vmem:[%s10799 + $0x8] sm:$0xf]
        %v10803 = vld [vmem:[%s10799 + $0xc] sm:$0xf]
        %v10804 = vld [vmem:[%s10799 + $0x10] sm:$0xf]
        %v10805 = vld [vmem:[%s10799 + $0x14] sm:$0xf]
        %v10806 = vld [vmem:[%s10799 + $0x18] sm:$0xf]
        %v10807 = vld [vmem:[%s10799 + $0x1c] sm:$0xf]
        %v10808 = vld [vmem:[%s10799 + $0x20] sm:$0xf]
        %v10809 = vld [vmem:[%s10799 + $0x24] sm:$0xf]
        %v10810 = vld [vmem:[%s10799 + $0x28] sm:$0xf]
        %v10811 = vld [vmem:[%s10799 + $0x2c] sm:$0xf]
        %v10812 = vld [vmem:[%s10799 + $0x30] sm:$0xf]
        %v10813 = vld [vmem:[%s10799 + $0x34] sm:$0xf]
        %v10814 = vld [vmem:[%s10799 + $0x38] sm:$0xf]
        %v10815 = vld [vmem:[%s10799 + $0x3c] sm:$0xf]
        %v10832 = vunpack.c.l.b16 %v10800
        %v10833 = vunpack.c.l.b16 %v10801
        %v10834 = vunpack.c.l.b16 %v10802
        %v10835 = vunpack.c.l.b16 %v10803
        %v10836 = vunpack.c.l.b16 %v10804
        %v10837 = vunpack.c.l.b16 %v10805
        %v10838 = vunpack.c.l.b16 %v10806
        %v10839 = vunpack.c.l.b16 %v10807
        %v10840 = vunpack.c.l.b16 %v10808
        %v10841 = vunpack.c.l.b16 %v10809
        %v10842 = vunpack.c.l.b16 %v10810
        %v10843 = vunpack.c.l.b16 %v10811
        %v10844 = vunpack.c.l.b16 %v10812
        %v10845 = vunpack.c.l.b16 %v10813
        %v10846 = vunpack.c.l.b16 %v10814
        %v10847 = vunpack.c.l.b16 %v10815
        %v10848 = vpack.c.b16 %v10833, %v10832
        %v10849 = vpack.c.b16 %v10835, %v10834
        %v10850 = vpack.c.b16 %v10837, %v10836
        %v10851 = vpack.c.b16 %v10839, %v10838
        %v10852 = vpack.c.b16 %v10841, %v10840
        %v10853 = vpack.c.b16 %v10843, %v10842
        %v10854 = vpack.c.b16 %v10845, %v10844
        %v10855 = vpack.c.b16 %v10847, %v10846
        %10864 = vmatprep.subr.bf16.mxu0 0
        %10865 = vmatpush1.bf16.msra.mxu0 %v10848
        %10866 = vmatprep.subr.bf16.mxu0 0
        %10867 = vmatpush1.bf16.msra.mxu0 %v10849
        %10868 = vmatprep.subr.bf16.mxu0 0
        %10869 = vmatpush1.bf16.msra.mxu0 %v10850
        %10870 = vmatprep.subr.bf16.mxu0 0
        %10871 = vmatpush1.bf16.msra.mxu0 %v10851
        %10872 = vmatprep.subr.bf16.mxu0 0
        %10873 = vmatpush1.bf16.msra.mxu0 %v10852
        %10874 = vmatprep.subr.bf16.mxu0 0
        %10875 = vmatpush1.bf16.msra.mxu0 %v10853
        %10876 = vmatprep.subr.bf16.mxu0 0
        %10877 = vmatpush1.bf16.msra.mxu0 %v10854
        %10878 = vmatprep.subr.bf16.mxu0 0
        %10879 = vmatpush1.bf16.msra.mxu0 %v10855
        %10880 = vmatprep.subr.bf16.mxu0 0
        %10881 = vmatpush1.bf16.msra.mxu0 0
        %10882 = vmatprep.subr.bf16.mxu0 0
        %10883 = vmatpush1.bf16.msra.mxu0 0
        %10884 = vmatprep.subr.bf16.mxu0 0
        %10885 = vmatpush1.bf16.msra.mxu0 0
        %10886 = vmatprep.subr.bf16.mxu0 0
        %10887 = vmatpush1.bf16.msra.mxu0 0
        %10888 = vmatprep.subr.bf16.mxu0 0
        %10889 = vmatpush1.bf16.msra.mxu0 0
        %10890 = vmatprep.subr.bf16.mxu0 0
        %10891 = vmatpush1.bf16.msra.mxu0 0
        %10892 = vmatprep.subr.bf16.mxu0 0
        %10893 = vmatpush1.bf16.msra.mxu0 0
        %10894 = vmatprep.subr.bf16.mxu0 0
        %10895 = vmatpush1.bf16.msra.mxu0 0
        %10896 = vmatprep.mubr.bf16.mxu0 0
        %10897 = vmatmul.mubr.bf16.gmra.mrb[0].mxu0 %v10783
        %v10898 = vpop.f32.mrb[0].mxu0
        %v10899 = vadd.f32 0.0, %v10898
        %v10900 = vpop.f32.mrb[0].mxu0
        %v10901 = vpop.f32.mrb[0].mxu0
        %v10902 = vadd.f32 0.0, %v10901
        %v10903 = vpop.f32.mrb[0].mxu0
        %10904 = vmatprep.mubr.bf16.mxu0 0
        %10905 = vmatmul.mubr.bf16.gmra.mrb[0].mxu0 %v10784
        %v10906 = vpop.f32.mrb[0].mxu0
        %v10907 = vadd.f32 0.0, %v10906
        %v10908 = vpop.f32.mrb[0].mxu0
        %v10909 = vpop.f32.mrb[0].mxu0
        %v10910 = vadd.f32 0.0, %v10909
        %v10911 = vpop.f32.mrb[0].mxu0
        %10912 = vmatprep.mubr.bf16.mxu0 0
        %10913 = vmatmul.mubr.bf16.gmra.mrb[0].mxu0 %v10785
        %v10914 = vpop.f32.mrb[0].mxu0
        %v10915 = vadd.f32 0.0, %v10914
        %v10916 = vpop.f32.mrb[0].mxu0
        %v10917 = vpop.f32.mrb[0].mxu0
        %v10918 = vadd.f32 0.0, %v10917
        %v10919 = vpop.f32.mrb[0].mxu0
        %10920 = vmatprep.mubr.bf16.mxu0 0
        %10921 = vmatmul.mubr.bf16.gmra.mrb[0].mxu0 %v10786
        %v10922 = vpop.f32.mrb[0].mxu0
        %v10923 = vadd.f32 0.0, %v10922
        %v10924 = vpop.f32.mrb[0].mxu0
        %v10925 = vpop.f32.mrb[0].mxu0
        %v10926 = vadd.f32 0.0, %v10925
        %v10927 = vpop.f32.mrb[0].mxu0
        %10928 = vmatprep.mubr.bf16.mxu0 0
        %10929 = vmatmul.mubr.bf16.gmra.mrb[0].mxu0 %v10787
        %v10930 = vpop.f32.mrb[0].mxu0
        %v10931 = vadd.f32 0.0, %v10930
        %v10932 = vpop.f32.mrb[0].mxu0
        %v10933 = vpop.f32.mrb[0].mxu0
        %v10934 = vadd.f32 0.0, %v10933
        %v10935 = vpop.f32.mrb[0].mxu0
        %10936 = vmatprep.mubr.bf16.mxu0 0
        %10937 = vmatmul.mubr.bf16.gmra.mrb[0].mxu0 %v10788
        %v10938 = vpop.f32.mrb[0].mxu0
        %v10939 = vadd.f32 0.0, %v10938
        %v10940 = vpop.f32.mrb[0].mxu0
        %v10941 = vpop.f32.mrb[0].mxu0
        %v10942 = vadd.f32 0.0, %v10941
        %v10943 = vpop.f32.mrb[0].mxu0
        %10944 = vmatprep.mubr.bf16.mxu0 0
        %10945 = vmatmul.mubr.bf16.gmra.mrb[0].mxu0 %v10789
        %v10946 = vpop.f32.mrb[0].mxu0
        %v10947 = vadd.f32 0.0, %v10946
        %v10948 = vpop.f32.mrb[0].mxu0
        %v10949 = vpop.f32.mrb[0].mxu0
        %v10950 = vadd.f32 0.0, %v10949
        %v10951 = vpop.f32.mrb[0].mxu0
        %10952 = vmatprep.mubr.bf16.mxu0 0
        %10953 = vmatmul.mubr.bf16.gmra.mrb[0].mxu0 %v10790
        %v10954 = vpop.f32.mrb[0].mxu0
        %v10955 = vadd.f32 0.0, %v10954
        %v10956 = vpop.f32.mrb[0].mxu0
        %v10957 = vpop.f32.mrb[0].mxu0
        %v10958 = vadd.f32 0.0, %v10957
        %v10959 = vpop.f32.mrb[0].mxu0
        %10960 = vmatprep.mubr.bf16.mxu0 0
        %10961 = vmatmul.mubr.bf16.gmra.mrb[0].mxu0 %v10791
        %v10962 = vpop.f32.mrb[0].mxu0
        %v10963 = vadd.f32 0.0, %v10962
        %v10964 = vpop.f32.mrb[0].mxu0
        %v10965 = vpop.f32.mrb[0].mxu0
        %v10966 = vadd.f32 0.0, %v10965
        %v10967 = vpop.f32.mrb[0].mxu0
        %10968 = vmatprep.mubr.bf16.mxu0 0
        %10969 = vmatmul.mubr.bf16.gmra.mrb[0].mxu0 %v10792
        %v10970 = vpop.f32.mrb[0].mxu0
        %v10971 = vadd.f32 0.0, %v10970
        %v10972 = vpop.f32.mrb[0].mxu0
        %v10973 = vpop.f32.mrb[0].mxu0
        %v10974 = vadd.f32 0.0, %v10973
        %v10975 = vpop.f32.mrb[0].mxu0
        %10976 = vmatprep.mubr.bf16.mxu0 0
        %10977 = vmatmul.mubr.bf16.gmra.mrb[0].mxu0 %v10793
        %v10978 = vpop.f32.mrb[0].mxu0
        %v10979 = vadd.f32 0.0, %v10978
        %v10980 = vpop.f32.mrb[0].mxu0
        %v10981 = vpop.f32.mrb[0].mxu0
        %v10982 = vadd.f32 0.0, %v10981
        %v10983 = vpop.f32.mrb[0].mxu0
        %10984 = vmatprep.mubr.bf16.mxu0 0
        %10985 = vmatmul.mubr.bf16.gmra.mrb[0].mxu0 %v10794
        %v10986 = vpop.f32.mrb[0].mxu0
        %v10987 = vadd.f32 0.0, %v10986
        %v10988 = vpop.f32.mrb[0].mxu0
        %v10989 = vpop.f32.mrb[0].mxu0
        %v10990 = vadd.f32 0.0, %v10989
        %v10991 = vpop.f32.mrb[0].mxu0
        %10992 = vmatprep.mubr.bf16.mxu0 0
        %10993 = vmatmul.mubr.bf16.gmra.mrb[0].mxu0 %v10795
        %v10994 = vpop.f32.mrb[0].mxu0
        %v10995 = vadd.f32 0.0, %v10994
        %v10996 = vpop.f32.mrb[0].mxu0
        %v10997 = vpop.f32.mrb[0].mxu0
        %v10998 = vadd.f32 0.0, %v10997
        %v10999 = vpop.f32.mrb[0].mxu0
        %11000 = vmatprep.mubr.bf16.mxu0 0
        %11001 = vmatmul.mubr.bf16.gmra.mrb[0].mxu0 %v10796
        %v11002 = vpop.f32.mrb[0].mxu0
        %v11003 = vadd.f32 0.0, %v11002
        %v11004 = vpop.f32.mrb[0].mxu0
        %v11005 = vpop.f32.mrb[0].mxu0
        %v11006 = vadd.f32 0.0, %v11005
        %v11007 = vpop.f32.mrb[0].mxu0
        %11008 = vmatprep.mubr.bf16.mxu0 0
        %11009 = vmatmul.mubr.bf16.gmra.mrb[0].mxu0 %v10797
        %v11010 = vpop.f32.mrb[0].mxu0
        %v11011 = vadd.f32 0.0, %v11010
        %v11012 = vpop.f32.mrb[0].mxu0
        %v11013 = vpop.f32.mrb[0].mxu0
        %v11014 = vadd.f32 0.0, %v11013
        %v11015 = vpop.f32.mrb[0].mxu0
        %11016 = vmatprep.mubr.bf16.mxu0 0
        %11017 = vmatmul.mubr.bf16.gmra.mrb[0].mxu0 %v10798
        %v11018 = vpop.f32.mrb[0].mxu0
        %v11019 = vadd.f32 0.0, %v11018
        %v11020 = vpop.f32.mrb[0].mxu0
        %v11021 = vpop.f32.mrb[0].mxu0
        %v11022 = vadd.f32 0.0, %v11021
        %v11023 = vpop.f32.mrb[0].mxu0
        %11024 = vdwg.mxu0
        %v11025 = vadd.f32 %v10687, %v10899
        %v11026 = vadd.f32 %v10688, %v10902
        %v11027 = vadd.f32 %v10689, %v10907
        %v11028 = vadd.f32 %v10690, %v10910
        %v11029 = vadd.f32 %v10691, %v10915
        %v11030 = vadd.f32 %v10692, %v10918
        %v11031 = vadd.f32 %v10693, %v10923
        %v11032 = vadd.f32 %v10694, %v10926
        %v11033 = vadd.f32 %v10695, %v10931
        %v11034 = vadd.f32 %v10696, %v10934
        %v11035 = vadd.f32 %v10697, %v10939
        %v11036 = vadd.f32 %v10698, %v10942
        %v11037 = vadd.f32 %v10699, %v10947
        %v11038 = vadd.f32 %v10700, %v10950
        %v11039 = vadd.f32 %v10701, %v10955
        %v11040 = vadd.f32 %v10702, %v10958
        %v11041 = vadd.f32 %v10703, %v10963
        %v11042 = vadd.f32 %v10704, %v10966
        %v11043 = vadd.f32 %v10705, %v10971
        %v11044 = vadd.f32 %v10706, %v10974
        %v11045 = vadd.f32 %v10707, %v10979
        %v11046 = vadd.f32 %v10708, %v10982
        %v11047 = vadd.f32 %v10709, %v10987
        %v11048 = vadd.f32 %v10710, %v10990
        %v11049 = vadd.f32 %v10711, %v10995
        %v11050 = vadd.f32 %v10712, %v10998
        %v11051 = vadd.f32 %v10713, %v11003
        %v11052 = vadd.f32 %v10714, %v11006
        %v11053 = vadd.f32 %v10715, %v11011
        %v11054 = vadd.f32 %v10716, %v11014
        %v11055 = vadd.f32 %v10717, %v11019
        %v11056 = vadd.f32 %v10718, %v11022
        %v11057 = vadd.f32 %v11025, %v4885
        %v11058 = vadd.f32 %v11026, %v4886
        %v11059 = vadd.f32 %v11027, %v4887
        %v11060 = vadd.f32 %v11028, %v4888
        %v11061 = vadd.f32 %v11029, %v4889
        %v11062 = vadd.f32 %v11030, %v4890
        %v11063 = vadd.f32 %v11031, %v4891
        %v11064 = vadd.f32 %v11032, %v4892
        %v11065 = vadd.f32 %v11033, %v4893
        %v11066 = vadd.f32 %v11034, %v4894
        %v11067 = vadd.f32 %v11035, %v4895
        %v11068 = vadd.f32 %v11036, %v4896
        %v11069 = vadd.f32 %v11037, %v4897
        %v11070 = vadd.f32 %v11038, %v4898
        %v11071 = vadd.f32 %v11039, %v4899
        %v11072 = vadd.f32 %v11040, %v4900
        %v11073 = vadd.f32 %v11041, %v4901
        %v11074 = vadd.f32 %v11042, %v4902
        %v11075 = vadd.f32 %v11043, %v4903
        %v11076 = vadd.f32 %v11044, %v4904
        %v11077 = vadd.f32 %v11045, %v4905
        %v11078 = vadd.f32 %v11046, %v4906
        %v11079 = vadd.f32 %v11047, %v4907
        %v11080 = vadd.f32 %v11048, %v4908
        %v11081 = vadd.f32 %v11049, %v4909
        %v11082 = vadd.f32 %v11050, %v4910
        %v11083 = vadd.f32 %v11051, %v4911
        %v11084 = vadd.f32 %v11052, %v4912
        %v11085 = vadd.f32 %v11053, %v4913
        %v11086 = vadd.f32 %v11054, %v4914
        %v11087 = vadd.f32 %v11055, %v4915
        %v11088 = vadd.f32 %v11056, %v4916
        %v11089 = vmax.f32 %v11057, 0.0
        %v11090 = vmax.f32 %v11058, 0.0
        %v11091 = vmax.f32 %v11059, 0.0
        %v11092 = vmax.f32 %v11060, 0.0
        %v11093 = vmax.f32 %v11061, 0.0
        %v11094 = vmax.f32 %v11062, 0.0
        %v11095 = vmax.f32 %v11063, 0.0
        %v11096 = vmax.f32 %v11064, 0.0
        %v11097 = vmax.f32 %v11065, 0.0
        %v11098 = vmax.f32 %v11066, 0.0
        %v11099 = vmax.f32 %v11067, 0.0
        %v11100 = vmax.f32 %v11068, 0.0
        %v11101 = vmax.f32 %v11069, 0.0
        %v11102 = vmax.f32 %v11070, 0.0
        %v11103 = vmax.f32 %v11071, 0.0
        %v11104 = vmax.f32 %v11072, 0.0
        %v11105 = vmax.f32 %v11073, 0.0
        %v11106 = vmax.f32 %v11074, 0.0
        %v11107 = vmax.f32 %v11075, 0.0
        %v11108 = vmax.f32 %v11076, 0.0
        %v11109 = vmax.f32 %v11077, 0.0
        %v11110 = vmax.f32 %v11078, 0.0
        %v11111 = vmax.f32 %v11079, 0.0
        %v11112 = vmax.f32 %v11080, 0.0
        %v11113 = vmax.f32 %v11081, 0.0
        %v11114 = vmax.f32 %v11082, 0.0
        %v11115 = vmax.f32 %v11083, 0.0
        %v11116 = vmax.f32 %v11084, 0.0
        %v11117 = vmax.f32 %v11085, 0.0
        %v11118 = vmax.f32 %v11086, 0.0
        %v11119 = vmax.f32 %v11087, 0.0
        %v11120 = vmax.f32 %v11088, 0.0
        %v11121 = vadd.f32 %v11089, %v11090
        %v11122 = vadd.f32 %v11121, %v11091
        %v11123 = vadd.f32 %v11122, %v11092
        %v11124 = vadd.f32 %v11123, %v11093
        %v11125 = vadd.f32 %v11124, %v11094
        %v11126 = vadd.f32 %v11125, %v11095
        %v11127 = vadd.f32 %v11126, %v11096
        %v11128 = vadd.f32 %v11127, %v11097
        %v11129 = vadd.f32 %v11128, %v11098
        %v11130 = vadd.f32 %v11129, %v11099
        %v11131 = vadd.f32 %v11130, %v11100
        %v11132 = vadd.f32 %v11131, %v11101
        %v11133 = vadd.f32 %v11132, %v11102
        %v11134 = vadd.f32 %v11133, %v11103
        %v11135 = vadd.f32 %v11134, %v11104
        %v11136 = vadd.f32 %v11135, %v11105
        %v11137 = vadd.f32 %v11136, %v11106
        %v11138 = vadd.f32 %v11137, %v11107
        %v11139 = vadd.f32 %v11138, %v11108
        %v11140 = vadd.f32 %v11139, %v11109
        %v11141 = vadd.f32 %v11140, %v11110
        %v11142 = vadd.f32 %v11141, %v11111
        %v11143 = vadd.f32 %v11142, %v11112
        %v11144 = vadd.f32 %v11143, %v11113
        %v11145 = vadd.f32 %v11144, %v11114
        %v11146 = vadd.f32 %v11145, %v11115
        %v11147 = vadd.f32 %v11146, %v11116
        %v11148 = vadd.f32 %v11147, %v11117
        %v11149 = vadd.f32 %v11148, %v11118
        %v11150 = vadd.f32 %v11149, %v11119
        %v11151 = vadd.f32 %v11150, %v11120
        %v11152 = vrot.slane %v11151, 4
        %v11153 = vadd.f32 %v11151, %v11152
        %v11154 = vrot.slane %v11153, 2
        %v11155 = vadd.f32 %v11153, %v11154
        %v11156 = vrot.slane %v11155, 1
        %v11157 = vadd.f32 %v11155, %v11156
        %v11158 = vrcp.pop 256.0
        %v11159 = vmul.f32 %v11157, %v11158
        %v11160 = vld [vmem:[%s8] sm:$0xff]
        %v11161 = vld [vmem:[%s8 + $0x8] sm:$0xff]
        %v11162 = vld [vmem:[%s8 + $0x10] sm:$0xff]
        %v11163 = vld [vmem:[%s8 + $0x18] sm:$0xff]
        %v11164 = vld [vmem:[%s8 + $0x20] sm:$0xff]
        %v11165 = vld [vmem:[%s8 + $0x28] sm:$0xff]
        %v11166 = vld [vmem:[%s8 + $0x30] sm:$0xff]
        %v11167 = vld [vmem:[%s8 + $0x38] sm:$0xff]
        %v11168 = vld [vmem:[%s8 + $0x40] sm:$0xff]
        %v11169 = vld [vmem:[%s8 + $0x48] sm:$0xff]
        %v11170 = vld [vmem:[%s8 + $0x50] sm:$0xff]
        %v11171 = vld [vmem:[%s8 + $0x58] sm:$0xff]
        %v11172 = vld [vmem:[%s8 + $0x60] sm:$0xff]
        %v11173 = vld [vmem:[%s8 + $0x68] sm:$0xff]
        %v11174 = vld [vmem:[%s8 + $0x70] sm:$0xff]
        %v11175 = vld [vmem:[%s8 + $0x78] sm:$0xff]
        %v11176 = vld [vmem:[%s9] sm:$0x1]
        %11177 = vmatprep.subr.mxu0 0.0
        %11178 = vmatpush1.msra.mxu0 %v11160
        %11179 = vmatprep.subr.mxu0 0.0
        %11180 = vmatpush1.msra.mxu0 %v11161
        %11181 = vmatprep.subr.mxu0 0.0
        %11182 = vmatpush1.msra.mxu0 %v11162
        %11183 = vmatprep.subr.mxu0 0.0
        %11184 = vmatpush1.msra.mxu0 %v11163
        %11185 = vmatprep.subr.mxu0 0.0
        %11186 = vmatpush1.msra.mxu0 %v11164
        %11187 = vmatprep.subr.mxu0 0.0
        %11188 = vmatpush1.msra.mxu0 %v11165
        %11189 = vmatprep.subr.mxu0 0.0
        %11190 = vmatpush1.msra.mxu0 %v11166
        %11191 = vmatprep.subr.mxu0 0.0
        %11192 = vmatpush1.msra.mxu0 %v11167
        %11193 = vmatprep.subr.mxu0 0.0
        %11194 = vmatpush1.msra.mxu0 %v11168
        %11195 = vmatprep.subr.mxu0 0.0
        %11196 = vmatpush1.msra.mxu0 %v11169
        %11197 = vmatprep.subr.mxu0 0.0
        %11198 = vmatpush1.msra.mxu0 %v11170
        %11199 = vmatprep.subr.mxu0 0.0
        %11200 = vmatpush1.msra.mxu0 %v11171
        %11201 = vmatprep.subr.mxu0 0.0
        %11202 = vmatpush1.msra.mxu0 %v11172
        %11203 = vmatprep.subr.mxu0 0.0
        %11204 = vmatpush1.msra.mxu0 %v11173
        %11205 = vmatprep.subr.mxu0 0.0
        %11206 = vmatpush1.msra.mxu0 %v11174
        %11207 = vmatprep.subr.mxu0 0.0
        %11208 = vmatpush1.msra.mxu0 %v11175
        %11209 = vmatprep.subr.mxu0 0.0
        %11210 = vmatpush1.msra.mxu0 0.0
        %11211 = vmatprep.subr.mxu0 0.0
        %11212 = vmatpush1.msra.mxu0 0.0
        %11213 = vmatprep.subr.mxu0 0.0
        %11214 = vmatpush1.msra.mxu0 0.0
        %11215 = vmatprep.subr.mxu0 0.0
        %11216 = vmatpush1.msra.mxu0 0.0
        %11217 = vmatprep.subr.mxu0 0.0
        %11218 = vmatpush1.msra.mxu0 0.0
        %11219 = vmatprep.subr.mxu0 0.0
        %11220 = vmatpush1.msra.mxu0 0.0
        %11221 = vmatprep.subr.mxu0 0.0
        %11222 = vmatpush1.msra.mxu0 0.0
        %11223 = vmatprep.subr.mxu0 0.0
        %11224 = vmatpush1.msra.mxu0 0.0
        %11225 = vmatprep.subr.mxu0 0.0
        %11226 = vmatpush1.msra.mxu0 0.0
        %11227 = vmatprep.subr.mxu0 0.0
        %11228 = vmatpush1.msra.mxu0 0.0
        %11229 = vmatprep.subr.mxu0 0.0
        %11230 = vmatpush1.msra.mxu0 0.0
        %11231 = vmatprep.subr.mxu0 0.0
        %11232 = vmatpush1.msra.mxu0 0.0
        %11233 = vmatprep.subr.mxu0 0.0
        %11234 = vmatpush1.msra.mxu0 0.0
        %11235 = vmatprep.subr.mxu0 0.0
        %11236 = vmatpush1.msra.mxu0 0.0
        %11237 = vmatprep.subr.mxu0 0.0
        %11238 = vmatpush1.msra.mxu0 0.0
        %11239 = vmatprep.subr.mxu0 0.0
        %11240 = vmatpush1.msra.mxu0 0.0
        %11241 = vmatprep.mubr.f32.mxu0 0.0
        %11242 = vmatmul.mubr.f32.gmra.mrb[0].mxu0 %v11159
        %v11243 = vpop.f32.mrb[0].mxu0
        %v11244 = vadd.f32 %v11176, %v11243
        %v11245 = vpop.f32.mrb[0].mxu0
        %11246 = vdwg.mxu0
        %vm11247 = vcmask 122880
        %11248 = vst.msk [vmem:[%s351] sm:$0x1] %vm11247, %v11244
        %s11249 = sand.u32 %s247, 1
        %s11250 = scalar_lea.sflag [#allocation5], %s11249
        %s11251 = sand.u32 %s247, 1
        %s11252 = scalar_lea.vmem [#allocation4], %s11251
        // Predicated region
        $region61: #{rgbf_embedding_forward.1} parent=59 // pred_check
          %p11253 = pneg %p257
        $region62: #{rgbf_embedding_forward.1} parent=59 // pred_check_branch
          %11255 = sbr.rel (%p11253) target = $region64
        $region63: #{rgbf_embedding_forward.1} parent=59 // pred_region
          %s11257 = ssub.s32 16, 16
          %11258 = vsyncadd %s11250, %s11257
          %s11259 = smul.addr %s24, 16
          %s11260 = scalar_lea.hbm %s10, %s11259
          %s11262 = sshll.u32 %s11252, 4
          %s11263 = int_to_ptr.vmem [resolvable:$true] %s11262
          %11265 = dma.vmem_to_hbm [thread:$0]  %s11263, 16, %s11260, %s11250
        $region64: #{rgbf_embedding_forward.1} parent=59 // pred_fallthru
          _
      $region60: #{rgbf_embedding_forward.1} parent=5 // pred_fallthru
        _
      %p11266 = scmp.le.s32.totalorder 2, %s19
      // Predicated region
      $region65: #{rgbf_embedding_forward.1} parent=5 // pred_check
        %p11267 = pneg %p11266
      $region66: #{rgbf_embedding_forward.1} parent=5 // pred_check_branch
        %11269 = sbr.rel (%p11267) target = $region68
      $region67: #{rgbf_embedding_forward.1} parent=5 // pred_region
        %s11270 = ssub.s32 %s19, 2
        // Predicated region
        $region69: #{rgbf_embedding_forward.1} parent=67 // pred_check
          %p11271 = pneg %p263
        $region70: #{rgbf_embedding_forward.1} parent=67 // pred_check_branch
          %11273 = sbr.rel (%p11271) target = $region72
        $region71: #{rgbf_embedding_forward.1} parent=67 // pred_region
          %s11274 = sand.u32 %s248, 1
          %s11275 = scalar_lea.sflag [#allocation5], %s11274
          %s11276 = sand.u32 %s248, 1
          %s11277 = scalar_lea.vmem [#allocation4], %s11276
          %11278 = dma.done %s11275, 16
        $region72: #{rgbf_embedding_forward.1} parent=67 // pred_fallthru
          _
      $region68: #{rgbf_embedding_forward.1} parent=5 // pred_fallthru
        _
    $region6: #{rgbf_embedding_forward.1} parent=1 // loop_footer
      %s23 = sadd.s32 1, %s19
    $region7: #{rgbf_embedding_forward.1} parent=1 // loop_footer_branch
      %18 = sbr.rel target = $region3
    $region8: #{rgbf_embedding_forward.1} parent=1 // loop_exit
      _
    %11279 = vsyncpa [#allocation5], 1
    %s11280 = scalar_lea.sflag [#allocation5], 1
    %11281 = vsyncpa %s11280, 1

</llo_original>
